<compile_context>
chip_gen: v6e
topology: v6e:2x2x1
jax: 0.10.0
libtpu: 0.0.40
codegen_flags: <defaults>
</compile_context>

<pallas_src>
import functools

import jax
import jax.numpy as jnp
from jax.experimental import pallas as pl
from jax.experimental.pallas import tpu as pltpu


def _act(dot_f32, bias_bf16):
    # Unscaled hardswish: v * relu6(v + 3).  The 1/6 of every hardswish is
    # folded into the *next* linear weight in the wrapper; the chain runs in
    # bf16 (the bf16 cast is needed for the following MXU dot anyway).
    v = dot_f32.astype(jnp.bfloat16) + bias_bf16
    return v * jnp.clip(v + 3.0, 0.0, 6.0)


def decoder_kernel(x_ref,
                   w0_ref, b0_ref,     # layers[0]: 1x1 ConvBN (block-diag packed)
                   w1_ref, b1_ref,     # layers[1]: 1x1 ConvBN (1/6 folded in)
                   wc_ref, bc_ref,     # self.conv: 1x1 ConvBN (1/6 folded in)
                   s_ref,              # (Nb, Nb*Tr) per-sample pool selection (MXU pooling)
                   wf1_ref, bf1_ref,   # classifier Linear 1 (1/(6*HW) folded in)
                   wf2_ref, bf2_ref,   # classifier Linear 2 (1/6 folded in)
                   out_ref, acc_ref, *, nb, tr):
    r = pl.program_id(1)

    @pl.when(r == 0)
    def _init():
        acc_ref[...] = jnp.zeros_like(acc_ref)

    # (nb, tr, Cp) -> (nb*tr, Cp); tr is a multiple of 8 (or == full R) so the
    # leading-dim collapse is layout-free.
    x = x_ref[...].reshape(nb * tr, x_ref.shape[-1])

    # self.layers + self.conv: three lane-packed pointwise matmuls + hardswish.
    h = _act(jnp.dot(x, w0_ref[...], preferred_element_type=jnp.float32), b0_ref[...])
    h = _act(jnp.dot(h, w1_ref[...], preferred_element_type=jnp.float32), b1_ref[...])
    h = _act(jnp.dot(h, wc_ref[...], preferred_element_type=jnp.float32), bc_ref[...])

    # self.avgpool partial sum on the MXU (VALU stays free): S is the
    # block-row-of-ones matrix selecting each sample's tr rows.
    acc_ref[...] += jnp.dot(s_ref[...], h, preferred_element_type=jnp.float32)

    # self.classifier (Linear -> Hardswish -> Dropout(eval)=Id -> Linear) and
    # the lane-dense output store, only on the last row step.
    @pl.when(r == pl.num_programs(1) - 1)
    def _finish():
        p = acc_ref[...].astype(jnp.bfloat16)                    # (nb, g*Cconv)
        z = jnp.dot(p, wf1_ref[...], preferred_element_type=jnp.float32) + bf1_ref[...]
        z = z * jnp.clip(z + 3.0, 0.0, 6.0)                      # tiny, stays f32
        z = jnp.dot(z.astype(jnp.bfloat16), wf2_ref[...],
                    preferred_element_type=jnp.float32) + bf2_ref[...]
        out_ref[...] = z                                         # (nb, NC_pad) lane-dense


def mobilenetv3_decoder(x_nchw, params, *, nb=8):
    """x_nchw: (N, Cb, H, W) float32.  Returns (N, num_classes) float32."""
    w0, b0, w1, b1, wc, bc, wf1, bf1, wf2, bf2 = params
    N, Cb, H, W = x_nchw.shape
    HW = H * W
    Cconv, HID, NC = wc.shape[1], wf1.shape[1], wf2.shape[1]
    bf16 = jnp.bfloat16

    # ---- lane packing: fold g spatial positions into the lane dim so that
    # activations carry g*Cb (~128) useful lanes instead of being lane-padded.
    g = 1
    while g * 2 * Cb <= 128 and HW % (g * 2) == 0:
        g *= 2
    R = HW // g                        # packed spatial rows per sample
    Cp = g * Cb

    # ---- row tiling (reduction axis): largest tile <= 64 rows that divides R.
    Tr = R
    for cand in (64, 32, 16, 8):
        if cand <= R and R % cand == 0:
            Tr = cand
            break
    n_row_blocks = R // Tr

    # ---- batch tiling ("parallel" axis; batches > nb give >= 2 megacore steps).
    Nb = nb
    N_pad = pl.cdiv(N, Nb) * Nb
    n_batch_blocks = N_pad // Nb

    HID_pad = pl.cdiv(HID, 128) * 128
    NC_pad = pl.cdiv(NC, 128) * 128

    # ---- input: NCHW -> (N, R, g*Cb) packed rows, bf16.
    # TODO(synk): this transpose/pack is one extra XLA pass over x; a
    # channels-last producer upstream would remove it.
    x = jnp.transpose(x_nchw, (0, 2, 3, 1)).reshape(N, R, Cp)
    if N_pad != N:
        x = jnp.pad(x, ((0, N_pad - N), (0, 0), (0, 0)))
    x = x.astype(bf16)

    # ---- weight preprocessing (static, wrapper-side):
    #  * zero-channel concat removed: w0 sliced to its first Cb rows,
    #  * block-diagonalised (kron with I_g) to match lane packing,
    #  * each hardswish's 1/6 and the avgpool's 1/HW folded into the next weight.
    eye_g = jnp.eye(g, dtype=jnp.float32)

    def bd(w):
        return jnp.kron(eye_g, w)

    w0_p = bd(w0[:Cb, :]).astype(bf16)                         # (g*Cb,   g*C1)
    b0_p = jnp.tile(b0, (1, g)).astype(bf16)
    w1_p = bd(w1 * (1.0 / 6.0)).astype(bf16)                   # (g*C1,   g*C2)
    b1_p = jnp.tile(b1, (1, g)).astype(bf16)
    wc_p = bd(wc * (1.0 / 6.0)).astype(bf16)                   # (g*C2, g*Cconv)
    bc_p = jnp.tile(bc, (1, g)).astype(bf16)
    s_mat = jnp.kron(jnp.eye(Nb, dtype=jnp.float32),
                     jnp.ones((1, Tr), jnp.float32)).astype(bf16)
    wf1_p = jnp.tile(wf1 * (1.0 / (6.0 * HW)), (g, 1))         # fold pool 1/HW + hs 1/6
    wf1_p = jnp.pad(wf1_p, ((0, 0), (0, HID_pad - HID))).astype(bf16)
    bf1_p = jnp.pad(bf1, ((0, 0), (0, HID_pad - HID)))
    wf2_p = jnp.pad(wf2 * (1.0 / 6.0),
                    ((0, HID_pad - HID), (0, NC_pad - NC))).astype(bf16)
    bf2_p = jnp.pad(bf2, ((0, 0), (0, NC_pad - NC)))

    consts = (w0_p, b0_p, w1_p, b1_p, wc_p, bc_p, s_mat,
              wf1_p, bf1_p, wf2_p, bf2_p)

    def full_spec(a):
        nd = a.ndim
        return pl.BlockSpec(a.shape, lambda i, r, _nd=nd: (0,) * _nd)

    kernel = functools.partial(decoder_kernel, nb=Nb, tr=Tr)

    out = pl.pallas_call(
        kernel,
        out_shape=jax.ShapeDtypeStruct((N_pad, NC_pad), jnp.float32),
        grid_spec=pltpu.PrefetchScalarGridSpec(
            num_scalar_prefetch=0,
            grid=(n_batch_blocks, n_row_blocks),
            in_specs=[pl.BlockSpec((Nb, Tr, Cp), lambda i, r: (i, r, 0))]
                     + [full_spec(a) for a in consts],
            out_specs=pl.BlockSpec((Nb, NC_pad), lambda i, r: (i, 0)),
            scratch_shapes=[pltpu.VMEM((Nb, g * Cconv), jnp.float32)]),
        compiler_params=pltpu.CompilerParams(
            dimension_semantics=("parallel", "arbitrary")),
    )(x, *consts)
    return out[:N, :NC]


def reference(x_nchw, params):
    """Plain-JAX f32 reference with the module's exact semantics."""
    w0, b0, w1, b1, wc, bc, wf1, bf1, wf2, bf2 = params
    N, Cb, H, W = x_nchw.shape
    x = jnp.transpose(x_nchw, (0, 2, 3, 1)).reshape(N, H * W, Cb)
    c0 = w0.shape[0]
    x = jnp.concatenate(
        [x, jnp.zeros((N, H * W, c0 - Cb), dtype=x.dtype)], axis=-1)

    def hs(v):
        return v * jnp.clip(v + 3.0, 0.0, 6.0) * (1.0 / 6.0)

    h = hs(x @ w0 + b0)
    h = hs(h @ w1 + b1)
    h = hs(h @ wc + bc)
    p = jnp.mean(h, axis=1)                          # AdaptiveAvgPool2d(1) + view
    z = hs(p @ wf1 + bf1)
    return z @ wf2 + bf2


def init_params(key, c0, c1, c2, cconv, hidden, nc):
    ks = jax.random.split(key, 10)

    def rnd(k, shape, scale):
        return jax.random.normal(k, shape, jnp.float32) * scale

    w0 = rnd(ks[0], (c0, c1), 0.20);     b0 = rnd(ks[1], (1, c1), 0.05)
    w1 = rnd(ks[2], (c1, c2), 0.15);     b1 = rnd(ks[3], (1, c2), 0.05)
    wc = rnd(ks[4], (c2, cconv), 0.10);  bc = rnd(ks[5], (1, cconv), 0.05)
    # classifier Linear weights pre-transposed to (in, out) (PyTorch stores (out, in))
    wf1 = rnd(ks[6], (cconv, hidden), 0.10); bf1 = rnd(ks[7], (1, hidden), 0.05)
    wf2 = rnd(ks[8], (hidden, nc), 0.10);    bf2 = rnd(ks[9], (1, nc), 0.05)
    return (w0, b0, w1, b1, wc, bc, wf1, bf1, wf2, bf2)


if __name__ == "__main__":
    key = jax.random.PRNGKey(0)
    kx, kp = jax.random.split(key)

    # Small shapes consistent with the module's forward pass.
    N, H, W = 2, 16, 16
    original_channels = 16
    bottleneck_ratio = 0.5
    Cb = int(bottleneck_ratio * original_channels)   # bottleneck_channels = 8
    C0 = 16                                          # original_size (layers[0].conv[0].in_channels)
    C1, C2, Cconv, HID, NC = 24, 32, 96, 64, 10

    x = jax.random.normal(kx, (N, Cb, H, W), jnp.float32)
    params = init_params(kp, C0, C1, C2, Cconv, HID, NC)

    y = jax.jit(mobilenetv3_decoder)(x, params)
    y = jax.block_until_ready(y)

    y_ref = reference(x, params)
    assert y.shape == (N, NC)
    # bf16 matmul operands + bf16 elementwise (f32 accumulation) => loosened tolerance.
    assert jnp.allclose(y, y_ref, atol=5e-2, rtol=5e-2), "mismatch vs reference"

    print("KERNEL_OK")
</pallas_src>

<mosaic_0001>
module attributes {stable_mosaic.version = 11 : i64} {
  func.func @decoder_kernel(%arg0: i32, %arg1: i32, %arg2: memref<8x16x128xbf16, #tpu.memory_space<vmem>>, %arg3: memref<128x384xbf16, #tpu.memory_space<vmem>>, %arg4: memref<1x384xbf16, #tpu.memory_space<vmem>>, %arg5: memref<384x512xbf16, #tpu.memory_space<vmem>>, %arg6: memref<1x512xbf16, #tpu.memory_space<vmem>>, %arg7: memref<512x1536xbf16, #tpu.memory_space<vmem>>, %arg8: memref<1x1536xbf16, #tpu.memory_space<vmem>>, %arg9: memref<8x128xbf16, #tpu.memory_space<vmem>>, %arg10: memref<1536x128xbf16, #tpu.memory_space<vmem>>, %arg11: memref<1x128xf32, #tpu.memory_space<vmem>>, %arg12: memref<128x128xbf16, #tpu.memory_space<vmem>>, %arg13: memref<1x128xf32, #tpu.memory_space<vmem>>, %arg14: memref<8x128xf32, #tpu.memory_space<vmem>>, %arg15: memref<8x1536xf32, #tpu.memory_space<vmem>>) attributes {dimension_semantics = [#tpu.dimension_semantics<parallel>, #tpu.dimension_semantics<arbitrary>], iteration_bounds = array<i64: 1, 1>, scalar_prefetch = 0 : i64, scratch_operands = 1 : i64, tpu.core_type = #tpu.core_type<tc>, window_params = [{transform_indices = @transform_0, window_bounds = array<i64: 8, 16, 128>}, {pipeline_mode = #tpu.pipeline_mode<synchronous>, transform_indices = @transform_1, window_bounds = array<i64: 128, 384>}, {pipeline_mode = #tpu.pipeline_mode<synchronous>, transform_indices = @transform_2, window_bounds = array<i64: 1, 384>}, {pipeline_mode = #tpu.pipeline_mode<synchronous>, transform_indices = @transform_3, window_bounds = array<i64: 384, 512>}, {pipeline_mode = #tpu.pipeline_mode<synchronous>, transform_indices = @transform_4, window_bounds = array<i64: 1, 512>}, {pipeline_mode = #tpu.pipeline_mode<synchronous>, transform_indices = @transform_5, window_bounds = array<i64: 512, 1536>}, {pipeline_mode = #tpu.pipeline_mode<synchronous>, transform_indices = @transform_6, window_bounds = array<i64: 1, 1536>}, {pipeline_mode = #tpu.pipeline_mode<synchronous>, transform_indices = @transform_7, window_bounds = array<i64: 8, 128>}, {pipeline_mode = #tpu.pipeline_mode<synchronous>, transform_indices = @transform_8, window_bounds = array<i64: 1536, 128>}, {pipeline_mode = #tpu.pipeline_mode<synchronous>, transform_indices = @transform_9, window_bounds = array<i64: 1, 128>}, {pipeline_mode = #tpu.pipeline_mode<synchronous>, transform_indices = @transform_10, window_bounds = array<i64: 128, 128>}, {pipeline_mode = #tpu.pipeline_mode<synchronous>, transform_indices = @transform_11, window_bounds = array<i64: 1, 128>}, {transform_indices = @transform_12, window_bounds = array<i64: 8, 128>}]} {
    %c0_i32 = arith.constant 0 : i32
    %0 = arith.cmpi eq, %arg1, %c0_i32 : i32
    %1 = arith.extui %0 : i1 to i32
    %c0_i32_0 = arith.constant 0 : i32
    %2 = arith.cmpi ne, %1, %c0_i32_0 : i32
    scf.if %2 {
      %cst_35 = arith.constant 0.000000e+00 : f32
      %58 = vector.broadcast %cst_35 : f32 to vector<8x1536xf32>
      %c0_36 = arith.constant 0 : index
      %c0_37 = arith.constant 0 : index
      %59 = vector.load %arg15[%c0_36, %c0_37] : memref<8x1536xf32, #tpu.memory_space<vmem>>, vector<8x1536xf32>
      tpu.vector_store %arg15[%c0_36, %c0_37], %58 {strides = array<i32>} : memref<8x1536xf32, #tpu.memory_space<vmem>>, vector<8x1536xf32>,
    } else {
    }
    %c0 = arith.constant 0 : index
    %c0_1 = arith.constant 0 : index
    %c0_2 = arith.constant 0 : index
    %3 = vector.load %arg2[%c0, %c0_1, %c0_2] : memref<8x16x128xbf16, #tpu.memory_space<vmem>>, vector<8x16x128xbf16>
    %4 = vector.shape_cast %3 : vector<8x16x128xbf16> to vector<128x128xbf16>
    %c0_3 = arith.constant 0 : index
    %c0_4 = arith.constant 0 : index
    %5 = vector.load %arg3[%c0_3, %c0_4] : memref<128x384xbf16, #tpu.memory_space<vmem>>, vector<128x384xbf16>
    %cst = arith.constant dense<0.000000e+00> : vector<128x384xf32>
    %6 = tpu.matmul %4, %5, %cst {dimension_numbers = #tpu.dot_dimension_numbers<[1], [0], [0], [1], [0, 0, 1, 1], [], []>} : vector<128x128xbf16>, vector<128x384xbf16>, vector<128x384xf32> -> vector<128x384xf32>
    %c0_5 = arith.constant 0 : index
    %c0_6 = arith.constant 0 : index
    %7 = vector.load %arg4[%c0_5, %c0_6] : memref<1x384xbf16, #tpu.memory_space<vmem>>, vector<1x384xbf16>
    %8 = arith.truncf %6 : vector<128x384xf32> to vector<128x384xbf16>
    %9 = vector.broadcast %7 : vector<1x384xbf16> to vector<128x384xbf16>
    %10 = arith.addf %8, %9 : vector<128x384xbf16>
    %cst_7 = arith.constant 3.000000e+00 : bf16
    %11 = vector.broadcast %cst_7 : bf16 to vector<128x384xbf16>
    %12 = arith.addf %10, %11 : vector<128x384xbf16>
    %cst_8 = arith.constant 0.000000e+00 : f32
    %cst_9 = arith.constant 6.000000e+00 : f32
    %13 = arith.truncf %cst_8 : f32 to bf16
    %14 = vector.broadcast %13 : bf16 to vector<128x384xbf16>
    %15 = arith.maximumf %14, %12 : vector<128x384xbf16>
    %16 = arith.truncf %cst_9 : f32 to bf16
    %17 = vector.broadcast %16 : bf16 to vector<128x384xbf16>
    %18 = arith.minimumf %17, %15 : vector<128x384xbf16>
    %19 = arith.mulf %10, %18 : vector<128x384xbf16>
    %c0_10 = arith.constant 0 : index
    %c0_11 = arith.constant 0 : index
    %20 = vector.load %arg5[%c0_10, %c0_11] : memref<384x512xbf16, #tpu.memory_space<vmem>>, vector<384x512xbf16>
    %cst_12 = arith.constant dense<0.000000e+00> : vector<128x512xf32>
    %21 = tpu.matmul %19, %20, %cst_12 {dimension_numbers = #tpu.dot_dimension_numbers<[1], [0], [0], [1], [0, 0, 1, 1], [], []>} : vector<128x384xbf16>, vector<384x512xbf16>, vector<128x512xf32> -> vector<128x512xf32>
    %c0_13 = arith.constant 0 : index
    %c0_14 = arith.constant 0 : index
    %22 = vector.load %arg6[%c0_13, %c0_14] : memref<1x512xbf16, #tpu.memory_space<vmem>>, vector<1x512xbf16>
    %23 = arith.truncf %21 : vector<128x512xf32> to vector<128x512xbf16>
    %24 = vector.broadcast %22 : vector<1x512xbf16> to vector<128x512xbf16>
    %25 = arith.addf %23, %24 : vector<128x512xbf16>
    %cst_15 = arith.constant 3.000000e+00 : bf16
    %26 = vector.broadcast %cst_15 : bf16 to vector<128x512xbf16>
    %27 = arith.addf %25, %26 : vector<128x512xbf16>
    %cst_16 = arith.constant 0.000000e+00 : f32
    %cst_17 = arith.constant 6.000000e+00 : f32
    %28 = arith.truncf %cst_16 : f32 to bf16
    %29 = vector.broadcast %28 : bf16 to vector<128x512xbf16>
    %30 = arith.maximumf %29, %27 : vector<128x512xbf16>
    %31 = arith.truncf %cst_17 : f32 to bf16
    %32 = vector.broadcast %31 : bf16 to vector<128x512xbf16>
    %33 = arith.minimumf %32, %30 : vector<128x512xbf16>
    %34 = arith.mulf %25, %33 : vector<128x512xbf16>
    %c0_18 = arith.constant 0 : index
    %c0_19 = arith.constant 0 : index
    %35 = vector.load %arg7[%c0_18, %c0_19] : memref<512x1536xbf16, #tpu.memory_space<vmem>>, vector<512x1536xbf16>
    %cst_20 = arith.constant dense<0.000000e+00> : vector<128x1536xf32>
    %36 = tpu.matmul %34, %35, %cst_20 {dimension_numbers = #tpu.dot_dimension_numbers<[1], [0], [0], [1], [0, 0, 1, 1], [], []>} : vector<128x512xbf16>, vector<512x1536xbf16>, vector<128x1536xf32> -> vector<128x1536xf32>
    %c0_21 = arith.constant 0 : index
    %c0_22 = arith.constant 0 : index
    %37 = vector.load %arg8[%c0_21, %c0_22] : memref<1x1536xbf16, #tpu.memory_space<vmem>>, vector<1x1536xbf16>
    %38 = arith.truncf %36 : vector<128x1536xf32> to vector<128x1536xbf16>
    %39 = vector.broadcast %37 : vector<1x1536xbf16> to vector<128x1536xbf16>
    %40 = arith.addf %38, %39 : vector<128x1536xbf16>
    %cst_23 = arith.constant 3.000000e+00 : bf16
    %41 = vector.broadcast %cst_23 : bf16 to vector<128x1536xbf16>
    %42 = arith.addf %40, %41 : vector<128x1536xbf16>
    %cst_24 = arith.constant 0.000000e+00 : f32
    %cst_25 = arith.constant 6.000000e+00 : f32
    %43 = arith.truncf %cst_24 : f32 to bf16
    %44 = vector.broadcast %43 : bf16 to vector<128x1536xbf16>
    %45 = arith.maximumf %44, %42 : vector<128x1536xbf16>
    %46 = arith.truncf %cst_25 : f32 to bf16
    %47 = vector.broadcast %46 : bf16 to vector<128x1536xbf16>
    %48 = arith.minimumf %47, %45 : vector<128x1536xbf16>
    %49 = arith.mulf %40, %48 : vector<128x1536xbf16>
    %c0_26 = arith.constant 0 : index
    %c0_27 = arith.constant 0 : index
    %50 = vector.load %arg15[%c0_26, %c0_27] : memref<8x1536xf32, #tpu.memory_space<vmem>>, vector<8x1536xf32>
    %c0_28 = arith.constant 0 : index
    %c0_29 = arith.constant 0 : index
    %51 = vector.load %arg9[%c0_28, %c0_29] : memref<8x128xbf16, #tpu.memory_space<vmem>>, vector<8x128xbf16>
    %cst_30 = arith.constant dense<0.000000e+00> : vector<8x1536xf32>
    %52 = tpu.matmul %51, %49, %cst_30 {dimension_numbers = #tpu.dot_dimension_numbers<[1], [0], [0], [1], [0, 0, 1, 1], [], []>} : vector<8x128xbf16>, vector<128x1536xbf16>, vector<8x1536xf32> -> vector<8x1536xf32>
    %53 = arith.addf %50, %52 : vector<8x1536xf32>
    %c0_31 = arith.constant 0 : index
    %c0_32 = arith.constant 0 : index
    %54 = vector.load %arg15[%c0_31, %c0_32] : memref<8x1536xf32, #tpu.memory_space<vmem>>, vector<8x1536xf32>
    tpu.vector_store %arg15[%c0_31, %c0_32], %53 {strides = array<i32>} : memref<8x1536xf32, #tpu.memory_space<vmem>>, vector<8x1536xf32>,
    %c0_i32_33 = arith.constant 0 : i32
    %55 = arith.cmpi eq, %arg1, %c0_i32_33 : i32
    %56 = arith.extui %55 : i1 to i32
    %c0_i32_34 = arith.constant 0 : i32
    %57 = arith.cmpi ne, %56, %c0_i32_34 : i32
    scf.if %57 {
      %c0_35 = arith.constant 0 : index
      %c0_36 = arith.constant 0 : index
      %58 = vector.load %arg15[%c0_35, %c0_36] : memref<8x1536xf32, #tpu.memory_space<vmem>>, vector<8x1536xf32>
      %59 = arith.truncf %58 : vector<8x1536xf32> to vector<8x1536xbf16>
      %c0_37 = arith.constant 0 : index
      %c0_38 = arith.constant 0 : index
      %60 = vector.load %arg10[%c0_37, %c0_38] : memref<1536x128xbf16, #tpu.memory_space<vmem>>, vector<1536x128xbf16>
      %cst_39 = arith.constant dense<0.000000e+00> : vector<8x128xf32>
      %61 = tpu.matmul %59, %60, %cst_39 {dimension_numbers = #tpu.dot_dimension_numbers<[1], [0], [0], [1], [0, 0, 1, 1], [], []>} : vector<8x1536xbf16>, vector<1536x128xbf16>, vector<8x128xf32> -> vector<8x128xf32>
      %c0_40 = arith.constant 0 : index
      %c0_41 = arith.constant 0 : index
      %62 = vector.load %arg11[%c0_40, %c0_41] : memref<1x128xf32, #tpu.memory_space<vmem>>, vector<1x128xf32>
      %63 = vector.broadcast %62 : vector<1x128xf32> to vector<8x128xf32>
      %64 = arith.addf %61, %63 : vector<8x128xf32>
      %cst_42 = arith.constant 3.000000e+00 : f32
      %65 = vector.broadcast %cst_42 : f32 to vector<8x128xf32>
      %66 = arith.addf %64, %65 : vector<8x128xf32>
      %cst_43 = arith.constant 0.000000e+00 : f32
      %cst_44 = arith.constant 6.000000e+00 : f32
      %67 = vector.broadcast %cst_43 : f32 to vector<8x128xf32>
      %68 = arith.maximumf %67, %66 : vector<8x128xf32>
      %69 = vector.broadcast %cst_44 : f32 to vector<8x128xf32>
      %70 = arith.minimumf %69, %68 : vector<8x128xf32>
      %71 = arith.mulf %64, %70 : vector<8x128xf32>
      %72 = arith.truncf %71 : vector<8x128xf32> to vector<8x128xbf16>
      %c0_45 = arith.constant 0 : index
      %c0_46 = arith.constant 0 : index
      %73 = vector.load %arg12[%c0_45, %c0_46] : memref<128x128xbf16, #tpu.memory_space<vmem>>, vector<128x128xbf16>
      %cst_47 = arith.constant dense<0.000000e+00> : vector<8x128xf32>
      %74 = tpu.matmul %72, %73, %cst_47 {dimension_numbers = #tpu.dot_dimension_numbers<[1], [0], [0], [1], [0, 0, 1, 1], [], []>} : vector<8x128xbf16>, vector<128x128xbf16>, vector<8x128xf32> -> vector<8x128xf32>
      %c0_48 = arith.constant 0 : index
      %c0_49 = arith.constant 0 : index
      %75 = vector.load %arg13[%c0_48, %c0_49] : memref<1x128xf32, #tpu.memory_space<vmem>>, vector<1x128xf32>
      %76 = vector.broadcast %75 : vector<1x128xf32> to vector<8x128xf32>
      %77 = arith.addf %74, %76 : vector<8x128xf32>
      %c0_50 = arith.constant 0 : index
      %c0_51 = arith.constant 0 : index
      %78 = vector.load %arg14[%c0_50, %c0_51] : memref<8x128xf32, #tpu.memory_space<vmem>>, vector<8x128xf32>
      tpu.vector_store %arg14[%c0_50, %c0_51], %77 {strides = array<i32>} : memref<8x128xf32, #tpu.memory_space<vmem>>, vector<8x128xf32>,
    } else {
    }
    return
  }
  func.func @transform_0(%arg0: i32, %arg1: i32) -> (i32, i32, i32) {
    %c0_i32 = arith.constant 0 : i32
    %c0_i32_0 = arith.constant 0 : i32
    return %arg0, %arg1, %c0_i32 : i32, i32, i32
  }
  func.func @transform_1(%arg0: i32, %arg1: i32) -> (i32, i32) {
    %c0_i32 = arith.constant 0 : i32
    %c0_i32_0 = arith.constant 0 : i32
    %c0_i32_1 = arith.constant 0 : i32
    return %c0_i32, %c0_i32_0 : i32, i32
  }
  func.func @transform_2(%arg0: i32, %arg1: i32) -> (i32, i32) {
    %c0_i32 = arith.constant 0 : i32
    %c0_i32_0 = arith.constant 0 : i32
    %c0_i32_1 = arith.constant 0 : i32
    return %c0_i32, %c0_i32_0 : i32, i32
  }
  func.func @transform_3(%arg0: i32, %arg1: i32) -> (i32, i32) {
    %c0_i32 = arith.constant 0 : i32
    %c0_i32_0 = arith.constant 0 : i32
    %c0_i32_1 = arith.constant 0 : i32
    return %c0_i32, %c0_i32_0 : i32, i32
  }
  func.func @transform_4(%arg0: i32, %arg1: i32) -> (i32, i32) {
    %c0_i32 = arith.constant 0 : i32
    %c0_i32_0 = arith.constant 0 : i32
    %c0_i32_1 = arith.constant 0 : i32
    return %c0_i32, %c0_i32_0 : i32, i32
  }
  func.func @transform_5(%arg0: i32, %arg1: i32) -> (i32, i32) {
    %c0_i32 = arith.constant 0 : i32
    %c0_i32_0 = arith.constant 0 : i32
    %c0_i32_1 = arith.constant 0 : i32
    return %c0_i32, %c0_i32_0 : i32, i32
  }
  func.func @transform_6(%arg0: i32, %arg1: i32) -> (i32, i32) {
    %c0_i32 = arith.constant 0 : i32
    %c0_i32_0 = arith.constant 0 : i32
    %c0_i32_1 = arith.constant 0 : i32
    return %c0_i32, %c0_i32_0 : i32, i32
  }
  func.func @transform_7(%arg0: i32, %arg1: i32) -> (i32, i32) {
    %c0_i32 = arith.constant 0 : i32
    %c0_i32_0 = arith.constant 0 : i32
    %c0_i32_1 = arith.constant 0 : i32
    return %c0_i32, %c0_i32_0 : i32, i32
  }
  func.func @transform_8(%arg0: i32, %arg1: i32) -> (i32, i32) {
    %c0_i32 = arith.constant 0 : i32
    %c0_i32_0 = arith.constant 0 : i32
    %c0_i32_1 = arith.constant 0 : i32
    return %c0_i32, %c0_i32_0 : i32, i32
  }
  func.func @transform_9(%arg0: i32, %arg1: i32) -> (i32, i32) {
    %c0_i32 = arith.constant 0 : i32
    %c0_i32_0 = arith.constant 0 : i32
    %c0_i32_1 = arith.constant 0 : i32
    return %c0_i32, %c0_i32_0 : i32, i32
  }
  func.func @transform_10(%arg0: i32, %arg1: i32) -> (i32, i32) {
    %c0_i32 = arith.constant 0 : i32
    %c0_i32_0 = arith.constant 0 : i32
    %c0_i32_1 = arith.constant 0 : i32
    return %c0_i32, %c0_i32_0 : i32, i32
  }
  func.func @transform_11(%arg0: i32, %arg1: i32) -> (i32, i32) {
    %c0_i32 = arith.constant 0 : i32
    %c0_i32_0 = arith.constant 0 : i32
    %c0_i32_1 = arith.constant 0 : i32
    return %c0_i32, %c0_i32_0 : i32, i32
  }
  func.func @transform_12(%arg0: i32, %arg1: i32) -> (i32, i32) {
    %c0_i32 = arith.constant 0 : i32
    %c0_i32_0 = arith.constant 0 : i32
    return %arg0, %c0_i32 : i32, i32
  }
}

</mosaic_0001>

<llo_original>
// kernel: mobilenetv3_decoder.1
$region0: #{mobilenetv3_decoder.1}
  #allocation0 [shape = 'u32[]', space=smem, size = 0x4, offset = 0x4, fixed_abs, tag = 'smem constant byte address 0x4 - core index']
  #allocation1 [shape = 'u32[144,128]{1,0:T(1,128)}', space=vmem, size = 0x12000, scoped, tag = 'internal scratch']
  #allocation2 [shape = 'f32[8,1536]{1,0:T(8,128)}', space=vmem, size = 0xc000, scoped, tag = 'scratch operand']
  %s0 = inlined_call_operand.vmem [shape: bf16[8,16,128], index: 0, kind: input, shape index: {}]
  %s1 = inlined_call_operand.vmem [shape: bf16[128,384], index: 1, kind: input, shape index: {}]
  %s2 = inlined_call_operand.vmem [shape: bf16[1,384], index: 2, kind: input, shape index: {}]
  %s3 = inlined_call_operand.vmem [shape: bf16[384,512], index: 3, kind: input, shape index: {}]
  %s4 = inlined_call_operand.vmem [shape: bf16[1,512], index: 4, kind: input, shape index: {}]
  %s5 = inlined_call_operand.vmem [shape: bf16[512,1536], index: 5, kind: input, shape index: {}]
  %s6 = inlined_call_operand.vmem [shape: bf16[1,1536], index: 6, kind: input, shape index: {}]
  %s7 = inlined_call_operand.vmem [shape: bf16[8,128], index: 7, kind: input, shape index: {}]
  %s8 = inlined_call_operand.vmem [shape: bf16[1536,128], index: 8, kind: input, shape index: {}]
  %s9 = inlined_call_operand.vmem [shape: f32[1,128], index: 9, kind: input, shape index: {}]
  %s10 = inlined_call_operand.vmem [shape: bf16[128,128], index: 10, kind: input, shape index: {}]
  %s11 = inlined_call_operand.vmem [shape: f32[1,128], index: 11, kind: input, shape index: {}]
  %s12 = inlined_call_operand.vmem [shape: f32[8,128], index: 12, kind: output, shape index: {}]
  %s13 = sld [smem:[#allocation0]]
  $region66: #{mobilenetv3_decoder.1} parent=0
    _
  %s15 = ssub.s32 1, %s13
  %s16 = scalar_select 0, %s15, %s13
  // Predicated region
  $region2: #{mobilenetv3_decoder.1} parent=0 // pred_check
    _
  $region3: #{mobilenetv3_decoder.1} parent=0 // pred_check_branch
    %18 = sbr.rel (0) target = $region5
  $region4: #{mobilenetv3_decoder.1} parent=0 // pred_region
    _
  $region5: #{mobilenetv3_decoder.1} parent=0 // pred_fallthru
    _
  // Predicated region
  $region6: #{mobilenetv3_decoder.1} parent=0 // pred_check
    _
  $region7: #{mobilenetv3_decoder.1} parent=0 // pred_check_branch
    %20 = sbr.rel (0) target = $region9
  $region8: #{mobilenetv3_decoder.1} parent=0 // pred_region
    _
  $region9: #{mobilenetv3_decoder.1} parent=0 // pred_fallthru
    _
  // Predicated region
  $region10: #{mobilenetv3_decoder.1} parent=0 // pred_check
    _
  $region11: #{mobilenetv3_decoder.1} parent=0 // pred_check_branch
    %22 = sbr.rel (0) target = $region13
  $region12: #{mobilenetv3_decoder.1} parent=0 // pred_region
    _
  $region13: #{mobilenetv3_decoder.1} parent=0 // pred_fallthru
    _
  // Predicated region
  $region14: #{mobilenetv3_decoder.1} parent=0 // pred_check
    _
  $region15: #{mobilenetv3_decoder.1} parent=0 // pred_check_branch
    %24 = sbr.rel (0) target = $region17
  $region16: #{mobilenetv3_decoder.1} parent=0 // pred_region
    _
  $region17: #{mobilenetv3_decoder.1} parent=0 // pred_fallthru
    _
  // Predicated region
  $region18: #{mobilenetv3_decoder.1} parent=0 // pred_check
    _
  $region19: #{mobilenetv3_decoder.1} parent=0 // pred_check_branch
    %26 = sbr.rel (0) target = $region21
  $region20: #{mobilenetv3_decoder.1} parent=0 // pred_region
    _
  $region21: #{mobilenetv3_decoder.1} parent=0 // pred_fallthru
    _
  // Predicated region
  $region22: #{mobilenetv3_decoder.1} parent=0 // pred_check
    _
  $region23: #{mobilenetv3_decoder.1} parent=0 // pred_check_branch
    %28 = sbr.rel (0) target = $region25
  $region24: #{mobilenetv3_decoder.1} parent=0 // pred_region
    _
  $region25: #{mobilenetv3_decoder.1} parent=0 // pred_fallthru
    _
  // Predicated region
  $region26: #{mobilenetv3_decoder.1} parent=0 // pred_check
    _
  $region27: #{mobilenetv3_decoder.1} parent=0 // pred_check_branch
    %30 = sbr.rel (0) target = $region29
  $region28: #{mobilenetv3_decoder.1} parent=0 // pred_region
    _
  $region29: #{mobilenetv3_decoder.1} parent=0 // pred_fallthru
    _
  // Predicated region
  $region30: #{mobilenetv3_decoder.1} parent=0 // pred_check
    _
  $region31: #{mobilenetv3_decoder.1} parent=0 // pred_check_branch
    %32 = sbr.rel (0) target = $region33
  $region32: #{mobilenetv3_decoder.1} parent=0 // pred_region
    _
  $region33: #{mobilenetv3_decoder.1} parent=0 // pred_fallthru
    _
  // Predicated region
  $region34: #{mobilenetv3_decoder.1} parent=0 // pred_check
    _
  $region35: #{mobilenetv3_decoder.1} parent=0 // pred_check_branch
    %34 = sbr.rel (0) target = $region37
  $region36: #{mobilenetv3_decoder.1} parent=0 // pred_region
    _
  $region37: #{mobilenetv3_decoder.1} parent=0 // pred_fallthru
    _
  // Predicated region
  $region38: #{mobilenetv3_decoder.1} parent=0 // pred_check
    _
  $region39: #{mobilenetv3_decoder.1} parent=0 // pred_check_branch
    %36 = sbr.rel (0) target = $region41
  $region40: #{mobilenetv3_decoder.1} parent=0 // pred_region
    _
  $region41: #{mobilenetv3_decoder.1} parent=0 // pred_fallthru
    _
  // Predicated region
  $region42: #{mobilenetv3_decoder.1} parent=0 // pred_check
    _
  $region43: #{mobilenetv3_decoder.1} parent=0 // pred_check_branch
    %38 = sbr.rel (0) target = $region45
  $region44: #{mobilenetv3_decoder.1} parent=0 // pred_region
    _
  $region45: #{mobilenetv3_decoder.1} parent=0 // pred_fallthru
    _
  // Predicated region
  $region46: #{mobilenetv3_decoder.1} parent=0 // pred_check
    _
  $region47: #{mobilenetv3_decoder.1} parent=0 // pred_check_branch
    %40 = sbr.rel (0) target = $region49
  $region48: #{mobilenetv3_decoder.1} parent=0 // pred_region
    _
  $region49: #{mobilenetv3_decoder.1} parent=0 // pred_fallthru
    _
  %p44 = scmp.eq.s32.totalorder 0, 0
  // Predicated region
  $region50: #{mobilenetv3_decoder.1} parent=0 // pred_check
    %p45 = pneg %p44
  $region51: #{mobilenetv3_decoder.1} parent=0 // pred_check_branch
    %47 = sbr.rel (%p45) target = $region53
  $region52: #{mobilenetv3_decoder.1} parent=0 // pred_region
    %48 = vst [vmem:[#allocation2] sm:$0xff] 0.0
    %49 = vst [vmem:[#allocation2 + $0x8] sm:$0xff] 0.0
    %50 = vst [vmem:[#allocation2 + $0x10] sm:$0xff] 0.0
    %51 = vst [vmem:[#allocation2 + $0x18] sm:$0xff] 0.0
    %52 = vst [vmem:[#allocation2 + $0x20] sm:$0xff] 0.0
    %53 = vst [vmem:[#allocation2 + $0x28] sm:$0xff] 0.0
    %54 = vst [vmem:[#allocation2 + $0x30] sm:$0xff] 0.0
    %55 = vst [vmem:[#allocation2 + $0x38] sm:$0xff] 0.0
    %56 = vst [vmem:[#allocation2 + $0x40] sm:$0xff] 0.0
    %57 = vst [vmem:[#allocation2 + $0x48] sm:$0xff] 0.0
    %58 = vst [vmem:[#allocation2 + $0x50] sm:$0xff] 0.0
    %59 = vst [vmem:[#allocation2 + $0x58] sm:$0xff] 0.0
  $region53: #{mobilenetv3_decoder.1} parent=0 // pred_fallthru
    _
  %v60 = vld [vmem:[%s0] sm:$0xf]
  %v61 = vld [vmem:[%s0 + $0x4] sm:$0xf]
  %v62 = vld [vmem:[%s0 + $0x8] sm:$0xf]
  %v63 = vld [vmem:[%s0 + $0xc] sm:$0xf]
  %v64 = vld [vmem:[%s0 + $0x10] sm:$0xf]
  %v65 = vld [vmem:[%s0 + $0x14] sm:$0xf]
  %v66 = vld [vmem:[%s0 + $0x18] sm:$0xf]
  %v67 = vld [vmem:[%s0 + $0x1c] sm:$0xf]
  %v68 = vld [vmem:[%s0 + $0x20] sm:$0xf]
  %v69 = vld [vmem:[%s0 + $0x24] sm:$0xf]
  %v70 = vld [vmem:[%s0 + $0x28] sm:$0xf]
  %v71 = vld [vmem:[%s0 + $0x2c] sm:$0xf]
  %v72 = vld [vmem:[%s0 + $0x30] sm:$0xf]
  %v73 = vld [vmem:[%s0 + $0x34] sm:$0xf]
  %v74 = vld [vmem:[%s0 + $0x38] sm:$0xf]
  %v75 = vld [vmem:[%s0 + $0x3c] sm:$0xf]
  %v76 = vld [vmem:[%s1] sm:$0xff]
  %v77 = vld [vmem:[%s1 + $0x8] sm:$0xf]
  %v78 = vld [vmem:[%s1 + $0xc] sm:$0xff]
  %v79 = vld [vmem:[%s1 + $0x14] sm:$0xf]
  %v80 = vld [vmem:[%s1 + $0x18] sm:$0xff]
  %v81 = vld [vmem:[%s1 + $0x20] sm:$0xf]
  %v82 = vld [vmem:[%s1 + $0x24] sm:$0xff]
  %v83 = vld [vmem:[%s1 + $0x2c] sm:$0xf]
  %v84 = vld [vmem:[%s1 + $0x30] sm:$0xff]
  %v85 = vld [vmem:[%s1 + $0x38] sm:$0xf]
  %v86 = vld [vmem:[%s1 + $0x3c] sm:$0xff]
  %v87 = vld [vmem:[%s1 + $0x44] sm:$0xf]
  %v88 = vld [vmem:[%s1 + $0x48] sm:$0xff]
  %v89 = vld [vmem:[%s1 + $0x50] sm:$0xf]
  %v90 = vld [vmem:[%s1 + $0x54] sm:$0xff]
  %v91 = vld [vmem:[%s1 + $0x5c] sm:$0xf]
  %v92 = vld [vmem:[%s1 + $0x60] sm:$0xff]
  %v93 = vld [vmem:[%s1 + $0x68] sm:$0xf]
  %v94 = vld [vmem:[%s1 + $0x6c] sm:$0xff]
  %v95 = vld [vmem:[%s1 + $0x74] sm:$0xf]
  %v96 = vld [vmem:[%s1 + $0x78] sm:$0xff]
  %v97 = vld [vmem:[%s1 + $0x80] sm:$0xf]
  %v98 = vld [vmem:[%s1 + $0x84] sm:$0xff]
  %v99 = vld [vmem:[%s1 + $0x8c] sm:$0xf]
  %v100 = vld [vmem:[%s1 + $0x90] sm:$0xff]
  %v101 = vld [vmem:[%s1 + $0x98] sm:$0xf]
  %v102 = vld [vmem:[%s1 + $0x9c] sm:$0xff]
  %v103 = vld [vmem:[%s1 + $0xa4] sm:$0xf]
  %v104 = vld [vmem:[%s1 + $0xa8] sm:$0xff]
  %v105 = vld [vmem:[%s1 + $0xb0] sm:$0xf]
  %v106 = vld [vmem:[%s1 + $0xb4] sm:$0xff]
  %v107 = vld [vmem:[%s1 + $0xbc] sm:$0xf]
  %v124 = vunpack.c.l.b16 %v60
  %v125 = vunpack.c.l.b16 %v61
  %v126 = vunpack.c.l.b16 %v62
  %v127 = vunpack.c.l.b16 %v63
  %v128 = vunpack.c.l.b16 %v64
  %v129 = vunpack.c.l.b16 %v65
  %v130 = vunpack.c.l.b16 %v66
  %v131 = vunpack.c.l.b16 %v67
  %v132 = vunpack.c.l.b16 %v68
  %v133 = vunpack.c.l.b16 %v69
  %v134 = vunpack.c.l.b16 %v70
  %v135 = vunpack.c.l.b16 %v71
  %v136 = vunpack.c.l.b16 %v72
  %v137 = vunpack.c.l.b16 %v73
  %v138 = vunpack.c.l.b16 %v74
  %v139 = vunpack.c.l.b16 %v75
  %v140 = vpack.c.b16 %v125, %v124
  %v141 = vpack.c.b16 %v127, %v126
  %v142 = vpack.c.b16 %v129, %v128
  %v143 = vpack.c.b16 %v131, %v130
  %v144 = vpack.c.b16 %v133, %v132
  %v145 = vpack.c.b16 %v135, %v134
  %v146 = vpack.c.b16 %v137, %v136
  %v147 = vpack.c.b16 %v139, %v138
  %v188 = vunpack.c.l.b16 %v76
  %v189 = vunpack.c.h.b16 %v76
  %v190 = vunpack.c.l.b16 %v77
  %v191 = vunpack.c.l.b16 %v78
  %v192 = vunpack.c.h.b16 %v78
  %v193 = vunpack.c.l.b16 %v79
  %v194 = vunpack.c.l.b16 %v80
  %v195 = vunpack.c.h.b16 %v80
  %v196 = vunpack.c.l.b16 %v81
  %v197 = vunpack.c.l.b16 %v82
  %v198 = vunpack.c.h.b16 %v82
  %v199 = vunpack.c.l.b16 %v83
  %v200 = vunpack.c.l.b16 %v84
  %v201 = vunpack.c.h.b16 %v84
  %v202 = vunpack.c.l.b16 %v85
  %v203 = vunpack.c.l.b16 %v86
  %v204 = vunpack.c.h.b16 %v86
  %v205 = vunpack.c.l.b16 %v87
  %v206 = vunpack.c.l.b16 %v88
  %v207 = vunpack.c.h.b16 %v88
  %v208 = vunpack.c.l.b16 %v89
  %v209 = vunpack.c.l.b16 %v90
  %v210 = vunpack.c.h.b16 %v90
  %v211 = vunpack.c.l.b16 %v91
  %v212 = vunpack.c.l.b16 %v92
  %v213 = vunpack.c.h.b16 %v92
  %v214 = vunpack.c.l.b16 %v93
  %v215 = vunpack.c.l.b16 %v94
  %v216 = vunpack.c.h.b16 %v94
  %v217 = vunpack.c.l.b16 %v95
  %v218 = vunpack.c.l.b16 %v96
  %v219 = vunpack.c.h.b16 %v96
  %v220 = vunpack.c.l.b16 %v97
  %v221 = vunpack.c.l.b16 %v98
  %v222 = vunpack.c.h.b16 %v98
  %v223 = vunpack.c.l.b16 %v99
  %v224 = vunpack.c.l.b16 %v100
  %v225 = vunpack.c.h.b16 %v100
  %v226 = vunpack.c.l.b16 %v101
  %v227 = vunpack.c.l.b16 %v102
  %v228 = vunpack.c.h.b16 %v102
  %v229 = vunpack.c.l.b16 %v103
  %v230 = vunpack.c.l.b16 %v104
  %v231 = vunpack.c.h.b16 %v104
  %v232 = vunpack.c.l.b16 %v105
  %v233 = vunpack.c.l.b16 %v106
  %v234 = vunpack.c.h.b16 %v106
  %v235 = vunpack.c.l.b16 %v107
  %v236 = vpack.c.b16 %v191, %v188
  %v237 = vpack.c.b16 %v192, %v189
  %v238 = vpack.c.b16 %v193, %v190
  %v239 = vpack.c.b16 %v197, %v194
  %v240 = vpack.c.b16 %v198, %v195
  %v241 = vpack.c.b16 %v199, %v196
  %v242 = vpack.c.b16 %v203, %v200
  %v243 = vpack.c.b16 %v204, %v201
  %v244 = vpack.c.b16 %v205, %v202
  %v245 = vpack.c.b16 %v209, %v206
  %v246 = vpack.c.b16 %v210, %v207
  %v247 = vpack.c.b16 %v211, %v208
  %v248 = vpack.c.b16 %v215, %v212
  %v249 = vpack.c.b16 %v216, %v213
  %v250 = vpack.c.b16 %v217, %v214
  %v251 = vpack.c.b16 %v221, %v218
  %v252 = vpack.c.b16 %v222, %v219
  %v253 = vpack.c.b16 %v223, %v220
  %v254 = vpack.c.b16 %v227, %v224
  %v255 = vpack.c.b16 %v228, %v225
  %v256 = vpack.c.b16 %v229, %v226
  %v257 = vpack.c.b16 %v233, %v230
  %v258 = vpack.c.b16 %v234, %v231
  %v259 = vpack.c.b16 %v235, %v232
  %284 = vmatprep.subr.bf16.mxu0 %v258
  %285 = vmatpush1.bf16.msra.mxu0 %v257
  %286 = vmatprep.subr.bf16.mxu0 %v255
  %287 = vmatpush1.bf16.msra.mxu0 %v254
  %288 = vmatprep.subr.bf16.mxu0 %v252
  %289 = vmatpush1.bf16.msra.mxu0 %v251
  %290 = vmatprep.subr.bf16.mxu0 %v249
  %291 = vmatpush1.bf16.msra.mxu0 %v248
  %292 = vmatprep.subr.bf16.mxu0 %v246
  %293 = vmatpush1.bf16.msra.mxu0 %v245
  %294 = vmatprep.subr.bf16.mxu0 %v243
  %295 = vmatpush1.bf16.msra.mxu0 %v242
  %296 = vmatprep.subr.bf16.mxu0 %v240
  %297 = vmatpush1.bf16.msra.mxu0 %v239
  %298 = vmatprep.subr.bf16.mxu0 %v237
  %299 = vmatpush1.bf16.msra.mxu0 %v236
  %300 = vmatprep.subr.bf16.mxu0 0
  %301 = vmatpush2.bf16.msra.mxu0 0
  %302 = vmatprep.subr.bf16.mxu0 0
  %303 = vmatpush2.bf16.msra.mxu0 0
  %304 = vmatprep.subr.bf16.mxu0 0
  %305 = vmatpush2.bf16.msra.mxu0 0
  %306 = vmatprep.subr.bf16.mxu0 0
  %307 = vmatpush2.bf16.msra.mxu0 0
  %308 = vmatprep.subr.bf16.mxu0 0
  %309 = vmatpush2.bf16.msra.mxu0 0
  %310 = vmatprep.subr.bf16.mxu0 0
  %311 = vmatpush2.bf16.msra.mxu0 0
  %312 = vmatprep.subr.bf16.mxu0 0
  %313 = vmatpush2.bf16.msra.mxu0 0
  %314 = vmatprep.subr.bf16.mxu0 0
  %315 = vmatpush2.bf16.msra.mxu0 0
  %316 = vmatprep.mubr.bf16.mxu0 0
  %317 = vmatmul.mubr.bf16.gmra.mxu0 %v140
  %v318 = vpop.f32.mrf.mxu0
  %v319 = vadd.f32 0.0, %v318
  %v320 = vpop.f32.mrf.mxu0
  %v321 = vadd.f32 0.0, %v320
  %v322 = vpop.f32.mrf.mxu0
  %v323 = vadd.f32 0.0, %v322
  %v324 = vpop.f32.mrf.mxu0
  %v325 = vadd.f32 0.0, %v324
  %326 = vmatprep.mubr.bf16.mxu0 0
  %327 = vmatmul.mubr.bf16.gmra.mxu0 %v141
  %v328 = vpop.f32.mrf.mxu0
  %v329 = vadd.f32 0.0, %v328
  %v330 = vpop.f32.mrf.mxu0
  %v331 = vadd.f32 0.0, %v330
  %v332 = vpop.f32.mrf.mxu0
  %v333 = vadd.f32 0.0, %v332
  %v334 = vpop.f32.mrf.mxu0
  %v335 = vadd.f32 0.0, %v334
  %336 = vmatprep.mubr.bf16.mxu0 0
  %337 = vmatmul.mubr.bf16.gmra.mxu0 %v142
  %v338 = vpop.f32.mrf.mxu0
  %v339 = vadd.f32 0.0, %v338
  %v340 = vpop.f32.mrf.mxu0
  %v341 = vadd.f32 0.0, %v340
  %v342 = vpop.f32.mrf.mxu0
  %v343 = vadd.f32 0.0, %v342
  %v344 = vpop.f32.mrf.mxu0
  %v345 = vadd.f32 0.0, %v344
  %346 = vmatprep.mubr.bf16.mxu0 0
  %347 = vmatmul.mubr.bf16.gmra.mxu0 %v143
  %v348 = vpop.f32.mrf.mxu0
  %v349 = vadd.f32 0.0, %v348
  %v350 = vpop.f32.mrf.mxu0
  %v351 = vadd.f32 0.0, %v350
  %v352 = vpop.f32.mrf.mxu0
  %v353 = vadd.f32 0.0, %v352
  %v354 = vpop.f32.mrf.mxu0
  %v355 = vadd.f32 0.0, %v354
  %356 = vmatprep.mubr.bf16.mxu0 0
  %357 = vmatmul.mubr.bf16.gmra.mxu0 %v144
  %v358 = vpop.f32.mrf.mxu0
  %v359 = vadd.f32 0.0, %v358
  %v360 = vpop.f32.mrf.mxu0
  %v361 = vadd.f32 0.0, %v360
  %v362 = vpop.f32.mrf.mxu0
  %v363 = vadd.f32 0.0, %v362
  %v364 = vpop.f32.mrf.mxu0
  %v365 = vadd.f32 0.0, %v364
  %366 = vmatprep.mubr.bf16.mxu0 0
  %367 = vmatmul.mubr.bf16.gmra.mxu0 %v145
  %v368 = vpop.f32.mrf.mxu0
  %v369 = vadd.f32 0.0, %v368
  %v370 = vpop.f32.mrf.mxu0
  %v371 = vadd.f32 0.0, %v370
  %v372 = vpop.f32.mrf.mxu0
  %v373 = vadd.f32 0.0, %v372
  %v374 = vpop.f32.mrf.mxu0
  %v375 = vadd.f32 0.0, %v374
  %376 = vmatprep.mubr.bf16.mxu0 0
  %377 = vmatmul.mubr.bf16.gmra.mxu0 %v146
  %v378 = vpop.f32.mrf.mxu0
  %v379 = vadd.f32 0.0, %v378
  %v380 = vpop.f32.mrf.mxu0
  %v381 = vadd.f32 0.0, %v380
  %v382 = vpop.f32.mrf.mxu0
  %v383 = vadd.f32 0.0, %v382
  %v384 = vpop.f32.mrf.mxu0
  %v385 = vadd.f32 0.0, %v384
  %386 = vmatprep.mubr.bf16.mxu0 0
  %387 = vmatmul.mubr.bf16.gmra.mxu0 %v147
  %v388 = vpop.f32.mrf.mxu0
  %v389 = vadd.f32 0.0, %v388
  %v390 = vpop.f32.mrf.mxu0
  %v391 = vadd.f32 0.0, %v390
  %v392 = vpop.f32.mrf.mxu0
  %v393 = vadd.f32 0.0, %v392
  %v394 = vpop.f32.mrf.mxu0
  %v395 = vadd.f32 0.0, %v394
  %396 = vdwg.mxu0
  %397 = vmatprep.subr.bf16.mxu0 0
  %398 = vmatpush1.bf16.msra.mxu0 %v259
  %399 = vmatprep.subr.bf16.mxu0 0
  %400 = vmatpush1.bf16.msra.mxu0 %v256
  %401 = vmatprep.subr.bf16.mxu0 0
  %402 = vmatpush1.bf16.msra.mxu0 %v253
  %403 = vmatprep.subr.bf16.mxu0 0
  %404 = vmatpush1.bf16.msra.mxu0 %v250
  %405 = vmatprep.subr.bf16.mxu0 0
  %406 = vmatpush1.bf16.msra.mxu0 %v247
  %407 = vmatprep.subr.bf16.mxu0 0
  %408 = vmatpush1.bf16.msra.mxu0 %v244
  %409 = vmatprep.subr.bf16.mxu0 0
  %410 = vmatpush1.bf16.msra.mxu0 %v241
  %411 = vmatprep.subr.bf16.mxu0 0
  %412 = vmatpush1.bf16.msra.mxu0 %v238
  %413 = vmatprep.subr.bf16.mxu0 0
  %414 = vmatpush2.bf16.msra.mxu0 0
  %415 = vmatprep.subr.bf16.mxu0 0
  %416 = vmatpush2.bf16.msra.mxu0 0
  %417 = vmatprep.subr.bf16.mxu0 0
  %418 = vmatpush2.bf16.msra.mxu0 0
  %419 = vmatprep.subr.bf16.mxu0 0
  %420 = vmatpush2.bf16.msra.mxu0 0
  %421 = vmatprep.subr.bf16.mxu0 0
  %422 = vmatpush2.bf16.msra.mxu0 0
  %423 = vmatprep.subr.bf16.mxu0 0
  %424 = vmatpush2.bf16.msra.mxu0 0
  %425 = vmatprep.subr.bf16.mxu0 0
  %426 = vmatpush2.bf16.msra.mxu0 0
  %427 = vmatprep.subr.bf16.mxu0 0
  %428 = vmatpush2.bf16.msra.mxu0 0
  %429 = vmatprep.mubr.bf16.mxu0 0
  %430 = vmatmul.mubr.bf16.gmra.mxu0 %v140
  %v431 = vpop.f32.mrf.mxu0
  %v432 = vadd.f32 0.0, %v431
  %v433 = vpop.f32.mrf.mxu0
  %v434 = vpop.f32.mrf.mxu0
  %v435 = vadd.f32 0.0, %v434
  %v436 = vpop.f32.mrf.mxu0
  %437 = vmatprep.mubr.bf16.mxu0 0
  %438 = vmatmul.mubr.bf16.gmra.mxu0 %v141
  %v439 = vpop.f32.mrf.mxu0
  %v440 = vadd.f32 0.0, %v439
  %v441 = vpop.f32.mrf.mxu0
  %v442 = vpop.f32.mrf.mxu0
  %v443 = vadd.f32 0.0, %v442
  %v444 = vpop.f32.mrf.mxu0
  %445 = vmatprep.mubr.bf16.mxu0 0
  %446 = vmatmul.mubr.bf16.gmra.mxu0 %v142
  %v447 = vpop.f32.mrf.mxu0
  %v448 = vadd.f32 0.0, %v447
  %v449 = vpop.f32.mrf.mxu0
  %v450 = vpop.f32.mrf.mxu0
  %v451 = vadd.f32 0.0, %v450
  %v452 = vpop.f32.mrf.mxu0
  %453 = vmatprep.mubr.bf16.mxu0 0
  %454 = vmatmul.mubr.bf16.gmra.mxu0 %v143
  %v455 = vpop.f32.mrf.mxu0
  %v456 = vadd.f32 0.0, %v455
  %v457 = vpop.f32.mrf.mxu0
  %v458 = vpop.f32.mrf.mxu0
  %v459 = vadd.f32 0.0, %v458
  %v460 = vpop.f32.mrf.mxu0
  %461 = vmatprep.mubr.bf16.mxu0 0
  %462 = vmatmul.mubr.bf16.gmra.mxu0 %v144
  %v463 = vpop.f32.mrf.mxu0
  %v464 = vadd.f32 0.0, %v463
  %v465 = vpop.f32.mrf.mxu0
  %v466 = vpop.f32.mrf.mxu0
  %v467 = vadd.f32 0.0, %v466
  %v468 = vpop.f32.mrf.mxu0
  %469 = vmatprep.mubr.bf16.mxu0 0
  %470 = vmatmul.mubr.bf16.gmra.mxu0 %v145
  %v471 = vpop.f32.mrf.mxu0
  %v472 = vadd.f32 0.0, %v471
  %v473 = vpop.f32.mrf.mxu0
  %v474 = vpop.f32.mrf.mxu0
  %v475 = vadd.f32 0.0, %v474
  %v476 = vpop.f32.mrf.mxu0
  %477 = vmatprep.mubr.bf16.mxu0 0
  %478 = vmatmul.mubr.bf16.gmra.mxu0 %v146
  %v479 = vpop.f32.mrf.mxu0
  %v480 = vadd.f32 0.0, %v479
  %v481 = vpop.f32.mrf.mxu0
  %v482 = vpop.f32.mrf.mxu0
  %v483 = vadd.f32 0.0, %v482
  %v484 = vpop.f32.mrf.mxu0
  %485 = vmatprep.mubr.bf16.mxu0 0
  %486 = vmatmul.mubr.bf16.gmra.mxu0 %v147
  %v487 = vpop.f32.mrf.mxu0
  %v488 = vadd.f32 0.0, %v487
  %v489 = vpop.f32.mrf.mxu0
  %v490 = vpop.f32.mrf.mxu0
  %v491 = vadd.f32 0.0, %v490
  %v492 = vpop.f32.mrf.mxu0
  %493 = vdwg.mxu0
  %v494 = vld [vmem:[%s2] sm:$0x7]
  %v495 = vpack.c.bf16 %v323, %v319
  %v496 = vpack.c.bf16 %v325, %v321
  %v497 = vpack.c.bf16 %v435, %v432
  %v498 = vpack.c.bf16 %v333, %v329
  %v499 = vpack.c.bf16 %v335, %v331
  %v500 = vpack.c.bf16 %v443, %v440
  %v501 = vpack.c.bf16 %v343, %v339
  %v502 = vpack.c.bf16 %v345, %v341
  %v503 = vpack.c.bf16 %v451, %v448
  %v504 = vpack.c.bf16 %v353, %v349
  %v505 = vpack.c.bf16 %v355, %v351
  %v506 = vpack.c.bf16 %v459, %v456
  %v507 = vpack.c.bf16 %v363, %v359
  %v508 = vpack.c.bf16 %v365, %v361
  %v509 = vpack.c.bf16 %v467, %v464
  %v510 = vpack.c.bf16 %v373, %v369
  %v511 = vpack.c.bf16 %v375, %v371
  %v512 = vpack.c.bf16 %v475, %v472
  %v513 = vpack.c.bf16 %v383, %v379
  %v514 = vpack.c.bf16 %v385, %v381
  %v515 = vpack.c.bf16 %v483, %v480
  %v516 = vpack.c.bf16 %v393, %v389
  %v517 = vpack.c.bf16 %v395, %v391
  %v518 = vpack.c.bf16 %v491, %v488
  %v521 = vunpack.c.l.s4 1966171168
  %v522 = vunpack.c.0.s8 %v521
  %v523 = vlaneseq
  %v524 = vshrl.u32 %v523, 7
  %v525 = vsub.s32 %v522, %v524
  %v526 = vrot.slane %v494, %v525
  %v527 = vcombine.high %v526, %v526
  %v529 = vunpack.c.l.s4 1966171168
  %v530 = vunpack.c.0.s8 %v529
  %v531 = vlaneseq
  %v532 = vshrl.u32 %v531, 7
  %v533 = vsub.s32 %v530, %v532
  %v534 = vrot.slane %v526, %v533
  %v536 = vunpack.c.l.s4 1966171168
  %v537 = vunpack.c.0.s8 %v536
  %v538 = vlaneseq
  %v539 = vshrl.u32 %v538, 7
  %v540 = vsub.s32 %v537, %v539
  %v541 = vrot.slane %v527, %v540
  %v542 = vcombine.high %v534, %v534
  %v544 = vpack.i.b16 %v534, %v534
  %v546 = vlaneseq
  %v547 = vshrl.u32 %v546, 7
  %v548 = vsub.s32 0, %v547
  %v549 = vrot.slane %v544, %v548
  %v551 = vpack.i.b16 %v541, %v541
  %v553 = vlaneseq
  %v554 = vshrl.u32 %v553, 7
  %v555 = vsub.s32 0, %v554
  %v556 = vrot.slane %v551, %v555
  %v558 = vpack.i.b16 %v542, %v542
  %v560 = vlaneseq
  %v561 = vshrl.u32 %v560, 7
  %v562 = vsub.s32 0, %v561
  %v563 = vrot.slane %v558, %v562
  %v564 = vadd.bf16 %v495, %v549
  %v565 = vadd.bf16 %v496, %v556
  %v566 = vadd.bf16 %v497, %v563
  %v567 = vadd.bf16 %v498, %v549
  %v568 = vadd.bf16 %v499, %v556
  %v569 = vadd.bf16 %v500, %v563
  %v570 = vadd.bf16 %v501, %v549
  %v571 = vadd.bf16 %v502, %v556
  %v572 = vadd.bf16 %v503, %v563
  %v573 = vadd.bf16 %v504, %v549
  %v574 = vadd.bf16 %v505, %v556
  %v575 = vadd.bf16 %v506, %v563
  %v576 = vadd.bf16 %v507, %v549
  %v577 = vadd.bf16 %v508, %v556
  %v578 = vadd.bf16 %v509, %v563
  %v579 = vadd.bf16 %v510, %v549
  %v580 = vadd.bf16 %v511, %v556
  %v581 = vadd.bf16 %v512, %v563
  %v582 = vadd.bf16 %v513, %v549
  %v583 = vadd.bf16 %v514, %v556
  %v584 = vadd.bf16 %v515, %v563
  %v585 = vadd.bf16 %v516, %v549
  %v586 = vadd.bf16 %v517, %v556
  %v587 = vadd.bf16 %v518, %v563
  %v588 = vadd.bf16 %v564, 1077952576
  %v589 = vadd.bf16 %v565, 1077952576
  %v590 = vadd.bf16 %v566, 1077952576
  %v591 = vadd.bf16 %v567, 1077952576
  %v592 = vadd.bf16 %v568, 1077952576
  %v593 = vadd.bf16 %v569, 1077952576
  %v594 = vadd.bf16 %v570, 1077952576
  %v595 = vadd.bf16 %v571, 1077952576
  %v596 = vadd.bf16 %v572, 1077952576
  %v597 = vadd.bf16 %v573, 1077952576
  %v598 = vadd.bf16 %v574, 1077952576
  %v599 = vadd.bf16 %v575, 1077952576
  %v600 = vadd.bf16 %v576, 1077952576
  %v601 = vadd.bf16 %v577, 1077952576
  %v602 = vadd.bf16 %v578, 1077952576
  %v603 = vadd.bf16 %v579, 1077952576
  %v604 = vadd.bf16 %v580, 1077952576
  %v605 = vadd.bf16 %v581, 1077952576
  %v606 = vadd.bf16 %v582, 1077952576
  %v607 = vadd.bf16 %v583, 1077952576
  %v608 = vadd.bf16 %v584, 1077952576
  %v609 = vadd.bf16 %v585, 1077952576
  %v610 = vadd.bf16 %v586, 1077952576
  %v611 = vadd.bf16 %v587, 1077952576
  %v612 = vmax.bf16 %v588, 0
  %v613 = vmax.bf16 %v589, 0
  %v614 = vmax.bf16 %v590, 0
  %v615 = vmax.bf16 %v591, 0
  %v616 = vmax.bf16 %v592, 0
  %v617 = vmax.bf16 %v593, 0
  %v618 = vmax.bf16 %v594, 0
  %v619 = vmax.bf16 %v595, 0
  %v620 = vmax.bf16 %v596, 0
  %v621 = vmax.bf16 %v597, 0
  %v622 = vmax.bf16 %v598, 0
  %v623 = vmax.bf16 %v599, 0
  %v624 = vmax.bf16 %v600, 0
  %v625 = vmax.bf16 %v601, 0
  %v626 = vmax.bf16 %v602, 0
  %v627 = vmax.bf16 %v603, 0
  %v628 = vmax.bf16 %v604, 0
  %v629 = vmax.bf16 %v605, 0
  %v630 = vmax.bf16 %v606, 0
  %v631 = vmax.bf16 %v607, 0
  %v632 = vmax.bf16 %v608, 0
  %v633 = vmax.bf16 %v609, 0
  %v634 = vmax.bf16 %v610, 0
  %v635 = vmax.bf16 %v611, 0
  %v636 = vmin.bf16 %v612, 1086341312
  %v637 = vmin.bf16 %v613, 1086341312
  %v638 = vmin.bf16 %v614, 1086341312
  %v639 = vmin.bf16 %v615, 1086341312
  %v640 = vmin.bf16 %v616, 1086341312
  %v641 = vmin.bf16 %v617, 1086341312
  %v642 = vmin.bf16 %v618, 1086341312
  %v643 = vmin.bf16 %v619, 1086341312
  %v644 = vmin.bf16 %v620, 1086341312
  %v645 = vmin.bf16 %v621, 1086341312
  %v646 = vmin.bf16 %v622, 1086341312
  %v647 = vmin.bf16 %v623, 1086341312
  %v648 = vmin.bf16 %v624, 1086341312
  %v649 = vmin.bf16 %v625, 1086341312
  %v650 = vmin.bf16 %v626, 1086341312
  %v651 = vmin.bf16 %v627, 1086341312
  %v652 = vmin.bf16 %v628, 1086341312
  %v653 = vmin.bf16 %v629, 1086341312
  %v654 = vmin.bf16 %v630, 1086341312
  %v655 = vmin.bf16 %v631, 1086341312
  %v656 = vmin.bf16 %v632, 1086341312
  %v657 = vmin.bf16 %v633, 1086341312
  %v658 = vmin.bf16 %v634, 1086341312
  %v659 = vmin.bf16 %v635, 1086341312
  %v660 = vmul.bf16 %v564, %v636
  %v661 = vmul.bf16 %v565, %v637
  %v662 = vmul.bf16 %v566, %v638
  %v663 = vmul.bf16 %v567, %v639
  %v664 = vmul.bf16 %v568, %v640
  %v665 = vmul.bf16 %v569, %v641
  %v666 = vmul.bf16 %v570, %v642
  %v667 = vmul.bf16 %v571, %v643
  %v668 = vmul.bf16 %v572, %v644
  %v669 = vmul.bf16 %v573, %v645
  %v670 = vmul.bf16 %v574, %v646
  %v671 = vmul.bf16 %v575, %v647
  %v672 = vmul.bf16 %v576, %v648
  %v673 = vmul.bf16 %v577, %v649
  %v674 = vmul.bf16 %v578, %v650
  %v675 = vmul.bf16 %v579, %v651
  %v676 = vmul.bf16 %v580, %v652
  %v677 = vmul.bf16 %v581, %v653
  %v678 = vmul.bf16 %v582, %v654
  %v679 = vmul.bf16 %v583, %v655
  %v680 = vmul.bf16 %v584, %v656
  %v681 = vmul.bf16 %v585, %v657
  %v682 = vmul.bf16 %v586, %v658
  %v683 = vmul.bf16 %v587, %v659
  %v684 = vld [vmem:[%s3] sm:$0xff]
  %v685 = vld [vmem:[%s3 + $0x8] sm:$0xff]
  %v686 = vld [vmem:[%s3 + $0x10] sm:$0xff]
  %v687 = vld [vmem:[%s3 + $0x18] sm:$0xff]
  %v688 = vld [vmem:[%s3 + $0x20] sm:$0xff]
  %v689 = vld [vmem:[%s3 + $0x28] sm:$0xff]
  %v690 = vld [vmem:[%s3 + $0x30] sm:$0xff]
  %v691 = vld [vmem:[%s3 + $0x38] sm:$0xff]
  %v692 = vld [vmem:[%s3 + $0x40] sm:$0xff]
  %v693 = vld [vmem:[%s3 + $0x48] sm:$0xff]
  %v694 = vld [vmem:[%s3 + $0x50] sm:$0xff]
  %v695 = vld [vmem:[%s3 + $0x58] sm:$0xff]
  %v696 = vld [vmem:[%s3 + $0x60] sm:$0xff]
  %v697 = vld [vmem:[%s3 + $0x68] sm:$0xff]
  %v698 = vld [vmem:[%s3 + $0x70] sm:$0xff]
  %v699 = vld [vmem:[%s3 + $0x78] sm:$0xff]
  %v700 = vld [vmem:[%s3 + $0x80] sm:$0xff]
  %v701 = vld [vmem:[%s3 + $0x88] sm:$0xff]
  %v702 = vld [vmem:[%s3 + $0x90] sm:$0xff]
  %v703 = vld [vmem:[%s3 + $0x98] sm:$0xff]
  %v704 = vld [vmem:[%s3 + $0xa0] sm:$0xff]
  %v705 = vld [vmem:[%s3 + $0xa8] sm:$0xff]
  %v706 = vld [vmem:[%s3 + $0xb0] sm:$0xff]
  %v707 = vld [vmem:[%s3 + $0xb8] sm:$0xff]
  %v708 = vld [vmem:[%s3 + $0xc0] sm:$0xff]
  %v709 = vld [vmem:[%s3 + $0xc8] sm:$0xff]
  %v710 = vld [vmem:[%s3 + $0xd0] sm:$0xff]
  %v711 = vld [vmem:[%s3 + $0xd8] sm:$0xff]
  %v712 = vld [vmem:[%s3 + $0xe0] sm:$0xff]
  %v713 = vld [vmem:[%s3 + $0xe8] sm:$0xff]
  %v714 = vld [vmem:[%s3 + $0xf0] sm:$0xff]
  %v715 = vld [vmem:[%s3 + $0xf8] sm:$0xff]
  %v716 = vld [vmem:[%s3 + $0x100] sm:$0xff]
  %v717 = vld [vmem:[%s3 + $0x108] sm:$0xff]
  %v718 = vld [vmem:[%s3 + $0x110] sm:$0xff]
  %v719 = vld [vmem:[%s3 + $0x118] sm:$0xff]
  %v720 = vld [vmem:[%s3 + $0x120] sm:$0xff]
  %v721 = vld [vmem:[%s3 + $0x128] sm:$0xff]
  %v722 = vld [vmem:[%s3 + $0x130] sm:$0xff]
  %v723 = vld [vmem:[%s3 + $0x138] sm:$0xff]
  %v724 = vld [vmem:[%s3 + $0x140] sm:$0xff]
  %v725 = vld [vmem:[%s3 + $0x148] sm:$0xff]
  %v726 = vld [vmem:[%s3 + $0x150] sm:$0xff]
  %v727 = vld [vmem:[%s3 + $0x158] sm:$0xff]
  %v728 = vld [vmem:[%s3 + $0x160] sm:$0xff]
  %v729 = vld [vmem:[%s3 + $0x168] sm:$0xff]
  %v730 = vld [vmem:[%s3 + $0x170] sm:$0xff]
  %v731 = vld [vmem:[%s3 + $0x178] sm:$0xff]
  %v732 = vld [vmem:[%s3 + $0x180] sm:$0xff]
  %v733 = vld [vmem:[%s3 + $0x188] sm:$0xff]
  %v734 = vld [vmem:[%s3 + $0x190] sm:$0xff]
  %v735 = vld [vmem:[%s3 + $0x198] sm:$0xff]
  %v736 = vld [vmem:[%s3 + $0x1a0] sm:$0xff]
  %v737 = vld [vmem:[%s3 + $0x1a8] sm:$0xff]
  %v738 = vld [vmem:[%s3 + $0x1b0] sm:$0xff]
  %v739 = vld [vmem:[%s3 + $0x1b8] sm:$0xff]
  %v740 = vld [vmem:[%s3 + $0x1c0] sm:$0xff]
  %v741 = vld [vmem:[%s3 + $0x1c8] sm:$0xff]
  %v742 = vld [vmem:[%s3 + $0x1d0] sm:$0xff]
  %v743 = vld [vmem:[%s3 + $0x1d8] sm:$0xff]
  %v744 = vld [vmem:[%s3 + $0x1e0] sm:$0xff]
  %v745 = vld [vmem:[%s3 + $0x1e8] sm:$0xff]
  %v746 = vld [vmem:[%s3 + $0x1f0] sm:$0xff]
  %v747 = vld [vmem:[%s3 + $0x1f8] sm:$0xff]
  %v748 = vld [vmem:[%s3 + $0x200] sm:$0xff]
  %v749 = vld [vmem:[%s3 + $0x208] sm:$0xff]
  %v750 = vld [vmem:[%s3 + $0x210] sm:$0xff]
  %v751 = vld [vmem:[%s3 + $0x218] sm:$0xff]
  %v752 = vld [vmem:[%s3 + $0x220] sm:$0xff]
  %v753 = vld [vmem:[%s3 + $0x228] sm:$0xff]
  %v754 = vld [vmem:[%s3 + $0x230] sm:$0xff]
  %v755 = vld [vmem:[%s3 + $0x238] sm:$0xff]
  %v756 = vld [vmem:[%s3 + $0x240] sm:$0xff]
  %v757 = vld [vmem:[%s3 + $0x248] sm:$0xff]
  %v758 = vld [vmem:[%s3 + $0x250] sm:$0xff]
  %v759 = vld [vmem:[%s3 + $0x258] sm:$0xff]
  %v760 = vld [vmem:[%s3 + $0x260] sm:$0xff]
  %v761 = vld [vmem:[%s3 + $0x268] sm:$0xff]
  %v762 = vld [vmem:[%s3 + $0x270] sm:$0xff]
  %v763 = vld [vmem:[%s3 + $0x278] sm:$0xff]
  %v764 = vld [vmem:[%s3 + $0x280] sm:$0xff]
  %v765 = vld [vmem:[%s3 + $0x288] sm:$0xff]
  %v766 = vld [vmem:[%s3 + $0x290] sm:$0xff]
  %v767 = vld [vmem:[%s3 + $0x298] sm:$0xff]
  %v768 = vld [vmem:[%s3 + $0x2a0] sm:$0xff]
  %v769 = vld [vmem:[%s3 + $0x2a8] sm:$0xff]
  %v770 = vld [vmem:[%s3 + $0x2b0] sm:$0xff]
  %v771 = vld [vmem:[%s3 + $0x2b8] sm:$0xff]
  %v772 = vld [vmem:[%s3 + $0x2c0] sm:$0xff]
  %v773 = vld [vmem:[%s3 + $0x2c8] sm:$0xff]
  %v774 = vld [vmem:[%s3 + $0x2d0] sm:$0xff]
  %v775 = vld [vmem:[%s3 + $0x2d8] sm:$0xff]
  %v776 = vld [vmem:[%s3 + $0x2e0] sm:$0xff]
  %v777 = vld [vmem:[%s3 + $0x2e8] sm:$0xff]
  %v778 = vld [vmem:[%s3 + $0x2f0] sm:$0xff]
  %v779 = vld [vmem:[%s3 + $0x2f8] sm:$0xff]
  %v876 = vunpack.c.l.b16 %v684
  %v877 = vunpack.c.h.b16 %v684
  %v878 = vunpack.c.l.b16 %v685
  %v879 = vunpack.c.h.b16 %v685
  %v880 = vunpack.c.l.b16 %v686
  %v881 = vunpack.c.h.b16 %v686
  %v882 = vunpack.c.l.b16 %v687
  %v883 = vunpack.c.h.b16 %v687
  %v884 = vunpack.c.l.b16 %v688
  %v885 = vunpack.c.h.b16 %v688
  %v886 = vunpack.c.l.b16 %v689
  %v887 = vunpack.c.h.b16 %v689
  %v888 = vunpack.c.l.b16 %v690
  %v889 = vunpack.c.h.b16 %v690
  %v890 = vunpack.c.l.b16 %v691
  %v891 = vunpack.c.h.b16 %v691
  %v892 = vunpack.c.l.b16 %v692
  %v893 = vunpack.c.h.b16 %v692
  %v894 = vunpack.c.l.b16 %v693
  %v895 = vunpack.c.h.b16 %v693
  %v896 = vunpack.c.l.b16 %v694
  %v897 = vunpack.c.h.b16 %v694
  %v898 = vunpack.c.l.b16 %v695
  %v899 = vunpack.c.h.b16 %v695
  %v900 = vunpack.c.l.b16 %v696
  %v901 = vunpack.c.h.b16 %v696
  %v902 = vunpack.c.l.b16 %v697
  %v903 = vunpack.c.h.b16 %v697
  %v904 = vunpack.c.l.b16 %v698
  %v905 = vunpack.c.h.b16 %v698
  %v906 = vunpack.c.l.b16 %v699
  %v907 = vunpack.c.h.b16 %v699
  %v908 = vunpack.c.l.b16 %v700
  %v909 = vunpack.c.h.b16 %v700
  %v910 = vunpack.c.l.b16 %v701
  %v911 = vunpack.c.h.b16 %v701
  %v912 = vunpack.c.l.b16 %v702
  %v913 = vunpack.c.h.b16 %v702
  %v914 = vunpack.c.l.b16 %v703
  %v915 = vunpack.c.h.b16 %v703
  %v916 = vunpack.c.l.b16 %v704
  %v917 = vunpack.c.h.b16 %v704
  %v918 = vunpack.c.l.b16 %v705
  %v919 = vunpack.c.h.b16 %v705
  %v920 = vunpack.c.l.b16 %v706
  %v921 = vunpack.c.h.b16 %v706
  %v922 = vunpack.c.l.b16 %v707
  %v923 = vunpack.c.h.b16 %v707
  %v924 = vunpack.c.l.b16 %v708
  %v925 = vunpack.c.h.b16 %v708
  %v926 = vunpack.c.l.b16 %v709
  %v927 = vunpack.c.h.b16 %v709
  %v928 = vunpack.c.l.b16 %v710
  %v929 = vunpack.c.h.b16 %v710
  %v930 = vunpack.c.l.b16 %v711
  %v931 = vunpack.c.h.b16 %v711
  %v932 = vunpack.c.l.b16 %v712
  %v933 = vunpack.c.h.b16 %v712
  %v934 = vunpack.c.l.b16 %v713
  %v935 = vunpack.c.h.b16 %v713
  %v936 = vunpack.c.l.b16 %v714
  %v937 = vunpack.c.h.b16 %v714
  %v938 = vunpack.c.l.b16 %v715
  %v939 = vunpack.c.h.b16 %v715
  %v940 = vunpack.c.l.b16 %v716
  %v941 = vunpack.c.h.b16 %v716
  %v942 = vunpack.c.l.b16 %v717
  %v943 = vunpack.c.h.b16 %v717
  %v944 = vunpack.c.l.b16 %v718
  %v945 = vunpack.c.h.b16 %v718
  %v946 = vunpack.c.l.b16 %v719
  %v947 = vunpack.c.h.b16 %v719
  %v948 = vunpack.c.l.b16 %v720
  %v949 = vunpack.c.h.b16 %v720
  %v950 = vunpack.c.l.b16 %v721
  %v951 = vunpack.c.h.b16 %v721
  %v952 = vunpack.c.l.b16 %v722
  %v953 = vunpack.c.h.b16 %v722
  %v954 = vunpack.c.l.b16 %v723
  %v955 = vunpack.c.h.b16 %v723
  %v956 = vunpack.c.l.b16 %v724
  %v957 = vunpack.c.h.b16 %v724
  %v958 = vunpack.c.l.b16 %v725
  %v959 = vunpack.c.h.b16 %v725
  %v960 = vunpack.c.l.b16 %v726
  %v961 = vunpack.c.h.b16 %v726
  %v962 = vunpack.c.l.b16 %v727
  %v963 = vunpack.c.h.b16 %v727
  %v964 = vunpack.c.l.b16 %v728
  %v965 = vunpack.c.h.b16 %v728
  %v966 = vunpack.c.l.b16 %v729
  %v967 = vunpack.c.h.b16 %v729
  %v968 = vunpack.c.l.b16 %v730
  %v969 = vunpack.c.h.b16 %v730
  %v970 = vunpack.c.l.b16 %v731
  %v971 = vunpack.c.h.b16 %v731
  %v972 = vunpack.c.l.b16 %v732
  %v973 = vunpack.c.h.b16 %v732
  %v974 = vunpack.c.l.b16 %v733
  %v975 = vunpack.c.h.b16 %v733
  %v976 = vunpack.c.l.b16 %v734
  %v977 = vunpack.c.h.b16 %v734
  %v978 = vunpack.c.l.b16 %v735
  %v979 = vunpack.c.h.b16 %v735
  %v980 = vunpack.c.l.b16 %v736
  %v981 = vunpack.c.h.b16 %v736
  %v982 = vunpack.c.l.b16 %v737
  %v983 = vunpack.c.h.b16 %v737
  %v984 = vunpack.c.l.b16 %v738
  %v985 = vunpack.c.h.b16 %v738
  %v986 = vunpack.c.l.b16 %v739
  %v987 = vunpack.c.h.b16 %v739
  %v988 = vunpack.c.l.b16 %v740
  %v989 = vunpack.c.h.b16 %v740
  %v990 = vunpack.c.l.b16 %v741
  %v991 = vunpack.c.h.b16 %v741
  %v992 = vunpack.c.l.b16 %v742
  %v993 = vunpack.c.h.b16 %v742
  %v994 = vunpack.c.l.b16 %v743
  %v995 = vunpack.c.h.b16 %v743
  %v996 = vunpack.c.l.b16 %v744
  %v997 = vunpack.c.h.b16 %v744
  %v998 = vunpack.c.l.b16 %v745
  %v999 = vunpack.c.h.b16 %v745
  %v1000 = vunpack.c.l.b16 %v746
  %v1001 = vunpack.c.h.b16 %v746
  %v1002 = vunpack.c.l.b16 %v747
  %v1003 = vunpack.c.h.b16 %v747
  %v1004 = vunpack.c.l.b16 %v748
  %v1005 = vunpack.c.h.b16 %v748
  %v1006 = vunpack.c.l.b16 %v749
  %v1007 = vunpack.c.h.b16 %v749
  %v1008 = vunpack.c.l.b16 %v750
  %v1009 = vunpack.c.h.b16 %v750
  %v1010 = vunpack.c.l.b16 %v751
  %v1011 = vunpack.c.h.b16 %v751
  %v1012 = vunpack.c.l.b16 %v752
  %v1013 = vunpack.c.h.b16 %v752
  %v1014 = vunpack.c.l.b16 %v753
  %v1015 = vunpack.c.h.b16 %v753
  %v1016 = vunpack.c.l.b16 %v754
  %v1017 = vunpack.c.h.b16 %v754
  %v1018 = vunpack.c.l.b16 %v755
  %v1019 = vunpack.c.h.b16 %v755
  %v1020 = vunpack.c.l.b16 %v756
  %v1021 = vunpack.c.h.b16 %v756
  %v1022 = vunpack.c.l.b16 %v757
  %v1023 = vunpack.c.h.b16 %v757
  %v1024 = vunpack.c.l.b16 %v758
  %v1025 = vunpack.c.h.b16 %v758
  %v1026 = vunpack.c.l.b16 %v759
  %v1027 = vunpack.c.h.b16 %v759
  %v1028 = vunpack.c.l.b16 %v760
  %v1029 = vunpack.c.h.b16 %v760
  %v1030 = vunpack.c.l.b16 %v761
  %v1031 = vunpack.c.h.b16 %v761
  %v1032 = vunpack.c.l.b16 %v762
  %v1033 = vunpack.c.h.b16 %v762
  %v1034 = vunpack.c.l.b16 %v763
  %v1035 = vunpack.c.h.b16 %v763
  %v1036 = vunpack.c.l.b16 %v764
  %v1037 = vunpack.c.h.b16 %v764
  %v1038 = vunpack.c.l.b16 %v765
  %v1039 = vunpack.c.h.b16 %v765
  %v1040 = vunpack.c.l.b16 %v766
  %v1041 = vunpack.c.h.b16 %v766
  %v1042 = vunpack.c.l.b16 %v767
  %v1043 = vunpack.c.h.b16 %v767
  %v1044 = vunpack.c.l.b16 %v768
  %v1045 = vunpack.c.h.b16 %v768
  %v1046 = vunpack.c.l.b16 %v769
  %v1047 = vunpack.c.h.b16 %v769
  %v1048 = vunpack.c.l.b16 %v770
  %v1049 = vunpack.c.h.b16 %v770
  %v1050 = vunpack.c.l.b16 %v771
  %v1051 = vunpack.c.h.b16 %v771
  %v1052 = vunpack.c.l.b16 %v772
  %v1053 = vunpack.c.h.b16 %v772
  %v1054 = vunpack.c.l.b16 %v773
  %v1055 = vunpack.c.h.b16 %v773
  %v1056 = vunpack.c.l.b16 %v774
  %v1057 = vunpack.c.h.b16 %v774
  %v1058 = vunpack.c.l.b16 %v775
  %v1059 = vunpack.c.h.b16 %v775
  %v1060 = vunpack.c.l.b16 %v776
  %v1061 = vunpack.c.h.b16 %v776
  %v1062 = vunpack.c.l.b16 %v777
  %v1063 = vunpack.c.h.b16 %v777
  %v1064 = vunpack.c.l.b16 %v778
  %v1065 = vunpack.c.h.b16 %v778
  %v1066 = vunpack.c.l.b16 %v779
  %v1067 = vunpack.c.h.b16 %v779
  %v1068 = vpack.c.b16 %v880, %v876
  %v1069 = vpack.c.b16 %v881, %v877
  %v1070 = vpack.c.b16 %v882, %v878
  %v1071 = vpack.c.b16 %v883, %v879
  %v1072 = vpack.c.b16 %v888, %v884
  %v1073 = vpack.c.b16 %v889, %v885
  %v1074 = vpack.c.b16 %v890, %v886
  %v1075 = vpack.c.b16 %v891, %v887
  %v1076 = vpack.c.b16 %v896, %v892
  %v1077 = vpack.c.b16 %v897, %v893
  %v1078 = vpack.c.b16 %v898, %v894
  %v1079 = vpack.c.b16 %v899, %v895
  %v1080 = vpack.c.b16 %v904, %v900
  %v1081 = vpack.c.b16 %v905, %v901
  %v1082 = vpack.c.b16 %v906, %v902
  %v1083 = vpack.c.b16 %v907, %v903
  %v1084 = vpack.c.b16 %v912, %v908
  %v1085 = vpack.c.b16 %v913, %v909
  %v1086 = vpack.c.b16 %v914, %v910
  %v1087 = vpack.c.b16 %v915, %v911
  %v1088 = vpack.c.b16 %v920, %v916
  %v1089 = vpack.c.b16 %v921, %v917
  %v1090 = vpack.c.b16 %v922, %v918
  %v1091 = vpack.c.b16 %v923, %v919
  %v1092 = vpack.c.b16 %v928, %v924
  %v1093 = vpack.c.b16 %v929, %v925
  %v1094 = vpack.c.b16 %v930, %v926
  %v1095 = vpack.c.b16 %v931, %v927
  %v1096 = vpack.c.b16 %v936, %v932
  %v1097 = vpack.c.b16 %v937, %v933
  %v1098 = vpack.c.b16 %v938, %v934
  %v1099 = vpack.c.b16 %v939, %v935
  %v1100 = vpack.c.b16 %v944, %v940
  %v1101 = vpack.c.b16 %v945, %v941
  %v1102 = vpack.c.b16 %v946, %v942
  %v1103 = vpack.c.b16 %v947, %v943
  %v1104 = vpack.c.b16 %v952, %v948
  %v1105 = vpack.c.b16 %v953, %v949
  %v1106 = vpack.c.b16 %v954, %v950
  %v1107 = vpack.c.b16 %v955, %v951
  %v1108 = vpack.c.b16 %v960, %v956
  %v1109 = vpack.c.b16 %v961, %v957
  %v1110 = vpack.c.b16 %v962, %v958
  %v1111 = vpack.c.b16 %v963, %v959
  %v1112 = vpack.c.b16 %v968, %v964
  %v1113 = vpack.c.b16 %v969, %v965
  %v1114 = vpack.c.b16 %v970, %v966
  %v1115 = vpack.c.b16 %v971, %v967
  %v1116 = vpack.c.b16 %v976, %v972
  %v1117 = vpack.c.b16 %v977, %v973
  %v1118 = vpack.c.b16 %v978, %v974
  %v1119 = vpack.c.b16 %v979, %v975
  %v1120 = vpack.c.b16 %v984, %v980
  %v1121 = vpack.c.b16 %v985, %v981
  %v1122 = vpack.c.b16 %v986, %v982
  %v1123 = vpack.c.b16 %v987, %v983
  %v1124 = vpack.c.b16 %v992, %v988
  %v1125 = vpack.c.b16 %v993, %v989
  %v1126 = vpack.c.b16 %v994, %v990
  %v1127 = vpack.c.b16 %v995, %v991
  %v1128 = vpack.c.b16 %v1000, %v996
  %v1129 = vpack.c.b16 %v1001, %v997
  %v1130 = vpack.c.b16 %v1002, %v998
  %v1131 = vpack.c.b16 %v1003, %v999
  %v1132 = vpack.c.b16 %v1008, %v1004
  %v1133 = vpack.c.b16 %v1009, %v1005
  %v1134 = vpack.c.b16 %v1010, %v1006
  %v1135 = vpack.c.b16 %v1011, %v1007
  %v1136 = vpack.c.b16 %v1016, %v1012
  %v1137 = vpack.c.b16 %v1017, %v1013
  %v1138 = vpack.c.b16 %v1018, %v1014
  %v1139 = vpack.c.b16 %v1019, %v1015
  %v1140 = vpack.c.b16 %v1024, %v1020
  %v1141 = vpack.c.b16 %v1025, %v1021
  %v1142 = vpack.c.b16 %v1026, %v1022
  %v1143 = vpack.c.b16 %v1027, %v1023
  %v1144 = vpack.c.b16 %v1032, %v1028
  %v1145 = vpack.c.b16 %v1033, %v1029
  %v1146 = vpack.c.b16 %v1034, %v1030
  %v1147 = vpack.c.b16 %v1035, %v1031
  %v1148 = vpack.c.b16 %v1040, %v1036
  %v1149 = vpack.c.b16 %v1041, %v1037
  %v1150 = vpack.c.b16 %v1042, %v1038
  %v1151 = vpack.c.b16 %v1043, %v1039
  %v1152 = vpack.c.b16 %v1048, %v1044
  %v1153 = vpack.c.b16 %v1049, %v1045
  %v1154 = vpack.c.b16 %v1050, %v1046
  %v1155 = vpack.c.b16 %v1051, %v1047
  %v1156 = vpack.c.b16 %v1056, %v1052
  %v1157 = vpack.c.b16 %v1057, %v1053
  %v1158 = vpack.c.b16 %v1058, %v1054
  %v1159 = vpack.c.b16 %v1059, %v1055
  %v1160 = vpack.c.b16 %v1064, %v1060
  %v1161 = vpack.c.b16 %v1065, %v1061
  %v1162 = vpack.c.b16 %v1066, %v1062
  %v1163 = vpack.c.b16 %v1067, %v1063
  %1260 = vmatprep.subr.bf16.mxu0 %v1097
  %1261 = vmatpush1.bf16.msra.mxu0 %v1096
  %1262 = vmatprep.subr.bf16.mxu0 %v1093
  %1263 = vmatpush1.bf16.msra.mxu0 %v1092
  %1264 = vmatprep.subr.bf16.mxu0 %v1089
  %1265 = vmatpush1.bf16.msra.mxu0 %v1088
  %1266 = vmatprep.subr.bf16.mxu0 %v1085
  %1267 = vmatpush1.bf16.msra.mxu0 %v1084
  %1268 = vmatprep.subr.bf16.mxu0 %v1081
  %1269 = vmatpush1.bf16.msra.mxu0 %v1080
  %1270 = vmatprep.subr.bf16.mxu0 %v1077
  %1271 = vmatpush1.bf16.msra.mxu0 %v1076
  %1272 = vmatprep.subr.bf16.mxu0 %v1073
  %1273 = vmatpush1.bf16.msra.mxu0 %v1072
  %1274 = vmatprep.subr.bf16.mxu0 %v1069
  %1275 = vmatpush1.bf16.msra.mxu0 %v1068
  %1276 = vmatprep.subr.bf16.mxu0 %v1129
  %1277 = vmatpush2.bf16.msra.mxu0 %v1128
  %1278 = vmatprep.subr.bf16.mxu0 %v1125
  %1279 = vmatpush2.bf16.msra.mxu0 %v1124
  %1280 = vmatprep.subr.bf16.mxu0 %v1121
  %1281 = vmatpush2.bf16.msra.mxu0 %v1120
  %1282 = vmatprep.subr.bf16.mxu0 %v1117
  %1283 = vmatpush2.bf16.msra.mxu0 %v1116
  %1284 = vmatprep.subr.bf16.mxu0 %v1113
  %1285 = vmatpush2.bf16.msra.mxu0 %v1112
  %1286 = vmatprep.subr.bf16.mxu0 %v1109
  %1287 = vmatpush2.bf16.msra.mxu0 %v1108
  %1288 = vmatprep.subr.bf16.mxu0 %v1105
  %1289 = vmatpush2.bf16.msra.mxu0 %v1104
  %1290 = vmatprep.subr.bf16.mxu0 %v1101
  %1291 = vmatpush2.bf16.msra.mxu0 %v1100
  %1292 = vmatprep.mubr.bf16.mxu0 %v661
  %1293 = vmatmul.mubr.bf16.gmra.mxu0 %v660
  %v1294 = vpop.f32.mrf.mxu0
  %v1295 = vadd.f32 0.0, %v1294
  %v1296 = vpop.f32.mrf.mxu0
  %v1297 = vadd.f32 0.0, %v1296
  %v1298 = vpop.f32.mrf.mxu0
  %v1299 = vadd.f32 0.0, %v1298
  %v1300 = vpop.f32.mrf.mxu0
  %v1301 = vadd.f32 0.0, %v1300
  %1302 = vmatprep.mubr.bf16.mxu0 %v664
  %1303 = vmatmul.mubr.bf16.gmra.mxu0 %v663
  %v1304 = vpop.f32.mrf.mxu0
  %v1305 = vadd.f32 0.0, %v1304
  %v1306 = vpop.f32.mrf.mxu0
  %v1307 = vadd.f32 0.0, %v1306
  %v1308 = vpop.f32.mrf.mxu0
  %v1309 = vadd.f32 0.0, %v1308
  %v1310 = vpop.f32.mrf.mxu0
  %v1311 = vadd.f32 0.0, %v1310
  %1312 = vmatprep.mubr.bf16.mxu0 %v667
  %1313 = vmatmul.mubr.bf16.gmra.mxu0 %v666
  %v1314 = vpop.f32.mrf.mxu0
  %v1315 = vadd.f32 0.0, %v1314
  %v1316 = vpop.f32.mrf.mxu0
  %v1317 = vadd.f32 0.0, %v1316
  %v1318 = vpop.f32.mrf.mxu0
  %v1319 = vadd.f32 0.0, %v1318
  %v1320 = vpop.f32.mrf.mxu0
  %v1321 = vadd.f32 0.0, %v1320
  %1322 = vmatprep.mubr.bf16.mxu0 %v670
  %1323 = vmatmul.mubr.bf16.gmra.mxu0 %v669
  %v1324 = vpop.f32.mrf.mxu0
  %v1325 = vadd.f32 0.0, %v1324
  %v1326 = vpop.f32.mrf.mxu0
  %v1327 = vadd.f32 0.0, %v1326
  %v1328 = vpop.f32.mrf.mxu0
  %v1329 = vadd.f32 0.0, %v1328
  %v1330 = vpop.f32.mrf.mxu0
  %v1331 = vadd.f32 0.0, %v1330
  %1332 = vmatprep.mubr.bf16.mxu0 %v673
  %1333 = vmatmul.mubr.bf16.gmra.mxu0 %v672
  %v1334 = vpop.f32.mrf.mxu0
  %v1335 = vadd.f32 0.0, %v1334
  %v1336 = vpop.f32.mrf.mxu0
  %v1337 = vadd.f32 0.0, %v1336
  %v1338 = vpop.f32.mrf.mxu0
  %v1339 = vadd.f32 0.0, %v1338
  %v1340 = vpop.f32.mrf.mxu0
  %v1341 = vadd.f32 0.0, %v1340
  %1342 = vmatprep.mubr.bf16.mxu0 %v676
  %1343 = vmatmul.mubr.bf16.gmra.mxu0 %v675
  %v1344 = vpop.f32.mrf.mxu0
  %v1345 = vadd.f32 0.0, %v1344
  %v1346 = vpop.f32.mrf.mxu0
  %v1347 = vadd.f32 0.0, %v1346
  %v1348 = vpop.f32.mrf.mxu0
  %v1349 = vadd.f32 0.0, %v1348
  %v1350 = vpop.f32.mrf.mxu0
  %v1351 = vadd.f32 0.0, %v1350
  %1352 = vmatprep.mubr.bf16.mxu0 %v679
  %1353 = vmatmul.mubr.bf16.gmra.mxu0 %v678
  %v1354 = vpop.f32.mrf.mxu0
  %v1355 = vadd.f32 0.0, %v1354
  %v1356 = vpop.f32.mrf.mxu0
  %v1357 = vadd.f32 0.0, %v1356
  %v1358 = vpop.f32.mrf.mxu0
  %v1359 = vadd.f32 0.0, %v1358
  %v1360 = vpop.f32.mrf.mxu0
  %v1361 = vadd.f32 0.0, %v1360
  %1362 = vmatprep.mubr.bf16.mxu0 %v682
  %1363 = vmatmul.mubr.bf16.gmra.mxu0 %v681
  %v1364 = vpop.f32.mrf.mxu0
  %v1365 = vadd.f32 0.0, %v1364
  %v1366 = vpop.f32.mrf.mxu0
  %v1367 = vadd.f32 0.0, %v1366
  %v1368 = vpop.f32.mrf.mxu0
  %v1369 = vadd.f32 0.0, %v1368
  %v1370 = vpop.f32.mrf.mxu0
  %v1371 = vadd.f32 0.0, %v1370
  %1372 = vdwg.mxu0
  %1373 = vmatprep.subr.bf16.mxu0 %v1161
  %1374 = vmatpush1.bf16.msra.mxu0 %v1160
  %1375 = vmatprep.subr.bf16.mxu0 %v1157
  %1376 = vmatpush1.bf16.msra.mxu0 %v1156
  %1377 = vmatprep.subr.bf16.mxu0 %v1153
  %1378 = vmatpush1.bf16.msra.mxu0 %v1152
  %1379 = vmatprep.subr.bf16.mxu0 %v1149
  %1380 = vmatpush1.bf16.msra.mxu0 %v1148
  %1381 = vmatprep.subr.bf16.mxu0 %v1145
  %1382 = vmatpush1.bf16.msra.mxu0 %v1144
  %1383 = vmatprep.subr.bf16.mxu0 %v1141
  %1384 = vmatpush1.bf16.msra.mxu0 %v1140
  %1385 = vmatprep.subr.bf16.mxu0 %v1137
  %1386 = vmatpush1.bf16.msra.mxu0 %v1136
  %1387 = vmatprep.subr.bf16.mxu0 %v1133
  %1388 = vmatpush1.bf16.msra.mxu0 %v1132
  %1389 = vmatprep.subr.bf16.mxu0 0
  %1390 = vmatpush2.bf16.msra.mxu0 0
  %1391 = vmatprep.subr.bf16.mxu0 0
  %1392 = vmatpush2.bf16.msra.mxu0 0
  %1393 = vmatprep.subr.bf16.mxu0 0
  %1394 = vmatpush2.bf16.msra.mxu0 0
  %1395 = vmatprep.subr.bf16.mxu0 0
  %1396 = vmatpush2.bf16.msra.mxu0 0
  %1397 = vmatprep.subr.bf16.mxu0 0
  %1398 = vmatpush2.bf16.msra.mxu0 0
  %1399 = vmatprep.subr.bf16.mxu0 0
  %1400 = vmatpush2.bf16.msra.mxu0 0
  %1401 = vmatprep.subr.bf16.mxu0 0
  %1402 = vmatpush2.bf16.msra.mxu0 0
  %1403 = vmatprep.subr.bf16.mxu0 0
  %1404 = vmatpush2.bf16.msra.mxu0 0
  %1405 = vmatprep.mubr.bf16.mxu0 0
  %1406 = vmatmul.mubr.bf16.gmra.mxu0 %v662
  %v1407 = vpop.f32.mrf.mxu0
  %v1408 = vadd.f32 %v1295, %v1407
  %v1409 = vpop.f32.mrf.mxu0
  %v1410 = vadd.f32 %v1297, %v1409
  %v1411 = vpop.f32.mrf.mxu0
  %v1412 = vadd.f32 %v1299, %v1411
  %v1413 = vpop.f32.mrf.mxu0
  %v1414 = vadd.f32 %v1301, %v1413
  %1415 = vmatprep.mubr.bf16.mxu0 0
  %1416 = vmatmul.mubr.bf16.gmra.mxu0 %v665
  %v1417 = vpop.f32.mrf.mxu0
  %v1418 = vadd.f32 %v1305, %v1417
  %v1419 = vpop.f32.mrf.mxu0
  %v1420 = vadd.f32 %v1307, %v1419
  %v1421 = vpop.f32.mrf.mxu0
  %v1422 = vadd.f32 %v1309, %v1421
  %v1423 = vpop.f32.mrf.mxu0
  %v1424 = vadd.f32 %v1311, %v1423
  %1425 = vmatprep.mubr.bf16.mxu0 0
  %1426 = vmatmul.mubr.bf16.gmra.mxu0 %v668
  %v1427 = vpop.f32.mrf.mxu0
  %v1428 = vadd.f32 %v1315, %v1427
  %v1429 = vpop.f32.mrf.mxu0
  %v1430 = vadd.f32 %v1317, %v1429
  %v1431 = vpop.f32.mrf.mxu0
  %v1432 = vadd.f32 %v1319, %v1431
  %v1433 = vpop.f32.mrf.mxu0
  %v1434 = vadd.f32 %v1321, %v1433
  %1435 = vmatprep.mubr.bf16.mxu0 0
  %1436 = vmatmul.mubr.bf16.gmra.mxu0 %v671
  %v1437 = vpop.f32.mrf.mxu0
  %v1438 = vadd.f32 %v1325, %v1437
  %v1439 = vpop.f32.mrf.mxu0
  %v1440 = vadd.f32 %v1327, %v1439
  %v1441 = vpop.f32.mrf.mxu0
  %v1442 = vadd.f32 %v1329, %v1441
  %v1443 = vpop.f32.mrf.mxu0
  %v1444 = vadd.f32 %v1331, %v1443
  %1445 = vmatprep.mubr.bf16.mxu0 0
  %1446 = vmatmul.mubr.bf16.gmra.mxu0 %v674
  %v1447 = vpop.f32.mrf.mxu0
  %v1448 = vadd.f32 %v1335, %v1447
  %v1449 = vpop.f32.mrf.mxu0
  %v1450 = vadd.f32 %v1337, %v1449
  %v1451 = vpop.f32.mrf.mxu0
  %v1452 = vadd.f32 %v1339, %v1451
  %v1453 = vpop.f32.mrf.mxu0
  %v1454 = vadd.f32 %v1341, %v1453
  %1455 = vmatprep.mubr.bf16.mxu0 0
  %1456 = vmatmul.mubr.bf16.gmra.mxu0 %v677
  %v1457 = vpop.f32.mrf.mxu0
  %v1458 = vadd.f32 %v1345, %v1457
  %v1459 = vpop.f32.mrf.mxu0
  %v1460 = vadd.f32 %v1347, %v1459
  %v1461 = vpop.f32.mrf.mxu0
  %v1462 = vadd.f32 %v1349, %v1461
  %v1463 = vpop.f32.mrf.mxu0
  %v1464 = vadd.f32 %v1351, %v1463
  %1465 = vmatprep.mubr.bf16.mxu0 0
  %1466 = vmatmul.mubr.bf16.gmra.mxu0 %v680
  %v1467 = vpop.f32.mrf.mxu0
  %v1468 = vadd.f32 %v1355, %v1467
  %v1469 = vpop.f32.mrf.mxu0
  %v1470 = vadd.f32 %v1357, %v1469
  %v1471 = vpop.f32.mrf.mxu0
  %v1472 = vadd.f32 %v1359, %v1471
  %v1473 = vpop.f32.mrf.mxu0
  %v1474 = vadd.f32 %v1361, %v1473
  %1475 = vmatprep.mubr.bf16.mxu0 0
  %1476 = vmatmul.mubr.bf16.gmra.mxu0 %v683
  %v1477 = vpop.f32.mrf.mxu0
  %v1478 = vadd.f32 %v1365, %v1477
  %v1479 = vpop.f32.mrf.mxu0
  %v1480 = vadd.f32 %v1367, %v1479
  %v1481 = vpop.f32.mrf.mxu0
  %v1482 = vadd.f32 %v1369, %v1481
  %v1483 = vpop.f32.mrf.mxu0
  %v1484 = vadd.f32 %v1371, %v1483
  %1485 = vdwg.mxu0
  %1486 = vmatprep.subr.bf16.mxu0 %v1099
  %1487 = vmatpush1.bf16.msra.mxu0 %v1098
  %1488 = vmatprep.subr.bf16.mxu0 %v1095
  %1489 = vmatpush1.bf16.msra.mxu0 %v1094
  %1490 = vmatprep.subr.bf16.mxu0 %v1091
  %1491 = vmatpush1.bf16.msra.mxu0 %v1090
  %1492 = vmatprep.subr.bf16.mxu0 %v1087
  %1493 = vmatpush1.bf16.msra.mxu0 %v1086
  %1494 = vmatprep.subr.bf16.mxu0 %v1083
  %1495 = vmatpush1.bf16.msra.mxu0 %v1082
  %1496 = vmatprep.subr.bf16.mxu0 %v1079
  %1497 = vmatpush1.bf16.msra.mxu0 %v1078
  %1498 = vmatprep.subr.bf16.mxu0 %v1075
  %1499 = vmatpush1.bf16.msra.mxu0 %v1074
  %1500 = vmatprep.subr.bf16.mxu0 %v1071
  %1501 = vmatpush1.bf16.msra.mxu0 %v1070
  %1502 = vmatprep.subr.bf16.mxu0 %v1131
  %1503 = vmatpush2.bf16.msra.mxu0 %v1130
  %1504 = vmatprep.subr.bf16.mxu0 %v1127
  %1505 = vmatpush2.bf16.msra.mxu0 %v1126
  %1506 = vmatprep.subr.bf16.mxu0 %v1123
  %1507 = vmatpush2.bf16.msra.mxu0 %v1122
  %1508 = vmatprep.subr.bf16.mxu0 %v1119
  %1509 = vmatpush2.bf16.msra.mxu0 %v1118
  %1510 = vmatprep.subr.bf16.mxu0 %v1115
  %1511 = vmatpush2.bf16.msra.mxu0 %v1114
  %1512 = vmatprep.subr.bf16.mxu0 %v1111
  %1513 = vmatpush2.bf16.msra.mxu0 %v1110
  %1514 = vmatprep.subr.bf16.mxu0 %v1107
  %1515 = vmatpush2.bf16.msra.mxu0 %v1106
  %1516 = vmatprep.subr.bf16.mxu0 %v1103
  %1517 = vmatpush2.bf16.msra.mxu0 %v1102
  %1518 = vmatprep.mubr.bf16.mxu0 %v661
  %1519 = vmatmul.mubr.bf16.gmra.mxu0 %v660
  %v1520 = vpop.f32.mrf.mxu0
  %v1521 = vadd.f32 0.0, %v1520
  %v1522 = vpop.f32.mrf.mxu0
  %v1523 = vadd.f32 0.0, %v1522
  %v1524 = vpop.f32.mrf.mxu0
  %v1525 = vadd.f32 0.0, %v1524
  %v1526 = vpop.f32.mrf.mxu0
  %v1527 = vadd.f32 0.0, %v1526
  %1528 = vmatprep.mubr.bf16.mxu0 %v664
  %1529 = vmatmul.mubr.bf16.gmra.mxu0 %v663
  %v1530 = vpop.f32.mrf.mxu0
  %v1531 = vadd.f32 0.0, %v1530
  %v1532 = vpop.f32.mrf.mxu0
  %v1533 = vadd.f32 0.0, %v1532
  %v1534 = vpop.f32.mrf.mxu0
  %v1535 = vadd.f32 0.0, %v1534
  %v1536 = vpop.f32.mrf.mxu0
  %v1537 = vadd.f32 0.0, %v1536
  %1538 = vmatprep.mubr.bf16.mxu0 %v667
  %1539 = vmatmul.mubr.bf16.gmra.mxu0 %v666
  %v1540 = vpop.f32.mrf.mxu0
  %v1541 = vadd.f32 0.0, %v1540
  %v1542 = vpop.f32.mrf.mxu0
  %v1543 = vadd.f32 0.0, %v1542
  %v1544 = vpop.f32.mrf.mxu0
  %v1545 = vadd.f32 0.0, %v1544
  %v1546 = vpop.f32.mrf.mxu0
  %v1547 = vadd.f32 0.0, %v1546
  %1548 = vmatprep.mubr.bf16.mxu0 %v670
  %1549 = vmatmul.mubr.bf16.gmra.mxu0 %v669
  %v1550 = vpop.f32.mrf.mxu0
  %v1551 = vadd.f32 0.0, %v1550
  %v1552 = vpop.f32.mrf.mxu0
  %v1553 = vadd.f32 0.0, %v1552
  %v1554 = vpop.f32.mrf.mxu0
  %v1555 = vadd.f32 0.0, %v1554
  %v1556 = vpop.f32.mrf.mxu0
  %v1557 = vadd.f32 0.0, %v1556
  %1558 = vmatprep.mubr.bf16.mxu0 %v673
  %1559 = vmatmul.mubr.bf16.gmra.mxu0 %v672
  %v1560 = vpop.f32.mrf.mxu0
  %v1561 = vadd.f32 0.0, %v1560
  %v1562 = vpop.f32.mrf.mxu0
  %v1563 = vadd.f32 0.0, %v1562
  %v1564 = vpop.f32.mrf.mxu0
  %v1565 = vadd.f32 0.0, %v1564
  %v1566 = vpop.f32.mrf.mxu0
  %v1567 = vadd.f32 0.0, %v1566
  %1568 = vmatprep.mubr.bf16.mxu0 %v676
  %1569 = vmatmul.mubr.bf16.gmra.mxu0 %v675
  %v1570 = vpop.f32.mrf.mxu0
  %v1571 = vadd.f32 0.0, %v1570
  %v1572 = vpop.f32.mrf.mxu0
  %v1573 = vadd.f32 0.0, %v1572
  %v1574 = vpop.f32.mrf.mxu0
  %v1575 = vadd.f32 0.0, %v1574
  %v1576 = vpop.f32.mrf.mxu0
  %v1577 = vadd.f32 0.0, %v1576
  %1578 = vmatprep.mubr.bf16.mxu0 %v679
  %1579 = vmatmul.mubr.bf16.gmra.mxu0 %v678
  %v1580 = vpop.f32.mrf.mxu0
  %v1581 = vadd.f32 0.0, %v1580
  %v1582 = vpop.f32.mrf.mxu0
  %v1583 = vadd.f32 0.0, %v1582
  %v1584 = vpop.f32.mrf.mxu0
  %v1585 = vadd.f32 0.0, %v1584
  %v1586 = vpop.f32.mrf.mxu0
  %v1587 = vadd.f32 0.0, %v1586
  %1588 = vmatprep.mubr.bf16.mxu0 %v682
  %1589 = vmatmul.mubr.bf16.gmra.mxu0 %v681
  %v1590 = vpop.f32.mrf.mxu0
  %v1591 = vadd.f32 0.0, %v1590
  %v1592 = vpop.f32.mrf.mxu0
  %v1593 = vadd.f32 0.0, %v1592
  %v1594 = vpop.f32.mrf.mxu0
  %v1595 = vadd.f32 0.0, %v1594
  %v1596 = vpop.f32.mrf.mxu0
  %v1597 = vadd.f32 0.0, %v1596
  %1598 = vdwg.mxu0
  %1599 = vmatprep.subr.bf16.mxu0 %v1163
  %1600 = vmatpush1.bf16.msra.mxu0 %v1162
  %1601 = vmatprep.subr.bf16.mxu0 %v1159
  %1602 = vmatpush1.bf16.msra.mxu0 %v1158
  %1603 = vmatprep.subr.bf16.mxu0 %v1155
  %1604 = vmatpush1.bf16.msra.mxu0 %v1154
  %1605 = vmatprep.subr.bf16.mxu0 %v1151
  %1606 = vmatpush1.bf16.msra.mxu0 %v1150
  %1607 = vmatprep.subr.bf16.mxu0 %v1147
  %1608 = vmatpush1.bf16.msra.mxu0 %v1146
  %1609 = vmatprep.subr.bf16.mxu0 %v1143
  %1610 = vmatpush1.bf16.msra.mxu0 %v1142
  %1611 = vmatprep.subr.bf16.mxu0 %v1139
  %1612 = vmatpush1.bf16.msra.mxu0 %v1138
  %1613 = vmatprep.subr.bf16.mxu0 %v1135
  %1614 = vmatpush1.bf16.msra.mxu0 %v1134
  %1615 = vmatprep.subr.bf16.mxu0 0
  %1616 = vmatpush2.bf16.msra.mxu0 0
  %1617 = vmatprep.subr.bf16.mxu0 0
  %1618 = vmatpush2.bf16.msra.mxu0 0
  %1619 = vmatprep.subr.bf16.mxu0 0
  %1620 = vmatpush2.bf16.msra.mxu0 0
  %1621 = vmatprep.subr.bf16.mxu0 0
  %1622 = vmatpush2.bf16.msra.mxu0 0
  %1623 = vmatprep.subr.bf16.mxu0 0
  %1624 = vmatpush2.bf16.msra.mxu0 0
  %1625 = vmatprep.subr.bf16.mxu0 0
  %1626 = vmatpush2.bf16.msra.mxu0 0
  %1627 = vmatprep.subr.bf16.mxu0 0
  %1628 = vmatpush2.bf16.msra.mxu0 0
  %1629 = vmatprep.subr.bf16.mxu0 0
  %1630 = vmatpush2.bf16.msra.mxu0 0
  %1631 = vmatprep.mubr.bf16.mxu0 0
  %1632 = vmatmul.mubr.bf16.gmra.mxu0 %v662
  %v1633 = vpop.f32.mrf.mxu0
  %v1634 = vadd.f32 %v1521, %v1633
  %v1635 = vpop.f32.mrf.mxu0
  %v1636 = vadd.f32 %v1523, %v1635
  %v1637 = vpop.f32.mrf.mxu0
  %v1638 = vadd.f32 %v1525, %v1637
  %v1639 = vpop.f32.mrf.mxu0
  %v1640 = vadd.f32 %v1527, %v1639
  %1641 = vmatprep.mubr.bf16.mxu0 0
  %1642 = vmatmul.mubr.bf16.gmra.mxu0 %v665
  %v1643 = vpop.f32.mrf.mxu0
  %v1644 = vadd.f32 %v1531, %v1643
  %v1645 = vpop.f32.mrf.mxu0
  %v1646 = vadd.f32 %v1533, %v1645
  %v1647 = vpop.f32.mrf.mxu0
  %v1648 = vadd.f32 %v1535, %v1647
  %v1649 = vpop.f32.mrf.mxu0
  %v1650 = vadd.f32 %v1537, %v1649
  %1651 = vmatprep.mubr.bf16.mxu0 0
  %1652 = vmatmul.mubr.bf16.gmra.mxu0 %v668
  %v1653 = vpop.f32.mrf.mxu0
  %v1654 = vadd.f32 %v1541, %v1653
  %v1655 = vpop.f32.mrf.mxu0
  %v1656 = vadd.f32 %v1543, %v1655
  %v1657 = vpop.f32.mrf.mxu0
  %v1658 = vadd.f32 %v1545, %v1657
  %v1659 = vpop.f32.mrf.mxu0
  %v1660 = vadd.f32 %v1547, %v1659
  %1661 = vmatprep.mubr.bf16.mxu0 0
  %1662 = vmatmul.mubr.bf16.gmra.mxu0 %v671
  %v1663 = vpop.f32.mrf.mxu0
  %v1664 = vadd.f32 %v1551, %v1663
  %v1665 = vpop.f32.mrf.mxu0
  %v1666 = vadd.f32 %v1553, %v1665
  %v1667 = vpop.f32.mrf.mxu0
  %v1668 = vadd.f32 %v1555, %v1667
  %v1669 = vpop.f32.mrf.mxu0
  %v1670 = vadd.f32 %v1557, %v1669
  %1671 = vmatprep.mubr.bf16.mxu0 0
  %1672 = vmatmul.mubr.bf16.gmra.mxu0 %v674
  %v1673 = vpop.f32.mrf.mxu0
  %v1674 = vadd.f32 %v1561, %v1673
  %v1675 = vpop.f32.mrf.mxu0
  %v1676 = vadd.f32 %v1563, %v1675
  %v1677 = vpop.f32.mrf.mxu0
  %v1678 = vadd.f32 %v1565, %v1677
  %v1679 = vpop.f32.mrf.mxu0
  %v1680 = vadd.f32 %v1567, %v1679
  %1681 = vmatprep.mubr.bf16.mxu0 0
  %1682 = vmatmul.mubr.bf16.gmra.mxu0 %v677
  %v1683 = vpop.f32.mrf.mxu0
  %v1684 = vadd.f32 %v1571, %v1683
  %v1685 = vpop.f32.mrf.mxu0
  %v1686 = vadd.f32 %v1573, %v1685
  %v1687 = vpop.f32.mrf.mxu0
  %v1688 = vadd.f32 %v1575, %v1687
  %v1689 = vpop.f32.mrf.mxu0
  %v1690 = vadd.f32 %v1577, %v1689
  %1691 = vmatprep.mubr.bf16.mxu0 0
  %1692 = vmatmul.mubr.bf16.gmra.mxu0 %v680
  %v1693 = vpop.f32.mrf.mxu0
  %v1694 = vadd.f32 %v1581, %v1693
  %v1695 = vpop.f32.mrf.mxu0
  %v1696 = vadd.f32 %v1583, %v1695
  %v1697 = vpop.f32.mrf.mxu0
  %v1698 = vadd.f32 %v1585, %v1697
  %v1699 = vpop.f32.mrf.mxu0
  %v1700 = vadd.f32 %v1587, %v1699
  %1701 = vmatprep.mubr.bf16.mxu0 0
  %1702 = vmatmul.mubr.bf16.gmra.mxu0 %v683
  %v1703 = vpop.f32.mrf.mxu0
  %v1704 = vadd.f32 %v1591, %v1703
  %v1705 = vpop.f32.mrf.mxu0
  %v1706 = vadd.f32 %v1593, %v1705
  %v1707 = vpop.f32.mrf.mxu0
  %v1708 = vadd.f32 %v1595, %v1707
  %v1709 = vpop.f32.mrf.mxu0
  %v1710 = vadd.f32 %v1597, %v1709
  %1711 = vdwg.mxu0
  %v1712 = vld [vmem:[%s4] sm:$0xf]
  %v1713 = vpack.c.bf16 %v1412, %v1408
  %v1714 = vpack.c.bf16 %v1414, %v1410
  %v1715 = vpack.c.bf16 %v1638, %v1634
  %v1716 = vpack.c.bf16 %v1640, %v1636
  %v1717 = vpack.c.bf16 %v1422, %v1418
  %v1718 = vpack.c.bf16 %v1424, %v1420
  %v1719 = vpack.c.bf16 %v1648, %v1644
  %v1720 = vpack.c.bf16 %v1650, %v1646
  %v1721 = vpack.c.bf16 %v1432, %v1428
  %v1722 = vpack.c.bf16 %v1434, %v1430
  %v1723 = vpack.c.bf16 %v1658, %v1654
  %v1724 = vpack.c.bf16 %v1660, %v1656
  %v1725 = vpack.c.bf16 %v1442, %v1438
  %v1726 = vpack.c.bf16 %v1444, %v1440
  %v1727 = vpack.c.bf16 %v1668, %v1664
  %v1728 = vpack.c.bf16 %v1670, %v1666
  %v1729 = vpack.c.bf16 %v1452, %v1448
  %v1730 = vpack.c.bf16 %v1454, %v1450
  %v1731 = vpack.c.bf16 %v1678, %v1674
  %v1732 = vpack.c.bf16 %v1680, %v1676
  %v1733 = vpack.c.bf16 %v1462, %v1458
  %v1734 = vpack.c.bf16 %v1464, %v1460
  %v1735 = vpack.c.bf16 %v1688, %v1684
  %v1736 = vpack.c.bf16 %v1690, %v1686
  %v1737 = vpack.c.bf16 %v1472, %v1468
  %v1738 = vpack.c.bf16 %v1474, %v1470
  %v1739 = vpack.c.bf16 %v1698, %v1694
  %v1740 = vpack.c.bf16 %v1700, %v1696
  %v1741 = vpack.c.bf16 %v1482, %v1478
  %v1742 = vpack.c.bf16 %v1484, %v1480
  %v1743 = vpack.c.bf16 %v1708, %v1704
  %v1744 = vpack.c.bf16 %v1710, %v1706
  %v1747 = vunpack.c.l.s4 1966171168
  %v1748 = vunpack.c.0.s8 %v1747
  %v1749 = vlaneseq
  %v1750 = vshrl.u32 %v1749, 7
  %v1751 = vsub.s32 %v1748, %v1750
  %v1752 = vrot.slane %v1712, %v1751
  %v1753 = vcombine.high %v1752, %v1752
  %v1755 = vunpack.c.l.s4 1966171168
  %v1756 = vunpack.c.0.s8 %v1755
  %v1757 = vlaneseq
  %v1758 = vshrl.u32 %v1757, 7
  %v1759 = vsub.s32 %v1756, %v1758
  %v1760 = vrot.slane %v1752, %v1759
  %v1762 = vunpack.c.l.s4 1966171168
  %v1763 = vunpack.c.0.s8 %v1762
  %v1764 = vlaneseq
  %v1765 = vshrl.u32 %v1764, 7
  %v1766 = vsub.s32 %v1763, %v1765
  %v1767 = vrot.slane %v1753, %v1766
  %v1768 = vcombine.high %v1760, %v1760
  %v1769 = vcombine.high %v1767, %v1767
  %v1771 = vpack.i.b16 %v1760, %v1760
  %v1773 = vlaneseq
  %v1774 = vshrl.u32 %v1773, 7
  %v1775 = vsub.s32 0, %v1774
  %v1776 = vrot.slane %v1771, %v1775
  %v1778 = vpack.i.b16 %v1767, %v1767
  %v1780 = vlaneseq
  %v1781 = vshrl.u32 %v1780, 7
  %v1782 = vsub.s32 0, %v1781
  %v1783 = vrot.slane %v1778, %v1782
  %v1785 = vpack.i.b16 %v1768, %v1768
  %v1787 = vlaneseq
  %v1788 = vshrl.u32 %v1787, 7
  %v1789 = vsub.s32 0, %v1788
  %v1790 = vrot.slane %v1785, %v1789
  %v1792 = vpack.i.b16 %v1769, %v1769
  %v1794 = vlaneseq
  %v1795 = vshrl.u32 %v1794, 7
  %v1796 = vsub.s32 0, %v1795
  %v1797 = vrot.slane %v1792, %v1796
  %v1798 = vadd.bf16 %v1713, %v1776
  %v1799 = vadd.bf16 %v1714, %v1783
  %v1800 = vadd.bf16 %v1715, %v1790
  %v1801 = vadd.bf16 %v1716, %v1797
  %v1802 = vadd.bf16 %v1717, %v1776
  %v1803 = vadd.bf16 %v1718, %v1783
  %v1804 = vadd.bf16 %v1719, %v1790
  %v1805 = vadd.bf16 %v1720, %v1797
  %v1806 = vadd.bf16 %v1721, %v1776
  %v1807 = vadd.bf16 %v1722, %v1783
  %v1808 = vadd.bf16 %v1723, %v1790
  %v1809 = vadd.bf16 %v1724, %v1797
  %v1810 = vadd.bf16 %v1725, %v1776
  %v1811 = vadd.bf16 %v1726, %v1783
  %v1812 = vadd.bf16 %v1727, %v1790
  %v1813 = vadd.bf16 %v1728, %v1797
  %v1814 = vadd.bf16 %v1729, %v1776
  %v1815 = vadd.bf16 %v1730, %v1783
  %v1816 = vadd.bf16 %v1731, %v1790
  %v1817 = vadd.bf16 %v1732, %v1797
  %v1818 = vadd.bf16 %v1733, %v1776
  %v1819 = vadd.bf16 %v1734, %v1783
  %v1820 = vadd.bf16 %v1735, %v1790
  %v1821 = vadd.bf16 %v1736, %v1797
  %v1822 = vadd.bf16 %v1737, %v1776
  %v1823 = vadd.bf16 %v1738, %v1783
  %v1824 = vadd.bf16 %v1739, %v1790
  %v1825 = vadd.bf16 %v1740, %v1797
  %v1826 = vadd.bf16 %v1741, %v1776
  %v1827 = vadd.bf16 %v1742, %v1783
  %v1828 = vadd.bf16 %v1743, %v1790
  %v1829 = vadd.bf16 %v1744, %v1797
  %v1830 = vadd.bf16 %v1798, 1077952576
  %v1831 = vadd.bf16 %v1799, 1077952576
  %v1832 = vadd.bf16 %v1800, 1077952576
  %v1833 = vadd.bf16 %v1801, 1077952576
  %v1834 = vadd.bf16 %v1802, 1077952576
  %v1835 = vadd.bf16 %v1803, 1077952576
  %v1836 = vadd.bf16 %v1804, 1077952576
  %v1837 = vadd.bf16 %v1805, 1077952576
  %v1838 = vadd.bf16 %v1806, 1077952576
  %v1839 = vadd.bf16 %v1807, 1077952576
  %v1840 = vadd.bf16 %v1808, 1077952576
  %v1841 = vadd.bf16 %v1809, 1077952576
  %v1842 = vadd.bf16 %v1810, 1077952576
  %v1843 = vadd.bf16 %v1811, 1077952576
  %v1844 = vadd.bf16 %v1812, 1077952576
  %v1845 = vadd.bf16 %v1813, 1077952576
  %v1846 = vadd.bf16 %v1814, 1077952576
  %v1847 = vadd.bf16 %v1815, 1077952576
  %v1848 = vadd.bf16 %v1816, 1077952576
  %v1849 = vadd.bf16 %v1817, 1077952576
  %v1850 = vadd.bf16 %v1818, 1077952576
  %v1851 = vadd.bf16 %v1819, 1077952576
  %v1852 = vadd.bf16 %v1820, 1077952576
  %v1853 = vadd.bf16 %v1821, 1077952576
  %v1854 = vadd.bf16 %v1822, 1077952576
  %v1855 = vadd.bf16 %v1823, 1077952576
  %v1856 = vadd.bf16 %v1824, 1077952576
  %v1857 = vadd.bf16 %v1825, 1077952576
  %v1858 = vadd.bf16 %v1826, 1077952576
  %v1859 = vadd.bf16 %v1827, 1077952576
  %v1860 = vadd.bf16 %v1828, 1077952576
  %v1861 = vadd.bf16 %v1829, 1077952576
  %v1862 = vmax.bf16 %v1830, 0
  %v1863 = vmax.bf16 %v1831, 0
  %v1864 = vmax.bf16 %v1832, 0
  %v1865 = vmax.bf16 %v1833, 0
  %v1866 = vmax.bf16 %v1834, 0
  %v1867 = vmax.bf16 %v1835, 0
  %v1868 = vmax.bf16 %v1836, 0
  %v1869 = vmax.bf16 %v1837, 0
  %v1870 = vmax.bf16 %v1838, 0
  %v1871 = vmax.bf16 %v1839, 0
  %v1872 = vmax.bf16 %v1840, 0
  %v1873 = vmax.bf16 %v1841, 0
  %v1874 = vmax.bf16 %v1842, 0
  %v1875 = vmax.bf16 %v1843, 0
  %v1876 = vmax.bf16 %v1844, 0
  %v1877 = vmax.bf16 %v1845, 0
  %v1878 = vmax.bf16 %v1846, 0
  %v1879 = vmax.bf16 %v1847, 0
  %v1880 = vmax.bf16 %v1848, 0
  %v1881 = vmax.bf16 %v1849, 0
  %v1882 = vmax.bf16 %v1850, 0
  %v1883 = vmax.bf16 %v1851, 0
  %v1884 = vmax.bf16 %v1852, 0
  %v1885 = vmax.bf16 %v1853, 0
  %v1886 = vmax.bf16 %v1854, 0
  %v1887 = vmax.bf16 %v1855, 0
  %v1888 = vmax.bf16 %v1856, 0
  %v1889 = vmax.bf16 %v1857, 0
  %v1890 = vmax.bf16 %v1858, 0
  %v1891 = vmax.bf16 %v1859, 0
  %v1892 = vmax.bf16 %v1860, 0
  %v1893 = vmax.bf16 %v1861, 0
  %v1894 = vmin.bf16 %v1862, 1086341312
  %v1895 = vmin.bf16 %v1863, 1086341312
  %v1896 = vmin.bf16 %v1864, 1086341312
  %v1897 = vmin.bf16 %v1865, 1086341312
  %v1898 = vmin.bf16 %v1866, 1086341312
  %v1899 = vmin.bf16 %v1867, 1086341312
  %v1900 = vmin.bf16 %v1868, 1086341312
  %v1901 = vmin.bf16 %v1869, 1086341312
  %v1902 = vmin.bf16 %v1870, 1086341312
  %v1903 = vmin.bf16 %v1871, 1086341312
  %v1904 = vmin.bf16 %v1872, 1086341312
  %v1905 = vmin.bf16 %v1873, 1086341312
  %v1906 = vmin.bf16 %v1874, 1086341312
  %v1907 = vmin.bf16 %v1875, 1086341312
  %v1908 = vmin.bf16 %v1876, 1086341312
  %v1909 = vmin.bf16 %v1877, 1086341312
  %v1910 = vmin.bf16 %v1878, 1086341312
  %v1911 = vmin.bf16 %v1879, 1086341312
  %v1912 = vmin.bf16 %v1880, 1086341312
  %v1913 = vmin.bf16 %v1881, 1086341312
  %v1914 = vmin.bf16 %v1882, 1086341312
  %v1915 = vmin.bf16 %v1883, 1086341312
  %v1916 = vmin.bf16 %v1884, 1086341312
  %v1917 = vmin.bf16 %v1885, 1086341312
  %v1918 = vmin.bf16 %v1886, 1086341312
  %v1919 = vmin.bf16 %v1887, 1086341312
  %v1920 = vmin.bf16 %v1888, 1086341312
  %v1921 = vmin.bf16 %v1889, 1086341312
  %v1922 = vmin.bf16 %v1890, 1086341312
  %v1923 = vmin.bf16 %v1891, 1086341312
  %v1924 = vmin.bf16 %v1892, 1086341312
  %v1925 = vmin.bf16 %v1893, 1086341312
  %v1926 = vmul.bf16 %v1798, %v1894
  %v1927 = vmul.bf16 %v1799, %v1895
  %v1928 = vmul.bf16 %v1800, %v1896
  %v1929 = vmul.bf16 %v1801, %v1897
  %v1930 = vmul.bf16 %v1802, %v1898
  %v1931 = vmul.bf16 %v1803, %v1899
  %v1932 = vmul.bf16 %v1804, %v1900
  %v1933 = vmul.bf16 %v1805, %v1901
  %v1934 = vmul.bf16 %v1806, %v1902
  %v1935 = vmul.bf16 %v1807, %v1903
  %v1936 = vmul.bf16 %v1808, %v1904
  %v1937 = vmul.bf16 %v1809, %v1905
  %v1938 = vmul.bf16 %v1810, %v1906
  %v1939 = vmul.bf16 %v1811, %v1907
  %v1940 = vmul.bf16 %v1812, %v1908
  %v1941 = vmul.bf16 %v1813, %v1909
  %v1942 = vmul.bf16 %v1814, %v1910
  %v1943 = vmul.bf16 %v1815, %v1911
  %v1944 = vmul.bf16 %v1816, %v1912
  %v1945 = vmul.bf16 %v1817, %v1913
  %v1946 = vmul.bf16 %v1818, %v1914
  %v1947 = vmul.bf16 %v1819, %v1915
  %v1948 = vmul.bf16 %v1820, %v1916
  %v1949 = vmul.bf16 %v1821, %v1917
  %v1950 = vmul.bf16 %v1822, %v1918
  %v1951 = vmul.bf16 %v1823, %v1919
  %v1952 = vmul.bf16 %v1824, %v1920
  %v1953 = vmul.bf16 %v1825, %v1921
  %v1954 = vmul.bf16 %v1826, %v1922
  %v1955 = vmul.bf16 %v1827, %v1923
  %v1956 = vmul.bf16 %v1828, %v1924
  %v1957 = vmul.bf16 %v1829, %v1925
  %v1958 = vld [vmem:[%s5] sm:$0xff]
  %v1959 = vld [vmem:[%s5 + $0x8] sm:$0xff]
  %v1960 = vld [vmem:[%s5 + $0x10] sm:$0xff]
  %v1961 = vld [vmem:[%s5 + $0x18] sm:$0xff]
  %v1962 = vld [vmem:[%s5 + $0x20] sm:$0xff]
  %v1963 = vld [vmem:[%s5 + $0x28] sm:$0xff]
  %v1964 = vld [vmem:[%s5 + $0x30] sm:$0xff]
  %v1965 = vld [vmem:[%s5 + $0x38] sm:$0xff]
  %v1966 = vld [vmem:[%s5 + $0x40] sm:$0xff]
  %v1967 = vld [vmem:[%s5 + $0x48] sm:$0xff]
  %v1968 = vld [vmem:[%s5 + $0x50] sm:$0xff]
  %v1969 = vld [vmem:[%s5 + $0x58] sm:$0xff]
  %v1970 = vld [vmem:[%s5 + $0x60] sm:$0xff]
  %v1971 = vld [vmem:[%s5 + $0x68] sm:$0xff]
  %v1972 = vld [vmem:[%s5 + $0x70] sm:$0xff]
  %v1973 = vld [vmem:[%s5 + $0x78] sm:$0xff]
  %v1974 = vld [vmem:[%s5 + $0x80] sm:$0xff]
  %v1975 = vld [vmem:[%s5 + $0x88] sm:$0xff]
  %v1976 = vld [vmem:[%s5 + $0x90] sm:$0xff]
  %v1977 = vld [vmem:[%s5 + $0x98] sm:$0xff]
  %v1978 = vld [vmem:[%s5 + $0xa0] sm:$0xff]
  %v1979 = vld [vmem:[%s5 + $0xa8] sm:$0xff]
  %v1980 = vld [vmem:[%s5 + $0xb0] sm:$0xff]
  %v1981 = vld [vmem:[%s5 + $0xb8] sm:$0xff]
  %v1982 = vld [vmem:[%s5 + $0xc0] sm:$0xff]
  %v1983 = vld [vmem:[%s5 + $0xc8] sm:$0xff]
  %v1984 = vld [vmem:[%s5 + $0xd0] sm:$0xff]
  %v1985 = vld [vmem:[%s5 + $0xd8] sm:$0xff]
  %v1986 = vld [vmem:[%s5 + $0xe0] sm:$0xff]
  %v1987 = vld [vmem:[%s5 + $0xe8] sm:$0xff]
  %v1988 = vld [vmem:[%s5 + $0xf0] sm:$0xff]
  %v1989 = vld [vmem:[%s5 + $0xf8] sm:$0xff]
  %v1990 = vld [vmem:[%s5 + $0x100] sm:$0xff]
  %v1991 = vld [vmem:[%s5 + $0x108] sm:$0xff]
  %v1992 = vld [vmem:[%s5 + $0x110] sm:$0xff]
  %v1993 = vld [vmem:[%s5 + $0x118] sm:$0xff]
  %v1994 = vld [vmem:[%s5 + $0x120] sm:$0xff]
  %v1995 = vld [vmem:[%s5 + $0x128] sm:$0xff]
  %v1996 = vld [vmem:[%s5 + $0x130] sm:$0xff]
  %v1997 = vld [vmem:[%s5 + $0x138] sm:$0xff]
  %v1998 = vld [vmem:[%s5 + $0x140] sm:$0xff]
  %v1999 = vld [vmem:[%s5 + $0x148] sm:$0xff]
  %v2000 = vld [vmem:[%s5 + $0x150] sm:$0xff]
  %v2001 = vld [vmem:[%s5 + $0x158] sm:$0xff]
  %v2002 = vld [vmem:[%s5 + $0x160] sm:$0xff]
  %v2003 = vld [vmem:[%s5 + $0x168] sm:$0xff]
  %v2004 = vld [vmem:[%s5 + $0x170] sm:$0xff]
  %v2005 = vld [vmem:[%s5 + $0x178] sm:$0xff]
  %v2006 = vld [vmem:[%s5 + $0x180] sm:$0xff]
  %v2007 = vld [vmem:[%s5 + $0x188] sm:$0xff]
  %v2008 = vld [vmem:[%s5 + $0x190] sm:$0xff]
  %v2009 = vld [vmem:[%s5 + $0x198] sm:$0xff]
  %v2010 = vld [vmem:[%s5 + $0x1a0] sm:$0xff]
  %v2011 = vld [vmem:[%s5 + $0x1a8] sm:$0xff]
  %v2012 = vld [vmem:[%s5 + $0x1b0] sm:$0xff]
  %v2013 = vld [vmem:[%s5 + $0x1b8] sm:$0xff]
  %v2014 = vld [vmem:[%s5 + $0x1c0] sm:$0xff]
  %v2015 = vld [vmem:[%s5 + $0x1c8] sm:$0xff]
  %v2016 = vld [vmem:[%s5 + $0x1d0] sm:$0xff]
  %v2017 = vld [vmem:[%s5 + $0x1d8] sm:$0xff]
  %v2018 = vld [vmem:[%s5 + $0x1e0] sm:$0xff]
  %v2019 = vld [vmem:[%s5 + $0x1e8] sm:$0xff]
  %v2020 = vld [vmem:[%s5 + $0x1f0] sm:$0xff]
  %v2021 = vld [vmem:[%s5 + $0x1f8] sm:$0xff]
  %v2022 = vld [vmem:[%s5 + $0x200] sm:$0xff]
  %v2023 = vld [vmem:[%s5 + $0x208] sm:$0xff]
  %v2024 = vld [vmem:[%s5 + $0x210] sm:$0xff]
  %v2025 = vld [vmem:[%s5 + $0x218] sm:$0xff]
  %v2026 = vld [vmem:[%s5 + $0x220] sm:$0xff]
  %v2027 = vld [vmem:[%s5 + $0x228] sm:$0xff]
  %v2028 = vld [vmem:[%s5 + $0x230] sm:$0xff]
  %v2029 = vld [vmem:[%s5 + $0x238] sm:$0xff]
  %v2030 = vld [vmem:[%s5 + $0x240] sm:$0xff]
  %v2031 = vld [vmem:[%s5 + $0x248] sm:$0xff]
  %v2032 = vld [vmem:[%s5 + $0x250] sm:$0xff]
  %v2033 = vld [vmem:[%s5 + $0x258] sm:$0xff]
  %v2034 = vld [vmem:[%s5 + $0x260] sm:$0xff]
  %v2035 = vld [vmem:[%s5 + $0x268] sm:$0xff]
  %v2036 = vld [vmem:[%s5 + $0x270] sm:$0xff]
  %v2037 = vld [vmem:[%s5 + $0x278] sm:$0xff]
  %v2038 = vld [vmem:[%s5 + $0x280] sm:$0xff]
  %v2039 = vld [vmem:[%s5 + $0x288] sm:$0xff]
  %v2040 = vld [vmem:[%s5 + $0x290] sm:$0xff]
  %v2041 = vld [vmem:[%s5 + $0x298] sm:$0xff]
  %v2042 = vld [vmem:[%s5 + $0x2a0] sm:$0xff]
  %v2043 = vld [vmem:[%s5 + $0x2a8] sm:$0xff]
  %v2044 = vld [vmem:[%s5 + $0x2b0] sm:$0xff]
  %v2045 = vld [vmem:[%s5 + $0x2b8] sm:$0xff]
  %v2046 = vld [vmem:[%s5 + $0x2c0] sm:$0xff]
  %v2047 = vld [vmem:[%s5 + $0x2c8] sm:$0xff]
  %v2048 = vld [vmem:[%s5 + $0x2d0] sm:$0xff]
  %v2049 = vld [vmem:[%s5 + $0x2d8] sm:$0xff]
  %v2050 = vld [vmem:[%s5 + $0x2e0] sm:$0xff]
  %v2051 = vld [vmem:[%s5 + $0x2e8] sm:$0xff]
  %v2052 = vld [vmem:[%s5 + $0x2f0] sm:$0xff]
  %v2053 = vld [vmem:[%s5 + $0x2f8] sm:$0xff]
  %v2054 = vld [vmem:[%s5 + $0x300] sm:$0xff]
  %v2055 = vld [vmem:[%s5 + $0x308] sm:$0xff]
  %v2056 = vld [vmem:[%s5 + $0x310] sm:$0xff]
  %v2057 = vld [vmem:[%s5 + $0x318] sm:$0xff]
  %v2058 = vld [vmem:[%s5 + $0x320] sm:$0xff]
  %v2059 = vld [vmem:[%s5 + $0x328] sm:$0xff]
  %v2060 = vld [vmem:[%s5 + $0x330] sm:$0xff]
  %v2061 = vld [vmem:[%s5 + $0x338] sm:$0xff]
  %v2062 = vld [vmem:[%s5 + $0x340] sm:$0xff]
  %v2063 = vld [vmem:[%s5 + $0x348] sm:$0xff]
  %v2064 = vld [vmem:[%s5 + $0x350] sm:$0xff]
  %v2065 = vld [vmem:[%s5 + $0x358] sm:$0xff]
  %v2066 = vld [vmem:[%s5 + $0x360] sm:$0xff]
  %v2067 = vld [vmem:[%s5 + $0x368] sm:$0xff]
  %v2068 = vld [vmem:[%s5 + $0x370] sm:$0xff]
  %v2069 = vld [vmem:[%s5 + $0x378] sm:$0xff]
  %v2070 = vld [vmem:[%s5 + $0x380] sm:$0xff]
  %v2071 = vld [vmem:[%s5 + $0x388] sm:$0xff]
  %v2072 = vld [vmem:[%s5 + $0x390] sm:$0xff]
  %v2073 = vld [vmem:[%s5 + $0x398] sm:$0xff]
  %v2074 = vld [vmem:[%s5 + $0x3a0] sm:$0xff]
  %v2075 = vld [vmem:[%s5 + $0x3a8] sm:$0xff]
  %v2076 = vld [vmem:[%s5 + $0x3b0] sm:$0xff]
  %v2077 = vld [vmem:[%s5 + $0x3b8] sm:$0xff]
  %v2078 = vld [vmem:[%s5 + $0x3c0] sm:$0xff]
  %v2079 = vld [vmem:[%s5 + $0x3c8] sm:$0xff]
  %v2080 = vld [vmem:[%s5 + $0x3d0] sm:$0xff]
  %v2081 = vld [vmem:[%s5 + $0x3d8] sm:$0xff]
  %v2082 = vld [vmem:[%s5 + $0x3e0] sm:$0xff]
  %v2083 = vld [vmem:[%s5 + $0x3e8] sm:$0xff]
  %v2084 = vld [vmem:[%s5 + $0x3f0] sm:$0xff]
  %v2085 = vld [vmem:[%s5 + $0x3f8] sm:$0xff]
  %v2086 = vld [vmem:[%s5 + $0x400] sm:$0xff]
  %v2087 = vld [vmem:[%s5 + $0x408] sm:$0xff]
  %v2088 = vld [vmem:[%s5 + $0x410] sm:$0xff]
  %v2089 = vld [vmem:[%s5 + $0x418] sm:$0xff]
  %v2090 = vld [vmem:[%s5 + $0x420] sm:$0xff]
  %v2091 = vld [vmem:[%s5 + $0x428] sm:$0xff]
  %v2092 = vld [vmem:[%s5 + $0x430] sm:$0xff]
  %v2093 = vld [vmem:[%s5 + $0x438] sm:$0xff]
  %v2094 = vld [vmem:[%s5 + $0x440] sm:$0xff]
  %v2095 = vld [vmem:[%s5 + $0x448] sm:$0xff]
  %v2096 = vld [vmem:[%s5 + $0x450] sm:$0xff]
  %v2097 = vld [vmem:[%s5 + $0x458] sm:$0xff]
  %v2098 = vld [vmem:[%s5 + $0x460] sm:$0xff]
  %v2099 = vld [vmem:[%s5 + $0x468] sm:$0xff]
  %v2100 = vld [vmem:[%s5 + $0x470] sm:$0xff]
  %v2101 = vld [vmem:[%s5 + $0x478] sm:$0xff]
  %v2102 = vld [vmem:[%s5 + $0x480] sm:$0xff]
  %v2103 = vld [vmem:[%s5 + $0x488] sm:$0xff]
  %v2104 = vld [vmem:[%s5 + $0x490] sm:$0xff]
  %v2105 = vld [vmem:[%s5 + $0x498] sm:$0xff]
  %v2106 = vld [vmem:[%s5 + $0x4a0] sm:$0xff]
  %v2107 = vld [vmem:[%s5 + $0x4a8] sm:$0xff]
  %v2108 = vld [vmem:[%s5 + $0x4b0] sm:$0xff]
  %v2109 = vld [vmem:[%s5 + $0x4b8] sm:$0xff]
  %v2110 = vld [vmem:[%s5 + $0x4c0] sm:$0xff]
  %v2111 = vld [vmem:[%s5 + $0x4c8] sm:$0xff]
  %v2112 = vld [vmem:[%s5 + $0x4d0] sm:$0xff]
  %v2113 = vld [vmem:[%s5 + $0x4d8] sm:$0xff]
  %v2114 = vld [vmem:[%s5 + $0x4e0] sm:$0xff]
  %v2115 = vld [vmem:[%s5 + $0x4e8] sm:$0xff]
  %v2116 = vld [vmem:[%s5 + $0x4f0] sm:$0xff]
  %v2117 = vld [vmem:[%s5 + $0x4f8] sm:$0xff]
  %v2118 = vld [vmem:[%s5 + $0x500] sm:$0xff]
  %v2119 = vld [vmem:[%s5 + $0x508] sm:$0xff]
  %v2120 = vld [vmem:[%s5 + $0x510] sm:$0xff]
  %v2121 = vld [vmem:[%s5 + $0x518] sm:$0xff]
  %v2122 = vld [vmem:[%s5 + $0x520] sm:$0xff]
  %v2123 = vld [vmem:[%s5 + $0x528] sm:$0xff]
  %v2124 = vld [vmem:[%s5 + $0x530] sm:$0xff]
  %v2125 = vld [vmem:[%s5 + $0x538] sm:$0xff]
  %v2126 = vld [vmem:[%s5 + $0x540] sm:$0xff]
  %v2127 = vld [vmem:[%s5 + $0x548] sm:$0xff]
  %v2128 = vld [vmem:[%s5 + $0x550] sm:$0xff]
  %v2129 = vld [vmem:[%s5 + $0x558] sm:$0xff]
  %v2130 = vld [vmem:[%s5 + $0x560] sm:$0xff]
  %v2131 = vld [vmem:[%s5 + $0x568] sm:$0xff]
  %v2132 = vld [vmem:[%s5 + $0x570] sm:$0xff]
  %v2133 = vld [vmem:[%s5 + $0x578] sm:$0xff]
  %v2134 = vld [vmem:[%s5 + $0x580] sm:$0xff]
  %v2135 = vld [vmem:[%s5 + $0x588] sm:$0xff]
  %v2136 = vld [vmem:[%s5 + $0x590] sm:$0xff]
  %v2137 = vld [vmem:[%s5 + $0x598] sm:$0xff]
  %v2138 = vld [vmem:[%s5 + $0x5a0] sm:$0xff]
  %v2139 = vld [vmem:[%s5 + $0x5a8] sm:$0xff]
  %v2140 = vld [vmem:[%s5 + $0x5b0] sm:$0xff]
  %v2141 = vld [vmem:[%s5 + $0x5b8] sm:$0xff]
  %v2142 = vld [vmem:[%s5 + $0x5c0] sm:$0xff]
  %v2143 = vld [vmem:[%s5 + $0x5c8] sm:$0xff]
  %v2144 = vld [vmem:[%s5 + $0x5d0] sm:$0xff]
  %v2145 = vld [vmem:[%s5 + $0x5d8] sm:$0xff]
  %v2146 = vld [vmem:[%s5 + $0x5e0] sm:$0xff]
  %v2147 = vld [vmem:[%s5 + $0x5e8] sm:$0xff]
  %v2148 = vld [vmem:[%s5 + $0x5f0] sm:$0xff]
  %v2149 = vld [vmem:[%s5 + $0x5f8] sm:$0xff]
  %v2150 = vld [vmem:[%s5 + $0x600] sm:$0xff]
  %v2151 = vld [vmem:[%s5 + $0x608] sm:$0xff]
  %v2152 = vld [vmem:[%s5 + $0x610] sm:$0xff]
  %v2153 = vld [vmem:[%s5 + $0x618] sm:$0xff]
  %v2154 = vld [vmem:[%s5 + $0x620] sm:$0xff]
  %v2155 = vld [vmem:[%s5 + $0x628] sm:$0xff]
  %v2156 = vld [vmem:[%s5 + $0x630] sm:$0xff]
  %v2157 = vld [vmem:[%s5 + $0x638] sm:$0xff]
  %v2158 = vld [vmem:[%s5 + $0x640] sm:$0xff]
  %v2159 = vld [vmem:[%s5 + $0x648] sm:$0xff]
  %v2160 = vld [vmem:[%s5 + $0x650] sm:$0xff]
  %v2161 = vld [vmem:[%s5 + $0x658] sm:$0xff]
  %v2162 = vld [vmem:[%s5 + $0x660] sm:$0xff]
  %v2163 = vld [vmem:[%s5 + $0x668] sm:$0xff]
  %v2164 = vld [vmem:[%s5 + $0x670] sm:$0xff]
  %v2165 = vld [vmem:[%s5 + $0x678] sm:$0xff]
  %v2166 = vld [vmem:[%s5 + $0x680] sm:$0xff]
  %v2167 = vld [vmem:[%s5 + $0x688] sm:$0xff]
  %v2168 = vld [vmem:[%s5 + $0x690] sm:$0xff]
  %v2169 = vld [vmem:[%s5 + $0x698] sm:$0xff]
  %v2170 = vld [vmem:[%s5 + $0x6a0] sm:$0xff]
  %v2171 = vld [vmem:[%s5 + $0x6a8] sm:$0xff]
  %v2172 = vld [vmem:[%s5 + $0x6b0] sm:$0xff]
  %v2173 = vld [vmem:[%s5 + $0x6b8] sm:$0xff]
  %v2174 = vld [vmem:[%s5 + $0x6c0] sm:$0xff]
  %v2175 = vld [vmem:[%s5 + $0x6c8] sm:$0xff]
  %v2176 = vld [vmem:[%s5 + $0x6d0] sm:$0xff]
  %v2177 = vld [vmem:[%s5 + $0x6d8] sm:$0xff]
  %v2178 = vld [vmem:[%s5 + $0x6e0] sm:$0xff]
  %v2179 = vld [vmem:[%s5 + $0x6e8] sm:$0xff]
  %v2180 = vld [vmem:[%s5 + $0x6f0] sm:$0xff]
  %v2181 = vld [vmem:[%s5 + $0x6f8] sm:$0xff]
  %v2182 = vld [vmem:[%s5 + $0x700] sm:$0xff]
  %v2183 = vld [vmem:[%s5 + $0x708] sm:$0xff]
  %v2184 = vld [vmem:[%s5 + $0x710] sm:$0xff]
  %v2185 = vld [vmem:[%s5 + $0x718] sm:$0xff]
  %v2186 = vld [vmem:[%s5 + $0x720] sm:$0xff]
  %v2187 = vld [vmem:[%s5 + $0x728] sm:$0xff]
  %v2188 = vld [vmem:[%s5 + $0x730] sm:$0xff]
  %v2189 = vld [vmem:[%s5 + $0x738] sm:$0xff]
  %v2190 = vld [vmem:[%s5 + $0x740] sm:$0xff]
  %v2191 = vld [vmem:[%s5 + $0x748] sm:$0xff]
  %v2192 = vld [vmem:[%s5 + $0x750] sm:$0xff]
  %v2193 = vld [vmem:[%s5 + $0x758] sm:$0xff]
  %v2194 = vld [vmem:[%s5 + $0x760] sm:$0xff]
  %v2195 = vld [vmem:[%s5 + $0x768] sm:$0xff]
  %v2196 = vld [vmem:[%s5 + $0x770] sm:$0xff]
  %v2197 = vld [vmem:[%s5 + $0x778] sm:$0xff]
  %v2198 = vld [vmem:[%s5 + $0x780] sm:$0xff]
  %v2199 = vld [vmem:[%s5 + $0x788] sm:$0xff]
  %v2200 = vld [vmem:[%s5 + $0x790] sm:$0xff]
  %v2201 = vld [vmem:[%s5 + $0x798] sm:$0xff]
  %v2202 = vld [vmem:[%s5 + $0x7a0] sm:$0xff]
  %v2203 = vld [vmem:[%s5 + $0x7a8] sm:$0xff]
  %v2204 = vld [vmem:[%s5 + $0x7b0] sm:$0xff]
  %v2205 = vld [vmem:[%s5 + $0x7b8] sm:$0xff]
  %v2206 = vld [vmem:[%s5 + $0x7c0] sm:$0xff]
  %v2207 = vld [vmem:[%s5 + $0x7c8] sm:$0xff]
  %v2208 = vld [vmem:[%s5 + $0x7d0] sm:$0xff]
  %v2209 = vld [vmem:[%s5 + $0x7d8] sm:$0xff]
  %v2210 = vld [vmem:[%s5 + $0x7e0] sm:$0xff]
  %v2211 = vld [vmem:[%s5 + $0x7e8] sm:$0xff]
  %v2212 = vld [vmem:[%s5 + $0x7f0] sm:$0xff]
  %v2213 = vld [vmem:[%s5 + $0x7f8] sm:$0xff]
  %v2214 = vld [vmem:[%s5 + $0x800] sm:$0xff]
  %v2215 = vld [vmem:[%s5 + $0x808] sm:$0xff]
  %v2216 = vld [vmem:[%s5 + $0x810] sm:$0xff]
  %v2217 = vld [vmem:[%s5 + $0x818] sm:$0xff]
  %v2218 = vld [vmem:[%s5 + $0x820] sm:$0xff]
  %v2219 = vld [vmem:[%s5 + $0x828] sm:$0xff]
  %v2220 = vld [vmem:[%s5 + $0x830] sm:$0xff]
  %v2221 = vld [vmem:[%s5 + $0x838] sm:$0xff]
  %v2222 = vld [vmem:[%s5 + $0x840] sm:$0xff]
  %v2223 = vld [vmem:[%s5 + $0x848] sm:$0xff]
  %v2224 = vld [vmem:[%s5 + $0x850] sm:$0xff]
  %v2225 = vld [vmem:[%s5 + $0x858] sm:$0xff]
  %v2226 = vld [vmem:[%s5 + $0x860] sm:$0xff]
  %v2227 = vld [vmem:[%s5 + $0x868] sm:$0xff]
  %v2228 = vld [vmem:[%s5 + $0x870] sm:$0xff]
  %v2229 = vld [vmem:[%s5 + $0x878] sm:$0xff]
  %v2230 = vld [vmem:[%s5 + $0x880] sm:$0xff]
  %v2231 = vld [vmem:[%s5 + $0x888] sm:$0xff]
  %v2232 = vld [vmem:[%s5 + $0x890] sm:$0xff]
  %v2233 = vld [vmem:[%s5 + $0x898] sm:$0xff]
  %v2234 = vld [vmem:[%s5 + $0x8a0] sm:$0xff]
  %v2235 = vld [vmem:[%s5 + $0x8a8] sm:$0xff]
  %v2236 = vld [vmem:[%s5 + $0x8b0] sm:$0xff]
  %v2237 = vld [vmem:[%s5 + $0x8b8] sm:$0xff]
  %v2238 = vld [vmem:[%s5 + $0x8c0] sm:$0xff]
  %v2239 = vld [vmem:[%s5 + $0x8c8] sm:$0xff]
  %v2240 = vld [vmem:[%s5 + $0x8d0] sm:$0xff]
  %v2241 = vld [vmem:[%s5 + $0x8d8] sm:$0xff]
  %v2242 = vld [vmem:[%s5 + $0x8e0] sm:$0xff]
  %v2243 = vld [vmem:[%s5 + $0x8e8] sm:$0xff]
  %v2244 = vld [vmem:[%s5 + $0x8f0] sm:$0xff]
  %v2245 = vld [vmem:[%s5 + $0x8f8] sm:$0xff]
  %v2246 = vld [vmem:[%s5 + $0x900] sm:$0xff]
  %v2247 = vld [vmem:[%s5 + $0x908] sm:$0xff]
  %v2248 = vld [vmem:[%s5 + $0x910] sm:$0xff]
  %v2249 = vld [vmem:[%s5 + $0x918] sm:$0xff]
  %v2250 = vld [vmem:[%s5 + $0x920] sm:$0xff]
  %v2251 = vld [vmem:[%s5 + $0x928] sm:$0xff]
  %v2252 = vld [vmem:[%s5 + $0x930] sm:$0xff]
  %v2253 = vld [vmem:[%s5 + $0x938] sm:$0xff]
  %v2254 = vld [vmem:[%s5 + $0x940] sm:$0xff]
  %v2255 = vld [vmem:[%s5 + $0x948] sm:$0xff]
  %v2256 = vld [vmem:[%s5 + $0x950] sm:$0xff]
  %v2257 = vld [vmem:[%s5 + $0x958] sm:$0xff]
  %v2258 = vld [vmem:[%s5 + $0x960] sm:$0xff]
  %v2259 = vld [vmem:[%s5 + $0x968] sm:$0xff]
  %v2260 = vld [vmem:[%s5 + $0x970] sm:$0xff]
  %v2261 = vld [vmem:[%s5 + $0x978] sm:$0xff]
  %v2262 = vld [vmem:[%s5 + $0x980] sm:$0xff]
  %v2263 = vld [vmem:[%s5 + $0x988] sm:$0xff]
  %v2264 = vld [vmem:[%s5 + $0x990] sm:$0xff]
  %v2265 = vld [vmem:[%s5 + $0x998] sm:$0xff]
  %v2266 = vld [vmem:[%s5 + $0x9a0] sm:$0xff]
  %v2267 = vld [vmem:[%s5 + $0x9a8] sm:$0xff]
  %v2268 = vld [vmem:[%s5 + $0x9b0] sm:$0xff]
  %v2269 = vld [vmem:[%s5 + $0x9b8] sm:$0xff]
  %v2270 = vld [vmem:[%s5 + $0x9c0] sm:$0xff]
  %v2271 = vld [vmem:[%s5 + $0x9c8] sm:$0xff]
  %v2272 = vld [vmem:[%s5 + $0x9d0] sm:$0xff]
  %v2273 = vld [vmem:[%s5 + $0x9d8] sm:$0xff]
  %v2274 = vld [vmem:[%s5 + $0x9e0] sm:$0xff]
  %v2275 = vld [vmem:[%s5 + $0x9e8] sm:$0xff]
  %v2276 = vld [vmem:[%s5 + $0x9f0] sm:$0xff]
  %v2277 = vld [vmem:[%s5 + $0x9f8] sm:$0xff]
  %v2278 = vld [vmem:[%s5 + $0xa00] sm:$0xff]
  %v2279 = vld [vmem:[%s5 + $0xa08] sm:$0xff]
  %v2280 = vld [vmem:[%s5 + $0xa10] sm:$0xff]
  %v2281 = vld [vmem:[%s5 + $0xa18] sm:$0xff]
  %v2282 = vld [vmem:[%s5 + $0xa20] sm:$0xff]
  %v2283 = vld [vmem:[%s5 + $0xa28] sm:$0xff]
  %v2284 = vld [vmem:[%s5 + $0xa30] sm:$0xff]
  %v2285 = vld [vmem:[%s5 + $0xa38] sm:$0xff]
  %v2286 = vld [vmem:[%s5 + $0xa40] sm:$0xff]
  %v2287 = vld [vmem:[%s5 + $0xa48] sm:$0xff]
  %v2288 = vld [vmem:[%s5 + $0xa50] sm:$0xff]
  %v2289 = vld [vmem:[%s5 + $0xa58] sm:$0xff]
  %v2290 = vld [vmem:[%s5 + $0xa60] sm:$0xff]
  %v2291 = vld [vmem:[%s5 + $0xa68] sm:$0xff]
  %v2292 = vld [vmem:[%s5 + $0xa70] sm:$0xff]
  %v2293 = vld [vmem:[%s5 + $0xa78] sm:$0xff]
  %v2294 = vld [vmem:[%s5 + $0xa80] sm:$0xff]
  %v2295 = vld [vmem:[%s5 + $0xa88] sm:$0xff]
  %v2296 = vld [vmem:[%s5 + $0xa90] sm:$0xff]
  %v2297 = vld [vmem:[%s5 + $0xa98] sm:$0xff]
  %v2298 = vld [vmem:[%s5 + $0xaa0] sm:$0xff]
  %v2299 = vld [vmem:[%s5 + $0xaa8] sm:$0xff]
  %v2300 = vld [vmem:[%s5 + $0xab0] sm:$0xff]
  %v2301 = vld [vmem:[%s5 + $0xab8] sm:$0xff]
  %v2302 = vld [vmem:[%s5 + $0xac0] sm:$0xff]
  %v2303 = vld [vmem:[%s5 + $0xac8] sm:$0xff]
  %v2304 = vld [vmem:[%s5 + $0xad0] sm:$0xff]
  %v2305 = vld [vmem:[%s5 + $0xad8] sm:$0xff]
  %v2306 = vld [vmem:[%s5 + $0xae0] sm:$0xff]
  %v2307 = vld [vmem:[%s5 + $0xae8] sm:$0xff]
  %v2308 = vld [vmem:[%s5 + $0xaf0] sm:$0xff]
  %v2309 = vld [vmem:[%s5 + $0xaf8] sm:$0xff]
  %v2310 = vld [vmem:[%s5 + $0xb00] sm:$0xff]
  %v2311 = vld [vmem:[%s5 + $0xb08] sm:$0xff]
  %v2312 = vld [vmem:[%s5 + $0xb10] sm:$0xff]
  %v2313 = vld [vmem:[%s5 + $0xb18] sm:$0xff]
  %v2314 = vld [vmem:[%s5 + $0xb20] sm:$0xff]
  %v2315 = vld [vmem:[%s5 + $0xb28] sm:$0xff]
  %v2316 = vld [vmem:[%s5 + $0xb30] sm:$0xff]
  %v2317 = vld [vmem:[%s5 + $0xb38] sm:$0xff]
  %v2318 = vld [vmem:[%s5 + $0xb40] sm:$0xff]
  %v2319 = vld [vmem:[%s5 + $0xb48] sm:$0xff]
  %v2320 = vld [vmem:[%s5 + $0xb50] sm:$0xff]
  %v2321 = vld [vmem:[%s5 + $0xb58] sm:$0xff]
  %v2322 = vld [vmem:[%s5 + $0xb60] sm:$0xff]
  %v2323 = vld [vmem:[%s5 + $0xb68] sm:$0xff]
  %v2324 = vld [vmem:[%s5 + $0xb70] sm:$0xff]
  %v2325 = vld [vmem:[%s5 + $0xb78] sm:$0xff]
  %v2326 = vld [vmem:[%s5 + $0xb80] sm:$0xff]
  %v2327 = vld [vmem:[%s5 + $0xb88] sm:$0xff]
  %v2328 = vld [vmem:[%s5 + $0xb90] sm:$0xff]
  %v2329 = vld [vmem:[%s5 + $0xb98] sm:$0xff]
  %v2330 = vld [vmem:[%s5 + $0xba0] sm:$0xff]
  %v2331 = vld [vmem:[%s5 + $0xba8] sm:$0xff]
  %v2332 = vld [vmem:[%s5 + $0xbb0] sm:$0xff]
  %v2333 = vld [vmem:[%s5 + $0xbb8] sm:$0xff]
  %v2334 = vld [vmem:[%s5 + $0xbc0] sm:$0xff]
  %v2335 = vld [vmem:[%s5 + $0xbc8] sm:$0xff]
  %v2336 = vld [vmem:[%s5 + $0xbd0] sm:$0xff]
  %v2337 = vld [vmem:[%s5 + $0xbd8] sm:$0xff]
  %v2338 = vld [vmem:[%s5 + $0xbe0] sm:$0xff]
  %v2339 = vld [vmem:[%s5 + $0xbe8] sm:$0xff]
  %v2340 = vld [vmem:[%s5 + $0xbf0] sm:$0xff]
  %v2341 = vld [vmem:[%s5 + $0xbf8] sm:$0xff]
  %v2726 = vunpack.c.l.b16 %v1958
  %v2727 = vunpack.c.h.b16 %v1958
  %v2728 = vunpack.c.l.b16 %v1959
  %v2729 = vunpack.c.h.b16 %v1959
  %v2730 = vunpack.c.l.b16 %v1960
  %v2731 = vunpack.c.h.b16 %v1960
  %v2732 = vunpack.c.l.b16 %v1961
  %v2733 = vunpack.c.h.b16 %v1961
  %v2734 = vunpack.c.l.b16 %v1962
  %v2735 = vunpack.c.h.b16 %v1962
  %v2736 = vunpack.c.l.b16 %v1963
  %v2737 = vunpack.c.h.b16 %v1963
  %v2738 = vunpack.c.l.b16 %v1964
  %v2739 = vunpack.c.h.b16 %v1964
  %v2740 = vunpack.c.l.b16 %v1965
  %v2741 = vunpack.c.h.b16 %v1965
  %v2742 = vunpack.c.l.b16 %v1966
  %v2743 = vunpack.c.h.b16 %v1966
  %v2744 = vunpack.c.l.b16 %v1967
  %v2745 = vunpack.c.h.b16 %v1967
  %v2746 = vunpack.c.l.b16 %v1968
  %v2747 = vunpack.c.h.b16 %v1968
  %v2748 = vunpack.c.l.b16 %v1969
  %v2749 = vunpack.c.h.b16 %v1969
  %v2750 = vunpack.c.l.b16 %v1970
  %v2751 = vunpack.c.h.b16 %v1970
  %v2752 = vunpack.c.l.b16 %v1971
  %v2753 = vunpack.c.h.b16 %v1971
  %v2754 = vunpack.c.l.b16 %v1972
  %v2755 = vunpack.c.h.b16 %v1972
  %v2756 = vunpack.c.l.b16 %v1973
  %v2757 = vunpack.c.h.b16 %v1973
  %v2758 = vunpack.c.l.b16 %v1974
  %v2759 = vunpack.c.h.b16 %v1974
  %v2760 = vunpack.c.l.b16 %v1975
  %v2761 = vunpack.c.h.b16 %v1975
  %v2762 = vunpack.c.l.b16 %v1976
  %v2763 = vunpack.c.h.b16 %v1976
  %v2764 = vunpack.c.l.b16 %v1977
  %v2765 = vunpack.c.h.b16 %v1977
  %v2766 = vunpack.c.l.b16 %v1978
  %v2767 = vunpack.c.h.b16 %v1978
  %v2768 = vunpack.c.l.b16 %v1979
  %v2769 = vunpack.c.h.b16 %v1979
  %v2770 = vunpack.c.l.b16 %v1980
  %v2771 = vunpack.c.h.b16 %v1980
  %v2772 = vunpack.c.l.b16 %v1981
  %v2773 = vunpack.c.h.b16 %v1981
  %v2774 = vunpack.c.l.b16 %v1982
  %v2775 = vunpack.c.h.b16 %v1982
  %v2776 = vunpack.c.l.b16 %v1983
  %v2777 = vunpack.c.h.b16 %v1983
  %v2778 = vunpack.c.l.b16 %v1984
  %v2779 = vunpack.c.h.b16 %v1984
  %v2780 = vunpack.c.l.b16 %v1985
  %v2781 = vunpack.c.h.b16 %v1985
  %v2782 = vunpack.c.l.b16 %v1986
  %v2783 = vunpack.c.h.b16 %v1986
  %v2784 = vunpack.c.l.b16 %v1987
  %v2785 = vunpack.c.h.b16 %v1987
  %v2786 = vunpack.c.l.b16 %v1988
  %v2787 = vunpack.c.h.b16 %v1988
  %v2788 = vunpack.c.l.b16 %v1989
  %v2789 = vunpack.c.h.b16 %v1989
  %v2790 = vunpack.c.l.b16 %v1990
  %v2791 = vunpack.c.h.b16 %v1990
  %v2792 = vunpack.c.l.b16 %v1991
  %v2793 = vunpack.c.h.b16 %v1991
  %v2794 = vunpack.c.l.b16 %v1992
  %v2795 = vunpack.c.h.b16 %v1992
  %v2796 = vunpack.c.l.b16 %v1993
  %v2797 = vunpack.c.h.b16 %v1993
  %v2798 = vunpack.c.l.b16 %v1994
  %v2799 = vunpack.c.h.b16 %v1994
  %v2800 = vunpack.c.l.b16 %v1995
  %v2801 = vunpack.c.h.b16 %v1995
  %v2802 = vunpack.c.l.b16 %v1996
  %v2803 = vunpack.c.h.b16 %v1996
  %v2804 = vunpack.c.l.b16 %v1997
  %v2805 = vunpack.c.h.b16 %v1997
  %v2806 = vunpack.c.l.b16 %v1998
  %v2807 = vunpack.c.h.b16 %v1998
  %v2808 = vunpack.c.l.b16 %v1999
  %v2809 = vunpack.c.h.b16 %v1999
  %v2810 = vunpack.c.l.b16 %v2000
  %v2811 = vunpack.c.h.b16 %v2000
  %v2812 = vunpack.c.l.b16 %v2001
  %v2813 = vunpack.c.h.b16 %v2001
  %v2814 = vunpack.c.l.b16 %v2002
  %v2815 = vunpack.c.h.b16 %v2002
  %v2816 = vunpack.c.l.b16 %v2003
  %v2817 = vunpack.c.h.b16 %v2003
  %v2818 = vunpack.c.l.b16 %v2004
  %v2819 = vunpack.c.h.b16 %v2004
  %v2820 = vunpack.c.l.b16 %v2005
  %v2821 = vunpack.c.h.b16 %v2005
  %v2822 = vunpack.c.l.b16 %v2006
  %v2823 = vunpack.c.h.b16 %v2006
  %v2824 = vunpack.c.l.b16 %v2007
  %v2825 = vunpack.c.h.b16 %v2007
  %v2826 = vunpack.c.l.b16 %v2008
  %v2827 = vunpack.c.h.b16 %v2008
  %v2828 = vunpack.c.l.b16 %v2009
  %v2829 = vunpack.c.h.b16 %v2009
  %v2830 = vunpack.c.l.b16 %v2010
  %v2831 = vunpack.c.h.b16 %v2010
  %v2832 = vunpack.c.l.b16 %v2011
  %v2833 = vunpack.c.h.b16 %v2011
  %v2834 = vunpack.c.l.b16 %v2012
  %v2835 = vunpack.c.h.b16 %v2012
  %v2836 = vunpack.c.l.b16 %v2013
  %v2837 = vunpack.c.h.b16 %v2013
  %v2838 = vunpack.c.l.b16 %v2014
  %v2839 = vunpack.c.h.b16 %v2014
  %v2840 = vunpack.c.l.b16 %v2015
  %v2841 = vunpack.c.h.b16 %v2015
  %v2842 = vunpack.c.l.b16 %v2016
  %v2843 = vunpack.c.h.b16 %v2016
  %v2844 = vunpack.c.l.b16 %v2017
  %v2845 = vunpack.c.h.b16 %v2017
  %v2846 = vunpack.c.l.b16 %v2018
  %v2847 = vunpack.c.h.b16 %v2018
  %v2848 = vunpack.c.l.b16 %v2019
  %v2849 = vunpack.c.h.b16 %v2019
  %v2850 = vunpack.c.l.b16 %v2020
  %v2851 = vunpack.c.h.b16 %v2020
  %v2852 = vunpack.c.l.b16 %v2021
  %v2853 = vunpack.c.h.b16 %v2021
  %v2854 = vunpack.c.l.b16 %v2022
  %v2855 = vunpack.c.h.b16 %v2022
  %v2856 = vunpack.c.l.b16 %v2023
  %v2857 = vunpack.c.h.b16 %v2023
  %v2858 = vunpack.c.l.b16 %v2024
  %v2859 = vunpack.c.h.b16 %v2024
  %v2860 = vunpack.c.l.b16 %v2025
  %v2861 = vunpack.c.h.b16 %v2025
  %v2862 = vunpack.c.l.b16 %v2026
  %v2863 = vunpack.c.h.b16 %v2026
  %v2864 = vunpack.c.l.b16 %v2027
  %v2865 = vunpack.c.h.b16 %v2027
  %v2866 = vunpack.c.l.b16 %v2028
  %v2867 = vunpack.c.h.b16 %v2028
  %v2868 = vunpack.c.l.b16 %v2029
  %v2869 = vunpack.c.h.b16 %v2029
  %v2870 = vunpack.c.l.b16 %v2030
  %v2871 = vunpack.c.h.b16 %v2030
  %v2872 = vunpack.c.l.b16 %v2031
  %v2873 = vunpack.c.h.b16 %v2031
  %v2874 = vunpack.c.l.b16 %v2032
  %v2875 = vunpack.c.h.b16 %v2032
  %v2876 = vunpack.c.l.b16 %v2033
  %v2877 = vunpack.c.h.b16 %v2033
  %v2878 = vunpack.c.l.b16 %v2034
  %v2879 = vunpack.c.h.b16 %v2034
  %v2880 = vunpack.c.l.b16 %v2035
  %v2881 = vunpack.c.h.b16 %v2035
  %v2882 = vunpack.c.l.b16 %v2036
  %v2883 = vunpack.c.h.b16 %v2036
  %v2884 = vunpack.c.l.b16 %v2037
  %v2885 = vunpack.c.h.b16 %v2037
  %v2886 = vunpack.c.l.b16 %v2038
  %v2887 = vunpack.c.h.b16 %v2038
  %v2888 = vunpack.c.l.b16 %v2039
  %v2889 = vunpack.c.h.b16 %v2039
  %v2890 = vunpack.c.l.b16 %v2040
  %v2891 = vunpack.c.h.b16 %v2040
  %v2892 = vunpack.c.l.b16 %v2041
  %v2893 = vunpack.c.h.b16 %v2041
  %v2894 = vunpack.c.l.b16 %v2042
  %v2895 = vunpack.c.h.b16 %v2042
  %v2896 = vunpack.c.l.b16 %v2043
  %v2897 = vunpack.c.h.b16 %v2043
  %v2898 = vunpack.c.l.b16 %v2044
  %v2899 = vunpack.c.h.b16 %v2044
  %v2900 = vunpack.c.l.b16 %v2045
  %v2901 = vunpack.c.h.b16 %v2045
  %v2902 = vunpack.c.l.b16 %v2046
  %v2903 = vunpack.c.h.b16 %v2046
  %v2904 = vunpack.c.l.b16 %v2047
  %v2905 = vunpack.c.h.b16 %v2047
  %v2906 = vunpack.c.l.b16 %v2048
  %v2907 = vunpack.c.h.b16 %v2048
  %v2908 = vunpack.c.l.b16 %v2049
  %v2909 = vunpack.c.h.b16 %v2049
  %v2910 = vunpack.c.l.b16 %v2050
  %v2911 = vunpack.c.h.b16 %v2050
  %v2912 = vunpack.c.l.b16 %v2051
  %v2913 = vunpack.c.h.b16 %v2051
  %v2914 = vunpack.c.l.b16 %v2052
  %v2915 = vunpack.c.h.b16 %v2052
  %v2916 = vunpack.c.l.b16 %v2053
  %v2917 = vunpack.c.h.b16 %v2053
  %v2918 = vunpack.c.l.b16 %v2054
  %v2919 = vunpack.c.h.b16 %v2054
  %v2920 = vunpack.c.l.b16 %v2055
  %v2921 = vunpack.c.h.b16 %v2055
  %v2922 = vunpack.c.l.b16 %v2056
  %v2923 = vunpack.c.h.b16 %v2056
  %v2924 = vunpack.c.l.b16 %v2057
  %v2925 = vunpack.c.h.b16 %v2057
  %v2926 = vunpack.c.l.b16 %v2058
  %v2927 = vunpack.c.h.b16 %v2058
  %v2928 = vunpack.c.l.b16 %v2059
  %v2929 = vunpack.c.h.b16 %v2059
  %v2930 = vunpack.c.l.b16 %v2060
  %v2931 = vunpack.c.h.b16 %v2060
  %v2932 = vunpack.c.l.b16 %v2061
  %v2933 = vunpack.c.h.b16 %v2061
  %v2934 = vunpack.c.l.b16 %v2062
  %v2935 = vunpack.c.h.b16 %v2062
  %v2936 = vunpack.c.l.b16 %v2063
  %v2937 = vunpack.c.h.b16 %v2063
  %v2938 = vunpack.c.l.b16 %v2064
  %v2939 = vunpack.c.h.b16 %v2064
  %v2940 = vunpack.c.l.b16 %v2065
  %v2941 = vunpack.c.h.b16 %v2065
  %v2942 = vunpack.c.l.b16 %v2066
  %v2943 = vunpack.c.h.b16 %v2066
  %v2944 = vunpack.c.l.b16 %v2067
  %v2945 = vunpack.c.h.b16 %v2067
  %v2946 = vunpack.c.l.b16 %v2068
  %v2947 = vunpack.c.h.b16 %v2068
  %v2948 = vunpack.c.l.b16 %v2069
  %v2949 = vunpack.c.h.b16 %v2069
  %v2950 = vunpack.c.l.b16 %v2070
  %v2951 = vunpack.c.h.b16 %v2070
  %v2952 = vunpack.c.l.b16 %v2071
  %v2953 = vunpack.c.h.b16 %v2071
  %v2954 = vunpack.c.l.b16 %v2072
  %v2955 = vunpack.c.h.b16 %v2072
  %v2956 = vunpack.c.l.b16 %v2073
  %v2957 = vunpack.c.h.b16 %v2073
  %v2958 = vunpack.c.l.b16 %v2074
  %v2959 = vunpack.c.h.b16 %v2074
  %v2960 = vunpack.c.l.b16 %v2075
  %v2961 = vunpack.c.h.b16 %v2075
  %v2962 = vunpack.c.l.b16 %v2076
  %v2963 = vunpack.c.h.b16 %v2076
  %v2964 = vunpack.c.l.b16 %v2077
  %v2965 = vunpack.c.h.b16 %v2077
  %v2966 = vunpack.c.l.b16 %v2078
  %v2967 = vunpack.c.h.b16 %v2078
  %v2968 = vunpack.c.l.b16 %v2079
  %v2969 = vunpack.c.h.b16 %v2079
  %v2970 = vunpack.c.l.b16 %v2080
  %v2971 = vunpack.c.h.b16 %v2080
  %v2972 = vunpack.c.l.b16 %v2081
  %v2973 = vunpack.c.h.b16 %v2081
  %v2974 = vunpack.c.l.b16 %v2082
  %v2975 = vunpack.c.h.b16 %v2082
  %v2976 = vunpack.c.l.b16 %v2083
  %v2977 = vunpack.c.h.b16 %v2083
  %v2978 = vunpack.c.l.b16 %v2084
  %v2979 = vunpack.c.h.b16 %v2084
  %v2980 = vunpack.c.l.b16 %v2085
  %v2981 = vunpack.c.h.b16 %v2085
  %v2982 = vunpack.c.l.b16 %v2086
  %v2983 = vunpack.c.h.b16 %v2086
  %v2984 = vunpack.c.l.b16 %v2087
  %v2985 = vunpack.c.h.b16 %v2087
  %v2986 = vunpack.c.l.b16 %v2088
  %v2987 = vunpack.c.h.b16 %v2088
  %v2988 = vunpack.c.l.b16 %v2089
  %v2989 = vunpack.c.h.b16 %v2089
  %v2990 = vunpack.c.l.b16 %v2090
  %v2991 = vunpack.c.h.b16 %v2090
  %v2992 = vunpack.c.l.b16 %v2091
  %v2993 = vunpack.c.h.b16 %v2091
  %v2994 = vunpack.c.l.b16 %v2092
  %v2995 = vunpack.c.h.b16 %v2092
  %v2996 = vunpack.c.l.b16 %v2093
  %v2997 = vunpack.c.h.b16 %v2093
  %v2998 = vunpack.c.l.b16 %v2094
  %v2999 = vunpack.c.h.b16 %v2094
  %v3000 = vunpack.c.l.b16 %v2095
  %v3001 = vunpack.c.h.b16 %v2095
  %v3002 = vunpack.c.l.b16 %v2096
  %v3003 = vunpack.c.h.b16 %v2096
  %v3004 = vunpack.c.l.b16 %v2097
  %v3005 = vunpack.c.h.b16 %v2097
  %v3006 = vunpack.c.l.b16 %v2098
  %v3007 = vunpack.c.h.b16 %v2098
  %v3008 = vunpack.c.l.b16 %v2099
  %v3009 = vunpack.c.h.b16 %v2099
  %v3010 = vunpack.c.l.b16 %v2100
  %v3011 = vunpack.c.h.b16 %v2100
  %v3012 = vunpack.c.l.b16 %v2101
  %v3013 = vunpack.c.h.b16 %v2101
  %v3014 = vunpack.c.l.b16 %v2102
  %v3015 = vunpack.c.h.b16 %v2102
  %v3016 = vunpack.c.l.b16 %v2103
  %v3017 = vunpack.c.h.b16 %v2103
  %v3018 = vunpack.c.l.b16 %v2104
  %v3019 = vunpack.c.h.b16 %v2104
  %v3020 = vunpack.c.l.b16 %v2105
  %v3021 = vunpack.c.h.b16 %v2105
  %v3022 = vunpack.c.l.b16 %v2106
  %v3023 = vunpack.c.h.b16 %v2106
  %v3024 = vunpack.c.l.b16 %v2107
  %v3025 = vunpack.c.h.b16 %v2107
  %v3026 = vunpack.c.l.b16 %v2108
  %v3027 = vunpack.c.h.b16 %v2108
  %v3028 = vunpack.c.l.b16 %v2109
  %v3029 = vunpack.c.h.b16 %v2109
  %v3030 = vunpack.c.l.b16 %v2110
  %v3031 = vunpack.c.h.b16 %v2110
  %v3032 = vunpack.c.l.b16 %v2111
  %v3033 = vunpack.c.h.b16 %v2111
  %v3034 = vunpack.c.l.b16 %v2112
  %v3035 = vunpack.c.h.b16 %v2112
  %v3036 = vunpack.c.l.b16 %v2113
  %v3037 = vunpack.c.h.b16 %v2113
  %v3038 = vunpack.c.l.b16 %v2114
  %v3039 = vunpack.c.h.b16 %v2114
  %v3040 = vunpack.c.l.b16 %v2115
  %v3041 = vunpack.c.h.b16 %v2115
  %v3042 = vunpack.c.l.b16 %v2116
  %v3043 = vunpack.c.h.b16 %v2116
  %v3044 = vunpack.c.l.b16 %v2117
  %v3045 = vunpack.c.h.b16 %v2117
  %v3046 = vunpack.c.l.b16 %v2118
  %v3047 = vunpack.c.h.b16 %v2118
  %v3048 = vunpack.c.l.b16 %v2119
  %v3049 = vunpack.c.h.b16 %v2119
  %v3050 = vunpack.c.l.b16 %v2120
  %v3051 = vunpack.c.h.b16 %v2120
  %v3052 = vunpack.c.l.b16 %v2121
  %v3053 = vunpack.c.h.b16 %v2121
  %v3054 = vunpack.c.l.b16 %v2122
  %v3055 = vunpack.c.h.b16 %v2122
  %v3056 = vunpack.c.l.b16 %v2123
  %v3057 = vunpack.c.h.b16 %v2123
  %v3058 = vunpack.c.l.b16 %v2124
  %v3059 = vunpack.c.h.b16 %v2124
  %v3060 = vunpack.c.l.b16 %v2125
  %v3061 = vunpack.c.h.b16 %v2125
  %v3062 = vunpack.c.l.b16 %v2126
  %v3063 = vunpack.c.h.b16 %v2126
  %v3064 = vunpack.c.l.b16 %v2127
  %v3065 = vunpack.c.h.b16 %v2127
  %v3066 = vunpack.c.l.b16 %v2128
  %v3067 = vunpack.c.h.b16 %v2128
  %v3068 = vunpack.c.l.b16 %v2129
  %v3069 = vunpack.c.h.b16 %v2129
  %v3070 = vunpack.c.l.b16 %v2130
  %v3071 = vunpack.c.h.b16 %v2130
  %v3072 = vunpack.c.l.b16 %v2131
  %v3073 = vunpack.c.h.b16 %v2131
  %v3074 = vunpack.c.l.b16 %v2132
  %v3075 = vunpack.c.h.b16 %v2132
  %v3076 = vunpack.c.l.b16 %v2133
  %v3077 = vunpack.c.h.b16 %v2133
  %v3078 = vunpack.c.l.b16 %v2134
  %v3079 = vunpack.c.h.b16 %v2134
  %v3080 = vunpack.c.l.b16 %v2135
  %v3081 = vunpack.c.h.b16 %v2135
  %v3082 = vunpack.c.l.b16 %v2136
  %v3083 = vunpack.c.h.b16 %v2136
  %v3084 = vunpack.c.l.b16 %v2137
  %v3085 = vunpack.c.h.b16 %v2137
  %v3086 = vunpack.c.l.b16 %v2138
  %v3087 = vunpack.c.h.b16 %v2138
  %v3088 = vunpack.c.l.b16 %v2139
  %v3089 = vunpack.c.h.b16 %v2139
  %v3090 = vunpack.c.l.b16 %v2140
  %v3091 = vunpack.c.h.b16 %v2140
  %v3092 = vunpack.c.l.b16 %v2141
  %v3093 = vunpack.c.h.b16 %v2141
  %v3094 = vunpack.c.l.b16 %v2142
  %v3095 = vunpack.c.h.b16 %v2142
  %v3096 = vunpack.c.l.b16 %v2143
  %v3097 = vunpack.c.h.b16 %v2143
  %v3098 = vunpack.c.l.b16 %v2144
  %v3099 = vunpack.c.h.b16 %v2144
  %v3100 = vunpack.c.l.b16 %v2145
  %v3101 = vunpack.c.h.b16 %v2145
  %v3102 = vunpack.c.l.b16 %v2146
  %v3103 = vunpack.c.h.b16 %v2146
  %v3104 = vunpack.c.l.b16 %v2147
  %v3105 = vunpack.c.h.b16 %v2147
  %v3106 = vunpack.c.l.b16 %v2148
  %v3107 = vunpack.c.h.b16 %v2148
  %v3108 = vunpack.c.l.b16 %v2149
  %v3109 = vunpack.c.h.b16 %v2149
  %v3110 = vunpack.c.l.b16 %v2150
  %v3111 = vunpack.c.h.b16 %v2150
  %v3112 = vunpack.c.l.b16 %v2151
  %v3113 = vunpack.c.h.b16 %v2151
  %v3114 = vunpack.c.l.b16 %v2152
  %v3115 = vunpack.c.h.b16 %v2152
  %v3116 = vunpack.c.l.b16 %v2153
  %v3117 = vunpack.c.h.b16 %v2153
  %v3118 = vunpack.c.l.b16 %v2154
  %v3119 = vunpack.c.h.b16 %v2154
  %v3120 = vunpack.c.l.b16 %v2155
  %v3121 = vunpack.c.h.b16 %v2155
  %v3122 = vunpack.c.l.b16 %v2156
  %v3123 = vunpack.c.h.b16 %v2156
  %v3124 = vunpack.c.l.b16 %v2157
  %v3125 = vunpack.c.h.b16 %v2157
  %v3126 = vunpack.c.l.b16 %v2158
  %v3127 = vunpack.c.h.b16 %v2158
  %v3128 = vunpack.c.l.b16 %v2159
  %v3129 = vunpack.c.h.b16 %v2159
  %v3130 = vunpack.c.l.b16 %v2160
  %v3131 = vunpack.c.h.b16 %v2160
  %v3132 = vunpack.c.l.b16 %v2161
  %v3133 = vunpack.c.h.b16 %v2161
  %v3134 = vunpack.c.l.b16 %v2162
  %v3135 = vunpack.c.h.b16 %v2162
  %v3136 = vunpack.c.l.b16 %v2163
  %v3137 = vunpack.c.h.b16 %v2163
  %v3138 = vunpack.c.l.b16 %v2164
  %v3139 = vunpack.c.h.b16 %v2164
  %v3140 = vunpack.c.l.b16 %v2165
  %v3141 = vunpack.c.h.b16 %v2165
  %v3142 = vunpack.c.l.b16 %v2166
  %v3143 = vunpack.c.h.b16 %v2166
  %v3144 = vunpack.c.l.b16 %v2167
  %v3145 = vunpack.c.h.b16 %v2167
  %v3146 = vunpack.c.l.b16 %v2168
  %v3147 = vunpack.c.h.b16 %v2168
  %v3148 = vunpack.c.l.b16 %v2169
  %v3149 = vunpack.c.h.b16 %v2169
  %v3150 = vunpack.c.l.b16 %v2170
  %v3151 = vunpack.c.h.b16 %v2170
  %v3152 = vunpack.c.l.b16 %v2171
  %v3153 = vunpack.c.h.b16 %v2171
  %v3154 = vunpack.c.l.b16 %v2172
  %v3155 = vunpack.c.h.b16 %v2172
  %v3156 = vunpack.c.l.b16 %v2173
  %v3157 = vunpack.c.h.b16 %v2173
  %v3158 = vunpack.c.l.b16 %v2174
  %v3159 = vunpack.c.h.b16 %v2174
  %v3160 = vunpack.c.l.b16 %v2175
  %v3161 = vunpack.c.h.b16 %v2175
  %v3162 = vunpack.c.l.b16 %v2176
  %v3163 = vunpack.c.h.b16 %v2176
  %v3164 = vunpack.c.l.b16 %v2177
  %v3165 = vunpack.c.h.b16 %v2177
  %v3166 = vunpack.c.l.b16 %v2178
  %v3167 = vunpack.c.h.b16 %v2178
  %v3168 = vunpack.c.l.b16 %v2179
  %v3169 = vunpack.c.h.b16 %v2179
  %v3170 = vunpack.c.l.b16 %v2180
  %v3171 = vunpack.c.h.b16 %v2180
  %v3172 = vunpack.c.l.b16 %v2181
  %v3173 = vunpack.c.h.b16 %v2181
  %v3174 = vunpack.c.l.b16 %v2182
  %v3175 = vunpack.c.h.b16 %v2182
  %v3176 = vunpack.c.l.b16 %v2183
  %v3177 = vunpack.c.h.b16 %v2183
  %v3178 = vunpack.c.l.b16 %v2184
  %v3179 = vunpack.c.h.b16 %v2184
  %v3180 = vunpack.c.l.b16 %v2185
  %v3181 = vunpack.c.h.b16 %v2185
  %v3182 = vunpack.c.l.b16 %v2186
  %v3183 = vunpack.c.h.b16 %v2186
  %v3184 = vunpack.c.l.b16 %v2187
  %v3185 = vunpack.c.h.b16 %v2187
  %v3186 = vunpack.c.l.b16 %v2188
  %v3187 = vunpack.c.h.b16 %v2188
  %v3188 = vunpack.c.l.b16 %v2189
  %v3189 = vunpack.c.h.b16 %v2189
  %v3190 = vunpack.c.l.b16 %v2190
  %v3191 = vunpack.c.h.b16 %v2190
  %v3192 = vunpack.c.l.b16 %v2191
  %v3193 = vunpack.c.h.b16 %v2191
  %v3194 = vunpack.c.l.b16 %v2192
  %v3195 = vunpack.c.h.b16 %v2192
  %v3196 = vunpack.c.l.b16 %v2193
  %v3197 = vunpack.c.h.b16 %v2193
  %v3198 = vunpack.c.l.b16 %v2194
  %v3199 = vunpack.c.h.b16 %v2194
  %v3200 = vunpack.c.l.b16 %v2195
  %v3201 = vunpack.c.h.b16 %v2195
  %v3202 = vunpack.c.l.b16 %v2196
  %v3203 = vunpack.c.h.b16 %v2196
  %v3204 = vunpack.c.l.b16 %v2197
  %v3205 = vunpack.c.h.b16 %v2197
  %v3206 = vunpack.c.l.b16 %v2198
  %v3207 = vunpack.c.h.b16 %v2198
  %v3208 = vunpack.c.l.b16 %v2199
  %v3209 = vunpack.c.h.b16 %v2199
  %v3210 = vunpack.c.l.b16 %v2200
  %v3211 = vunpack.c.h.b16 %v2200
  %v3212 = vunpack.c.l.b16 %v2201
  %v3213 = vunpack.c.h.b16 %v2201
  %v3214 = vunpack.c.l.b16 %v2202
  %v3215 = vunpack.c.h.b16 %v2202
  %v3216 = vunpack.c.l.b16 %v2203
  %v3217 = vunpack.c.h.b16 %v2203
  %v3218 = vunpack.c.l.b16 %v2204
  %v3219 = vunpack.c.h.b16 %v2204
  %v3220 = vunpack.c.l.b16 %v2205
  %v3221 = vunpack.c.h.b16 %v2205
  %v3222 = vunpack.c.l.b16 %v2206
  %v3223 = vunpack.c.h.b16 %v2206
  %v3224 = vunpack.c.l.b16 %v2207
  %v3225 = vunpack.c.h.b16 %v2207
  %v3226 = vunpack.c.l.b16 %v2208
  %v3227 = vunpack.c.h.b16 %v2208
  %v3228 = vunpack.c.l.b16 %v2209
  %v3229 = vunpack.c.h.b16 %v2209
  %v3230 = vunpack.c.l.b16 %v2210
  %v3231 = vunpack.c.h.b16 %v2210
  %v3232 = vunpack.c.l.b16 %v2211
  %v3233 = vunpack.c.h.b16 %v2211
  %v3234 = vunpack.c.l.b16 %v2212
  %v3235 = vunpack.c.h.b16 %v2212
  %v3236 = vunpack.c.l.b16 %v2213
  %v3237 = vunpack.c.h.b16 %v2213
  %v3238 = vunpack.c.l.b16 %v2214
  %v3239 = vunpack.c.h.b16 %v2214
  %v3240 = vunpack.c.l.b16 %v2215
  %v3241 = vunpack.c.h.b16 %v2215
  %v3242 = vunpack.c.l.b16 %v2216
  %v3243 = vunpack.c.h.b16 %v2216
  %v3244 = vunpack.c.l.b16 %v2217
  %v3245 = vunpack.c.h.b16 %v2217
  %v3246 = vunpack.c.l.b16 %v2218
  %v3247 = vunpack.c.h.b16 %v2218
  %v3248 = vunpack.c.l.b16 %v2219
  %v3249 = vunpack.c.h.b16 %v2219
  %v3250 = vunpack.c.l.b16 %v2220
  %v3251 = vunpack.c.h.b16 %v2220
  %v3252 = vunpack.c.l.b16 %v2221
  %v3253 = vunpack.c.h.b16 %v2221
  %v3254 = vunpack.c.l.b16 %v2222
  %v3255 = vunpack.c.h.b16 %v2222
  %v3256 = vunpack.c.l.b16 %v2223
  %v3257 = vunpack.c.h.b16 %v2223
  %v3258 = vunpack.c.l.b16 %v2224
  %v3259 = vunpack.c.h.b16 %v2224
  %v3260 = vunpack.c.l.b16 %v2225
  %v3261 = vunpack.c.h.b16 %v2225
  %v3262 = vunpack.c.l.b16 %v2226
  %v3263 = vunpack.c.h.b16 %v2226
  %v3264 = vunpack.c.l.b16 %v2227
  %v3265 = vunpack.c.h.b16 %v2227
  %v3266 = vunpack.c.l.b16 %v2228
  %v3267 = vunpack.c.h.b16 %v2228
  %v3268 = vunpack.c.l.b16 %v2229
  %v3269 = vunpack.c.h.b16 %v2229
  %v3270 = vunpack.c.l.b16 %v2230
  %v3271 = vunpack.c.h.b16 %v2230
  %v3272 = vunpack.c.l.b16 %v2231
  %v3273 = vunpack.c.h.b16 %v2231
  %v3274 = vunpack.c.l.b16 %v2232
  %v3275 = vunpack.c.h.b16 %v2232
  %v3276 = vunpack.c.l.b16 %v2233
  %v3277 = vunpack.c.h.b16 %v2233
  %v3278 = vunpack.c.l.b16 %v2234
  %v3279 = vunpack.c.h.b16 %v2234
  %v3280 = vunpack.c.l.b16 %v2235
  %v3281 = vunpack.c.h.b16 %v2235
  %v3282 = vunpack.c.l.b16 %v2236
  %v3283 = vunpack.c.h.b16 %v2236
  %v3284 = vunpack.c.l.b16 %v2237
  %v3285 = vunpack.c.h.b16 %v2237
  %v3286 = vunpack.c.l.b16 %v2238
  %v3287 = vunpack.c.h.b16 %v2238
  %v3288 = vunpack.c.l.b16 %v2239
  %v3289 = vunpack.c.h.b16 %v2239
  %v3290 = vunpack.c.l.b16 %v2240
  %v3291 = vunpack.c.h.b16 %v2240
  %v3292 = vunpack.c.l.b16 %v2241
  %v3293 = vunpack.c.h.b16 %v2241
  %v3294 = vunpack.c.l.b16 %v2242
  %v3295 = vunpack.c.h.b16 %v2242
  %v3296 = vunpack.c.l.b16 %v2243
  %v3297 = vunpack.c.h.b16 %v2243
  %v3298 = vunpack.c.l.b16 %v2244
  %v3299 = vunpack.c.h.b16 %v2244
  %v3300 = vunpack.c.l.b16 %v2245
  %v3301 = vunpack.c.h.b16 %v2245
  %v3302 = vunpack.c.l.b16 %v2246
  %v3303 = vunpack.c.h.b16 %v2246
  %v3304 = vunpack.c.l.b16 %v2247
  %v3305 = vunpack.c.h.b16 %v2247
  %v3306 = vunpack.c.l.b16 %v2248
  %v3307 = vunpack.c.h.b16 %v2248
  %v3308 = vunpack.c.l.b16 %v2249
  %v3309 = vunpack.c.h.b16 %v2249
  %v3310 = vunpack.c.l.b16 %v2250
  %v3311 = vunpack.c.h.b16 %v2250
  %v3312 = vunpack.c.l.b16 %v2251
  %v3313 = vunpack.c.h.b16 %v2251
  %v3314 = vunpack.c.l.b16 %v2252
  %v3315 = vunpack.c.h.b16 %v2252
  %v3316 = vunpack.c.l.b16 %v2253
  %v3317 = vunpack.c.h.b16 %v2253
  %v3318 = vunpack.c.l.b16 %v2254
  %v3319 = vunpack.c.h.b16 %v2254
  %v3320 = vunpack.c.l.b16 %v2255
  %v3321 = vunpack.c.h.b16 %v2255
  %v3322 = vunpack.c.l.b16 %v2256
  %v3323 = vunpack.c.h.b16 %v2256
  %v3324 = vunpack.c.l.b16 %v2257
  %v3325 = vunpack.c.h.b16 %v2257
  %v3326 = vunpack.c.l.b16 %v2258
  %v3327 = vunpack.c.h.b16 %v2258
  %v3328 = vunpack.c.l.b16 %v2259
  %v3329 = vunpack.c.h.b16 %v2259
  %v3330 = vunpack.c.l.b16 %v2260
  %v3331 = vunpack.c.h.b16 %v2260
  %v3332 = vunpack.c.l.b16 %v2261
  %v3333 = vunpack.c.h.b16 %v2261
  %v3334 = vunpack.c.l.b16 %v2262
  %v3335 = vunpack.c.h.b16 %v2262
  %v3336 = vunpack.c.l.b16 %v2263
  %v3337 = vunpack.c.h.b16 %v2263
  %v3338 = vunpack.c.l.b16 %v2264
  %v3339 = vunpack.c.h.b16 %v2264
  %v3340 = vunpack.c.l.b16 %v2265
  %v3341 = vunpack.c.h.b16 %v2265
  %v3342 = vunpack.c.l.b16 %v2266
  %v3343 = vunpack.c.h.b16 %v2266
  %v3344 = vunpack.c.l.b16 %v2267
  %v3345 = vunpack.c.h.b16 %v2267
  %v3346 = vunpack.c.l.b16 %v2268
  %v3347 = vunpack.c.h.b16 %v2268
  %v3348 = vunpack.c.l.b16 %v2269
  %v3349 = vunpack.c.h.b16 %v2269
  %v3350 = vunpack.c.l.b16 %v2270
  %v3351 = vunpack.c.h.b16 %v2270
  %v3352 = vunpack.c.l.b16 %v2271
  %v3353 = vunpack.c.h.b16 %v2271
  %v3354 = vunpack.c.l.b16 %v2272
  %v3355 = vunpack.c.h.b16 %v2272
  %v3356 = vunpack.c.l.b16 %v2273
  %v3357 = vunpack.c.h.b16 %v2273
  %v3358 = vunpack.c.l.b16 %v2274
  %v3359 = vunpack.c.h.b16 %v2274
  %v3360 = vunpack.c.l.b16 %v2275
  %v3361 = vunpack.c.h.b16 %v2275
  %v3362 = vunpack.c.l.b16 %v2276
  %v3363 = vunpack.c.h.b16 %v2276
  %v3364 = vunpack.c.l.b16 %v2277
  %v3365 = vunpack.c.h.b16 %v2277
  %v3366 = vunpack.c.l.b16 %v2278
  %v3367 = vunpack.c.h.b16 %v2278
  %v3368 = vunpack.c.l.b16 %v2279
  %v3369 = vunpack.c.h.b16 %v2279
  %v3370 = vunpack.c.l.b16 %v2280
  %v3371 = vunpack.c.h.b16 %v2280
  %v3372 = vunpack.c.l.b16 %v2281
  %v3373 = vunpack.c.h.b16 %v2281
  %v3374 = vunpack.c.l.b16 %v2282
  %v3375 = vunpack.c.h.b16 %v2282
  %v3376 = vunpack.c.l.b16 %v2283
  %v3377 = vunpack.c.h.b16 %v2283
  %v3378 = vunpack.c.l.b16 %v2284
  %v3379 = vunpack.c.h.b16 %v2284
  %v3380 = vunpack.c.l.b16 %v2285
  %v3381 = vunpack.c.h.b16 %v2285
  %v3382 = vunpack.c.l.b16 %v2286
  %v3383 = vunpack.c.h.b16 %v2286
  %v3384 = vunpack.c.l.b16 %v2287
  %v3385 = vunpack.c.h.b16 %v2287
  %v3386 = vunpack.c.l.b16 %v2288
  %v3387 = vunpack.c.h.b16 %v2288
  %v3388 = vunpack.c.l.b16 %v2289
  %v3389 = vunpack.c.h.b16 %v2289
  %v3390 = vunpack.c.l.b16 %v2290
  %v3391 = vunpack.c.h.b16 %v2290
  %v3392 = vunpack.c.l.b16 %v2291
  %v3393 = vunpack.c.h.b16 %v2291
  %v3394 = vunpack.c.l.b16 %v2292
  %v3395 = vunpack.c.h.b16 %v2292
  %v3396 = vunpack.c.l.b16 %v2293
  %v3397 = vunpack.c.h.b16 %v2293
  %v3398 = vunpack.c.l.b16 %v2294
  %v3399 = vunpack.c.h.b16 %v2294
  %v3400 = vunpack.c.l.b16 %v2295
  %v3401 = vunpack.c.h.b16 %v2295
  %v3402 = vunpack.c.l.b16 %v2296
  %v3403 = vunpack.c.h.b16 %v2296
  %v3404 = vunpack.c.l.b16 %v2297
  %v3405 = vunpack.c.h.b16 %v2297
  %v3406 = vunpack.c.l.b16 %v2298
  %v3407 = vunpack.c.h.b16 %v2298
  %v3408 = vunpack.c.l.b16 %v2299
  %v3409 = vunpack.c.h.b16 %v2299
  %v3410 = vunpack.c.l.b16 %v2300
  %v3411 = vunpack.c.h.b16 %v2300
  %v3412 = vunpack.c.l.b16 %v2301
  %v3413 = vunpack.c.h.b16 %v2301
  %v3414 = vunpack.c.l.b16 %v2302
  %v3415 = vunpack.c.h.b16 %v2302
  %v3416 = vunpack.c.l.b16 %v2303
  %v3417 = vunpack.c.h.b16 %v2303
  %v3418 = vunpack.c.l.b16 %v2304
  %v3419 = vunpack.c.h.b16 %v2304
  %v3420 = vunpack.c.l.b16 %v2305
  %v3421 = vunpack.c.h.b16 %v2305
  %v3422 = vunpack.c.l.b16 %v2306
  %v3423 = vunpack.c.h.b16 %v2306
  %v3424 = vunpack.c.l.b16 %v2307
  %v3425 = vunpack.c.h.b16 %v2307
  %v3426 = vunpack.c.l.b16 %v2308
  %v3427 = vunpack.c.h.b16 %v2308
  %v3428 = vunpack.c.l.b16 %v2309
  %v3429 = vunpack.c.h.b16 %v2309
  %v3430 = vunpack.c.l.b16 %v2310
  %v3431 = vunpack.c.h.b16 %v2310
  %v3432 = vunpack.c.l.b16 %v2311
  %v3433 = vunpack.c.h.b16 %v2311
  %v3434 = vunpack.c.l.b16 %v2312
  %v3435 = vunpack.c.h.b16 %v2312
  %v3436 = vunpack.c.l.b16 %v2313
  %v3437 = vunpack.c.h.b16 %v2313
  %v3438 = vunpack.c.l.b16 %v2314
  %v3439 = vunpack.c.h.b16 %v2314
  %v3440 = vunpack.c.l.b16 %v2315
  %v3441 = vunpack.c.h.b16 %v2315
  %v3442 = vunpack.c.l.b16 %v2316
  %v3443 = vunpack.c.h.b16 %v2316
  %v3444 = vunpack.c.l.b16 %v2317
  %v3445 = vunpack.c.h.b16 %v2317
  %v3446 = vunpack.c.l.b16 %v2318
  %v3447 = vunpack.c.h.b16 %v2318
  %v3448 = vunpack.c.l.b16 %v2319
  %v3449 = vunpack.c.h.b16 %v2319
  %v3450 = vunpack.c.l.b16 %v2320
  %v3451 = vunpack.c.h.b16 %v2320
  %v3452 = vunpack.c.l.b16 %v2321
  %v3453 = vunpack.c.h.b16 %v2321
  %v3454 = vunpack.c.l.b16 %v2322
  %v3455 = vunpack.c.h.b16 %v2322
  %v3456 = vunpack.c.l.b16 %v2323
  %v3457 = vunpack.c.h.b16 %v2323
  %v3458 = vunpack.c.l.b16 %v2324
  %v3459 = vunpack.c.h.b16 %v2324
  %v3460 = vunpack.c.l.b16 %v2325
  %v3461 = vunpack.c.h.b16 %v2325
  %v3462 = vunpack.c.l.b16 %v2326
  %v3463 = vunpack.c.h.b16 %v2326
  %v3464 = vunpack.c.l.b16 %v2327
  %v3465 = vunpack.c.h.b16 %v2327
  %v3466 = vunpack.c.l.b16 %v2328
  %v3467 = vunpack.c.h.b16 %v2328
  %v3468 = vunpack.c.l.b16 %v2329
  %v3469 = vunpack.c.h.b16 %v2329
  %v3470 = vunpack.c.l.b16 %v2330
  %v3471 = vunpack.c.h.b16 %v2330
  %v3472 = vunpack.c.l.b16 %v2331
  %v3473 = vunpack.c.h.b16 %v2331
  %v3474 = vunpack.c.l.b16 %v2332
  %v3475 = vunpack.c.h.b16 %v2332
  %v3476 = vunpack.c.l.b16 %v2333
  %v3477 = vunpack.c.h.b16 %v2333
  %v3478 = vunpack.c.l.b16 %v2334
  %v3479 = vunpack.c.h.b16 %v2334
  %v3480 = vunpack.c.l.b16 %v2335
  %v3481 = vunpack.c.h.b16 %v2335
  %v3482 = vunpack.c.l.b16 %v2336
  %v3483 = vunpack.c.h.b16 %v2336
  %v3484 = vunpack.c.l.b16 %v2337
  %v3485 = vunpack.c.h.b16 %v2337
  %v3486 = vunpack.c.l.b16 %v2338
  %v3487 = vunpack.c.h.b16 %v2338
  %v3488 = vunpack.c.l.b16 %v2339
  %v3489 = vunpack.c.h.b16 %v2339
  %v3490 = vunpack.c.l.b16 %v2340
  %v3491 = vunpack.c.h.b16 %v2340
  %v3492 = vunpack.c.l.b16 %v2341
  %v3493 = vunpack.c.h.b16 %v2341
  %v3494 = vpack.c.b16 %v2738, %v2726
  %v3495 = vpack.c.b16 %v2739, %v2727
  %v3496 = vpack.c.b16 %v2740, %v2728
  %v3497 = vpack.c.b16 %v2741, %v2729
  %v3498 = vpack.c.b16 %v2742, %v2730
  %v3499 = vpack.c.b16 %v2743, %v2731
  %v3500 = vpack.c.b16 %v2744, %v2732
  %v3501 = vpack.c.b16 %v2745, %v2733
  %v3502 = vpack.c.b16 %v2746, %v2734
  %v3503 = vpack.c.b16 %v2747, %v2735
  %v3504 = vpack.c.b16 %v2748, %v2736
  %v3505 = vpack.c.b16 %v2749, %v2737
  %v3506 = vpack.c.b16 %v2762, %v2750
  %v3507 = vpack.c.b16 %v2763, %v2751
  %v3508 = vpack.c.b16 %v2764, %v2752
  %v3509 = vpack.c.b16 %v2765, %v2753
  %v3510 = vpack.c.b16 %v2766, %v2754
  %v3511 = vpack.c.b16 %v2767, %v2755
  %v3512 = vpack.c.b16 %v2768, %v2756
  %v3513 = vpack.c.b16 %v2769, %v2757
  %v3514 = vpack.c.b16 %v2770, %v2758
  %v3515 = vpack.c.b16 %v2771, %v2759
  %v3516 = vpack.c.b16 %v2772, %v2760
  %v3517 = vpack.c.b16 %v2773, %v2761
  %v3518 = vpack.c.b16 %v2786, %v2774
  %v3519 = vpack.c.b16 %v2787, %v2775
  %v3520 = vpack.c.b16 %v2788, %v2776
  %v3521 = vpack.c.b16 %v2789, %v2777
  %v3522 = vpack.c.b16 %v2790, %v2778
  %v3523 = vpack.c.b16 %v2791, %v2779
  %v3524 = vpack.c.b16 %v2792, %v2780
  %v3525 = vpack.c.b16 %v2793, %v2781
  %v3526 = vpack.c.b16 %v2794, %v2782
  %v3527 = vpack.c.b16 %v2795, %v2783
  %v3528 = vpack.c.b16 %v2796, %v2784
  %v3529 = vpack.c.b16 %v2797, %v2785
  %v3530 = vpack.c.b16 %v2810, %v2798
  %v3531 = vpack.c.b16 %v2811, %v2799
  %v3532 = vpack.c.b16 %v2812, %v2800
  %v3533 = vpack.c.b16 %v2813, %v2801
  %v3534 = vpack.c.b16 %v2814, %v2802
  %v3535 = vpack.c.b16 %v2815, %v2803
  %v3536 = vpack.c.b16 %v2816, %v2804
  %v3537 = vpack.c.b16 %v2817, %v2805
  %v3538 = vpack.c.b16 %v2818, %v2806
  %v3539 = vpack.c.b16 %v2819, %v2807
  %v3540 = vpack.c.b16 %v2820, %v2808
  %v3541 = vpack.c.b16 %v2821, %v2809
  %v3542 = vpack.c.b16 %v2834, %v2822
  %v3543 = vpack.c.b16 %v2835, %v2823
  %v3544 = vpack.c.b16 %v2836, %v2824
  %v3545 = vpack.c.b16 %v2837, %v2825
  %v3546 = vpack.c.b16 %v2838, %v2826
  %v3547 = vpack.c.b16 %v2839, %v2827
  %v3548 = vpack.c.b16 %v2840, %v2828
  %v3549 = vpack.c.b16 %v2841, %v2829
  %v3550 = vpack.c.b16 %v2842, %v2830
  %v3551 = vpack.c.b16 %v2843, %v2831
  %v3552 = vpack.c.b16 %v2844, %v2832
  %v3553 = vpack.c.b16 %v2845, %v2833
  %v3554 = vpack.c.b16 %v2858, %v2846
  %v3555 = vpack.c.b16 %v2859, %v2847
  %v3556 = vpack.c.b16 %v2860, %v2848
  %v3557 = vpack.c.b16 %v2861, %v2849
  %v3558 = vpack.c.b16 %v2862, %v2850
  %v3559 = vpack.c.b16 %v2863, %v2851
  %v3560 = vpack.c.b16 %v2864, %v2852
  %v3561 = vpack.c.b16 %v2865, %v2853
  %v3562 = vpack.c.b16 %v2866, %v2854
  %v3563 = vpack.c.b16 %v2867, %v2855
  %v3564 = vpack.c.b16 %v2868, %v2856
  %v3565 = vpack.c.b16 %v2869, %v2857
  %v3566 = vpack.c.b16 %v2882, %v2870
  %v3567 = vpack.c.b16 %v2883, %v2871
  %v3568 = vpack.c.b16 %v2884, %v2872
  %v3569 = vpack.c.b16 %v2885, %v2873
  %v3570 = vpack.c.b16 %v2886, %v2874
  %v3571 = vpack.c.b16 %v2887, %v2875
  %v3572 = vpack.c.b16 %v2888, %v2876
  %v3573 = vpack.c.b16 %v2889, %v2877
  %v3574 = vpack.c.b16 %v2890, %v2878
  %v3575 = vpack.c.b16 %v2891, %v2879
  %v3576 = vpack.c.b16 %v2892, %v2880
  %v3577 = vpack.c.b16 %v2893, %v2881
  %v3578 = vpack.c.b16 %v2906, %v2894
  %v3579 = vpack.c.b16 %v2907, %v2895
  %v3580 = vpack.c.b16 %v2908, %v2896
  %v3581 = vpack.c.b16 %v2909, %v2897
  %v3582 = vpack.c.b16 %v2910, %v2898
  %v3583 = vpack.c.b16 %v2911, %v2899
  %v3584 = vpack.c.b16 %v2912, %v2900
  %v3585 = vpack.c.b16 %v2913, %v2901
  %v3586 = vpack.c.b16 %v2914, %v2902
  %v3587 = vpack.c.b16 %v2915, %v2903
  %v3588 = vpack.c.b16 %v2916, %v2904
  %v3589 = vpack.c.b16 %v2917, %v2905
  %v3590 = vpack.c.b16 %v2930, %v2918
  %v3591 = vpack.c.b16 %v2931, %v2919
  %v3592 = vpack.c.b16 %v2932, %v2920
  %v3593 = vpack.c.b16 %v2933, %v2921
  %v3594 = vpack.c.b16 %v2934, %v2922
  %v3595 = vpack.c.b16 %v2935, %v2923
  %v3596 = vpack.c.b16 %v2936, %v2924
  %v3597 = vpack.c.b16 %v2937, %v2925
  %v3598 = vpack.c.b16 %v2938, %v2926
  %v3599 = vpack.c.b16 %v2939, %v2927
  %v3600 = vpack.c.b16 %v2940, %v2928
  %v3601 = vpack.c.b16 %v2941, %v2929
  %v3602 = vpack.c.b16 %v2954, %v2942
  %v3603 = vpack.c.b16 %v2955, %v2943
  %v3604 = vpack.c.b16 %v2956, %v2944
  %v3605 = vpack.c.b16 %v2957, %v2945
  %v3606 = vpack.c.b16 %v2958, %v2946
  %v3607 = vpack.c.b16 %v2959, %v2947
  %v3608 = vpack.c.b16 %v2960, %v2948
  %v3609 = vpack.c.b16 %v2961, %v2949
  %v3610 = vpack.c.b16 %v2962, %v2950
  %v3611 = vpack.c.b16 %v2963, %v2951
  %v3612 = vpack.c.b16 %v2964, %v2952
  %v3613 = vpack.c.b16 %v2965, %v2953
  %v3614 = vpack.c.b16 %v2978, %v2966
  %v3615 = vpack.c.b16 %v2979, %v2967
  %v3616 = vpack.c.b16 %v2980, %v2968
  %v3617 = vpack.c.b16 %v2981, %v2969
  %v3618 = vpack.c.b16 %v2982, %v2970
  %v3619 = vpack.c.b16 %v2983, %v2971
  %v3620 = vpack.c.b16 %v2984, %v2972
  %v3621 = vpack.c.b16 %v2985, %v2973
  %v3622 = vpack.c.b16 %v2986, %v2974
  %v3623 = vpack.c.b16 %v2987, %v2975
  %v3624 = vpack.c.b16 %v2988, %v2976
  %v3625 = vpack.c.b16 %v2989, %v2977
  %v3626 = vpack.c.b16 %v3002, %v2990
  %v3627 = vpack.c.b16 %v3003, %v2991
  %v3628 = vpack.c.b16 %v3004, %v2992
  %v3629 = vpack.c.b16 %v3005, %v2993
  %v3630 = vpack.c.b16 %v3006, %v2994
  %v3631 = vpack.c.b16 %v3007, %v2995
  %v3632 = vpack.c.b16 %v3008, %v2996
  %v3633 = vpack.c.b16 %v3009, %v2997
  %v3634 = vpack.c.b16 %v3010, %v2998
  %v3635 = vpack.c.b16 %v3011, %v2999
  %v3636 = vpack.c.b16 %v3012, %v3000
  %v3637 = vpack.c.b16 %v3013, %v3001
  %v3638 = vpack.c.b16 %v3026, %v3014
  %v3639 = vpack.c.b16 %v3027, %v3015
  %v3640 = vpack.c.b16 %v3028, %v3016
  %v3641 = vpack.c.b16 %v3029, %v3017
  %v3642 = vpack.c.b16 %v3030, %v3018
  %v3643 = vpack.c.b16 %v3031, %v3019
  %v3644 = vpack.c.b16 %v3032, %v3020
  %v3645 = vpack.c.b16 %v3033, %v3021
  %v3646 = vpack.c.b16 %v3034, %v3022
  %v3647 = vpack.c.b16 %v3035, %v3023
  %v3648 = vpack.c.b16 %v3036, %v3024
  %v3649 = vpack.c.b16 %v3037, %v3025
  %v3650 = vpack.c.b16 %v3050, %v3038
  %v3651 = vpack.c.b16 %v3051, %v3039
  %v3652 = vpack.c.b16 %v3052, %v3040
  %v3653 = vpack.c.b16 %v3053, %v3041
  %v3654 = vpack.c.b16 %v3054, %v3042
  %v3655 = vpack.c.b16 %v3055, %v3043
  %v3656 = vpack.c.b16 %v3056, %v3044
  %v3657 = vpack.c.b16 %v3057, %v3045
  %v3658 = vpack.c.b16 %v3058, %v3046
  %v3659 = vpack.c.b16 %v3059, %v3047
  %v3660 = vpack.c.b16 %v3060, %v3048
  %v3661 = vpack.c.b16 %v3061, %v3049
  %v3662 = vpack.c.b16 %v3074, %v3062
  %v3663 = vpack.c.b16 %v3075, %v3063
  %v3664 = vpack.c.b16 %v3076, %v3064
  %v3665 = vpack.c.b16 %v3077, %v3065
  %v3666 = vpack.c.b16 %v3078, %v3066
  %v3667 = vpack.c.b16 %v3079, %v3067
  %v3668 = vpack.c.b16 %v3080, %v3068
  %v3669 = vpack.c.b16 %v3081, %v3069
  %v3670 = vpack.c.b16 %v3082, %v3070
  %v3671 = vpack.c.b16 %v3083, %v3071
  %v3672 = vpack.c.b16 %v3084, %v3072
  %v3673 = vpack.c.b16 %v3085, %v3073
  %v3674 = vpack.c.b16 %v3098, %v3086
  %v3675 = vpack.c.b16 %v3099, %v3087
  %v3676 = vpack.c.b16 %v3100, %v3088
  %v3677 = vpack.c.b16 %v3101, %v3089
  %v3678 = vpack.c.b16 %v3102, %v3090
  %v3679 = vpack.c.b16 %v3103, %v3091
  %v3680 = vpack.c.b16 %v3104, %v3092
  %v3681 = vpack.c.b16 %v3105, %v3093
  %v3682 = vpack.c.b16 %v3106, %v3094
  %v3683 = vpack.c.b16 %v3107, %v3095
  %v3684 = vpack.c.b16 %v3108, %v3096
  %v3685 = vpack.c.b16 %v3109, %v3097
  %v3686 = vpack.c.b16 %v3122, %v3110
  %v3687 = vpack.c.b16 %v3123, %v3111
  %v3688 = vpack.c.b16 %v3124, %v3112
  %v3689 = vpack.c.b16 %v3125, %v3113
  %v3690 = vpack.c.b16 %v3126, %v3114
  %v3691 = vpack.c.b16 %v3127, %v3115
  %v3692 = vpack.c.b16 %v3128, %v3116
  %v3693 = vpack.c.b16 %v3129, %v3117
  %v3694 = vpack.c.b16 %v3130, %v3118
  %v3695 = vpack.c.b16 %v3131, %v3119
  %v3696 = vpack.c.b16 %v3132, %v3120
  %v3697 = vpack.c.b16 %v3133, %v3121
  %v3698 = vpack.c.b16 %v3146, %v3134
  %v3699 = vpack.c.b16 %v3147, %v3135
  %v3700 = vpack.c.b16 %v3148, %v3136
  %v3701 = vpack.c.b16 %v3149, %v3137
  %v3702 = vpack.c.b16 %v3150, %v3138
  %v3703 = vpack.c.b16 %v3151, %v3139
  %v3704 = vpack.c.b16 %v3152, %v3140
  %v3705 = vpack.c.b16 %v3153, %v3141
  %v3706 = vpack.c.b16 %v3154, %v3142
  %v3707 = vpack.c.b16 %v3155, %v3143
  %v3708 = vpack.c.b16 %v3156, %v3144
  %v3709 = vpack.c.b16 %v3157, %v3145
  %v3710 = vpack.c.b16 %v3170, %v3158
  %v3711 = vpack.c.b16 %v3171, %v3159
  %v3712 = vpack.c.b16 %v3172, %v3160
  %v3713 = vpack.c.b16 %v3173, %v3161
  %v3714 = vpack.c.b16 %v3174, %v3162
  %v3715 = vpack.c.b16 %v3175, %v3163
  %v3716 = vpack.c.b16 %v3176, %v3164
  %v3717 = vpack.c.b16 %v3177, %v3165
  %v3718 = vpack.c.b16 %v3178, %v3166
  %v3719 = vpack.c.b16 %v3179, %v3167
  %v3720 = vpack.c.b16 %v3180, %v3168
  %v3721 = vpack.c.b16 %v3181, %v3169
  %v3722 = vpack.c.b16 %v3194, %v3182
  %v3723 = vpack.c.b16 %v3195, %v3183
  %v3724 = vpack.c.b16 %v3196, %v3184
  %v3725 = vpack.c.b16 %v3197, %v3185
  %v3726 = vpack.c.b16 %v3198, %v3186
  %v3727 = vpack.c.b16 %v3199, %v3187
  %v3728 = vpack.c.b16 %v3200, %v3188
  %v3729 = vpack.c.b16 %v3201, %v3189
  %v3730 = vpack.c.b16 %v3202, %v3190
  %v3731 = vpack.c.b16 %v3203, %v3191
  %v3732 = vpack.c.b16 %v3204, %v3192
  %v3733 = vpack.c.b16 %v3205, %v3193
  %v3734 = vpack.c.b16 %v3218, %v3206
  %v3735 = vpack.c.b16 %v3219, %v3207
  %v3736 = vpack.c.b16 %v3220, %v3208
  %v3737 = vpack.c.b16 %v3221, %v3209
  %v3738 = vpack.c.b16 %v3222, %v3210
  %v3739 = vpack.c.b16 %v3223, %v3211
  %v3740 = vpack.c.b16 %v3224, %v3212
  %v3741 = vpack.c.b16 %v3225, %v3213
  %v3742 = vpack.c.b16 %v3226, %v3214
  %v3743 = vpack.c.b16 %v3227, %v3215
  %v3744 = vpack.c.b16 %v3228, %v3216
  %v3745 = vpack.c.b16 %v3229, %v3217
  %v3746 = vpack.c.b16 %v3242, %v3230
  %v3747 = vpack.c.b16 %v3243, %v3231
  %v3748 = vpack.c.b16 %v3244, %v3232
  %v3749 = vpack.c.b16 %v3245, %v3233
  %v3750 = vpack.c.b16 %v3246, %v3234
  %v3751 = vpack.c.b16 %v3247, %v3235
  %v3752 = vpack.c.b16 %v3248, %v3236
  %v3753 = vpack.c.b16 %v3249, %v3237
  %v3754 = vpack.c.b16 %v3250, %v3238
  %v3755 = vpack.c.b16 %v3251, %v3239
  %v3756 = vpack.c.b16 %v3252, %v3240
  %v3757 = vpack.c.b16 %v3253, %v3241
  %v3758 = vpack.c.b16 %v3266, %v3254
  %v3759 = vpack.c.b16 %v3267, %v3255
  %v3760 = vpack.c.b16 %v3268, %v3256
  %v3761 = vpack.c.b16 %v3269, %v3257
  %v3762 = vpack.c.b16 %v3270, %v3258
  %v3763 = vpack.c.b16 %v3271, %v3259
  %v3764 = vpack.c.b16 %v3272, %v3260
  %v3765 = vpack.c.b16 %v3273, %v3261
  %v3766 = vpack.c.b16 %v3274, %v3262
  %v3767 = vpack.c.b16 %v3275, %v3263
  %v3768 = vpack.c.b16 %v3276, %v3264
  %v3769 = vpack.c.b16 %v3277, %v3265
  %v3770 = vpack.c.b16 %v3290, %v3278
  %v3771 = vpack.c.b16 %v3291, %v3279
  %v3772 = vpack.c.b16 %v3292, %v3280
  %v3773 = vpack.c.b16 %v3293, %v3281
  %v3774 = vpack.c.b16 %v3294, %v3282
  %v3775 = vpack.c.b16 %v3295, %v3283
  %v3776 = vpack.c.b16 %v3296, %v3284
  %v3777 = vpack.c.b16 %v3297, %v3285
  %v3778 = vpack.c.b16 %v3298, %v3286
  %v3779 = vpack.c.b16 %v3299, %v3287
  %v3780 = vpack.c.b16 %v3300, %v3288
  %v3781 = vpack.c.b16 %v3301, %v3289
  %v3782 = vpack.c.b16 %v3314, %v3302
  %v3783 = vpack.c.b16 %v3315, %v3303
  %v3784 = vpack.c.b16 %v3316, %v3304
  %v3785 = vpack.c.b16 %v3317, %v3305
  %v3786 = vpack.c.b16 %v3318, %v3306
  %v3787 = vpack.c.b16 %v3319, %v3307
  %v3788 = vpack.c.b16 %v3320, %v3308
  %v3789 = vpack.c.b16 %v3321, %v3309
  %v3790 = vpack.c.b16 %v3322, %v3310
  %v3791 = vpack.c.b16 %v3323, %v3311
  %v3792 = vpack.c.b16 %v3324, %v3312
  %v3793 = vpack.c.b16 %v3325, %v3313
  %v3794 = vpack.c.b16 %v3338, %v3326
  %v3795 = vpack.c.b16 %v3339, %v3327
  %v3796 = vpack.c.b16 %v3340, %v3328
  %v3797 = vpack.c.b16 %v3341, %v3329
  %v3798 = vpack.c.b16 %v3342, %v3330
  %v3799 = vpack.c.b16 %v3343, %v3331
  %v3800 = vpack.c.b16 %v3344, %v3332
  %v3801 = vpack.c.b16 %v3345, %v3333
  %v3802 = vpack.c.b16 %v3346, %v3334
  %v3803 = vpack.c.b16 %v3347, %v3335
  %v3804 = vpack.c.b16 %v3348, %v3336
  %v3805 = vpack.c.b16 %v3349, %v3337
  %v3806 = vpack.c.b16 %v3362, %v3350
  %v3807 = vpack.c.b16 %v3363, %v3351
  %v3808 = vpack.c.b16 %v3364, %v3352
  %v3809 = vpack.c.b16 %v3365, %v3353
  %v3810 = vpack.c.b16 %v3366, %v3354
  %v3811 = vpack.c.b16 %v3367, %v3355
  %v3812 = vpack.c.b16 %v3368, %v3356
  %v3813 = vpack.c.b16 %v3369, %v3357
  %v3814 = vpack.c.b16 %v3370, %v3358
  %v3815 = vpack.c.b16 %v3371, %v3359
  %v3816 = vpack.c.b16 %v3372, %v3360
  %v3817 = vpack.c.b16 %v3373, %v3361
  %v3818 = vpack.c.b16 %v3386, %v3374
  %v3819 = vpack.c.b16 %v3387, %v3375
  %v3820 = vpack.c.b16 %v3388, %v3376
  %v3821 = vpack.c.b16 %v3389, %v3377
  %v3822 = vpack.c.b16 %v3390, %v3378
  %v3823 = vpack.c.b16 %v3391, %v3379
  %v3824 = vpack.c.b16 %v3392, %v3380
  %v3825 = vpack.c.b16 %v3393, %v3381
  %v3826 = vpack.c.b16 %v3394, %v3382
  %v3827 = vpack.c.b16 %v3395, %v3383
  %v3828 = vpack.c.b16 %v3396, %v3384
  %v3829 = vpack.c.b16 %v3397, %v3385
  %v3830 = vpack.c.b16 %v3410, %v3398
  %v3831 = vpack.c.b16 %v3411, %v3399
  %v3832 = vpack.c.b16 %v3412, %v3400
  %v3833 = vpack.c.b16 %v3413, %v3401
  %v3834 = vpack.c.b16 %v3414, %v3402
  %v3835 = vpack.c.b16 %v3415, %v3403
  %v3836 = vpack.c.b16 %v3416, %v3404
  %v3837 = vpack.c.b16 %v3417, %v3405
  %v3838 = vpack.c.b16 %v3418, %v3406
  %v3839 = vpack.c.b16 %v3419, %v3407
  %v3840 = vpack.c.b16 %v3420, %v3408
  %v3841 = vpack.c.b16 %v3421, %v3409
  %v3842 = vpack.c.b16 %v3434, %v3422
  %v3843 = vpack.c.b16 %v3435, %v3423
  %v3844 = vpack.c.b16 %v3436, %v3424
  %v3845 = vpack.c.b16 %v3437, %v3425
  %v3846 = vpack.c.b16 %v3438, %v3426
  %v3847 = vpack.c.b16 %v3439, %v3427
  %v3848 = vpack.c.b16 %v3440, %v3428
  %v3849 = vpack.c.b16 %v3441, %v3429
  %v3850 = vpack.c.b16 %v3442, %v3430
  %v3851 = vpack.c.b16 %v3443, %v3431
  %v3852 = vpack.c.b16 %v3444, %v3432
  %v3853 = vpack.c.b16 %v3445, %v3433
  %v3854 = vpack.c.b16 %v3458, %v3446
  %v3855 = vpack.c.b16 %v3459, %v3447
  %v3856 = vpack.c.b16 %v3460, %v3448
  %v3857 = vpack.c.b16 %v3461, %v3449
  %v3858 = vpack.c.b16 %v3462, %v3450
  %v3859 = vpack.c.b16 %v3463, %v3451
  %v3860 = vpack.c.b16 %v3464, %v3452
  %v3861 = vpack.c.b16 %v3465, %v3453
  %v3862 = vpack.c.b16 %v3466, %v3454
  %v3863 = vpack.c.b16 %v3467, %v3455
  %v3864 = vpack.c.b16 %v3468, %v3456
  %v3865 = vpack.c.b16 %v3469, %v3457
  %v3866 = vpack.c.b16 %v3482, %v3470
  %v3867 = vpack.c.b16 %v3483, %v3471
  %v3868 = vpack.c.b16 %v3484, %v3472
  %v3869 = vpack.c.b16 %v3485, %v3473
  %v3870 = vpack.c.b16 %v3486, %v3474
  %v3871 = vpack.c.b16 %v3487, %v3475
  %v3872 = vpack.c.b16 %v3488, %v3476
  %v3873 = vpack.c.b16 %v3489, %v3477
  %v3874 = vpack.c.b16 %v3490, %v3478
  %v3875 = vpack.c.b16 %v3491, %v3479
  %v3876 = vpack.c.b16 %v3492, %v3480
  %v3877 = vpack.c.b16 %v3493, %v3481
  %4262 = vmatprep.subr.bf16.mxu0 %v3579
  %4263 = vmatpush1.bf16.msra.mxu0 %v3578
  %4264 = vmatprep.subr.bf16.mxu0 %v3567
  %4265 = vmatpush1.bf16.msra.mxu0 %v3566
  %4266 = vmatprep.subr.bf16.mxu0 %v3555
  %4267 = vmatpush1.bf16.msra.mxu0 %v3554
  %4268 = vmatprep.subr.bf16.mxu0 %v3543
  %4269 = vmatpush1.bf16.msra.mxu0 %v3542
  %4270 = vmatprep.subr.bf16.mxu0 %v3531
  %4271 = vmatpush1.bf16.msra.mxu0 %v3530
  %4272 = vmatprep.subr.bf16.mxu0 %v3519
  %4273 = vmatpush1.bf16.msra.mxu0 %v3518
  %4274 = vmatprep.subr.bf16.mxu0 %v3507
  %4275 = vmatpush1.bf16.msra.mxu0 %v3506
  %4276 = vmatprep.subr.bf16.mxu0 %v3495
  %4277 = vmatpush1.bf16.msra.mxu0 %v3494
  %4278 = vmatprep.subr.bf16.mxu0 %v3675
  %4279 = vmatpush2.bf16.msra.mxu0 %v3674
  %4280 = vmatprep.subr.bf16.mxu0 %v3663
  %4281 = vmatpush2.bf16.msra.mxu0 %v3662
  %4282 = vmatprep.subr.bf16.mxu0 %v3651
  %4283 = vmatpush2.bf16.msra.mxu0 %v3650
  %4284 = vmatprep.subr.bf16.mxu0 %v3639
  %4285 = vmatpush2.bf16.msra.mxu0 %v3638
  %4286 = vmatprep.subr.bf16.mxu0 %v3627
  %4287 = vmatpush2.bf16.msra.mxu0 %v3626
  %4288 = vmatprep.subr.bf16.mxu0 %v3615
  %4289 = vmatpush2.bf16.msra.mxu0 %v3614
  %4290 = vmatprep.subr.bf16.mxu0 %v3603
  %4291 = vmatpush2.bf16.msra.mxu0 %v3602
  %4292 = vmatprep.subr.bf16.mxu0 %v3591
  %4293 = vmatpush2.bf16.msra.mxu0 %v3590
  %4294 = vmatprep.mubr.bf16.mxu0 %v1927
  %4295 = vmatmul.mubr.bf16.gmra.mxu0 %v1926
  %v4296 = vpop.f32.mrf.mxu0
  %v4297 = vadd.f32 0.0, %v4296
  %v4298 = vpop.f32.mrf.mxu0
  %v4299 = vadd.f32 0.0, %v4298
  %v4300 = vpop.f32.mrf.mxu0
  %v4301 = vadd.f32 0.0, %v4300
  %v4302 = vpop.f32.mrf.mxu0
  %v4303 = vadd.f32 0.0, %v4302
  %4304 = vmatprep.mubr.bf16.mxu0 %v1931
  %4305 = vmatmul.mubr.bf16.gmra.mxu0 %v1930
  %v4306 = vpop.f32.mrf.mxu0
  %v4307 = vadd.f32 0.0, %v4306
  %v4308 = vpop.f32.mrf.mxu0
  %v4309 = vadd.f32 0.0, %v4308
  %v4310 = vpop.f32.mrf.mxu0
  %v4311 = vadd.f32 0.0, %v4310
  %v4312 = vpop.f32.mrf.mxu0
  %v4313 = vadd.f32 0.0, %v4312
  %4314 = vmatprep.mubr.bf16.mxu0 %v1935
  %4315 = vmatmul.mubr.bf16.gmra.mxu0 %v1934
  %v4316 = vpop.f32.mrf.mxu0
  %v4317 = vadd.f32 0.0, %v4316
  %v4318 = vpop.f32.mrf.mxu0
  %v4319 = vadd.f32 0.0, %v4318
  %v4320 = vpop.f32.mrf.mxu0
  %v4321 = vadd.f32 0.0, %v4320
  %v4322 = vpop.f32.mrf.mxu0
  %v4323 = vadd.f32 0.0, %v4322
  %4324 = vmatprep.mubr.bf16.mxu0 %v1939
  %4325 = vmatmul.mubr.bf16.gmra.mxu0 %v1938
  %v4326 = vpop.f32.mrf.mxu0
  %v4327 = vadd.f32 0.0, %v4326
  %v4328 = vpop.f32.mrf.mxu0
  %v4329 = vadd.f32 0.0, %v4328
  %v4330 = vpop.f32.mrf.mxu0
  %v4331 = vadd.f32 0.0, %v4330
  %v4332 = vpop.f32.mrf.mxu0
  %v4333 = vadd.f32 0.0, %v4332
  %4334 = vmatprep.mubr.bf16.mxu0 %v1943
  %4335 = vmatmul.mubr.bf16.gmra.mxu0 %v1942
  %v4336 = vpop.f32.mrf.mxu0
  %v4337 = vadd.f32 0.0, %v4336
  %v4338 = vpop.f32.mrf.mxu0
  %v4339 = vadd.f32 0.0, %v4338
  %v4340 = vpop.f32.mrf.mxu0
  %v4341 = vadd.f32 0.0, %v4340
  %v4342 = vpop.f32.mrf.mxu0
  %v4343 = vadd.f32 0.0, %v4342
  %4344 = vmatprep.mubr.bf16.mxu0 %v1947
  %4345 = vmatmul.mubr.bf16.gmra.mxu0 %v1946
  %v4346 = vpop.f32.mrf.mxu0
  %v4347 = vadd.f32 0.0, %v4346
  %v4348 = vpop.f32.mrf.mxu0
  %v4349 = vadd.f32 0.0, %v4348
  %v4350 = vpop.f32.mrf.mxu0
  %v4351 = vadd.f32 0.0, %v4350
  %v4352 = vpop.f32.mrf.mxu0
  %v4353 = vadd.f32 0.0, %v4352
  %4354 = vmatprep.mubr.bf16.mxu0 %v1951
  %4355 = vmatmul.mubr.bf16.gmra.mxu0 %v1950
  %v4356 = vpop.f32.mrf.mxu0
  %v4357 = vadd.f32 0.0, %v4356
  %v4358 = vpop.f32.mrf.mxu0
  %v4359 = vadd.f32 0.0, %v4358
  %v4360 = vpop.f32.mrf.mxu0
  %v4361 = vadd.f32 0.0, %v4360
  %v4362 = vpop.f32.mrf.mxu0
  %v4363 = vadd.f32 0.0, %v4362
  %4364 = vmatprep.mubr.bf16.mxu0 %v1955
  %4365 = vmatmul.mubr.bf16.gmra.mxu0 %v1954
  %v4366 = vpop.f32.mrf.mxu0
  %v4367 = vadd.f32 0.0, %v4366
  %v4368 = vpop.f32.mrf.mxu0
  %v4369 = vadd.f32 0.0, %v4368
  %v4370 = vpop.f32.mrf.mxu0
  %v4371 = vadd.f32 0.0, %v4370
  %v4372 = vpop.f32.mrf.mxu0
  %v4373 = vadd.f32 0.0, %v4372
  %4374 = vdwg.mxu0
  %4375 = vmatprep.subr.bf16.mxu0 %v3771
  %4376 = vmatpush1.bf16.msra.mxu0 %v3770
  %4377 = vmatprep.subr.bf16.mxu0 %v3759
  %4378 = vmatpush1.bf16.msra.mxu0 %v3758
  %4379 = vmatprep.subr.bf16.mxu0 %v3747
  %4380 = vmatpush1.bf16.msra.mxu0 %v3746
  %4381 = vmatprep.subr.bf16.mxu0 %v3735
  %4382 = vmatpush1.bf16.msra.mxu0 %v3734
  %4383 = vmatprep.subr.bf16.mxu0 %v3723
  %4384 = vmatpush1.bf16.msra.mxu0 %v3722
  %4385 = vmatprep.subr.bf16.mxu0 %v3711
  %4386 = vmatpush1.bf16.msra.mxu0 %v3710
  %4387 = vmatprep.subr.bf16.mxu0 %v3699
  %4388 = vmatpush1.bf16.msra.mxu0 %v3698
  %4389 = vmatprep.subr.bf16.mxu0 %v3687
  %4390 = vmatpush1.bf16.msra.mxu0 %v3686
  %4391 = vmatprep.subr.bf16.mxu0 %v3867
  %4392 = vmatpush2.bf16.msra.mxu0 %v3866
  %4393 = vmatprep.subr.bf16.mxu0 %v3855
  %4394 = vmatpush2.bf16.msra.mxu0 %v3854
  %4395 = vmatprep.subr.bf16.mxu0 %v3843
  %4396 = vmatpush2.bf16.msra.mxu0 %v3842
  %4397 = vmatprep.subr.bf16.mxu0 %v3831
  %4398 = vmatpush2.bf16.msra.mxu0 %v3830
  %4399 = vmatprep.subr.bf16.mxu0 %v3819
  %4400 = vmatpush2.bf16.msra.mxu0 %v3818
  %4401 = vmatprep.subr.bf16.mxu0 %v3807
  %4402 = vmatpush2.bf16.msra.mxu0 %v3806
  %4403 = vmatprep.subr.bf16.mxu0 %v3795
  %4404 = vmatpush2.bf16.msra.mxu0 %v3794
  %4405 = vmatprep.subr.bf16.mxu0 %v3783
  %4406 = vmatpush2.bf16.msra.mxu0 %v3782
  %4407 = vmatprep.mubr.bf16.mxu0 %v1929
  %4408 = vmatmul.mubr.bf16.gmra.mxu0 %v1928
  %v4409 = vpop.f32.mrf.mxu0
  %v4410 = vadd.f32 %v4297, %v4409
  %v4411 = vpop.f32.mrf.mxu0
  %v4412 = vadd.f32 %v4299, %v4411
  %v4413 = vpop.f32.mrf.mxu0
  %v4414 = vadd.f32 %v4301, %v4413
  %v4415 = vpop.f32.mrf.mxu0
  %v4416 = vadd.f32 %v4303, %v4415
  %4417 = vmatprep.mubr.bf16.mxu0 %v1933
  %4418 = vmatmul.mubr.bf16.gmra.mxu0 %v1932
  %v4419 = vpop.f32.mrf.mxu0
  %v4420 = vadd.f32 %v4307, %v4419
  %v4421 = vpop.f32.mrf.mxu0
  %v4422 = vadd.f32 %v4309, %v4421
  %v4423 = vpop.f32.mrf.mxu0
  %v4424 = vadd.f32 %v4311, %v4423
  %v4425 = vpop.f32.mrf.mxu0
  %v4426 = vadd.f32 %v4313, %v4425
  %4427 = vmatprep.mubr.bf16.mxu0 %v1937
  %4428 = vmatmul.mubr.bf16.gmra.mxu0 %v1936
  %v4429 = vpop.f32.mrf.mxu0
  %v4430 = vadd.f32 %v4317, %v4429
  %v4431 = vpop.f32.mrf.mxu0
  %v4432 = vadd.f32 %v4319, %v4431
  %v4433 = vpop.f32.mrf.mxu0
  %v4434 = vadd.f32 %v4321, %v4433
  %v4435 = vpop.f32.mrf.mxu0
  %v4436 = vadd.f32 %v4323, %v4435
  %4437 = vmatprep.mubr.bf16.mxu0 %v1941
  %4438 = vmatmul.mubr.bf16.gmra.mxu0 %v1940
  %v4439 = vpop.f32.mrf.mxu0
  %v4440 = vadd.f32 %v4327, %v4439
  %v4441 = vpop.f32.mrf.mxu0
  %v4442 = vadd.f32 %v4329, %v4441
  %v4443 = vpop.f32.mrf.mxu0
  %v4444 = vadd.f32 %v4331, %v4443
  %v4445 = vpop.f32.mrf.mxu0
  %v4446 = vadd.f32 %v4333, %v4445
  %4447 = vmatprep.mubr.bf16.mxu0 %v1945
  %4448 = vmatmul.mubr.bf16.gmra.mxu0 %v1944
  %v4449 = vpop.f32.mrf.mxu0
  %v4450 = vadd.f32 %v4337, %v4449
  %v4451 = vpop.f32.mrf.mxu0
  %v4452 = vadd.f32 %v4339, %v4451
  %v4453 = vpop.f32.mrf.mxu0
  %v4454 = vadd.f32 %v4341, %v4453
  %v4455 = vpop.f32.mrf.mxu0
  %v4456 = vadd.f32 %v4343, %v4455
  %4457 = vmatprep.mubr.bf16.mxu0 %v1949
  %4458 = vmatmul.mubr.bf16.gmra.mxu0 %v1948
  %v4459 = vpop.f32.mrf.mxu0
  %v4460 = vadd.f32 %v4347, %v4459
  %v4461 = vpop.f32.mrf.mxu0
  %v4462 = vadd.f32 %v4349, %v4461
  %v4463 = vpop.f32.mrf.mxu0
  %v4464 = vadd.f32 %v4351, %v4463
  %v4465 = vpop.f32.mrf.mxu0
  %v4466 = vadd.f32 %v4353, %v4465
  %4467 = vmatprep.mubr.bf16.mxu0 %v1953
  %4468 = vmatmul.mubr.bf16.gmra.mxu0 %v1952
  %v4469 = vpop.f32.mrf.mxu0
  %v4470 = vadd.f32 %v4357, %v4469
  %v4471 = vpop.f32.mrf.mxu0
  %v4472 = vadd.f32 %v4359, %v4471
  %v4473 = vpop.f32.mrf.mxu0
  %v4474 = vadd.f32 %v4361, %v4473
  %v4475 = vpop.f32.mrf.mxu0
  %v4476 = vadd.f32 %v4363, %v4475
  %4477 = vmatprep.mubr.bf16.mxu0 %v1957
  %4478 = vmatmul.mubr.bf16.gmra.mxu0 %v1956
  %v4479 = vpop.f32.mrf.mxu0
  %v4480 = vadd.f32 %v4367, %v4479
  %v4481 = vpop.f32.mrf.mxu0
  %v4482 = vadd.f32 %v4369, %v4481
  %v4483 = vpop.f32.mrf.mxu0
  %v4484 = vadd.f32 %v4371, %v4483
  %v4485 = vpop.f32.mrf.mxu0
  %v4486 = vadd.f32 %v4373, %v4485
  %4487 = vdwg.mxu0
  %4488 = vmatprep.subr.bf16.mxu0 %v3581
  %4489 = vmatpush1.bf16.msra.mxu0 %v3580
  %4490 = vmatprep.subr.bf16.mxu0 %v3569
  %4491 = vmatpush1.bf16.msra.mxu0 %v3568
  %4492 = vmatprep.subr.bf16.mxu0 %v3557
  %4493 = vmatpush1.bf16.msra.mxu0 %v3556
  %4494 = vmatprep.subr.bf16.mxu0 %v3545
  %4495 = vmatpush1.bf16.msra.mxu0 %v3544
  %4496 = vmatprep.subr.bf16.mxu0 %v3533
  %4497 = vmatpush1.bf16.msra.mxu0 %v3532
  %4498 = vmatprep.subr.bf16.mxu0 %v3521
  %4499 = vmatpush1.bf16.msra.mxu0 %v3520
  %4500 = vmatprep.subr.bf16.mxu0 %v3509
  %4501 = vmatpush1.bf16.msra.mxu0 %v3508
  %4502 = vmatprep.subr.bf16.mxu0 %v3497
  %4503 = vmatpush1.bf16.msra.mxu0 %v3496
  %4504 = vmatprep.subr.bf16.mxu0 %v3677
  %4505 = vmatpush2.bf16.msra.mxu0 %v3676
  %4506 = vmatprep.subr.bf16.mxu0 %v3665
  %4507 = vmatpush2.bf16.msra.mxu0 %v3664
  %4508 = vmatprep.subr.bf16.mxu0 %v3653
  %4509 = vmatpush2.bf16.msra.mxu0 %v3652
  %4510 = vmatprep.subr.bf16.mxu0 %v3641
  %4511 = vmatpush2.bf16.msra.mxu0 %v3640
  %4512 = vmatprep.subr.bf16.mxu0 %v3629
  %4513 = vmatpush2.bf16.msra.mxu0 %v3628
  %4514 = vmatprep.subr.bf16.mxu0 %v3617
  %4515 = vmatpush2.bf16.msra.mxu0 %v3616
  %4516 = vmatprep.subr.bf16.mxu0 %v3605
  %4517 = vmatpush2.bf16.msra.mxu0 %v3604
  %4518 = vmatprep.subr.bf16.mxu0 %v3593
  %4519 = vmatpush2.bf16.msra.mxu0 %v3592
  %4520 = vmatprep.mubr.bf16.mxu0 %v1927
  %4521 = vmatmul.mubr.bf16.gmra.mxu0 %v1926
  %v4522 = vpop.f32.mrf.mxu0
  %v4523 = vadd.f32 0.0, %v4522
  %v4524 = vpop.f32.mrf.mxu0
  %v4525 = vadd.f32 0.0, %v4524
  %v4526 = vpop.f32.mrf.mxu0
  %v4527 = vadd.f32 0.0, %v4526
  %v4528 = vpop.f32.mrf.mxu0
  %v4529 = vadd.f32 0.0, %v4528
  %4530 = vmatprep.mubr.bf16.mxu0 %v1931
  %4531 = vmatmul.mubr.bf16.gmra.mxu0 %v1930
  %v4532 = vpop.f32.mrf.mxu0
  %v4533 = vadd.f32 0.0, %v4532
  %v4534 = vpop.f32.mrf.mxu0
  %v4535 = vadd.f32 0.0, %v4534
  %v4536 = vpop.f32.mrf.mxu0
  %v4537 = vadd.f32 0.0, %v4536
  %v4538 = vpop.f32.mrf.mxu0
  %v4539 = vadd.f32 0.0, %v4538
  %4540 = vmatprep.mubr.bf16.mxu0 %v1935
  %4541 = vmatmul.mubr.bf16.gmra.mxu0 %v1934
  %v4542 = vpop.f32.mrf.mxu0
  %v4543 = vadd.f32 0.0, %v4542
  %v4544 = vpop.f32.mrf.mxu0
  %v4545 = vadd.f32 0.0, %v4544
  %v4546 = vpop.f32.mrf.mxu0
  %v4547 = vadd.f32 0.0, %v4546
  %v4548 = vpop.f32.mrf.mxu0
  %v4549 = vadd.f32 0.0, %v4548
  %4550 = vmatprep.mubr.bf16.mxu0 %v1939
  %4551 = vmatmul.mubr.bf16.gmra.mxu0 %v1938
  %v4552 = vpop.f32.mrf.mxu0
  %v4553 = vadd.f32 0.0, %v4552
  %v4554 = vpop.f32.mrf.mxu0
  %v4555 = vadd.f32 0.0, %v4554
  %v4556 = vpop.f32.mrf.mxu0
  %v4557 = vadd.f32 0.0, %v4556
  %v4558 = vpop.f32.mrf.mxu0
  %v4559 = vadd.f32 0.0, %v4558
  %4560 = vmatprep.mubr.bf16.mxu0 %v1943
  %4561 = vmatmul.mubr.bf16.gmra.mxu0 %v1942
  %v4562 = vpop.f32.mrf.mxu0
  %v4563 = vadd.f32 0.0, %v4562
  %v4564 = vpop.f32.mrf.mxu0
  %v4565 = vadd.f32 0.0, %v4564
  %v4566 = vpop.f32.mrf.mxu0
  %v4567 = vadd.f32 0.0, %v4566
  %v4568 = vpop.f32.mrf.mxu0
  %v4569 = vadd.f32 0.0, %v4568
  %4570 = vmatprep.mubr.bf16.mxu0 %v1947
  %4571 = vmatmul.mubr.bf16.gmra.mxu0 %v1946
  %v4572 = vpop.f32.mrf.mxu0
  %v4573 = vadd.f32 0.0, %v4572
  %v4574 = vpop.f32.mrf.mxu0
  %v4575 = vadd.f32 0.0, %v4574
  %v4576 = vpop.f32.mrf.mxu0
  %v4577 = vadd.f32 0.0, %v4576
  %v4578 = vpop.f32.mrf.mxu0
  %v4579 = vadd.f32 0.0, %v4578
  %4580 = vmatprep.mubr.bf16.mxu0 %v1951
  %4581 = vmatmul.mubr.bf16.gmra.mxu0 %v1950
  %v4582 = vpop.f32.mrf.mxu0
  %v4583 = vadd.f32 0.0, %v4582
  %v4584 = vpop.f32.mrf.mxu0
  %v4585 = vadd.f32 0.0, %v4584
  %v4586 = vpop.f32.mrf.mxu0
  %v4587 = vadd.f32 0.0, %v4586
  %v4588 = vpop.f32.mrf.mxu0
  %v4589 = vadd.f32 0.0, %v4588
  %4590 = vmatprep.mubr.bf16.mxu0 %v1955
  %4591 = vmatmul.mubr.bf16.gmra.mxu0 %v1954
  %v4592 = vpop.f32.mrf.mxu0
  %v4593 = vadd.f32 0.0, %v4592
  %v4594 = vpop.f32.mrf.mxu0
  %v4595 = vadd.f32 0.0, %v4594
  %v4596 = vpop.f32.mrf.mxu0
  %v4597 = vadd.f32 0.0, %v4596
  %v4598 = vpop.f32.mrf.mxu0
  %v4599 = vadd.f32 0.0, %v4598
  %4600 = vdwg.mxu0
  %4601 = vmatprep.subr.bf16.mxu0 %v3773
  %4602 = vmatpush1.bf16.msra.mxu0 %v3772
  %4603 = vmatprep.subr.bf16.mxu0 %v3761
  %4604 = vmatpush1.bf16.msra.mxu0 %v3760
  %4605 = vmatprep.subr.bf16.mxu0 %v3749
  %4606 = vmatpush1.bf16.msra.mxu0 %v3748
  %4607 = vmatprep.subr.bf16.mxu0 %v3737
  %4608 = vmatpush1.bf16.msra.mxu0 %v3736
  %4609 = vmatprep.subr.bf16.mxu0 %v3725
  %4610 = vmatpush1.bf16.msra.mxu0 %v3724
  %4611 = vmatprep.subr.bf16.mxu0 %v3713
  %4612 = vmatpush1.bf16.msra.mxu0 %v3712
  %4613 = vmatprep.subr.bf16.mxu0 %v3701
  %4614 = vmatpush1.bf16.msra.mxu0 %v3700
  %4615 = vmatprep.subr.bf16.mxu0 %v3689
  %4616 = vmatpush1.bf16.msra.mxu0 %v3688
  %4617 = vmatprep.subr.bf16.mxu0 %v3869
  %4618 = vmatpush2.bf16.msra.mxu0 %v3868
  %4619 = vmatprep.subr.bf16.mxu0 %v3857
  %4620 = vmatpush2.bf16.msra.mxu0 %v3856
  %4621 = vmatprep.subr.bf16.mxu0 %v3845
  %4622 = vmatpush2.bf16.msra.mxu0 %v3844
  %4623 = vmatprep.subr.bf16.mxu0 %v3833
  %4624 = vmatpush2.bf16.msra.mxu0 %v3832
  %4625 = vmatprep.subr.bf16.mxu0 %v3821
  %4626 = vmatpush2.bf16.msra.mxu0 %v3820
  %4627 = vmatprep.subr.bf16.mxu0 %v3809
  %4628 = vmatpush2.bf16.msra.mxu0 %v3808
  %4629 = vmatprep.subr.bf16.mxu0 %v3797
  %4630 = vmatpush2.bf16.msra.mxu0 %v3796
  %4631 = vmatprep.subr.bf16.mxu0 %v3785
  %4632 = vmatpush2.bf16.msra.mxu0 %v3784
  %4633 = vmatprep.mubr.bf16.mxu0 %v1929
  %4634 = vmatmul.mubr.bf16.gmra.mxu0 %v1928
  %v4635 = vpop.f32.mrf.mxu0
  %v4636 = vadd.f32 %v4523, %v4635
  %v4637 = vpop.f32.mrf.mxu0
  %v4638 = vadd.f32 %v4525, %v4637
  %v4639 = vpop.f32.mrf.mxu0
  %v4640 = vadd.f32 %v4527, %v4639
  %v4641 = vpop.f32.mrf.mxu0
  %v4642 = vadd.f32 %v4529, %v4641
  %4643 = vmatprep.mubr.bf16.mxu0 %v1933
  %4644 = vmatmul.mubr.bf16.gmra.mxu0 %v1932
  %v4645 = vpop.f32.mrf.mxu0
  %v4646 = vadd.f32 %v4533, %v4645
  %v4647 = vpop.f32.mrf.mxu0
  %v4648 = vadd.f32 %v4535, %v4647
  %v4649 = vpop.f32.mrf.mxu0
  %v4650 = vadd.f32 %v4537, %v4649
  %v4651 = vpop.f32.mrf.mxu0
  %v4652 = vadd.f32 %v4539, %v4651
  %4653 = vmatprep.mubr.bf16.mxu0 %v1937
  %4654 = vmatmul.mubr.bf16.gmra.mxu0 %v1936
  %v4655 = vpop.f32.mrf.mxu0
  %v4656 = vadd.f32 %v4543, %v4655
  %v4657 = vpop.f32.mrf.mxu0
  %v4658 = vadd.f32 %v4545, %v4657
  %v4659 = vpop.f32.mrf.mxu0
  %v4660 = vadd.f32 %v4547, %v4659
  %v4661 = vpop.f32.mrf.mxu0
  %v4662 = vadd.f32 %v4549, %v4661
  %4663 = vmatprep.mubr.bf16.mxu0 %v1941
  %4664 = vmatmul.mubr.bf16.gmra.mxu0 %v1940
  %v4665 = vpop.f32.mrf.mxu0
  %v4666 = vadd.f32 %v4553, %v4665
  %v4667 = vpop.f32.mrf.mxu0
  %v4668 = vadd.f32 %v4555, %v4667
  %v4669 = vpop.f32.mrf.mxu0
  %v4670 = vadd.f32 %v4557, %v4669
  %v4671 = vpop.f32.mrf.mxu0
  %v4672 = vadd.f32 %v4559, %v4671
  %4673 = vmatprep.mubr.bf16.mxu0 %v1945
  %4674 = vmatmul.mubr.bf16.gmra.mxu0 %v1944
  %v4675 = vpop.f32.mrf.mxu0
  %v4676 = vadd.f32 %v4563, %v4675
  %v4677 = vpop.f32.mrf.mxu0
  %v4678 = vadd.f32 %v4565, %v4677
  %v4679 = vpop.f32.mrf.mxu0
  %v4680 = vadd.f32 %v4567, %v4679
  %v4681 = vpop.f32.mrf.mxu0
  %v4682 = vadd.f32 %v4569, %v4681
  %4683 = vmatprep.mubr.bf16.mxu0 %v1949
  %4684 = vmatmul.mubr.bf16.gmra.mxu0 %v1948
  %v4685 = vpop.f32.mrf.mxu0
  %v4686 = vadd.f32 %v4573, %v4685
  %v4687 = vpop.f32.mrf.mxu0
  %v4688 = vadd.f32 %v4575, %v4687
  %v4689 = vpop.f32.mrf.mxu0
  %v4690 = vadd.f32 %v4577, %v4689
  %v4691 = vpop.f32.mrf.mxu0
  %v4692 = vadd.f32 %v4579, %v4691
  %4693 = vmatprep.mubr.bf16.mxu0 %v1953
  %4694 = vmatmul.mubr.bf16.gmra.mxu0 %v1952
  %v4695 = vpop.f32.mrf.mxu0
  %v4696 = vadd.f32 %v4583, %v4695
  %v4697 = vpop.f32.mrf.mxu0
  %v4698 = vadd.f32 %v4585, %v4697
  %v4699 = vpop.f32.mrf.mxu0
  %v4700 = vadd.f32 %v4587, %v4699
  %v4701 = vpop.f32.mrf.mxu0
  %v4702 = vadd.f32 %v4589, %v4701
  %4703 = vmatprep.mubr.bf16.mxu0 %v1957
  %4704 = vmatmul.mubr.bf16.gmra.mxu0 %v1956
  %v4705 = vpop.f32.mrf.mxu0
  %v4706 = vadd.f32 %v4593, %v4705
  %v4707 = vpop.f32.mrf.mxu0
  %v4708 = vadd.f32 %v4595, %v4707
  %v4709 = vpop.f32.mrf.mxu0
  %v4710 = vadd.f32 %v4597, %v4709
  %v4711 = vpop.f32.mrf.mxu0
  %v4712 = vadd.f32 %v4599, %v4711
  %4713 = vdwg.mxu0
  %4714 = vmatprep.subr.bf16.mxu0 %v3583
  %4715 = vmatpush1.bf16.msra.mxu0 %v3582
  %4716 = vmatprep.subr.bf16.mxu0 %v3571
  %4717 = vmatpush1.bf16.msra.mxu0 %v3570
  %4718 = vmatprep.subr.bf16.mxu0 %v3559
  %4719 = vmatpush1.bf16.msra.mxu0 %v3558
  %4720 = vmatprep.subr.bf16.mxu0 %v3547
  %4721 = vmatpush1.bf16.msra.mxu0 %v3546
  %4722 = vmatprep.subr.bf16.mxu0 %v3535
  %4723 = vmatpush1.bf16.msra.mxu0 %v3534
  %4724 = vmatprep.subr.bf16.mxu0 %v3523
  %4725 = vmatpush1.bf16.msra.mxu0 %v3522
  %4726 = vmatprep.subr.bf16.mxu0 %v3511
  %4727 = vmatpush1.bf16.msra.mxu0 %v3510
  %4728 = vmatprep.subr.bf16.mxu0 %v3499
  %4729 = vmatpush1.bf16.msra.mxu0 %v3498
  %4730 = vmatprep.subr.bf16.mxu0 %v3679
  %4731 = vmatpush2.bf16.msra.mxu0 %v3678
  %4732 = vmatprep.subr.bf16.mxu0 %v3667
  %4733 = vmatpush2.bf16.msra.mxu0 %v3666
  %4734 = vmatprep.subr.bf16.mxu0 %v3655
  %4735 = vmatpush2.bf16.msra.mxu0 %v3654
  %4736 = vmatprep.subr.bf16.mxu0 %v3643
  %4737 = vmatpush2.bf16.msra.mxu0 %v3642
  %4738 = vmatprep.subr.bf16.mxu0 %v3631
  %4739 = vmatpush2.bf16.msra.mxu0 %v3630
  %4740 = vmatprep.subr.bf16.mxu0 %v3619
  %4741 = vmatpush2.bf16.msra.mxu0 %v3618
  %4742 = vmatprep.subr.bf16.mxu0 %v3607
  %4743 = vmatpush2.bf16.msra.mxu0 %v3606
  %4744 = vmatprep.subr.bf16.mxu0 %v3595
  %4745 = vmatpush2.bf16.msra.mxu0 %v3594
  %4746 = vmatprep.mubr.bf16.mxu0 %v1927
  %4747 = vmatmul.mubr.bf16.gmra.mxu0 %v1926
  %v4748 = vpop.f32.mrf.mxu0
  %v4749 = vadd.f32 0.0, %v4748
  %v4750 = vpop.f32.mrf.mxu0
  %v4751 = vadd.f32 0.0, %v4750
  %v4752 = vpop.f32.mrf.mxu0
  %v4753 = vadd.f32 0.0, %v4752
  %v4754 = vpop.f32.mrf.mxu0
  %v4755 = vadd.f32 0.0, %v4754
  %4756 = vmatprep.mubr.bf16.mxu0 %v1931
  %4757 = vmatmul.mubr.bf16.gmra.mxu0 %v1930
  %v4758 = vpop.f32.mrf.mxu0
  %v4759 = vadd.f32 0.0, %v4758
  %v4760 = vpop.f32.mrf.mxu0
  %v4761 = vadd.f32 0.0, %v4760
  %v4762 = vpop.f32.mrf.mxu0
  %v4763 = vadd.f32 0.0, %v4762
  %v4764 = vpop.f32.mrf.mxu0
  %v4765 = vadd.f32 0.0, %v4764
  %4766 = vmatprep.mubr.bf16.mxu0 %v1935
  %4767 = vmatmul.mubr.bf16.gmra.mxu0 %v1934
  %v4768 = vpop.f32.mrf.mxu0
  %v4769 = vadd.f32 0.0, %v4768
  %v4770 = vpop.f32.mrf.mxu0
  %v4771 = vadd.f32 0.0, %v4770
  %v4772 = vpop.f32.mrf.mxu0
  %v4773 = vadd.f32 0.0, %v4772
  %v4774 = vpop.f32.mrf.mxu0
  %v4775 = vadd.f32 0.0, %v4774
  %4776 = vmatprep.mubr.bf16.mxu0 %v1939
  %4777 = vmatmul.mubr.bf16.gmra.mxu0 %v1938
  %v4778 = vpop.f32.mrf.mxu0
  %v4779 = vadd.f32 0.0, %v4778
  %v4780 = vpop.f32.mrf.mxu0
  %v4781 = vadd.f32 0.0, %v4780
  %v4782 = vpop.f32.mrf.mxu0
  %v4783 = vadd.f32 0.0, %v4782
  %v4784 = vpop.f32.mrf.mxu0
  %v4785 = vadd.f32 0.0, %v4784
  %4786 = vmatprep.mubr.bf16.mxu0 %v1943
  %4787 = vmatmul.mubr.bf16.gmra.mxu0 %v1942
  %v4788 = vpop.f32.mrf.mxu0
  %v4789 = vadd.f32 0.0, %v4788
  %v4790 = vpop.f32.mrf.mxu0
  %v4791 = vadd.f32 0.0, %v4790
  %v4792 = vpop.f32.mrf.mxu0
  %v4793 = vadd.f32 0.0, %v4792
  %v4794 = vpop.f32.mrf.mxu0
  %v4795 = vadd.f32 0.0, %v4794
  %4796 = vmatprep.mubr.bf16.mxu0 %v1947
  %4797 = vmatmul.mubr.bf16.gmra.mxu0 %v1946
  %v4798 = vpop.f32.mrf.mxu0
  %v4799 = vadd.f32 0.0, %v4798
  %v4800 = vpop.f32.mrf.mxu0
  %v4801 = vadd.f32 0.0, %v4800
  %v4802 = vpop.f32.mrf.mxu0
  %v4803 = vadd.f32 0.0, %v4802
  %v4804 = vpop.f32.mrf.mxu0
  %v4805 = vadd.f32 0.0, %v4804
  %4806 = vmatprep.mubr.bf16.mxu0 %v1951
  %4807 = vmatmul.mubr.bf16.gmra.mxu0 %v1950
  %v4808 = vpop.f32.mrf.mxu0
  %v4809 = vadd.f32 0.0, %v4808
  %v4810 = vpop.f32.mrf.mxu0
  %v4811 = vadd.f32 0.0, %v4810
  %v4812 = vpop.f32.mrf.mxu0
  %v4813 = vadd.f32 0.0, %v4812
  %v4814 = vpop.f32.mrf.mxu0
  %v4815 = vadd.f32 0.0, %v4814
  %4816 = vmatprep.mubr.bf16.mxu0 %v1955
  %4817 = vmatmul.mubr.bf16.gmra.mxu0 %v1954
  %v4818 = vpop.f32.mrf.mxu0
  %v4819 = vadd.f32 0.0, %v4818
  %v4820 = vpop.f32.mrf.mxu0
  %v4821 = vadd.f32 0.0, %v4820
  %v4822 = vpop.f32.mrf.mxu0
  %v4823 = vadd.f32 0.0, %v4822
  %v4824 = vpop.f32.mrf.mxu0
  %v4825 = vadd.f32 0.0, %v4824
  %4826 = vdwg.mxu0
  %4827 = vmatprep.subr.bf16.mxu0 %v3775
  %4828 = vmatpush1.bf16.msra.mxu0 %v3774
  %4829 = vmatprep.subr.bf16.mxu0 %v3763
  %4830 = vmatpush1.bf16.msra.mxu0 %v3762
  %4831 = vmatprep.subr.bf16.mxu0 %v3751
  %4832 = vmatpush1.bf16.msra.mxu0 %v3750
  %4833 = vmatprep.subr.bf16.mxu0 %v3739
  %4834 = vmatpush1.bf16.msra.mxu0 %v3738
  %4835 = vmatprep.subr.bf16.mxu0 %v3727
  %4836 = vmatpush1.bf16.msra.mxu0 %v3726
  %4837 = vmatprep.subr.bf16.mxu0 %v3715
  %4838 = vmatpush1.bf16.msra.mxu0 %v3714
  %4839 = vmatprep.subr.bf16.mxu0 %v3703
  %4840 = vmatpush1.bf16.msra.mxu0 %v3702
  %4841 = vmatprep.subr.bf16.mxu0 %v3691
  %4842 = vmatpush1.bf16.msra.mxu0 %v3690
  %4843 = vmatprep.subr.bf16.mxu0 %v3871
  %4844 = vmatpush2.bf16.msra.mxu0 %v3870
  %4845 = vmatprep.subr.bf16.mxu0 %v3859
  %4846 = vmatpush2.bf16.msra.mxu0 %v3858
  %4847 = vmatprep.subr.bf16.mxu0 %v3847
  %4848 = vmatpush2.bf16.msra.mxu0 %v3846
  %4849 = vmatprep.subr.bf16.mxu0 %v3835
  %4850 = vmatpush2.bf16.msra.mxu0 %v3834
  %4851 = vmatprep.subr.bf16.mxu0 %v3823
  %4852 = vmatpush2.bf16.msra.mxu0 %v3822
  %4853 = vmatprep.subr.bf16.mxu0 %v3811
  %4854 = vmatpush2.bf16.msra.mxu0 %v3810
  %4855 = vmatprep.subr.bf16.mxu0 %v3799
  %4856 = vmatpush2.bf16.msra.mxu0 %v3798
  %4857 = vmatprep.subr.bf16.mxu0 %v3787
  %4858 = vmatpush2.bf16.msra.mxu0 %v3786
  %4859 = vmatprep.mubr.bf16.mxu0 %v1929
  %4860 = vmatmul.mubr.bf16.gmra.mxu0 %v1928
  %v4861 = vpop.f32.mrf.mxu0
  %v4862 = vadd.f32 %v4749, %v4861
  %v4863 = vpop.f32.mrf.mxu0
  %v4864 = vadd.f32 %v4751, %v4863
  %v4865 = vpop.f32.mrf.mxu0
  %v4866 = vadd.f32 %v4753, %v4865
  %v4867 = vpop.f32.mrf.mxu0
  %v4868 = vadd.f32 %v4755, %v4867
  %4869 = vmatprep.mubr.bf16.mxu0 %v1933
  %4870 = vmatmul.mubr.bf16.gmra.mxu0 %v1932
  %v4871 = vpop.f32.mrf.mxu0
  %v4872 = vadd.f32 %v4759, %v4871
  %v4873 = vpop.f32.mrf.mxu0
  %v4874 = vadd.f32 %v4761, %v4873
  %v4875 = vpop.f32.mrf.mxu0
  %v4876 = vadd.f32 %v4763, %v4875
  %v4877 = vpop.f32.mrf.mxu0
  %v4878 = vadd.f32 %v4765, %v4877
  %4879 = vmatprep.mubr.bf16.mxu0 %v1937
  %4880 = vmatmul.mubr.bf16.gmra.mxu0 %v1936
  %v4881 = vpop.f32.mrf.mxu0
  %v4882 = vadd.f32 %v4769, %v4881
  %v4883 = vpop.f32.mrf.mxu0
  %v4884 = vadd.f32 %v4771, %v4883
  %v4885 = vpop.f32.mrf.mxu0
  %v4886 = vadd.f32 %v4773, %v4885
  %v4887 = vpop.f32.mrf.mxu0
  %v4888 = vadd.f32 %v4775, %v4887
  %4889 = vmatprep.mubr.bf16.mxu0 %v1941
  %4890 = vmatmul.mubr.bf16.gmra.mxu0 %v1940
  %v4891 = vpop.f32.mrf.mxu0
  %v4892 = vadd.f32 %v4779, %v4891
  %v4893 = vpop.f32.mrf.mxu0
  %v4894 = vadd.f32 %v4781, %v4893
  %v4895 = vpop.f32.mrf.mxu0
  %v4896 = vadd.f32 %v4783, %v4895
  %v4897 = vpop.f32.mrf.mxu0
  %v4898 = vadd.f32 %v4785, %v4897
  %4899 = vmatprep.mubr.bf16.mxu0 %v1945
  %4900 = vmatmul.mubr.bf16.gmra.mxu0 %v1944
  %v4901 = vpop.f32.mrf.mxu0
  %v4902 = vadd.f32 %v4789, %v4901
  %v4903 = vpop.f32.mrf.mxu0
  %v4904 = vadd.f32 %v4791, %v4903
  %v4905 = vpop.f32.mrf.mxu0
  %v4906 = vadd.f32 %v4793, %v4905
  %v4907 = vpop.f32.mrf.mxu0
  %v4908 = vadd.f32 %v4795, %v4907
  %4909 = vmatprep.mubr.bf16.mxu0 %v1949
  %4910 = vmatmul.mubr.bf16.gmra.mxu0 %v1948
  %v4911 = vpop.f32.mrf.mxu0
  %v4912 = vadd.f32 %v4799, %v4911
  %v4913 = vpop.f32.mrf.mxu0
  %v4914 = vadd.f32 %v4801, %v4913
  %v4915 = vpop.f32.mrf.mxu0
  %v4916 = vadd.f32 %v4803, %v4915
  %v4917 = vpop.f32.mrf.mxu0
  %v4918 = vadd.f32 %v4805, %v4917
  %4919 = vmatprep.mubr.bf16.mxu0 %v1953
  %4920 = vmatmul.mubr.bf16.gmra.mxu0 %v1952
  %v4921 = vpop.f32.mrf.mxu0
  %v4922 = vadd.f32 %v4809, %v4921
  %v4923 = vpop.f32.mrf.mxu0
  %v4924 = vadd.f32 %v4811, %v4923
  %v4925 = vpop.f32.mrf.mxu0
  %v4926 = vadd.f32 %v4813, %v4925
  %v4927 = vpop.f32.mrf.mxu0
  %v4928 = vadd.f32 %v4815, %v4927
  %4929 = vmatprep.mubr.bf16.mxu0 %v1957
  %4930 = vmatmul.mubr.bf16.gmra.mxu0 %v1956
  %v4931 = vpop.f32.mrf.mxu0
  %v4932 = vadd.f32 %v4819, %v4931
  %v4933 = vpop.f32.mrf.mxu0
  %v4934 = vadd.f32 %v4821, %v4933
  %v4935 = vpop.f32.mrf.mxu0
  %v4936 = vadd.f32 %v4823, %v4935
  %v4937 = vpop.f32.mrf.mxu0
  %v4938 = vadd.f32 %v4825, %v4937
  %4939 = vdwg.mxu0
  %4940 = vmatprep.subr.bf16.mxu0 %v3585
  %4941 = vmatpush1.bf16.msra.mxu0 %v3584
  %4942 = vmatprep.subr.bf16.mxu0 %v3573
  %4943 = vmatpush1.bf16.msra.mxu0 %v3572
  %4944 = vmatprep.subr.bf16.mxu0 %v3561
  %4945 = vmatpush1.bf16.msra.mxu0 %v3560
  %4946 = vmatprep.subr.bf16.mxu0 %v3549
  %4947 = vmatpush1.bf16.msra.mxu0 %v3548
  %4948 = vmatprep.subr.bf16.mxu0 %v3537
  %4949 = vmatpush1.bf16.msra.mxu0 %v3536
  %4950 = vmatprep.subr.bf16.mxu0 %v3525
  %4951 = vmatpush1.bf16.msra.mxu0 %v3524
  %4952 = vmatprep.subr.bf16.mxu0 %v3513
  %4953 = vmatpush1.bf16.msra.mxu0 %v3512
  %4954 = vmatprep.subr.bf16.mxu0 %v3501
  %4955 = vmatpush1.bf16.msra.mxu0 %v3500
  %4956 = vmatprep.subr.bf16.mxu0 %v3681
  %4957 = vmatpush2.bf16.msra.mxu0 %v3680
  %4958 = vmatprep.subr.bf16.mxu0 %v3669
  %4959 = vmatpush2.bf16.msra.mxu0 %v3668
  %4960 = vmatprep.subr.bf16.mxu0 %v3657
  %4961 = vmatpush2.bf16.msra.mxu0 %v3656
  %4962 = vmatprep.subr.bf16.mxu0 %v3645
  %4963 = vmatpush2.bf16.msra.mxu0 %v3644
  %4964 = vmatprep.subr.bf16.mxu0 %v3633
  %4965 = vmatpush2.bf16.msra.mxu0 %v3632
  %4966 = vmatprep.subr.bf16.mxu0 %v3621
  %4967 = vmatpush2.bf16.msra.mxu0 %v3620
  %4968 = vmatprep.subr.bf16.mxu0 %v3609
  %4969 = vmatpush2.bf16.msra.mxu0 %v3608
  %4970 = vmatprep.subr.bf16.mxu0 %v3597
  %4971 = vmatpush2.bf16.msra.mxu0 %v3596
  %4972 = vmatprep.mubr.bf16.mxu0 %v1927
  %4973 = vmatmul.mubr.bf16.gmra.mxu0 %v1926
  %v4974 = vpop.f32.mrf.mxu0
  %v4975 = vadd.f32 0.0, %v4974
  %v4976 = vpop.f32.mrf.mxu0
  %v4977 = vadd.f32 0.0, %v4976
  %v4978 = vpop.f32.mrf.mxu0
  %v4979 = vadd.f32 0.0, %v4978
  %v4980 = vpop.f32.mrf.mxu0
  %v4981 = vadd.f32 0.0, %v4980
  %4982 = vmatprep.mubr.bf16.mxu0 %v1931
  %4983 = vmatmul.mubr.bf16.gmra.mxu0 %v1930
  %v4984 = vpop.f32.mrf.mxu0
  %v4985 = vadd.f32 0.0, %v4984
  %v4986 = vpop.f32.mrf.mxu0
  %v4987 = vadd.f32 0.0, %v4986
  %v4988 = vpop.f32.mrf.mxu0
  %v4989 = vadd.f32 0.0, %v4988
  %v4990 = vpop.f32.mrf.mxu0
  %v4991 = vadd.f32 0.0, %v4990
  %4992 = vmatprep.mubr.bf16.mxu0 %v1935
  %4993 = vmatmul.mubr.bf16.gmra.mxu0 %v1934
  %v4994 = vpop.f32.mrf.mxu0
  %v4995 = vadd.f32 0.0, %v4994
  %v4996 = vpop.f32.mrf.mxu0
  %v4997 = vadd.f32 0.0, %v4996
  %v4998 = vpop.f32.mrf.mxu0
  %v4999 = vadd.f32 0.0, %v4998
  %v5000 = vpop.f32.mrf.mxu0
  %v5001 = vadd.f32 0.0, %v5000
  %5002 = vmatprep.mubr.bf16.mxu0 %v1939
  %5003 = vmatmul.mubr.bf16.gmra.mxu0 %v1938
  %v5004 = vpop.f32.mrf.mxu0
  %v5005 = vadd.f32 0.0, %v5004
  %v5006 = vpop.f32.mrf.mxu0
  %v5007 = vadd.f32 0.0, %v5006
  %v5008 = vpop.f32.mrf.mxu0
  %v5009 = vadd.f32 0.0, %v5008
  %v5010 = vpop.f32.mrf.mxu0
  %v5011 = vadd.f32 0.0, %v5010
  %5012 = vmatprep.mubr.bf16.mxu0 %v1943
  %5013 = vmatmul.mubr.bf16.gmra.mxu0 %v1942
  %v5014 = vpop.f32.mrf.mxu0
  %v5015 = vadd.f32 0.0, %v5014
  %v5016 = vpop.f32.mrf.mxu0
  %v5017 = vadd.f32 0.0, %v5016
  %v5018 = vpop.f32.mrf.mxu0
  %v5019 = vadd.f32 0.0, %v5018
  %v5020 = vpop.f32.mrf.mxu0
  %v5021 = vadd.f32 0.0, %v5020
  %5022 = vmatprep.mubr.bf16.mxu0 %v1947
  %5023 = vmatmul.mubr.bf16.gmra.mxu0 %v1946
  %v5024 = vpop.f32.mrf.mxu0
  %v5025 = vadd.f32 0.0, %v5024
  %v5026 = vpop.f32.mrf.mxu0
  %v5027 = vadd.f32 0.0, %v5026
  %v5028 = vpop.f32.mrf.mxu0
  %v5029 = vadd.f32 0.0, %v5028
  %v5030 = vpop.f32.mrf.mxu0
  %v5031 = vadd.f32 0.0, %v5030
  %5032 = vmatprep.mubr.bf16.mxu0 %v1951
  %5033 = vmatmul.mubr.bf16.gmra.mxu0 %v1950
  %v5034 = vpop.f32.mrf.mxu0
  %v5035 = vadd.f32 0.0, %v5034
  %v5036 = vpop.f32.mrf.mxu0
  %v5037 = vadd.f32 0.0, %v5036
  %v5038 = vpop.f32.mrf.mxu0
  %v5039 = vadd.f32 0.0, %v5038
  %v5040 = vpop.f32.mrf.mxu0
  %v5041 = vadd.f32 0.0, %v5040
  %5042 = vmatprep.mubr.bf16.mxu0 %v1955
  %5043 = vmatmul.mubr.bf16.gmra.mxu0 %v1954
  %v5044 = vpop.f32.mrf.mxu0
  %v5045 = vadd.f32 0.0, %v5044
  %v5046 = vpop.f32.mrf.mxu0
  %v5047 = vadd.f32 0.0, %v5046
  %v5048 = vpop.f32.mrf.mxu0
  %v5049 = vadd.f32 0.0, %v5048
  %v5050 = vpop.f32.mrf.mxu0
  %v5051 = vadd.f32 0.0, %v5050
  %5052 = vdwg.mxu0
  %5053 = vmatprep.subr.bf16.mxu0 %v3777
  %5054 = vmatpush1.bf16.msra.mxu0 %v3776
  %5055 = vmatprep.subr.bf16.mxu0 %v3765
  %5056 = vmatpush1.bf16.msra.mxu0 %v3764
  %5057 = vmatprep.subr.bf16.mxu0 %v3753
  %5058 = vmatpush1.bf16.msra.mxu0 %v3752
  %5059 = vmatprep.subr.bf16.mxu0 %v3741
  %5060 = vmatpush1.bf16.msra.mxu0 %v3740
  %5061 = vmatprep.subr.bf16.mxu0 %v3729
  %5062 = vmatpush1.bf16.msra.mxu0 %v3728
  %5063 = vmatprep.subr.bf16.mxu0 %v3717
  %5064 = vmatpush1.bf16.msra.mxu0 %v3716
  %5065 = vmatprep.subr.bf16.mxu0 %v3705
  %5066 = vmatpush1.bf16.msra.mxu0 %v3704
  %5067 = vmatprep.subr.bf16.mxu0 %v3693
  %5068 = vmatpush1.bf16.msra.mxu0 %v3692
  %5069 = vmatprep.subr.bf16.mxu0 %v3873
  %5070 = vmatpush2.bf16.msra.mxu0 %v3872
  %5071 = vmatprep.subr.bf16.mxu0 %v3861
  %5072 = vmatpush2.bf16.msra.mxu0 %v3860
  %5073 = vmatprep.subr.bf16.mxu0 %v3849
  %5074 = vmatpush2.bf16.msra.mxu0 %v3848
  %5075 = vmatprep.subr.bf16.mxu0 %v3837
  %5076 = vmatpush2.bf16.msra.mxu0 %v3836
  %5077 = vmatprep.subr.bf16.mxu0 %v3825
  %5078 = vmatpush2.bf16.msra.mxu0 %v3824
  %5079 = vmatprep.subr.bf16.mxu0 %v3813
  %5080 = vmatpush2.bf16.msra.mxu0 %v3812
  %5081 = vmatprep.subr.bf16.mxu0 %v3801
  %5082 = vmatpush2.bf16.msra.mxu0 %v3800
  %5083 = vmatprep.subr.bf16.mxu0 %v3789
  %5084 = vmatpush2.bf16.msra.mxu0 %v3788
  %5085 = vmatprep.mubr.bf16.mxu0 %v1929
  %5086 = vmatmul.mubr.bf16.gmra.mxu0 %v1928
  %v5087 = vpop.f32.mrf.mxu0
  %v5088 = vadd.f32 %v4975, %v5087
  %v5089 = vpop.f32.mrf.mxu0
  %v5090 = vadd.f32 %v4977, %v5089
  %v5091 = vpop.f32.mrf.mxu0
  %v5092 = vadd.f32 %v4979, %v5091
  %v5093 = vpop.f32.mrf.mxu0
  %v5094 = vadd.f32 %v4981, %v5093
  %5095 = vmatprep.mubr.bf16.mxu0 %v1933
  %5096 = vmatmul.mubr.bf16.gmra.mxu0 %v1932
  %v5097 = vpop.f32.mrf.mxu0
  %v5098 = vadd.f32 %v4985, %v5097
  %v5099 = vpop.f32.mrf.mxu0
  %v5100 = vadd.f32 %v4987, %v5099
  %v5101 = vpop.f32.mrf.mxu0
  %v5102 = vadd.f32 %v4989, %v5101
  %v5103 = vpop.f32.mrf.mxu0
  %v5104 = vadd.f32 %v4991, %v5103
  %5105 = vmatprep.mubr.bf16.mxu0 %v1937
  %5106 = vmatmul.mubr.bf16.gmra.mxu0 %v1936
  %v5107 = vpop.f32.mrf.mxu0
  %v5108 = vadd.f32 %v4995, %v5107
  %v5109 = vpop.f32.mrf.mxu0
  %v5110 = vadd.f32 %v4997, %v5109
  %v5111 = vpop.f32.mrf.mxu0
  %v5112 = vadd.f32 %v4999, %v5111
  %v5113 = vpop.f32.mrf.mxu0
  %v5114 = vadd.f32 %v5001, %v5113
  %5115 = vmatprep.mubr.bf16.mxu0 %v1941
  %5116 = vmatmul.mubr.bf16.gmra.mxu0 %v1940
  %v5117 = vpop.f32.mrf.mxu0
  %v5118 = vadd.f32 %v5005, %v5117
  %v5119 = vpop.f32.mrf.mxu0
  %v5120 = vadd.f32 %v5007, %v5119
  %v5121 = vpop.f32.mrf.mxu0
  %v5122 = vadd.f32 %v5009, %v5121
  %v5123 = vpop.f32.mrf.mxu0
  %v5124 = vadd.f32 %v5011, %v5123
  %5125 = vmatprep.mubr.bf16.mxu0 %v1945
  %5126 = vmatmul.mubr.bf16.gmra.mxu0 %v1944
  %v5127 = vpop.f32.mrf.mxu0
  %v5128 = vadd.f32 %v5015, %v5127
  %v5129 = vpop.f32.mrf.mxu0
  %v5130 = vadd.f32 %v5017, %v5129
  %v5131 = vpop.f32.mrf.mxu0
  %v5132 = vadd.f32 %v5019, %v5131
  %v5133 = vpop.f32.mrf.mxu0
  %v5134 = vadd.f32 %v5021, %v5133
  %5135 = vmatprep.mubr.bf16.mxu0 %v1949
  %5136 = vmatmul.mubr.bf16.gmra.mxu0 %v1948
  %v5137 = vpop.f32.mrf.mxu0
  %v5138 = vadd.f32 %v5025, %v5137
  %v5139 = vpop.f32.mrf.mxu0
  %v5140 = vadd.f32 %v5027, %v5139
  %v5141 = vpop.f32.mrf.mxu0
  %v5142 = vadd.f32 %v5029, %v5141
  %v5143 = vpop.f32.mrf.mxu0
  %v5144 = vadd.f32 %v5031, %v5143
  %5145 = vmatprep.mubr.bf16.mxu0 %v1953
  %5146 = vmatmul.mubr.bf16.gmra.mxu0 %v1952
  %v5147 = vpop.f32.mrf.mxu0
  %v5148 = vadd.f32 %v5035, %v5147
  %v5149 = vpop.f32.mrf.mxu0
  %v5150 = vadd.f32 %v5037, %v5149
  %v5151 = vpop.f32.mrf.mxu0
  %v5152 = vadd.f32 %v5039, %v5151
  %v5153 = vpop.f32.mrf.mxu0
  %v5154 = vadd.f32 %v5041, %v5153
  %5155 = vmatprep.mubr.bf16.mxu0 %v1957
  %5156 = vmatmul.mubr.bf16.gmra.mxu0 %v1956
  %v5157 = vpop.f32.mrf.mxu0
  %v5158 = vadd.f32 %v5045, %v5157
  %v5159 = vpop.f32.mrf.mxu0
  %v5160 = vadd.f32 %v5047, %v5159
  %v5161 = vpop.f32.mrf.mxu0
  %v5162 = vadd.f32 %v5049, %v5161
  %v5163 = vpop.f32.mrf.mxu0
  %v5164 = vadd.f32 %v5051, %v5163
  %5165 = vdwg.mxu0
  %5166 = vmatprep.subr.bf16.mxu0 %v3587
  %5167 = vmatpush1.bf16.msra.mxu0 %v3586
  %5168 = vmatprep.subr.bf16.mxu0 %v3575
  %5169 = vmatpush1.bf16.msra.mxu0 %v3574
  %5170 = vmatprep.subr.bf16.mxu0 %v3563
  %5171 = vmatpush1.bf16.msra.mxu0 %v3562
  %5172 = vmatprep.subr.bf16.mxu0 %v3551
  %5173 = vmatpush1.bf16.msra.mxu0 %v3550
  %5174 = vmatprep.subr.bf16.mxu0 %v3539
  %5175 = vmatpush1.bf16.msra.mxu0 %v3538
  %5176 = vmatprep.subr.bf16.mxu0 %v3527
  %5177 = vmatpush1.bf16.msra.mxu0 %v3526
  %5178 = vmatprep.subr.bf16.mxu0 %v3515
  %5179 = vmatpush1.bf16.msra.mxu0 %v3514
  %5180 = vmatprep.subr.bf16.mxu0 %v3503
  %5181 = vmatpush1.bf16.msra.mxu0 %v3502
  %5182 = vmatprep.subr.bf16.mxu0 %v3683
  %5183 = vmatpush2.bf16.msra.mxu0 %v3682
  %5184 = vmatprep.subr.bf16.mxu0 %v3671
  %5185 = vmatpush2.bf16.msra.mxu0 %v3670
  %5186 = vmatprep.subr.bf16.mxu0 %v3659
  %5187 = vmatpush2.bf16.msra.mxu0 %v3658
  %5188 = vmatprep.subr.bf16.mxu0 %v3647
  %5189 = vmatpush2.bf16.msra.mxu0 %v3646
  %5190 = vmatprep.subr.bf16.mxu0 %v3635
  %5191 = vmatpush2.bf16.msra.mxu0 %v3634
  %5192 = vmatprep.subr.bf16.mxu0 %v3623
  %5193 = vmatpush2.bf16.msra.mxu0 %v3622
  %5194 = vmatprep.subr.bf16.mxu0 %v3611
  %5195 = vmatpush2.bf16.msra.mxu0 %v3610
  %5196 = vmatprep.subr.bf16.mxu0 %v3599
  %5197 = vmatpush2.bf16.msra.mxu0 %v3598
  %5198 = vmatprep.mubr.bf16.mxu0 %v1927
  %5199 = vmatmul.mubr.bf16.gmra.mxu0 %v1926
  %v5200 = vpop.f32.mrf.mxu0
  %v5201 = vadd.f32 0.0, %v5200
  %v5202 = vpop.f32.mrf.mxu0
  %v5203 = vadd.f32 0.0, %v5202
  %v5204 = vpop.f32.mrf.mxu0
  %v5205 = vadd.f32 0.0, %v5204
  %v5206 = vpop.f32.mrf.mxu0
  %v5207 = vadd.f32 0.0, %v5206
  %5208 = vmatprep.mubr.bf16.mxu0 %v1931
  %5209 = vmatmul.mubr.bf16.gmra.mxu0 %v1930
  %v5210 = vpop.f32.mrf.mxu0
  %v5211 = vadd.f32 0.0, %v5210
  %v5212 = vpop.f32.mrf.mxu0
  %v5213 = vadd.f32 0.0, %v5212
  %v5214 = vpop.f32.mrf.mxu0
  %v5215 = vadd.f32 0.0, %v5214
  %v5216 = vpop.f32.mrf.mxu0
  %v5217 = vadd.f32 0.0, %v5216
  %5218 = vmatprep.mubr.bf16.mxu0 %v1935
  %5219 = vmatmul.mubr.bf16.gmra.mxu0 %v1934
  %v5220 = vpop.f32.mrf.mxu0
  %v5221 = vadd.f32 0.0, %v5220
  %v5222 = vpop.f32.mrf.mxu0
  %v5223 = vadd.f32 0.0, %v5222
  %v5224 = vpop.f32.mrf.mxu0
  %v5225 = vadd.f32 0.0, %v5224
  %v5226 = vpop.f32.mrf.mxu0
  %v5227 = vadd.f32 0.0, %v5226
  %5228 = vmatprep.mubr.bf16.mxu0 %v1939
  %5229 = vmatmul.mubr.bf16.gmra.mxu0 %v1938
  %v5230 = vpop.f32.mrf.mxu0
  %v5231 = vadd.f32 0.0, %v5230
  %v5232 = vpop.f32.mrf.mxu0
  %v5233 = vadd.f32 0.0, %v5232
  %v5234 = vpop.f32.mrf.mxu0
  %v5235 = vadd.f32 0.0, %v5234
  %v5236 = vpop.f32.mrf.mxu0
  %v5237 = vadd.f32 0.0, %v5236
  %5238 = vmatprep.mubr.bf16.mxu0 %v1943
  %5239 = vmatmul.mubr.bf16.gmra.mxu0 %v1942
  %v5240 = vpop.f32.mrf.mxu0
  %v5241 = vadd.f32 0.0, %v5240
  %v5242 = vpop.f32.mrf.mxu0
  %v5243 = vadd.f32 0.0, %v5242
  %v5244 = vpop.f32.mrf.mxu0
  %v5245 = vadd.f32 0.0, %v5244
  %v5246 = vpop.f32.mrf.mxu0
  %v5247 = vadd.f32 0.0, %v5246
  %5248 = vmatprep.mubr.bf16.mxu0 %v1947
  %5249 = vmatmul.mubr.bf16.gmra.mxu0 %v1946
  %v5250 = vpop.f32.mrf.mxu0
  %v5251 = vadd.f32 0.0, %v5250
  %v5252 = vpop.f32.mrf.mxu0
  %v5253 = vadd.f32 0.0, %v5252
  %v5254 = vpop.f32.mrf.mxu0
  %v5255 = vadd.f32 0.0, %v5254
  %v5256 = vpop.f32.mrf.mxu0
  %v5257 = vadd.f32 0.0, %v5256
  %5258 = vmatprep.mubr.bf16.mxu0 %v1951
  %5259 = vmatmul.mubr.bf16.gmra.mxu0 %v1950
  %v5260 = vpop.f32.mrf.mxu0
  %v5261 = vadd.f32 0.0, %v5260
  %v5262 = vpop.f32.mrf.mxu0
  %v5263 = vadd.f32 0.0, %v5262
  %v5264 = vpop.f32.mrf.mxu0
  %v5265 = vadd.f32 0.0, %v5264
  %v5266 = vpop.f32.mrf.mxu0
  %v5267 = vadd.f32 0.0, %v5266
  %5268 = vmatprep.mubr.bf16.mxu0 %v1955
  %5269 = vmatmul.mubr.bf16.gmra.mxu0 %v1954
  %v5270 = vpop.f32.mrf.mxu0
  %v5271 = vadd.f32 0.0, %v5270
  %v5272 = vpop.f32.mrf.mxu0
  %v5273 = vadd.f32 0.0, %v5272
  %v5274 = vpop.f32.mrf.mxu0
  %v5275 = vadd.f32 0.0, %v5274
  %v5276 = vpop.f32.mrf.mxu0
  %v5277 = vadd.f32 0.0, %v5276
  %5278 = vdwg.mxu0
  %5279 = vmatprep.subr.bf16.mxu0 %v3779
  %5280 = vmatpush1.bf16.msra.mxu0 %v3778
  %5281 = vmatprep.subr.bf16.mxu0 %v3767
  %5282 = vmatpush1.bf16.msra.mxu0 %v3766
  %5283 = vmatprep.subr.bf16.mxu0 %v3755
  %5284 = vmatpush1.bf16.msra.mxu0 %v3754
  %5285 = vmatprep.subr.bf16.mxu0 %v3743
  %5286 = vmatpush1.bf16.msra.mxu0 %v3742
  %5287 = vmatprep.subr.bf16.mxu0 %v3731
  %5288 = vmatpush1.bf16.msra.mxu0 %v3730
  %5289 = vmatprep.subr.bf16.mxu0 %v3719
  %5290 = vmatpush1.bf16.msra.mxu0 %v3718
  %5291 = vmatprep.subr.bf16.mxu0 %v3707
  %5292 = vmatpush1.bf16.msra.mxu0 %v3706
  %5293 = vmatprep.subr.bf16.mxu0 %v3695
  %5294 = vmatpush1.bf16.msra.mxu0 %v3694
  %5295 = vmatprep.subr.bf16.mxu0 %v3875
  %5296 = vmatpush2.bf16.msra.mxu0 %v3874
  %5297 = vmatprep.subr.bf16.mxu0 %v3863
  %5298 = vmatpush2.bf16.msra.mxu0 %v3862
  %5299 = vmatprep.subr.bf16.mxu0 %v3851
  %5300 = vmatpush2.bf16.msra.mxu0 %v3850
  %5301 = vmatprep.subr.bf16.mxu0 %v3839
  %5302 = vmatpush2.bf16.msra.mxu0 %v3838
  %5303 = vmatprep.subr.bf16.mxu0 %v3827
  %5304 = vmatpush2.bf16.msra.mxu0 %v3826
  %5305 = vmatprep.subr.bf16.mxu0 %v3815
  %5306 = vmatpush2.bf16.msra.mxu0 %v3814
  %5307 = vmatprep.subr.bf16.mxu0 %v3803
  %5308 = vmatpush2.bf16.msra.mxu0 %v3802
  %5309 = vmatprep.subr.bf16.mxu0 %v3791
  %5310 = vmatpush2.bf16.msra.mxu0 %v3790
  %5311 = vmatprep.mubr.bf16.mxu0 %v1929
  %5312 = vmatmul.mubr.bf16.gmra.mxu0 %v1928
  %v5313 = vpop.f32.mrf.mxu0
  %v5314 = vadd.f32 %v5201, %v5313
  %v5315 = vpop.f32.mrf.mxu0
  %v5316 = vadd.f32 %v5203, %v5315
  %v5317 = vpop.f32.mrf.mxu0
  %v5318 = vadd.f32 %v5205, %v5317
  %v5319 = vpop.f32.mrf.mxu0
  %v5320 = vadd.f32 %v5207, %v5319
  %5321 = vmatprep.mubr.bf16.mxu0 %v1933
  %5322 = vmatmul.mubr.bf16.gmra.mxu0 %v1932
  %v5323 = vpop.f32.mrf.mxu0
  %v5324 = vadd.f32 %v5211, %v5323
  %v5325 = vpop.f32.mrf.mxu0
  %v5326 = vadd.f32 %v5213, %v5325
  %v5327 = vpop.f32.mrf.mxu0
  %v5328 = vadd.f32 %v5215, %v5327
  %v5329 = vpop.f32.mrf.mxu0
  %v5330 = vadd.f32 %v5217, %v5329
  %5331 = vmatprep.mubr.bf16.mxu0 %v1937
  %5332 = vmatmul.mubr.bf16.gmra.mxu0 %v1936
  %v5333 = vpop.f32.mrf.mxu0
  %v5334 = vadd.f32 %v5221, %v5333
  %v5335 = vpop.f32.mrf.mxu0
  %v5336 = vadd.f32 %v5223, %v5335
  %v5337 = vpop.f32.mrf.mxu0
  %v5338 = vadd.f32 %v5225, %v5337
  %v5339 = vpop.f32.mrf.mxu0
  %v5340 = vadd.f32 %v5227, %v5339
  %5341 = vmatprep.mubr.bf16.mxu0 %v1941
  %5342 = vmatmul.mubr.bf16.gmra.mxu0 %v1940
  %v5343 = vpop.f32.mrf.mxu0
  %v5344 = vadd.f32 %v5231, %v5343
  %v5345 = vpop.f32.mrf.mxu0
  %v5346 = vadd.f32 %v5233, %v5345
  %v5347 = vpop.f32.mrf.mxu0
  %v5348 = vadd.f32 %v5235, %v5347
  %v5349 = vpop.f32.mrf.mxu0
  %v5350 = vadd.f32 %v5237, %v5349
  %5351 = vmatprep.mubr.bf16.mxu0 %v1945
  %5352 = vmatmul.mubr.bf16.gmra.mxu0 %v1944
  %v5353 = vpop.f32.mrf.mxu0
  %v5354 = vadd.f32 %v5241, %v5353
  %v5355 = vpop.f32.mrf.mxu0
  %v5356 = vadd.f32 %v5243, %v5355
  %v5357 = vpop.f32.mrf.mxu0
  %v5358 = vadd.f32 %v5245, %v5357
  %v5359 = vpop.f32.mrf.mxu0
  %v5360 = vadd.f32 %v5247, %v5359
  %5361 = vmatprep.mubr.bf16.mxu0 %v1949
  %5362 = vmatmul.mubr.bf16.gmra.mxu0 %v1948
  %v5363 = vpop.f32.mrf.mxu0
  %v5364 = vadd.f32 %v5251, %v5363
  %v5365 = vpop.f32.mrf.mxu0
  %v5366 = vadd.f32 %v5253, %v5365
  %v5367 = vpop.f32.mrf.mxu0
  %v5368 = vadd.f32 %v5255, %v5367
  %v5369 = vpop.f32.mrf.mxu0
  %v5370 = vadd.f32 %v5257, %v5369
  %5371 = vmatprep.mubr.bf16.mxu0 %v1953
  %5372 = vmatmul.mubr.bf16.gmra.mxu0 %v1952
  %v5373 = vpop.f32.mrf.mxu0
  %v5374 = vadd.f32 %v5261, %v5373
  %v5375 = vpop.f32.mrf.mxu0
  %v5376 = vadd.f32 %v5263, %v5375
  %v5377 = vpop.f32.mrf.mxu0
  %v5378 = vadd.f32 %v5265, %v5377
  %v5379 = vpop.f32.mrf.mxu0
  %v5380 = vadd.f32 %v5267, %v5379
  %5381 = vmatprep.mubr.bf16.mxu0 %v1957
  %5382 = vmatmul.mubr.bf16.gmra.mxu0 %v1956
  %v5383 = vpop.f32.mrf.mxu0
  %v5384 = vadd.f32 %v5271, %v5383
  %v5385 = vpop.f32.mrf.mxu0
  %v5386 = vadd.f32 %v5273, %v5385
  %v5387 = vpop.f32.mrf.mxu0
  %v5388 = vadd.f32 %v5275, %v5387
  %v5389 = vpop.f32.mrf.mxu0
  %v5390 = vadd.f32 %v5277, %v5389
  %5391 = vdwg.mxu0
  %5392 = vmatprep.subr.bf16.mxu0 %v3589
  %5393 = vmatpush1.bf16.msra.mxu0 %v3588
  %5394 = vmatprep.subr.bf16.mxu0 %v3577
  %5395 = vmatpush1.bf16.msra.mxu0 %v3576
  %5396 = vmatprep.subr.bf16.mxu0 %v3565
  %5397 = vmatpush1.bf16.msra.mxu0 %v3564
  %5398 = vmatprep.subr.bf16.mxu0 %v3553
  %5399 = vmatpush1.bf16.msra.mxu0 %v3552
  %5400 = vmatprep.subr.bf16.mxu0 %v3541
  %5401 = vmatpush1.bf16.msra.mxu0 %v3540
  %5402 = vmatprep.subr.bf16.mxu0 %v3529
  %5403 = vmatpush1.bf16.msra.mxu0 %v3528
  %5404 = vmatprep.subr.bf16.mxu0 %v3517
  %5405 = vmatpush1.bf16.msra.mxu0 %v3516
  %5406 = vmatprep.subr.bf16.mxu0 %v3505
  %5407 = vmatpush1.bf16.msra.mxu0 %v3504
  %5408 = vmatprep.subr.bf16.mxu0 %v3685
  %5409 = vmatpush2.bf16.msra.mxu0 %v3684
  %5410 = vmatprep.subr.bf16.mxu0 %v3673
  %5411 = vmatpush2.bf16.msra.mxu0 %v3672
  %5412 = vmatprep.subr.bf16.mxu0 %v3661
  %5413 = vmatpush2.bf16.msra.mxu0 %v3660
  %5414 = vmatprep.subr.bf16.mxu0 %v3649
  %5415 = vmatpush2.bf16.msra.mxu0 %v3648
  %5416 = vmatprep.subr.bf16.mxu0 %v3637
  %5417 = vmatpush2.bf16.msra.mxu0 %v3636
  %5418 = vmatprep.subr.bf16.mxu0 %v3625
  %5419 = vmatpush2.bf16.msra.mxu0 %v3624
  %5420 = vmatprep.subr.bf16.mxu0 %v3613
  %5421 = vmatpush2.bf16.msra.mxu0 %v3612
  %5422 = vmatprep.subr.bf16.mxu0 %v3601
  %5423 = vmatpush2.bf16.msra.mxu0 %v3600
  %5424 = vmatprep.mubr.bf16.mxu0 %v1927
  %5425 = vmatmul.mubr.bf16.gmra.mxu0 %v1926
  %v5426 = vpop.f32.mrf.mxu0
  %v5427 = vadd.f32 0.0, %v5426
  %v5428 = vpop.f32.mrf.mxu0
  %v5429 = vadd.f32 0.0, %v5428
  %v5430 = vpop.f32.mrf.mxu0
  %v5431 = vadd.f32 0.0, %v5430
  %v5432 = vpop.f32.mrf.mxu0
  %v5433 = vadd.f32 0.0, %v5432
  %5434 = vmatprep.mubr.bf16.mxu0 %v1931
  %5435 = vmatmul.mubr.bf16.gmra.mxu0 %v1930
  %v5436 = vpop.f32.mrf.mxu0
  %v5437 = vadd.f32 0.0, %v5436
  %v5438 = vpop.f32.mrf.mxu0
  %v5439 = vadd.f32 0.0, %v5438
  %v5440 = vpop.f32.mrf.mxu0
  %v5441 = vadd.f32 0.0, %v5440
  %v5442 = vpop.f32.mrf.mxu0
  %v5443 = vadd.f32 0.0, %v5442
  %5444 = vmatprep.mubr.bf16.mxu0 %v1935
  %5445 = vmatmul.mubr.bf16.gmra.mxu0 %v1934
  %v5446 = vpop.f32.mrf.mxu0
  %v5447 = vadd.f32 0.0, %v5446
  %v5448 = vpop.f32.mrf.mxu0
  %v5449 = vadd.f32 0.0, %v5448
  %v5450 = vpop.f32.mrf.mxu0
  %v5451 = vadd.f32 0.0, %v5450
  %v5452 = vpop.f32.mrf.mxu0
  %v5453 = vadd.f32 0.0, %v5452
  %5454 = vmatprep.mubr.bf16.mxu0 %v1939
  %5455 = vmatmul.mubr.bf16.gmra.mxu0 %v1938
  %v5456 = vpop.f32.mrf.mxu0
  %v5457 = vadd.f32 0.0, %v5456
  %v5458 = vpop.f32.mrf.mxu0
  %v5459 = vadd.f32 0.0, %v5458
  %v5460 = vpop.f32.mrf.mxu0
  %v5461 = vadd.f32 0.0, %v5460
  %v5462 = vpop.f32.mrf.mxu0
  %v5463 = vadd.f32 0.0, %v5462
  %5464 = vmatprep.mubr.bf16.mxu0 %v1943
  %5465 = vmatmul.mubr.bf16.gmra.mxu0 %v1942
  %v5466 = vpop.f32.mrf.mxu0
  %v5467 = vadd.f32 0.0, %v5466
  %v5468 = vpop.f32.mrf.mxu0
  %v5469 = vadd.f32 0.0, %v5468
  %v5470 = vpop.f32.mrf.mxu0
  %v5471 = vadd.f32 0.0, %v5470
  %v5472 = vpop.f32.mrf.mxu0
  %v5473 = vadd.f32 0.0, %v5472
  %5474 = vmatprep.mubr.bf16.mxu0 %v1947
  %5475 = vmatmul.mubr.bf16.gmra.mxu0 %v1946
  %v5476 = vpop.f32.mrf.mxu0
  %v5477 = vadd.f32 0.0, %v5476
  %v5478 = vpop.f32.mrf.mxu0
  %v5479 = vadd.f32 0.0, %v5478
  %v5480 = vpop.f32.mrf.mxu0
  %v5481 = vadd.f32 0.0, %v5480
  %v5482 = vpop.f32.mrf.mxu0
  %v5483 = vadd.f32 0.0, %v5482
  %5484 = vmatprep.mubr.bf16.mxu0 %v1951
  %5485 = vmatmul.mubr.bf16.gmra.mxu0 %v1950
  %v5486 = vpop.f32.mrf.mxu0
  %v5487 = vadd.f32 0.0, %v5486
  %v5488 = vpop.f32.mrf.mxu0
  %v5489 = vadd.f32 0.0, %v5488
  %v5490 = vpop.f32.mrf.mxu0
  %v5491 = vadd.f32 0.0, %v5490
  %v5492 = vpop.f32.mrf.mxu0
  %v5493 = vadd.f32 0.0, %v5492
  %5494 = vmatprep.mubr.bf16.mxu0 %v1955
  %5495 = vmatmul.mubr.bf16.gmra.mxu0 %v1954
  %v5496 = vpop.f32.mrf.mxu0
  %v5497 = vadd.f32 0.0, %v5496
  %v5498 = vpop.f32.mrf.mxu0
  %v5499 = vadd.f32 0.0, %v5498
  %v5500 = vpop.f32.mrf.mxu0
  %v5501 = vadd.f32 0.0, %v5500
  %v5502 = vpop.f32.mrf.mxu0
  %v5503 = vadd.f32 0.0, %v5502
  %5504 = vdwg.mxu0
  %5505 = vmatprep.subr.bf16.mxu0 %v3781
  %5506 = vmatpush1.bf16.msra.mxu0 %v3780
  %5507 = vmatprep.subr.bf16.mxu0 %v3769
  %5508 = vmatpush1.bf16.msra.mxu0 %v3768
  %5509 = vmatprep.subr.bf16.mxu0 %v3757
  %5510 = vmatpush1.bf16.msra.mxu0 %v3756
  %5511 = vmatprep.subr.bf16.mxu0 %v3745
  %5512 = vmatpush1.bf16.msra.mxu0 %v3744
  %5513 = vmatprep.subr.bf16.mxu0 %v3733
  %5514 = vmatpush1.bf16.msra.mxu0 %v3732
  %5515 = vmatprep.subr.bf16.mxu0 %v3721
  %5516 = vmatpush1.bf16.msra.mxu0 %v3720
  %5517 = vmatprep.subr.bf16.mxu0 %v3709
  %5518 = vmatpush1.bf16.msra.mxu0 %v3708
  %5519 = vmatprep.subr.bf16.mxu0 %v3697
  %5520 = vmatpush1.bf16.msra.mxu0 %v3696
  %5521 = vmatprep.subr.bf16.mxu0 %v3877
  %5522 = vmatpush2.bf16.msra.mxu0 %v3876
  %5523 = vmatprep.subr.bf16.mxu0 %v3865
  %5524 = vmatpush2.bf16.msra.mxu0 %v3864
  %5525 = vmatprep.subr.bf16.mxu0 %v3853
  %5526 = vmatpush2.bf16.msra.mxu0 %v3852
  %5527 = vmatprep.subr.bf16.mxu0 %v3841
  %5528 = vmatpush2.bf16.msra.mxu0 %v3840
  %5529 = vmatprep.subr.bf16.mxu0 %v3829
  %5530 = vmatpush2.bf16.msra.mxu0 %v3828
  %5531 = vmatprep.subr.bf16.mxu0 %v3817
  %5532 = vmatpush2.bf16.msra.mxu0 %v3816
  %5533 = vmatprep.subr.bf16.mxu0 %v3805
  %5534 = vmatpush2.bf16.msra.mxu0 %v3804
  %5535 = vmatprep.subr.bf16.mxu0 %v3793
  %5536 = vmatpush2.bf16.msra.mxu0 %v3792
  %5537 = vmatprep.mubr.bf16.mxu0 %v1929
  %5538 = vmatmul.mubr.bf16.gmra.mxu0 %v1928
  %v5539 = vpop.f32.mrf.mxu0
  %v5540 = vadd.f32 %v5427, %v5539
  %v5541 = vpop.f32.mrf.mxu0
  %v5542 = vadd.f32 %v5429, %v5541
  %v5543 = vpop.f32.mrf.mxu0
  %v5544 = vadd.f32 %v5431, %v5543
  %v5545 = vpop.f32.mrf.mxu0
  %v5546 = vadd.f32 %v5433, %v5545
  %5547 = vmatprep.mubr.bf16.mxu0 %v1933
  %5548 = vmatmul.mubr.bf16.gmra.mxu0 %v1932
  %v5549 = vpop.f32.mrf.mxu0
  %v5550 = vadd.f32 %v5437, %v5549
  %v5551 = vpop.f32.mrf.mxu0
  %v5552 = vadd.f32 %v5439, %v5551
  %v5553 = vpop.f32.mrf.mxu0
  %v5554 = vadd.f32 %v5441, %v5553
  %v5555 = vpop.f32.mrf.mxu0
  %v5556 = vadd.f32 %v5443, %v5555
  %5557 = vmatprep.mubr.bf16.mxu0 %v1937
  %5558 = vmatmul.mubr.bf16.gmra.mxu0 %v1936
  %v5559 = vpop.f32.mrf.mxu0
  %v5560 = vadd.f32 %v5447, %v5559
  %v5561 = vpop.f32.mrf.mxu0
  %v5562 = vadd.f32 %v5449, %v5561
  %v5563 = vpop.f32.mrf.mxu0
  %v5564 = vadd.f32 %v5451, %v5563
  %v5565 = vpop.f32.mrf.mxu0
  %v5566 = vadd.f32 %v5453, %v5565
  %5567 = vmatprep.mubr.bf16.mxu0 %v1941
  %5568 = vmatmul.mubr.bf16.gmra.mxu0 %v1940
  %v5569 = vpop.f32.mrf.mxu0
  %v5570 = vadd.f32 %v5457, %v5569
  %v5571 = vpop.f32.mrf.mxu0
  %v5572 = vadd.f32 %v5459, %v5571
  %v5573 = vpop.f32.mrf.mxu0
  %v5574 = vadd.f32 %v5461, %v5573
  %v5575 = vpop.f32.mrf.mxu0
  %v5576 = vadd.f32 %v5463, %v5575
  %5577 = vmatprep.mubr.bf16.mxu0 %v1945
  %5578 = vmatmul.mubr.bf16.gmra.mxu0 %v1944
  %v5579 = vpop.f32.mrf.mxu0
  %v5580 = vadd.f32 %v5467, %v5579
  %v5581 = vpop.f32.mrf.mxu0
  %v5582 = vadd.f32 %v5469, %v5581
  %v5583 = vpop.f32.mrf.mxu0
  %v5584 = vadd.f32 %v5471, %v5583
  %v5585 = vpop.f32.mrf.mxu0
  %v5586 = vadd.f32 %v5473, %v5585
  %5587 = vmatprep.mubr.bf16.mxu0 %v1949
  %5588 = vmatmul.mubr.bf16.gmra.mxu0 %v1948
  %v5589 = vpop.f32.mrf.mxu0
  %v5590 = vadd.f32 %v5477, %v5589
  %v5591 = vpop.f32.mrf.mxu0
  %v5592 = vadd.f32 %v5479, %v5591
  %v5593 = vpop.f32.mrf.mxu0
  %v5594 = vadd.f32 %v5481, %v5593
  %v5595 = vpop.f32.mrf.mxu0
  %v5596 = vadd.f32 %v5483, %v5595
  %5597 = vmatprep.mubr.bf16.mxu0 %v1953
  %5598 = vmatmul.mubr.bf16.gmra.mxu0 %v1952
  %v5599 = vpop.f32.mrf.mxu0
  %v5600 = vadd.f32 %v5487, %v5599
  %v5601 = vpop.f32.mrf.mxu0
  %v5602 = vadd.f32 %v5489, %v5601
  %v5603 = vpop.f32.mrf.mxu0
  %v5604 = vadd.f32 %v5491, %v5603
  %v5605 = vpop.f32.mrf.mxu0
  %v5606 = vadd.f32 %v5493, %v5605
  %5607 = vmatprep.mubr.bf16.mxu0 %v1957
  %5608 = vmatmul.mubr.bf16.gmra.mxu0 %v1956
  %v5609 = vpop.f32.mrf.mxu0
  %v5610 = vadd.f32 %v5497, %v5609
  %v5611 = vpop.f32.mrf.mxu0
  %v5612 = vadd.f32 %v5499, %v5611
  %v5613 = vpop.f32.mrf.mxu0
  %v5614 = vadd.f32 %v5501, %v5613
  %v5615 = vpop.f32.mrf.mxu0
  %v5616 = vadd.f32 %v5503, %v5615
  %5617 = vdwg.mxu0
  %v5618 = vld [vmem:[%s6] sm:$0xff]
  %v5619 = vld [vmem:[%s6 + $0x8] sm:$0xf]
  %v5620 = vpack.c.bf16 %v4414, %v4410
  %v5621 = vpack.c.bf16 %v4416, %v4412
  %v5622 = vpack.c.bf16 %v4640, %v4636
  %v5623 = vpack.c.bf16 %v4642, %v4638
  %v5624 = vpack.c.bf16 %v4866, %v4862
  %v5625 = vpack.c.bf16 %v4868, %v4864
  %v5626 = vpack.c.bf16 %v5092, %v5088
  %v5627 = vpack.c.bf16 %v5094, %v5090
  %v5628 = vpack.c.bf16 %v5318, %v5314
  %v5629 = vpack.c.bf16 %v5320, %v5316
  %v5630 = vpack.c.bf16 %v5544, %v5540
  %v5631 = vpack.c.bf16 %v5546, %v5542
  %v5632 = vpack.c.bf16 %v4424, %v4420
  %v5633 = vpack.c.bf16 %v4426, %v4422
  %v5634 = vpack.c.bf16 %v4650, %v4646
  %v5635 = vpack.c.bf16 %v4652, %v4648
  %v5636 = vpack.c.bf16 %v4876, %v4872
  %v5637 = vpack.c.bf16 %v4878, %v4874
  %v5638 = vpack.c.bf16 %v5102, %v5098
  %v5639 = vpack.c.bf16 %v5104, %v5100
  %v5640 = vpack.c.bf16 %v5328, %v5324
  %v5641 = vpack.c.bf16 %v5330, %v5326
  %v5642 = vpack.c.bf16 %v5554, %v5550
  %v5643 = vpack.c.bf16 %v5556, %v5552
  %v5644 = vpack.c.bf16 %v4434, %v4430
  %v5645 = vpack.c.bf16 %v4436, %v4432
  %v5646 = vpack.c.bf16 %v4660, %v4656
  %v5647 = vpack.c.bf16 %v4662, %v4658
  %v5648 = vpack.c.bf16 %v4886, %v4882
  %v5649 = vpack.c.bf16 %v4888, %v4884
  %v5650 = vpack.c.bf16 %v5112, %v5108
  %v5651 = vpack.c.bf16 %v5114, %v5110
  %v5652 = vpack.c.bf16 %v5338, %v5334
  %v5653 = vpack.c.bf16 %v5340, %v5336
  %v5654 = vpack.c.bf16 %v5564, %v5560
  %v5655 = vpack.c.bf16 %v5566, %v5562
  %v5656 = vpack.c.bf16 %v4444, %v4440
  %v5657 = vpack.c.bf16 %v4446, %v4442
  %v5658 = vpack.c.bf16 %v4670, %v4666
  %v5659 = vpack.c.bf16 %v4672, %v4668
  %v5660 = vpack.c.bf16 %v4896, %v4892
  %v5661 = vpack.c.bf16 %v4898, %v4894
  %v5662 = vpack.c.bf16 %v5122, %v5118
  %v5663 = vpack.c.bf16 %v5124, %v5120
  %v5664 = vpack.c.bf16 %v5348, %v5344
  %v5665 = vpack.c.bf16 %v5350, %v5346
  %v5666 = vpack.c.bf16 %v5574, %v5570
  %v5667 = vpack.c.bf16 %v5576, %v5572
  %v5668 = vpack.c.bf16 %v4454, %v4450
  %v5669 = vpack.c.bf16 %v4456, %v4452
  %v5670 = vpack.c.bf16 %v4680, %v4676
  %v5671 = vpack.c.bf16 %v4682, %v4678
  %v5672 = vpack.c.bf16 %v4906, %v4902
  %v5673 = vpack.c.bf16 %v4908, %v4904
  %v5674 = vpack.c.bf16 %v5132, %v5128
  %v5675 = vpack.c.bf16 %v5134, %v5130
  %v5676 = vpack.c.bf16 %v5358, %v5354
  %v5677 = vpack.c.bf16 %v5360, %v5356
  %v5678 = vpack.c.bf16 %v5584, %v5580
  %v5679 = vpack.c.bf16 %v5586, %v5582
  %v5680 = vpack.c.bf16 %v4464, %v4460
  %v5681 = vpack.c.bf16 %v4466, %v4462
  %v5682 = vpack.c.bf16 %v4690, %v4686
  %v5683 = vpack.c.bf16 %v4692, %v4688
  %v5684 = vpack.c.bf16 %v4916, %v4912
  %v5685 = vpack.c.bf16 %v4918, %v4914
  %v5686 = vpack.c.bf16 %v5142, %v5138
  %v5687 = vpack.c.bf16 %v5144, %v5140
  %v5688 = vpack.c.bf16 %v5368, %v5364
  %v5689 = vpack.c.bf16 %v5370, %v5366
  %v5690 = vpack.c.bf16 %v5594, %v5590
  %v5691 = vpack.c.bf16 %v5596, %v5592
  %v5692 = vpack.c.bf16 %v4474, %v4470
  %v5693 = vpack.c.bf16 %v4476, %v4472
  %v5694 = vpack.c.bf16 %v4700, %v4696
  %v5695 = vpack.c.bf16 %v4702, %v4698
  %v5696 = vpack.c.bf16 %v4926, %v4922
  %v5697 = vpack.c.bf16 %v4928, %v4924
  %v5698 = vpack.c.bf16 %v5152, %v5148
  %v5699 = vpack.c.bf16 %v5154, %v5150
  %v5700 = vpack.c.bf16 %v5378, %v5374
  %v5701 = vpack.c.bf16 %v5380, %v5376
  %v5702 = vpack.c.bf16 %v5604, %v5600
  %v5703 = vpack.c.bf16 %v5606, %v5602
  %v5704 = vpack.c.bf16 %v4484, %v4480
  %v5705 = vpack.c.bf16 %v4486, %v4482
  %v5706 = vpack.c.bf16 %v4710, %v4706
  %v5707 = vpack.c.bf16 %v4712, %v4708
  %v5708 = vpack.c.bf16 %v4936, %v4932
  %v5709 = vpack.c.bf16 %v4938, %v4934
  %v5710 = vpack.c.bf16 %v5162, %v5158
  %v5711 = vpack.c.bf16 %v5164, %v5160
  %v5712 = vpack.c.bf16 %v5388, %v5384
  %v5713 = vpack.c.bf16 %v5390, %v5386
  %v5714 = vpack.c.bf16 %v5614, %v5610
  %v5715 = vpack.c.bf16 %v5616, %v5612
  %v5718 = vcombine.high %v5618, %v5618
  %v5720 = vunpack.c.l.s4 1966171168
  %v5721 = vunpack.c.0.s8 %v5720
  %v5722 = vlaneseq
  %v5723 = vshrl.u32 %v5722, 7
  %v5724 = vsub.s32 %v5721, %v5723
  %v5725 = vrot.slane %v5618, %v5724
  %v5727 = vunpack.c.l.s4 1966171168
  %v5728 = vunpack.c.0.s8 %v5727
  %v5729 = vlaneseq
  %v5730 = vshrl.u32 %v5729, 7
  %v5731 = vsub.s32 %v5728, %v5730
  %v5732 = vrot.slane %v5718, %v5731
  %v5733 = vcombine.high %v5725, %v5725
  %v5734 = vcombine.high %v5732, %v5732
  %v5736 = vunpack.c.l.s4 1966171168
  %v5737 = vunpack.c.0.s8 %v5736
  %v5738 = vlaneseq
  %v5739 = vshrl.u32 %v5738, 7
  %v5740 = vsub.s32 %v5737, %v5739
  %v5741 = vrot.slane %v5725, %v5740
  %v5743 = vunpack.c.l.s4 1966171168
  %v5744 = vunpack.c.0.s8 %v5743
  %v5745 = vlaneseq
  %v5746 = vshrl.u32 %v5745, 7
  %v5747 = vsub.s32 %v5744, %v5746
  %v5748 = vrot.slane %v5732, %v5747
  %v5750 = vunpack.c.l.s4 1966171168
  %v5751 = vunpack.c.0.s8 %v5750
  %v5752 = vlaneseq
  %v5753 = vshrl.u32 %v5752, 7
  %v5754 = vsub.s32 %v5751, %v5753
  %v5755 = vrot.slane %v5733, %v5754
  %v5757 = vunpack.c.l.s4 1966171168
  %v5758 = vunpack.c.0.s8 %v5757
  %v5759 = vlaneseq
  %v5760 = vshrl.u32 %v5759, 7
  %v5761 = vsub.s32 %v5758, %v5760
  %v5762 = vrot.slane %v5734, %v5761
  %v5763 = vcombine.high %v5741, %v5741
  %v5764 = vcombine.high %v5748, %v5748
  %v5765 = vcombine.high %v5755, %v5755
  %v5766 = vcombine.high %v5762, %v5762
  %v5768 = vunpack.c.l.s4 1966171168
  %v5769 = vunpack.c.0.s8 %v5768
  %v5770 = vlaneseq
  %v5771 = vshrl.u32 %v5770, 7
  %v5772 = vsub.s32 %v5769, %v5771
  %v5773 = vrot.slane %v5619, %v5772
  %v5774 = vcombine.high %v5773, %v5773
  %v5776 = vunpack.c.l.s4 1966171168
  %v5777 = vunpack.c.0.s8 %v5776
  %v5778 = vlaneseq
  %v5779 = vshrl.u32 %v5778, 7
  %v5780 = vsub.s32 %v5777, %v5779
  %v5781 = vrot.slane %v5773, %v5780
  %v5783 = vunpack.c.l.s4 1966171168
  %v5784 = vunpack.c.0.s8 %v5783
  %v5785 = vlaneseq
  %v5786 = vshrl.u32 %v5785, 7
  %v5787 = vsub.s32 %v5784, %v5786
  %v5788 = vrot.slane %v5774, %v5787
  %v5789 = vcombine.high %v5781, %v5781
  %v5790 = vcombine.high %v5788, %v5788
  %v5792 = vpack.i.b16 %v5741, %v5741
  %v5794 = vlaneseq
  %v5795 = vshrl.u32 %v5794, 7
  %v5796 = vsub.s32 0, %v5795
  %v5797 = vrot.slane %v5792, %v5796
  %v5799 = vpack.i.b16 %v5755, %v5755
  %v5801 = vlaneseq
  %v5802 = vshrl.u32 %v5801, 7
  %v5803 = vsub.s32 0, %v5802
  %v5804 = vrot.slane %v5799, %v5803
  %v5806 = vpack.i.b16 %v5763, %v5763
  %v5808 = vlaneseq
  %v5809 = vshrl.u32 %v5808, 7
  %v5810 = vsub.s32 0, %v5809
  %v5811 = vrot.slane %v5806, %v5810
  %v5813 = vpack.i.b16 %v5765, %v5765
  %v5815 = vlaneseq
  %v5816 = vshrl.u32 %v5815, 7
  %v5817 = vsub.s32 0, %v5816
  %v5818 = vrot.slane %v5813, %v5817
  %v5820 = vpack.i.b16 %v5748, %v5748
  %v5822 = vlaneseq
  %v5823 = vshrl.u32 %v5822, 7
  %v5824 = vsub.s32 0, %v5823
  %v5825 = vrot.slane %v5820, %v5824
  %v5827 = vpack.i.b16 %v5762, %v5762
  %v5829 = vlaneseq
  %v5830 = vshrl.u32 %v5829, 7
  %v5831 = vsub.s32 0, %v5830
  %v5832 = vrot.slane %v5827, %v5831
  %v5834 = vpack.i.b16 %v5764, %v5764
  %v5836 = vlaneseq
  %v5837 = vshrl.u32 %v5836, 7
  %v5838 = vsub.s32 0, %v5837
  %v5839 = vrot.slane %v5834, %v5838
  %v5841 = vpack.i.b16 %v5766, %v5766
  %v5843 = vlaneseq
  %v5844 = vshrl.u32 %v5843, 7
  %v5845 = vsub.s32 0, %v5844
  %v5846 = vrot.slane %v5841, %v5845
  %v5848 = vpack.i.b16 %v5781, %v5781
  %v5850 = vlaneseq
  %v5851 = vshrl.u32 %v5850, 7
  %v5852 = vsub.s32 0, %v5851
  %v5853 = vrot.slane %v5848, %v5852
  %v5855 = vpack.i.b16 %v5788, %v5788
  %v5857 = vlaneseq
  %v5858 = vshrl.u32 %v5857, 7
  %v5859 = vsub.s32 0, %v5858
  %v5860 = vrot.slane %v5855, %v5859
  %v5862 = vpack.i.b16 %v5789, %v5789
  %v5864 = vlaneseq
  %v5865 = vshrl.u32 %v5864, 7
  %v5866 = vsub.s32 0, %v5865
  %v5867 = vrot.slane %v5862, %v5866
  %v5869 = vpack.i.b16 %v5790, %v5790
  %v5871 = vlaneseq
  %v5872 = vshrl.u32 %v5871, 7
  %v5873 = vsub.s32 0, %v5872
  %v5874 = vrot.slane %v5869, %v5873
  %v5875 = vadd.bf16 %v5620, %v5797
  %v5876 = vadd.bf16 %v5621, %v5804
  %v5877 = vadd.bf16 %v5622, %v5811
  %v5878 = vadd.bf16 %v5623, %v5818
  %v5879 = vadd.bf16 %v5624, %v5825
  %v5880 = vadd.bf16 %v5625, %v5832
  %v5881 = vadd.bf16 %v5626, %v5839
  %v5882 = vadd.bf16 %v5627, %v5846
  %v5883 = vadd.bf16 %v5628, %v5853
  %v5884 = vadd.bf16 %v5629, %v5860
  %v5885 = vadd.bf16 %v5630, %v5867
  %v5886 = vadd.bf16 %v5631, %v5874
  %v5887 = vadd.bf16 %v5632, %v5797
  %v5888 = vadd.bf16 %v5633, %v5804
  %v5889 = vadd.bf16 %v5634, %v5811
  %v5890 = vadd.bf16 %v5635, %v5818
  %v5891 = vadd.bf16 %v5636, %v5825
  %v5892 = vadd.bf16 %v5637, %v5832
  %v5893 = vadd.bf16 %v5638, %v5839
  %v5894 = vadd.bf16 %v5639, %v5846
  %v5895 = vadd.bf16 %v5640, %v5853
  %v5896 = vadd.bf16 %v5641, %v5860
  %v5897 = vadd.bf16 %v5642, %v5867
  %v5898 = vadd.bf16 %v5643, %v5874
  %v5899 = vadd.bf16 %v5644, %v5797
  %v5900 = vadd.bf16 %v5645, %v5804
  %v5901 = vadd.bf16 %v5646, %v5811
  %v5902 = vadd.bf16 %v5647, %v5818
  %v5903 = vadd.bf16 %v5648, %v5825
  %v5904 = vadd.bf16 %v5649, %v5832
  %v5905 = vadd.bf16 %v5650, %v5839
  %v5906 = vadd.bf16 %v5651, %v5846
  %v5907 = vadd.bf16 %v5652, %v5853
  %v5908 = vadd.bf16 %v5653, %v5860
  %v5909 = vadd.bf16 %v5654, %v5867
  %v5910 = vadd.bf16 %v5655, %v5874
  %v5911 = vadd.bf16 %v5656, %v5797
  %v5912 = vadd.bf16 %v5657, %v5804
  %v5913 = vadd.bf16 %v5658, %v5811
  %v5914 = vadd.bf16 %v5659, %v5818
  %v5915 = vadd.bf16 %v5660, %v5825
  %v5916 = vadd.bf16 %v5661, %v5832
  %v5917 = vadd.bf16 %v5662, %v5839
  %v5918 = vadd.bf16 %v5663, %v5846
  %v5919 = vadd.bf16 %v5664, %v5853
  %v5920 = vadd.bf16 %v5665, %v5860
  %v5921 = vadd.bf16 %v5666, %v5867
  %v5922 = vadd.bf16 %v5667, %v5874
  %v5923 = vadd.bf16 %v5668, %v5797
  %v5924 = vadd.bf16 %v5669, %v5804
  %v5925 = vadd.bf16 %v5670, %v5811
  %v5926 = vadd.bf16 %v5671, %v5818
  %v5927 = vadd.bf16 %v5672, %v5825
  %v5928 = vadd.bf16 %v5673, %v5832
  %v5929 = vadd.bf16 %v5674, %v5839
  %v5930 = vadd.bf16 %v5675, %v5846
  %v5931 = vadd.bf16 %v5676, %v5853
  %v5932 = vadd.bf16 %v5677, %v5860
  %v5933 = vadd.bf16 %v5678, %v5867
  %v5934 = vadd.bf16 %v5679, %v5874
  %v5935 = vadd.bf16 %v5680, %v5797
  %v5936 = vadd.bf16 %v5681, %v5804
  %v5937 = vadd.bf16 %v5682, %v5811
  %v5938 = vadd.bf16 %v5683, %v5818
  %v5939 = vadd.bf16 %v5684, %v5825
  %v5940 = vadd.bf16 %v5685, %v5832
  %v5941 = vadd.bf16 %v5686, %v5839
  %v5942 = vadd.bf16 %v5687, %v5846
  %v5943 = vadd.bf16 %v5688, %v5853
  %v5944 = vadd.bf16 %v5689, %v5860
  %v5945 = vadd.bf16 %v5690, %v5867
  %v5946 = vadd.bf16 %v5691, %v5874
  %v5947 = vadd.bf16 %v5692, %v5797
  %v5948 = vadd.bf16 %v5693, %v5804
  %v5949 = vadd.bf16 %v5694, %v5811
  %v5950 = vadd.bf16 %v5695, %v5818
  %v5951 = vadd.bf16 %v5696, %v5825
  %v5952 = vadd.bf16 %v5697, %v5832
  %v5953 = vadd.bf16 %v5698, %v5839
  %v5954 = vadd.bf16 %v5699, %v5846
  %v5955 = vadd.bf16 %v5700, %v5853
  %v5956 = vadd.bf16 %v5701, %v5860
  %v5957 = vadd.bf16 %v5702, %v5867
  %v5958 = vadd.bf16 %v5703, %v5874
  %v5959 = vadd.bf16 %v5704, %v5797
  %v5960 = vadd.bf16 %v5705, %v5804
  %v5961 = vadd.bf16 %v5706, %v5811
  %v5962 = vadd.bf16 %v5707, %v5818
  %v5963 = vadd.bf16 %v5708, %v5825
  %v5964 = vadd.bf16 %v5709, %v5832
  %v5965 = vadd.bf16 %v5710, %v5839
  %v5966 = vadd.bf16 %v5711, %v5846
  %v5967 = vadd.bf16 %v5712, %v5853
  %v5968 = vadd.bf16 %v5713, %v5860
  %v5969 = vadd.bf16 %v5714, %v5867
  %v5970 = vadd.bf16 %v5715, %v5874
  %v5971 = vadd.bf16 %v5875, 1077952576
  %v5972 = vadd.bf16 %v5876, 1077952576
  %v5973 = vadd.bf16 %v5877, 1077952576
  %v5974 = vadd.bf16 %v5878, 1077952576
  %v5975 = vadd.bf16 %v5879, 1077952576
  %v5976 = vadd.bf16 %v5880, 1077952576
  %v5977 = vadd.bf16 %v5881, 1077952576
  %v5978 = vadd.bf16 %v5882, 1077952576
  %v5979 = vadd.bf16 %v5883, 1077952576
  %v5980 = vadd.bf16 %v5884, 1077952576
  %v5981 = vadd.bf16 %v5885, 1077952576
  %v5982 = vadd.bf16 %v5886, 1077952576
  %v5983 = vadd.bf16 %v5887, 1077952576
  %v5984 = vadd.bf16 %v5888, 1077952576
  %v5985 = vadd.bf16 %v5889, 1077952576
  %v5986 = vadd.bf16 %v5890, 1077952576
  %v5987 = vadd.bf16 %v5891, 1077952576
  %v5988 = vadd.bf16 %v5892, 1077952576
  %v5989 = vadd.bf16 %v5893, 1077952576
  %v5990 = vadd.bf16 %v5894, 1077952576
  %v5991 = vadd.bf16 %v5895, 1077952576
  %v5992 = vadd.bf16 %v5896, 1077952576
  %v5993 = vadd.bf16 %v5897, 1077952576
  %v5994 = vadd.bf16 %v5898, 1077952576
  %v5995 = vadd.bf16 %v5899, 1077952576
  %v5996 = vadd.bf16 %v5900, 1077952576
  %v5997 = vadd.bf16 %v5901, 1077952576
  %v5998 = vadd.bf16 %v5902, 1077952576
  %v5999 = vadd.bf16 %v5903, 1077952576
  %v6000 = vadd.bf16 %v5904, 1077952576
  %v6001 = vadd.bf16 %v5905, 1077952576
  %v6002 = vadd.bf16 %v5906, 1077952576
  %v6003 = vadd.bf16 %v5907, 1077952576
  %v6004 = vadd.bf16 %v5908, 1077952576
  %v6005 = vadd.bf16 %v5909, 1077952576
  %v6006 = vadd.bf16 %v5910, 1077952576
  %v6007 = vadd.bf16 %v5911, 1077952576
  %v6008 = vadd.bf16 %v5912, 1077952576
  %v6009 = vadd.bf16 %v5913, 1077952576
  %v6010 = vadd.bf16 %v5914, 1077952576
  %v6011 = vadd.bf16 %v5915, 1077952576
  %v6012 = vadd.bf16 %v5916, 1077952576
  %v6013 = vadd.bf16 %v5917, 1077952576
  %v6014 = vadd.bf16 %v5918, 1077952576
  %v6015 = vadd.bf16 %v5919, 1077952576
  %v6016 = vadd.bf16 %v5920, 1077952576
  %v6017 = vadd.bf16 %v5921, 1077952576
  %v6018 = vadd.bf16 %v5922, 1077952576
  %v6019 = vadd.bf16 %v5923, 1077952576
  %v6020 = vadd.bf16 %v5924, 1077952576
  %v6021 = vadd.bf16 %v5925, 1077952576
  %v6022 = vadd.bf16 %v5926, 1077952576
  %v6023 = vadd.bf16 %v5927, 1077952576
  %v6024 = vadd.bf16 %v5928, 1077952576
  %v6025 = vadd.bf16 %v5929, 1077952576
  %v6026 = vadd.bf16 %v5930, 1077952576
  %v6027 = vadd.bf16 %v5931, 1077952576
  %v6028 = vadd.bf16 %v5932, 1077952576
  %v6029 = vadd.bf16 %v5933, 1077952576
  %v6030 = vadd.bf16 %v5934, 1077952576
  %v6031 = vadd.bf16 %v5935, 1077952576
  %v6032 = vadd.bf16 %v5936, 1077952576
  %v6033 = vadd.bf16 %v5937, 1077952576
  %v6034 = vadd.bf16 %v5938, 1077952576
  %v6035 = vadd.bf16 %v5939, 1077952576
  %v6036 = vadd.bf16 %v5940, 1077952576
  %v6037 = vadd.bf16 %v5941, 1077952576
  %v6038 = vadd.bf16 %v5942, 1077952576
  %v6039 = vadd.bf16 %v5943, 1077952576
  %v6040 = vadd.bf16 %v5944, 1077952576
  %v6041 = vadd.bf16 %v5945, 1077952576
  %v6042 = vadd.bf16 %v5946, 1077952576
  %v6043 = vadd.bf16 %v5947, 1077952576
  %v6044 = vadd.bf16 %v5948, 1077952576
  %v6045 = vadd.bf16 %v5949, 1077952576
  %v6046 = vadd.bf16 %v5950, 1077952576
  %v6047 = vadd.bf16 %v5951, 1077952576
  %v6048 = vadd.bf16 %v5952, 1077952576
  %v6049 = vadd.bf16 %v5953, 1077952576
  %v6050 = vadd.bf16 %v5954, 1077952576
  %v6051 = vadd.bf16 %v5955, 1077952576
  %v6052 = vadd.bf16 %v5956, 1077952576
  %v6053 = vadd.bf16 %v5957, 1077952576
  %v6054 = vadd.bf16 %v5958, 1077952576
  %v6055 = vadd.bf16 %v5959, 1077952576
  %v6056 = vadd.bf16 %v5960, 1077952576
  %v6057 = vadd.bf16 %v5961, 1077952576
  %v6058 = vadd.bf16 %v5962, 1077952576
  %v6059 = vadd.bf16 %v5963, 1077952576
  %v6060 = vadd.bf16 %v5964, 1077952576
  %v6061 = vadd.bf16 %v5965, 1077952576
  %v6062 = vadd.bf16 %v5966, 1077952576
  %v6063 = vadd.bf16 %v5967, 1077952576
  %v6064 = vadd.bf16 %v5968, 1077952576
  %v6065 = vadd.bf16 %v5969, 1077952576
  %v6066 = vadd.bf16 %v5970, 1077952576
  %v6067 = vmax.bf16 %v5971, 0
  %v6068 = vmax.bf16 %v5972, 0
  %v6069 = vmax.bf16 %v5973, 0
  %v6070 = vmax.bf16 %v5974, 0
  %v6071 = vmax.bf16 %v5975, 0
  %v6072 = vmax.bf16 %v5976, 0
  %v6073 = vmax.bf16 %v5977, 0
  %v6074 = vmax.bf16 %v5978, 0
  %v6075 = vmax.bf16 %v5979, 0
  %v6076 = vmax.bf16 %v5980, 0
  %v6077 = vmax.bf16 %v5981, 0
  %v6078 = vmax.bf16 %v5982, 0
  %v6079 = vmax.bf16 %v5983, 0
  %v6080 = vmax.bf16 %v5984, 0
  %v6081 = vmax.bf16 %v5985, 0
  %v6082 = vmax.bf16 %v5986, 0
  %v6083 = vmax.bf16 %v5987, 0
  %v6084 = vmax.bf16 %v5988, 0
  %v6085 = vmax.bf16 %v5989, 0
  %v6086 = vmax.bf16 %v5990, 0
  %v6087 = vmax.bf16 %v5991, 0
  %v6088 = vmax.bf16 %v5992, 0
  %v6089 = vmax.bf16 %v5993, 0
  %v6090 = vmax.bf16 %v5994, 0
  %v6091 = vmax.bf16 %v5995, 0
  %v6092 = vmax.bf16 %v5996, 0
  %v6093 = vmax.bf16 %v5997, 0
  %v6094 = vmax.bf16 %v5998, 0
  %v6095 = vmax.bf16 %v5999, 0
  %v6096 = vmax.bf16 %v6000, 0
  %v6097 = vmax.bf16 %v6001, 0
  %v6098 = vmax.bf16 %v6002, 0
  %v6099 = vmax.bf16 %v6003, 0
  %v6100 = vmax.bf16 %v6004, 0
  %v6101 = vmax.bf16 %v6005, 0
  %v6102 = vmax.bf16 %v6006, 0
  %v6103 = vmax.bf16 %v6007, 0
  %v6104 = vmax.bf16 %v6008, 0
  %v6105 = vmax.bf16 %v6009, 0
  %v6106 = vmax.bf16 %v6010, 0
  %v6107 = vmax.bf16 %v6011, 0
  %v6108 = vmax.bf16 %v6012, 0
  %v6109 = vmax.bf16 %v6013, 0
  %v6110 = vmax.bf16 %v6014, 0
  %v6111 = vmax.bf16 %v6015, 0
  %v6112 = vmax.bf16 %v6016, 0
  %v6113 = vmax.bf16 %v6017, 0
  %v6114 = vmax.bf16 %v6018, 0
  %v6115 = vmax.bf16 %v6019, 0
  %v6116 = vmax.bf16 %v6020, 0
  %v6117 = vmax.bf16 %v6021, 0
  %v6118 = vmax.bf16 %v6022, 0
  %v6119 = vmax.bf16 %v6023, 0
  %v6120 = vmax.bf16 %v6024, 0
  %v6121 = vmax.bf16 %v6025, 0
  %v6122 = vmax.bf16 %v6026, 0
  %v6123 = vmax.bf16 %v6027, 0
  %v6124 = vmax.bf16 %v6028, 0
  %v6125 = vmax.bf16 %v6029, 0
  %v6126 = vmax.bf16 %v6030, 0
  %v6127 = vmax.bf16 %v6031, 0
  %v6128 = vmax.bf16 %v6032, 0
  %v6129 = vmax.bf16 %v6033, 0
  %v6130 = vmax.bf16 %v6034, 0
  %v6131 = vmax.bf16 %v6035, 0
  %v6132 = vmax.bf16 %v6036, 0
  %v6133 = vmax.bf16 %v6037, 0
  %v6134 = vmax.bf16 %v6038, 0
  %v6135 = vmax.bf16 %v6039, 0
  %v6136 = vmax.bf16 %v6040, 0
  %v6137 = vmax.bf16 %v6041, 0
  %v6138 = vmax.bf16 %v6042, 0
  %v6139 = vmax.bf16 %v6043, 0
  %v6140 = vmax.bf16 %v6044, 0
  %v6141 = vmax.bf16 %v6045, 0
  %v6142 = vmax.bf16 %v6046, 0
  %v6143 = vmax.bf16 %v6047, 0
  %v6144 = vmax.bf16 %v6048, 0
  %v6145 = vmax.bf16 %v6049, 0
  %v6146 = vmax.bf16 %v6050, 0
  %v6147 = vmax.bf16 %v6051, 0
  %v6148 = vmax.bf16 %v6052, 0
  %v6149 = vmax.bf16 %v6053, 0
  %v6150 = vmax.bf16 %v6054, 0
  %v6151 = vmax.bf16 %v6055, 0
  %v6152 = vmax.bf16 %v6056, 0
  %v6153 = vmax.bf16 %v6057, 0
  %v6154 = vmax.bf16 %v6058, 0
  %v6155 = vmax.bf16 %v6059, 0
  %v6156 = vmax.bf16 %v6060, 0
  %v6157 = vmax.bf16 %v6061, 0
  %v6158 = vmax.bf16 %v6062, 0
  %v6159 = vmax.bf16 %v6063, 0
  %v6160 = vmax.bf16 %v6064, 0
  %v6161 = vmax.bf16 %v6065, 0
  %v6162 = vmax.bf16 %v6066, 0
  %v6163 = vmin.bf16 %v6067, 1086341312
  %v6164 = vmin.bf16 %v6068, 1086341312
  %v6165 = vmin.bf16 %v6069, 1086341312
  %v6166 = vmin.bf16 %v6070, 1086341312
  %v6167 = vmin.bf16 %v6071, 1086341312
  %v6168 = vmin.bf16 %v6072, 1086341312
  %v6169 = vmin.bf16 %v6073, 1086341312
  %v6170 = vmin.bf16 %v6074, 1086341312
  %v6171 = vmin.bf16 %v6075, 1086341312
  %v6172 = vmin.bf16 %v6076, 1086341312
  %v6173 = vmin.bf16 %v6077, 1086341312
  %v6174 = vmin.bf16 %v6078, 1086341312
  %v6175 = vmin.bf16 %v6079, 1086341312
  %v6176 = vmin.bf16 %v6080, 1086341312
  %v6177 = vmin.bf16 %v6081, 1086341312
  %v6178 = vmin.bf16 %v6082, 1086341312
  %v6179 = vmin.bf16 %v6083, 1086341312
  %v6180 = vmin.bf16 %v6084, 1086341312
  %v6181 = vmin.bf16 %v6085, 1086341312
  %v6182 = vmin.bf16 %v6086, 1086341312
  %v6183 = vmin.bf16 %v6087, 1086341312
  %v6184 = vmin.bf16 %v6088, 1086341312
  %v6185 = vmin.bf16 %v6089, 1086341312
  %v6186 = vmin.bf16 %v6090, 1086341312
  %v6187 = vmin.bf16 %v6091, 1086341312
  %v6188 = vmin.bf16 %v6092, 1086341312
  %v6189 = vmin.bf16 %v6093, 1086341312
  %v6190 = vmin.bf16 %v6094, 1086341312
  %v6191 = vmin.bf16 %v6095, 1086341312
  %v6192 = vmin.bf16 %v6096, 1086341312
  %v6193 = vmin.bf16 %v6097, 1086341312
  %v6194 = vmin.bf16 %v6098, 1086341312
  %v6195 = vmin.bf16 %v6099, 1086341312
  %v6196 = vmin.bf16 %v6100, 1086341312
  %v6197 = vmin.bf16 %v6101, 1086341312
  %v6198 = vmin.bf16 %v6102, 1086341312
  %v6199 = vmin.bf16 %v6103, 1086341312
  %v6200 = vmin.bf16 %v6104, 1086341312
  %v6201 = vmin.bf16 %v6105, 1086341312
  %v6202 = vmin.bf16 %v6106, 1086341312
  %v6203 = vmin.bf16 %v6107, 1086341312
  %v6204 = vmin.bf16 %v6108, 1086341312
  %v6205 = vmin.bf16 %v6109, 1086341312
  %v6206 = vmin.bf16 %v6110, 1086341312
  %v6207 = vmin.bf16 %v6111, 1086341312
  %v6208 = vmin.bf16 %v6112, 1086341312
  %v6209 = vmin.bf16 %v6113, 1086341312
  %v6210 = vmin.bf16 %v6114, 1086341312
  %v6211 = vmin.bf16 %v6115, 1086341312
  %v6212 = vmin.bf16 %v6116, 1086341312
  %v6213 = vmin.bf16 %v6117, 1086341312
  %v6214 = vmin.bf16 %v6118, 1086341312
  %v6215 = vmin.bf16 %v6119, 1086341312
  %v6216 = vmin.bf16 %v6120, 1086341312
  %v6217 = vmin.bf16 %v6121, 1086341312
  %v6218 = vmin.bf16 %v6122, 1086341312
  %v6219 = vmin.bf16 %v6123, 1086341312
  %v6220 = vmin.bf16 %v6124, 1086341312
  %v6221 = vmin.bf16 %v6125, 1086341312
  %v6222 = vmin.bf16 %v6126, 1086341312
  %v6223 = vmin.bf16 %v6127, 1086341312
  %v6224 = vmin.bf16 %v6128, 1086341312
  %v6225 = vmin.bf16 %v6129, 1086341312
  %v6226 = vmin.bf16 %v6130, 1086341312
  %v6227 = vmin.bf16 %v6131, 1086341312
  %v6228 = vmin.bf16 %v6132, 1086341312
  %v6229 = vmin.bf16 %v6133, 1086341312
  %v6230 = vmin.bf16 %v6134, 1086341312
  %v6231 = vmin.bf16 %v6135, 1086341312
  %v6232 = vmin.bf16 %v6136, 1086341312
  %v6233 = vmin.bf16 %v6137, 1086341312
  %v6234 = vmin.bf16 %v6138, 1086341312
  %v6235 = vmin.bf16 %v6139, 1086341312
  %v6236 = vmin.bf16 %v6140, 1086341312
  %v6237 = vmin.bf16 %v6141, 1086341312
  %v6238 = vmin.bf16 %v6142, 1086341312
  %v6239 = vmin.bf16 %v6143, 1086341312
  %v6240 = vmin.bf16 %v6144, 1086341312
  %v6241 = vmin.bf16 %v6145, 1086341312
  %v6242 = vmin.bf16 %v6146, 1086341312
  %v6243 = vmin.bf16 %v6147, 1086341312
  %v6244 = vmin.bf16 %v6148, 1086341312
  %v6245 = vmin.bf16 %v6149, 1086341312
  %v6246 = vmin.bf16 %v6150, 1086341312
  %v6247 = vmin.bf16 %v6151, 1086341312
  %v6248 = vmin.bf16 %v6152, 1086341312
  %v6249 = vmin.bf16 %v6153, 1086341312
  %v6250 = vmin.bf16 %v6154, 1086341312
  %v6251 = vmin.bf16 %v6155, 1086341312
  %v6252 = vmin.bf16 %v6156, 1086341312
  %v6253 = vmin.bf16 %v6157, 1086341312
  %v6254 = vmin.bf16 %v6158, 1086341312
  %v6255 = vmin.bf16 %v6159, 1086341312
  %v6256 = vmin.bf16 %v6160, 1086341312
  %v6257 = vmin.bf16 %v6161, 1086341312
  %v6258 = vmin.bf16 %v6162, 1086341312
  %v6259 = vmul.bf16 %v5875, %v6163
  %v6260 = vmul.bf16 %v5876, %v6164
  %v6261 = vmul.bf16 %v5877, %v6165
  %v6262 = vmul.bf16 %v5878, %v6166
  %v6263 = vmul.bf16 %v5879, %v6167
  %v6264 = vmul.bf16 %v5880, %v6168
  %v6265 = vmul.bf16 %v5881, %v6169
  %v6266 = vmul.bf16 %v5882, %v6170
  %v6267 = vmul.bf16 %v5883, %v6171
  %v6268 = vmul.bf16 %v5884, %v6172
  %v6269 = vmul.bf16 %v5885, %v6173
  %v6270 = vmul.bf16 %v5886, %v6174
  %v6271 = vmul.bf16 %v5887, %v6175
  %v6272 = vmul.bf16 %v5888, %v6176
  %v6273 = vmul.bf16 %v5889, %v6177
  %v6274 = vmul.bf16 %v5890, %v6178
  %v6275 = vmul.bf16 %v5891, %v6179
  %v6276 = vmul.bf16 %v5892, %v6180
  %v6277 = vmul.bf16 %v5893, %v6181
  %v6278 = vmul.bf16 %v5894, %v6182
  %v6279 = vmul.bf16 %v5895, %v6183
  %v6280 = vmul.bf16 %v5896, %v6184
  %v6281 = vmul.bf16 %v5897, %v6185
  %v6282 = vmul.bf16 %v5898, %v6186
  %v6283 = vmul.bf16 %v5899, %v6187
  %v6284 = vmul.bf16 %v5900, %v6188
  %v6285 = vmul.bf16 %v5901, %v6189
  %v6286 = vmul.bf16 %v5902, %v6190
  %v6287 = vmul.bf16 %v5903, %v6191
  %v6288 = vmul.bf16 %v5904, %v6192
  %v6289 = vmul.bf16 %v5905, %v6193
  %v6290 = vmul.bf16 %v5906, %v6194
  %v6291 = vmul.bf16 %v5907, %v6195
  %v6292 = vmul.bf16 %v5908, %v6196
  %v6293 = vmul.bf16 %v5909, %v6197
  %v6294 = vmul.bf16 %v5910, %v6198
  %v6295 = vmul.bf16 %v5911, %v6199
  %v6296 = vmul.bf16 %v5912, %v6200
  %v6297 = vmul.bf16 %v5913, %v6201
  %v6298 = vmul.bf16 %v5914, %v6202
  %v6299 = vmul.bf16 %v5915, %v6203
  %v6300 = vmul.bf16 %v5916, %v6204
  %v6301 = vmul.bf16 %v5917, %v6205
  %v6302 = vmul.bf16 %v5918, %v6206
  %v6303 = vmul.bf16 %v5919, %v6207
  %v6304 = vmul.bf16 %v5920, %v6208
  %v6305 = vmul.bf16 %v5921, %v6209
  %v6306 = vmul.bf16 %v5922, %v6210
  %v6307 = vmul.bf16 %v5923, %v6211
  %v6308 = vmul.bf16 %v5924, %v6212
  %v6309 = vmul.bf16 %v5925, %v6213
  %v6310 = vmul.bf16 %v5926, %v6214
  %v6311 = vmul.bf16 %v5927, %v6215
  %v6312 = vmul.bf16 %v5928, %v6216
  %v6313 = vmul.bf16 %v5929, %v6217
  %v6314 = vmul.bf16 %v5930, %v6218
  %v6315 = vmul.bf16 %v5931, %v6219
  %v6316 = vmul.bf16 %v5932, %v6220
  %v6317 = vmul.bf16 %v5933, %v6221
  %v6318 = vmul.bf16 %v5934, %v6222
  %v6319 = vmul.bf16 %v5935, %v6223
  %v6320 = vmul.bf16 %v5936, %v6224
  %v6321 = vmul.bf16 %v5937, %v6225
  %v6322 = vmul.bf16 %v5938, %v6226
  %v6323 = vmul.bf16 %v5939, %v6227
  %v6324 = vmul.bf16 %v5940, %v6228
  %v6325 = vmul.bf16 %v5941, %v6229
  %v6326 = vmul.bf16 %v5942, %v6230
  %v6327 = vmul.bf16 %v5943, %v6231
  %v6328 = vmul.bf16 %v5944, %v6232
  %v6329 = vmul.bf16 %v5945, %v6233
  %v6330 = vmul.bf16 %v5946, %v6234
  %v6331 = vmul.bf16 %v5947, %v6235
  %v6332 = vmul.bf16 %v5948, %v6236
  %v6333 = vmul.bf16 %v5949, %v6237
  %v6334 = vmul.bf16 %v5950, %v6238
  %v6335 = vmul.bf16 %v5951, %v6239
  %v6336 = vmul.bf16 %v5952, %v6240
  %v6337 = vmul.bf16 %v5953, %v6241
  %v6338 = vmul.bf16 %v5954, %v6242
  %v6339 = vmul.bf16 %v5955, %v6243
  %v6340 = vmul.bf16 %v5956, %v6244
  %v6341 = vmul.bf16 %v5957, %v6245
  %v6342 = vmul.bf16 %v5958, %v6246
  %v6343 = vmul.bf16 %v5959, %v6247
  %v6344 = vmul.bf16 %v5960, %v6248
  %v6345 = vmul.bf16 %v5961, %v6249
  %v6346 = vmul.bf16 %v5962, %v6250
  %v6347 = vmul.bf16 %v5963, %v6251
  %v6348 = vmul.bf16 %v5964, %v6252
  %v6349 = vmul.bf16 %v5965, %v6253
  %v6350 = vmul.bf16 %v5966, %v6254
  %v6351 = vmul.bf16 %v5967, %v6255
  %v6352 = vmul.bf16 %v5968, %v6256
  %v6353 = vmul.bf16 %v5969, %v6257
  %v6354 = vmul.bf16 %v5970, %v6258
  %v6355 = vld [vmem:[#allocation2] sm:$0xff]
  %v6356 = vld [vmem:[#allocation2 + $0x8] sm:$0xff]
  %v6357 = vld [vmem:[#allocation2 + $0x10] sm:$0xff]
  %v6358 = vld [vmem:[#allocation2 + $0x18] sm:$0xff]
  %v6359 = vld [vmem:[#allocation2 + $0x20] sm:$0xff]
  %v6360 = vld [vmem:[#allocation2 + $0x28] sm:$0xff]
  %v6361 = vld [vmem:[#allocation2 + $0x30] sm:$0xff]
  %v6362 = vld [vmem:[#allocation2 + $0x38] sm:$0xff]
  %v6363 = vld [vmem:[#allocation2 + $0x40] sm:$0xff]
  %v6364 = vld [vmem:[#allocation2 + $0x48] sm:$0xff]
  %v6365 = vld [vmem:[#allocation2 + $0x50] sm:$0xff]
  %v6366 = vld [vmem:[#allocation2 + $0x58] sm:$0xff]
  %v6367 = vld [vmem:[%s7] sm:$0xf]
  %6368 = vmatprep.subr.bf16.mxu0 %v6344
  %6369 = vmatpush1.bf16.msra.mxu0 %v6343
  %6370 = vmatprep.subr.bf16.mxu0 %v6332
  %6371 = vmatpush1.bf16.msra.mxu0 %v6331
  %6372 = vmatprep.subr.bf16.mxu0 %v6320
  %6373 = vmatpush1.bf16.msra.mxu0 %v6319
  %6374 = vmatprep.subr.bf16.mxu0 %v6308
  %6375 = vmatpush1.bf16.msra.mxu0 %v6307
  %6376 = vmatprep.subr.bf16.mxu0 %v6296
  %6377 = vmatpush1.bf16.msra.mxu0 %v6295
  %6378 = vmatprep.subr.bf16.mxu0 %v6284
  %6379 = vmatpush1.bf16.msra.mxu0 %v6283
  %6380 = vmatprep.subr.bf16.mxu0 %v6272
  %6381 = vmatpush1.bf16.msra.mxu0 %v6271
  %6382 = vmatprep.subr.bf16.mxu0 %v6260
  %6383 = vmatpush1.bf16.msra.mxu0 %v6259
  %6384 = vmatprep.subr.bf16.mxu0 0
  %6385 = vmatpush2.bf16.msra.mxu0 0
  %6386 = vmatprep.subr.bf16.mxu0 0
  %6387 = vmatpush2.bf16.msra.mxu0 0
  %6388 = vmatprep.subr.bf16.mxu0 0
  %6389 = vmatpush2.bf16.msra.mxu0 0
  %6390 = vmatprep.subr.bf16.mxu0 0
  %6391 = vmatpush2.bf16.msra.mxu0 0
  %6392 = vmatprep.subr.bf16.mxu0 0
  %6393 = vmatpush2.bf16.msra.mxu0 0
  %6394 = vmatprep.subr.bf16.mxu0 0
  %6395 = vmatpush2.bf16.msra.mxu0 0
  %6396 = vmatprep.subr.bf16.mxu0 0
  %6397 = vmatpush2.bf16.msra.mxu0 0
  %6398 = vmatprep.subr.bf16.mxu0 0
  %6399 = vmatpush2.bf16.msra.mxu0 0
  %6400 = vmatprep.mubr.bf16.mxu0 0
  %6401 = vmatmul.mubr.bf16.gmra.mxu0 %v6367
  %v6402 = vpop.f32.mrf.mxu0
  %v6403 = vadd.f32 0.0, %v6402
  %v6404 = vpop.f32.mrf.mxu0
  %v6405 = vadd.f32 0.0, %v6404
  %v6406 = vpop.f32.mrf.mxu0
  %v6407 = vpop.f32.mrf.mxu0
  %6408 = vdwg.mxu0
  %6409 = vmatprep.subr.bf16.mxu0 %v6346
  %6410 = vmatpush1.bf16.msra.mxu0 %v6345
  %6411 = vmatprep.subr.bf16.mxu0 %v6334
  %6412 = vmatpush1.bf16.msra.mxu0 %v6333
  %6413 = vmatprep.subr.bf16.mxu0 %v6322
  %6414 = vmatpush1.bf16.msra.mxu0 %v6321
  %6415 = vmatprep.subr.bf16.mxu0 %v6310
  %6416 = vmatpush1.bf16.msra.mxu0 %v6309
  %6417 = vmatprep.subr.bf16.mxu0 %v6298
  %6418 = vmatpush1.bf16.msra.mxu0 %v6297
  %6419 = vmatprep.subr.bf16.mxu0 %v6286
  %6420 = vmatpush1.bf16.msra.mxu0 %v6285
  %6421 = vmatprep.subr.bf16.mxu0 %v6274
  %6422 = vmatpush1.bf16.msra.mxu0 %v6273
  %6423 = vmatprep.subr.bf16.mxu0 %v6262
  %6424 = vmatpush1.bf16.msra.mxu0 %v6261
  %6425 = vmatprep.subr.bf16.mxu0 0
  %6426 = vmatpush2.bf16.msra.mxu0 0
  %6427 = vmatprep.subr.bf16.mxu0 0
  %6428 = vmatpush2.bf16.msra.mxu0 0
  %6429 = vmatprep.subr.bf16.mxu0 0
  %6430 = vmatpush2.bf16.msra.mxu0 0
  %6431 = vmatprep.subr.bf16.mxu0 0
  %6432 = vmatpush2.bf16.msra.mxu0 0
  %6433 = vmatprep.subr.bf16.mxu0 0
  %6434 = vmatpush2.bf16.msra.mxu0 0
  %6435 = vmatprep.subr.bf16.mxu0 0
  %6436 = vmatpush2.bf16.msra.mxu0 0
  %6437 = vmatprep.subr.bf16.mxu0 0
  %6438 = vmatpush2.bf16.msra.mxu0 0
  %6439 = vmatprep.subr.bf16.mxu0 0
  %6440 = vmatpush2.bf16.msra.mxu0 0
  %6441 = vmatprep.mubr.bf16.mxu0 0
  %6442 = vmatmul.mubr.bf16.gmra.mxu0 %v6367
  %v6443 = vpop.f32.mrf.mxu0
  %v6444 = vadd.f32 0.0, %v6443
  %v6445 = vpop.f32.mrf.mxu0
  %v6446 = vadd.f32 0.0, %v6445
  %v6447 = vpop.f32.mrf.mxu0
  %v6448 = vpop.f32.mrf.mxu0
  %6449 = vdwg.mxu0
  %6450 = vmatprep.subr.bf16.mxu0 %v6348
  %6451 = vmatpush1.bf16.msra.mxu0 %v6347
  %6452 = vmatprep.subr.bf16.mxu0 %v6336
  %6453 = vmatpush1.bf16.msra.mxu0 %v6335
  %6454 = vmatprep.subr.bf16.mxu0 %v6324
  %6455 = vmatpush1.bf16.msra.mxu0 %v6323
  %6456 = vmatprep.subr.bf16.mxu0 %v6312
  %6457 = vmatpush1.bf16.msra.mxu0 %v6311
  %6458 = vmatprep.subr.bf16.mxu0 %v6300
  %6459 = vmatpush1.bf16.msra.mxu0 %v6299
  %6460 = vmatprep.subr.bf16.mxu0 %v6288
  %6461 = vmatpush1.bf16.msra.mxu0 %v6287
  %6462 = vmatprep.subr.bf16.mxu0 %v6276
  %6463 = vmatpush1.bf16.msra.mxu0 %v6275
  %6464 = vmatprep.subr.bf16.mxu0 %v6264
  %6465 = vmatpush1.bf16.msra.mxu0 %v6263
  %6466 = vmatprep.subr.bf16.mxu0 0
  %6467 = vmatpush2.bf16.msra.mxu0 0
  %6468 = vmatprep.subr.bf16.mxu0 0
  %6469 = vmatpush2.bf16.msra.mxu0 0
  %6470 = vmatprep.subr.bf16.mxu0 0
  %6471 = vmatpush2.bf16.msra.mxu0 0
  %6472 = vmatprep.subr.bf16.mxu0 0
  %6473 = vmatpush2.bf16.msra.mxu0 0
  %6474 = vmatprep.subr.bf16.mxu0 0
  %6475 = vmatpush2.bf16.msra.mxu0 0
  %6476 = vmatprep.subr.bf16.mxu0 0
  %6477 = vmatpush2.bf16.msra.mxu0 0
  %6478 = vmatprep.subr.bf16.mxu0 0
  %6479 = vmatpush2.bf16.msra.mxu0 0
  %6480 = vmatprep.subr.bf16.mxu0 0
  %6481 = vmatpush2.bf16.msra.mxu0 0
  %6482 = vmatprep.mubr.bf16.mxu0 0
  %6483 = vmatmul.mubr.bf16.gmra.mxu0 %v6367
  %v6484 = vpop.f32.mrf.mxu0
  %v6485 = vadd.f32 0.0, %v6484
  %v6486 = vpop.f32.mrf.mxu0
  %v6487 = vadd.f32 0.0, %v6486
  %v6488 = vpop.f32.mrf.mxu0
  %v6489 = vpop.f32.mrf.mxu0
  %6490 = vdwg.mxu0
  %6491 = vmatprep.subr.bf16.mxu0 %v6350
  %6492 = vmatpush1.bf16.msra.mxu0 %v6349
  %6493 = vmatprep.subr.bf16.mxu0 %v6338
  %6494 = vmatpush1.bf16.msra.mxu0 %v6337
  %6495 = vmatprep.subr.bf16.mxu0 %v6326
  %6496 = vmatpush1.bf16.msra.mxu0 %v6325
  %6497 = vmatprep.subr.bf16.mxu0 %v6314
  %6498 = vmatpush1.bf16.msra.mxu0 %v6313
  %6499 = vmatprep.subr.bf16.mxu0 %v6302
  %6500 = vmatpush1.bf16.msra.mxu0 %v6301
  %6501 = vmatprep.subr.bf16.mxu0 %v6290
  %6502 = vmatpush1.bf16.msra.mxu0 %v6289
  %6503 = vmatprep.subr.bf16.mxu0 %v6278
  %6504 = vmatpush1.bf16.msra.mxu0 %v6277
  %6505 = vmatprep.subr.bf16.mxu0 %v6266
  %6506 = vmatpush1.bf16.msra.mxu0 %v6265
  %6507 = vmatprep.subr.bf16.mxu0 0
  %6508 = vmatpush2.bf16.msra.mxu0 0
  %6509 = vmatprep.subr.bf16.mxu0 0
  %6510 = vmatpush2.bf16.msra.mxu0 0
  %6511 = vmatprep.subr.bf16.mxu0 0
  %6512 = vmatpush2.bf16.msra.mxu0 0
  %6513 = vmatprep.subr.bf16.mxu0 0
  %6514 = vmatpush2.bf16.msra.mxu0 0
  %6515 = vmatprep.subr.bf16.mxu0 0
  %6516 = vmatpush2.bf16.msra.mxu0 0
  %6517 = vmatprep.subr.bf16.mxu0 0
  %6518 = vmatpush2.bf16.msra.mxu0 0
  %6519 = vmatprep.subr.bf16.mxu0 0
  %6520 = vmatpush2.bf16.msra.mxu0 0
  %6521 = vmatprep.subr.bf16.mxu0 0
  %6522 = vmatpush2.bf16.msra.mxu0 0
  %6523 = vmatprep.mubr.bf16.mxu0 0
  %6524 = vmatmul.mubr.bf16.gmra.mxu0 %v6367
  %v6525 = vpop.f32.mrf.mxu0
  %v6526 = vadd.f32 0.0, %v6525
  %v6527 = vpop.f32.mrf.mxu0
  %v6528 = vadd.f32 0.0, %v6527
  %v6529 = vpop.f32.mrf.mxu0
  %v6530 = vpop.f32.mrf.mxu0
  %6531 = vdwg.mxu0
  %6532 = vmatprep.subr.bf16.mxu0 %v6352
  %6533 = vmatpush1.bf16.msra.mxu0 %v6351
  %6534 = vmatprep.subr.bf16.mxu0 %v6340
  %6535 = vmatpush1.bf16.msra.mxu0 %v6339
  %6536 = vmatprep.subr.bf16.mxu0 %v6328
  %6537 = vmatpush1.bf16.msra.mxu0 %v6327
  %6538 = vmatprep.subr.bf16.mxu0 %v6316
  %6539 = vmatpush1.bf16.msra.mxu0 %v6315
  %6540 = vmatprep.subr.bf16.mxu0 %v6304
  %6541 = vmatpush1.bf16.msra.mxu0 %v6303
  %6542 = vmatprep.subr.bf16.mxu0 %v6292
  %6543 = vmatpush1.bf16.msra.mxu0 %v6291
  %6544 = vmatprep.subr.bf16.mxu0 %v6280
  %6545 = vmatpush1.bf16.msra.mxu0 %v6279
  %6546 = vmatprep.subr.bf16.mxu0 %v6268
  %6547 = vmatpush1.bf16.msra.mxu0 %v6267
  %6548 = vmatprep.subr.bf16.mxu0 0
  %6549 = vmatpush2.bf16.msra.mxu0 0
  %6550 = vmatprep.subr.bf16.mxu0 0
  %6551 = vmatpush2.bf16.msra.mxu0 0
  %6552 = vmatprep.subr.bf16.mxu0 0
  %6553 = vmatpush2.bf16.msra.mxu0 0
  %6554 = vmatprep.subr.bf16.mxu0 0
  %6555 = vmatpush2.bf16.msra.mxu0 0
  %6556 = vmatprep.subr.bf16.mxu0 0
  %6557 = vmatpush2.bf16.msra.mxu0 0
  %6558 = vmatprep.subr.bf16.mxu0 0
  %6559 = vmatpush2.bf16.msra.mxu0 0
  %6560 = vmatprep.subr.bf16.mxu0 0
  %6561 = vmatpush2.bf16.msra.mxu0 0
  %6562 = vmatprep.subr.bf16.mxu0 0
  %6563 = vmatpush2.bf16.msra.mxu0 0
  %6564 = vmatprep.mubr.bf16.mxu0 0
  %6565 = vmatmul.mubr.bf16.gmra.mxu0 %v6367
  %v6566 = vpop.f32.mrf.mxu0
  %v6567 = vadd.f32 0.0, %v6566
  %v6568 = vpop.f32.mrf.mxu0
  %v6569 = vadd.f32 0.0, %v6568
  %v6570 = vpop.f32.mrf.mxu0
  %v6571 = vpop.f32.mrf.mxu0
  %6572 = vdwg.mxu0
  %6573 = vmatprep.subr.bf16.mxu0 %v6354
  %6574 = vmatpush1.bf16.msra.mxu0 %v6353
  %6575 = vmatprep.subr.bf16.mxu0 %v6342
  %6576 = vmatpush1.bf16.msra.mxu0 %v6341
  %6577 = vmatprep.subr.bf16.mxu0 %v6330
  %6578 = vmatpush1.bf16.msra.mxu0 %v6329
  %6579 = vmatprep.subr.bf16.mxu0 %v6318
  %6580 = vmatpush1.bf16.msra.mxu0 %v6317
  %6581 = vmatprep.subr.bf16.mxu0 %v6306
  %6582 = vmatpush1.bf16.msra.mxu0 %v6305
  %6583 = vmatprep.subr.bf16.mxu0 %v6294
  %6584 = vmatpush1.bf16.msra.mxu0 %v6293
  %6585 = vmatprep.subr.bf16.mxu0 %v6282
  %6586 = vmatpush1.bf16.msra.mxu0 %v6281
  %6587 = vmatprep.subr.bf16.mxu0 %v6270
  %6588 = vmatpush1.bf16.msra.mxu0 %v6269
  %6589 = vmatprep.subr.bf16.mxu0 0
  %6590 = vmatpush2.bf16.msra.mxu0 0
  %6591 = vmatprep.subr.bf16.mxu0 0
  %6592 = vmatpush2.bf16.msra.mxu0 0
  %6593 = vmatprep.subr.bf16.mxu0 0
  %6594 = vmatpush2.bf16.msra.mxu0 0
  %6595 = vmatprep.subr.bf16.mxu0 0
  %6596 = vmatpush2.bf16.msra.mxu0 0
  %6597 = vmatprep.subr.bf16.mxu0 0
  %6598 = vmatpush2.bf16.msra.mxu0 0
  %6599 = vmatprep.subr.bf16.mxu0 0
  %6600 = vmatpush2.bf16.msra.mxu0 0
  %6601 = vmatprep.subr.bf16.mxu0 0
  %6602 = vmatpush2.bf16.msra.mxu0 0
  %6603 = vmatprep.subr.bf16.mxu0 0
  %6604 = vmatpush2.bf16.msra.mxu0 0
  %6605 = vmatprep.mubr.bf16.mxu0 0
  %6606 = vmatmul.mubr.bf16.gmra.mxu0 %v6367
  %v6607 = vpop.f32.mrf.mxu0
  %v6608 = vadd.f32 0.0, %v6607
  %v6609 = vpop.f32.mrf.mxu0
  %v6610 = vadd.f32 0.0, %v6609
  %v6611 = vpop.f32.mrf.mxu0
  %v6612 = vpop.f32.mrf.mxu0
  %6613 = vdwg.mxu0
  %v6614 = vadd.f32 %v6355, %v6403
  %v6615 = vadd.f32 %v6356, %v6405
  %v6616 = vadd.f32 %v6357, %v6444
  %v6617 = vadd.f32 %v6358, %v6446
  %v6618 = vadd.f32 %v6359, %v6485
  %v6619 = vadd.f32 %v6360, %v6487
  %v6620 = vadd.f32 %v6361, %v6526
  %v6621 = vadd.f32 %v6362, %v6528
  %v6622 = vadd.f32 %v6363, %v6567
  %v6623 = vadd.f32 %v6364, %v6569
  %v6624 = vadd.f32 %v6365, %v6608
  %v6625 = vadd.f32 %v6366, %v6610
  %6626 = vst [vmem:[#allocation2] sm:$0xff] %v6614
  %6627 = vst [vmem:[#allocation2 + $0x8] sm:$0xff] %v6615
  %6628 = vst [vmem:[#allocation2 + $0x10] sm:$0xff] %v6616
  %6629 = vst [vmem:[#allocation2 + $0x18] sm:$0xff] %v6617
  %6630 = vst [vmem:[#allocation2 + $0x20] sm:$0xff] %v6618
  %6631 = vst [vmem:[#allocation2 + $0x28] sm:$0xff] %v6619
  %6632 = vst [vmem:[#allocation2 + $0x30] sm:$0xff] %v6620
  %6633 = vst [vmem:[#allocation2 + $0x38] sm:$0xff] %v6621
  %6634 = vst [vmem:[#allocation2 + $0x40] sm:$0xff] %v6622
  %6635 = vst [vmem:[#allocation2 + $0x48] sm:$0xff] %v6623
  %6636 = vst [vmem:[#allocation2 + $0x50] sm:$0xff] %v6624
  %6637 = vst [vmem:[#allocation2 + $0x58] sm:$0xff] %v6625
  // Predicated region
  $region54: #{mobilenetv3_decoder.1} parent=0 // pred_check
    %p6638 = pneg %p44
  $region55: #{mobilenetv3_decoder.1} parent=0 // pred_check_branch
    %6640 = sbr.rel (%p6638) target = $region57
  $region56: #{mobilenetv3_decoder.1} parent=0 // pred_region
    %v6641 = vld [vmem:[#allocation2] sm:$0xff]
    %v6642 = vld [vmem:[#allocation2 + $0x8] sm:$0xff]
    %v6643 = vld [vmem:[#allocation2 + $0x10] sm:$0xff]
    %v6644 = vld [vmem:[#allocation2 + $0x18] sm:$0xff]
    %v6645 = vld [vmem:[#allocation2 + $0x20] sm:$0xff]
    %v6646 = vld [vmem:[#allocation2 + $0x28] sm:$0xff]
    %v6647 = vld [vmem:[#allocation2 + $0x30] sm:$0xff]
    %v6648 = vld [vmem:[#allocation2 + $0x38] sm:$0xff]
    %v6649 = vld [vmem:[#allocation2 + $0x40] sm:$0xff]
    %v6650 = vld [vmem:[#allocation2 + $0x48] sm:$0xff]
    %v6651 = vld [vmem:[#allocation2 + $0x50] sm:$0xff]
    %v6652 = vld [vmem:[#allocation2 + $0x58] sm:$0xff]
    %v6653 = vpack.c.bf16 %v6641, %v6641
    %v6654 = vpack.c.bf16 %v6642, %v6642
    %v6655 = vpack.c.bf16 %v6643, %v6643
    %v6656 = vpack.c.bf16 %v6644, %v6644
    %v6657 = vpack.c.bf16 %v6645, %v6645
    %v6658 = vpack.c.bf16 %v6646, %v6646
    %v6659 = vpack.c.bf16 %v6647, %v6647
    %v6660 = vpack.c.bf16 %v6648, %v6648
    %v6661 = vpack.c.bf16 %v6649, %v6649
    %v6662 = vpack.c.bf16 %v6650, %v6650
    %v6663 = vpack.c.bf16 %v6651, %v6651
    %v6664 = vpack.c.bf16 %v6652, %v6652
    %v6665 = vld [vmem:[%s8] sm:$0xf]
    %v6666 = vld [vmem:[%s8 + $0x4] sm:$0xf]
    %v6667 = vld [vmem:[%s8 + $0x8] sm:$0xf]
    %v6668 = vld [vmem:[%s8 + $0xc] sm:$0xf]
    %v6669 = vld [vmem:[%s8 + $0x10] sm:$0xf]
    %v6670 = vld [vmem:[%s8 + $0x14] sm:$0xf]
    %v6671 = vld [vmem:[%s8 + $0x18] sm:$0xf]
    %v6672 = vld [vmem:[%s8 + $0x1c] sm:$0xf]
    %v6673 = vld [vmem:[%s8 + $0x20] sm:$0xf]
    %v6674 = vld [vmem:[%s8 + $0x24] sm:$0xf]
    %v6675 = vld [vmem:[%s8 + $0x28] sm:$0xf]
    %v6676 = vld [vmem:[%s8 + $0x2c] sm:$0xf]
    %v6677 = vld [vmem:[%s8 + $0x30] sm:$0xf]
    %v6678 = vld [vmem:[%s8 + $0x34] sm:$0xf]
    %v6679 = vld [vmem:[%s8 + $0x38] sm:$0xf]
    %v6680 = vld [vmem:[%s8 + $0x3c] sm:$0xf]
    %v6681 = vld [vmem:[%s8 + $0x40] sm:$0xf]
    %v6682 = vld [vmem:[%s8 + $0x44] sm:$0xf]
    %v6683 = vld [vmem:[%s8 + $0x48] sm:$0xf]
    %v6684 = vld [vmem:[%s8 + $0x4c] sm:$0xf]
    %v6685 = vld [vmem:[%s8 + $0x50] sm:$0xf]
    %v6686 = vld [vmem:[%s8 + $0x54] sm:$0xf]
    %v6687 = vld [vmem:[%s8 + $0x58] sm:$0xf]
    %v6688 = vld [vmem:[%s8 + $0x5c] sm:$0xf]
    %v6689 = vld [vmem:[%s8 + $0x60] sm:$0xf]
    %v6690 = vld [vmem:[%s8 + $0x64] sm:$0xf]
    %v6691 = vld [vmem:[%s8 + $0x68] sm:$0xf]
    %v6692 = vld [vmem:[%s8 + $0x6c] sm:$0xf]
    %v6693 = vld [vmem:[%s8 + $0x70] sm:$0xf]
    %v6694 = vld [vmem:[%s8 + $0x74] sm:$0xf]
    %v6695 = vld [vmem:[%s8 + $0x78] sm:$0xf]
    %v6696 = vld [vmem:[%s8 + $0x7c] sm:$0xf]
    %v6697 = vld [vmem:[%s8 + $0x80] sm:$0xf]
    %v6698 = vld [vmem:[%s8 + $0x84] sm:$0xf]
    %v6699 = vld [vmem:[%s8 + $0x88] sm:$0xf]
    %v6700 = vld [vmem:[%s8 + $0x8c] sm:$0xf]
    %v6701 = vld [vmem:[%s8 + $0x90] sm:$0xf]
    %v6702 = vld [vmem:[%s8 + $0x94] sm:$0xf]
    %v6703 = vld [vmem:[%s8 + $0x98] sm:$0xf]
    %v6704 = vld [vmem:[%s8 + $0x9c] sm:$0xf]
    %v6705 = vld [vmem:[%s8 + $0xa0] sm:$0xf]
    %v6706 = vld [vmem:[%s8 + $0xa4] sm:$0xf]
    %v6707 = vld [vmem:[%s8 + $0xa8] sm:$0xf]
    %v6708 = vld [vmem:[%s8 + $0xac] sm:$0xf]
    %v6709 = vld [vmem:[%s8 + $0xb0] sm:$0xf]
    %v6710 = vld [vmem:[%s8 + $0xb4] sm:$0xf]
    %v6711 = vld [vmem:[%s8 + $0xb8] sm:$0xf]
    %v6712 = vld [vmem:[%s8 + $0xbc] sm:$0xf]
    %v6713 = vld [vmem:[%s8 + $0xc0] sm:$0xf]
    %v6714 = vld [vmem:[%s8 + $0xc4] sm:$0xf]
    %v6715 = vld [vmem:[%s8 + $0xc8] sm:$0xf]
    %v6716 = vld [vmem:[%s8 + $0xcc] sm:$0xf]
    %v6717 = vld [vmem:[%s8 + $0xd0] sm:$0xf]
    %v6718 = vld [vmem:[%s8 + $0xd4] sm:$0xf]
    %v6719 = vld [vmem:[%s8 + $0xd8] sm:$0xf]
    %v6720 = vld [vmem:[%s8 + $0xdc] sm:$0xf]
    %v6721 = vld [vmem:[%s8 + $0xe0] sm:$0xf]
    %v6722 = vld [vmem:[%s8 + $0xe4] sm:$0xf]
    %v6723 = vld [vmem:[%s8 + $0xe8] sm:$0xf]
    %v6724 = vld [vmem:[%s8 + $0xec] sm:$0xf]
    %v6725 = vld [vmem:[%s8 + $0xf0] sm:$0xf]
    %v6726 = vld [vmem:[%s8 + $0xf4] sm:$0xf]
    %v6727 = vld [vmem:[%s8 + $0xf8] sm:$0xf]
    %v6728 = vld [vmem:[%s8 + $0xfc] sm:$0xf]
    %v6729 = vld [vmem:[%s8 + $0x100] sm:$0xf]
    %v6730 = vld [vmem:[%s8 + $0x104] sm:$0xf]
    %v6731 = vld [vmem:[%s8 + $0x108] sm:$0xf]
    %v6732 = vld [vmem:[%s8 + $0x10c] sm:$0xf]
    %v6733 = vld [vmem:[%s8 + $0x110] sm:$0xf]
    %v6734 = vld [vmem:[%s8 + $0x114] sm:$0xf]
    %v6735 = vld [vmem:[%s8 + $0x118] sm:$0xf]
    %v6736 = vld [vmem:[%s8 + $0x11c] sm:$0xf]
    %v6737 = vld [vmem:[%s8 + $0x120] sm:$0xf]
    %v6738 = vld [vmem:[%s8 + $0x124] sm:$0xf]
    %v6739 = vld [vmem:[%s8 + $0x128] sm:$0xf]
    %v6740 = vld [vmem:[%s8 + $0x12c] sm:$0xf]
    %v6741 = vld [vmem:[%s8 + $0x130] sm:$0xf]
    %v6742 = vld [vmem:[%s8 + $0x134] sm:$0xf]
    %v6743 = vld [vmem:[%s8 + $0x138] sm:$0xf]
    %v6744 = vld [vmem:[%s8 + $0x13c] sm:$0xf]
    %v6745 = vld [vmem:[%s8 + $0x140] sm:$0xf]
    %v6746 = vld [vmem:[%s8 + $0x144] sm:$0xf]
    %v6747 = vld [vmem:[%s8 + $0x148] sm:$0xf]
    %v6748 = vld [vmem:[%s8 + $0x14c] sm:$0xf]
    %v6749 = vld [vmem:[%s8 + $0x150] sm:$0xf]
    %v6750 = vld [vmem:[%s8 + $0x154] sm:$0xf]
    %v6751 = vld [vmem:[%s8 + $0x158] sm:$0xf]
    %v6752 = vld [vmem:[%s8 + $0x15c] sm:$0xf]
    %v6753 = vld [vmem:[%s8 + $0x160] sm:$0xf]
    %v6754 = vld [vmem:[%s8 + $0x164] sm:$0xf]
    %v6755 = vld [vmem:[%s8 + $0x168] sm:$0xf]
    %v6756 = vld [vmem:[%s8 + $0x16c] sm:$0xf]
    %v6757 = vld [vmem:[%s8 + $0x170] sm:$0xf]
    %v6758 = vld [vmem:[%s8 + $0x174] sm:$0xf]
    %v6759 = vld [vmem:[%s8 + $0x178] sm:$0xf]
    %v6760 = vld [vmem:[%s8 + $0x17c] sm:$0xf]
    %v6761 = vld [vmem:[%s8 + $0x180] sm:$0xf]
    %v6762 = vld [vmem:[%s8 + $0x184] sm:$0xf]
    %v6763 = vld [vmem:[%s8 + $0x188] sm:$0xf]
    %v6764 = vld [vmem:[%s8 + $0x18c] sm:$0xf]
    %v6765 = vld [vmem:[%s8 + $0x190] sm:$0xf]
    %v6766 = vld [vmem:[%s8 + $0x194] sm:$0xf]
    %v6767 = vld [vmem:[%s8 + $0x198] sm:$0xf]
    %v6768 = vld [vmem:[%s8 + $0x19c] sm:$0xf]
    %v6769 = vld [vmem:[%s8 + $0x1a0] sm:$0xf]
    %v6770 = vld [vmem:[%s8 + $0x1a4] sm:$0xf]
    %v6771 = vld [vmem:[%s8 + $0x1a8] sm:$0xf]
    %v6772 = vld [vmem:[%s8 + $0x1ac] sm:$0xf]
    %v6773 = vld [vmem:[%s8 + $0x1b0] sm:$0xf]
    %v6774 = vld [vmem:[%s8 + $0x1b4] sm:$0xf]
    %v6775 = vld [vmem:[%s8 + $0x1b8] sm:$0xf]
    %v6776 = vld [vmem:[%s8 + $0x1bc] sm:$0xf]
    %v6777 = vld [vmem:[%s8 + $0x1c0] sm:$0xf]
    %v6778 = vld [vmem:[%s8 + $0x1c4] sm:$0xf]
    %v6779 = vld [vmem:[%s8 + $0x1c8] sm:$0xf]
    %v6780 = vld [vmem:[%s8 + $0x1cc] sm:$0xf]
    %v6781 = vld [vmem:[%s8 + $0x1d0] sm:$0xf]
    %v6782 = vld [vmem:[%s8 + $0x1d4] sm:$0xf]
    %v6783 = vld [vmem:[%s8 + $0x1d8] sm:$0xf]
    %v6784 = vld [vmem:[%s8 + $0x1dc] sm:$0xf]
    %v6785 = vld [vmem:[%s8 + $0x1e0] sm:$0xf]
    %v6786 = vld [vmem:[%s8 + $0x1e4] sm:$0xf]
    %v6787 = vld [vmem:[%s8 + $0x1e8] sm:$0xf]
    %v6788 = vld [vmem:[%s8 + $0x1ec] sm:$0xf]
    %v6789 = vld [vmem:[%s8 + $0x1f0] sm:$0xf]
    %v6790 = vld [vmem:[%s8 + $0x1f4] sm:$0xf]
    %v6791 = vld [vmem:[%s8 + $0x1f8] sm:$0xf]
    %v6792 = vld [vmem:[%s8 + $0x1fc] sm:$0xf]
    %v6793 = vld [vmem:[%s8 + $0x200] sm:$0xf]
    %v6794 = vld [vmem:[%s8 + $0x204] sm:$0xf]
    %v6795 = vld [vmem:[%s8 + $0x208] sm:$0xf]
    %v6796 = vld [vmem:[%s8 + $0x20c] sm:$0xf]
    %v6797 = vld [vmem:[%s8 + $0x210] sm:$0xf]
    %v6798 = vld [vmem:[%s8 + $0x214] sm:$0xf]
    %v6799 = vld [vmem:[%s8 + $0x218] sm:$0xf]
    %v6800 = vld [vmem:[%s8 + $0x21c] sm:$0xf]
    %v6801 = vld [vmem:[%s8 + $0x220] sm:$0xf]
    %v6802 = vld [vmem:[%s8 + $0x224] sm:$0xf]
    %v6803 = vld [vmem:[%s8 + $0x228] sm:$0xf]
    %v6804 = vld [vmem:[%s8 + $0x22c] sm:$0xf]
    %v6805 = vld [vmem:[%s8 + $0x230] sm:$0xf]
    %v6806 = vld [vmem:[%s8 + $0x234] sm:$0xf]
    %v6807 = vld [vmem:[%s8 + $0x238] sm:$0xf]
    %v6808 = vld [vmem:[%s8 + $0x23c] sm:$0xf]
    %v6809 = vld [vmem:[%s8 + $0x240] sm:$0xf]
    %v6810 = vld [vmem:[%s8 + $0x244] sm:$0xf]
    %v6811 = vld [vmem:[%s8 + $0x248] sm:$0xf]
    %v6812 = vld [vmem:[%s8 + $0x24c] sm:$0xf]
    %v6813 = vld [vmem:[%s8 + $0x250] sm:$0xf]
    %v6814 = vld [vmem:[%s8 + $0x254] sm:$0xf]
    %v6815 = vld [vmem:[%s8 + $0x258] sm:$0xf]
    %v6816 = vld [vmem:[%s8 + $0x25c] sm:$0xf]
    %v6817 = vld [vmem:[%s8 + $0x260] sm:$0xf]
    %v6818 = vld [vmem:[%s8 + $0x264] sm:$0xf]
    %v6819 = vld [vmem:[%s8 + $0x268] sm:$0xf]
    %v6820 = vld [vmem:[%s8 + $0x26c] sm:$0xf]
    %v6821 = vld [vmem:[%s8 + $0x270] sm:$0xf]
    %v6822 = vld [vmem:[%s8 + $0x274] sm:$0xf]
    %v6823 = vld [vmem:[%s8 + $0x278] sm:$0xf]
    %v6824 = vld [vmem:[%s8 + $0x27c] sm:$0xf]
    %v6825 = vld [vmem:[%s8 + $0x280] sm:$0xf]
    %v6826 = vld [vmem:[%s8 + $0x284] sm:$0xf]
    %v6827 = vld [vmem:[%s8 + $0x288] sm:$0xf]
    %v6828 = vld [vmem:[%s8 + $0x28c] sm:$0xf]
    %v6829 = vld [vmem:[%s8 + $0x290] sm:$0xf]
    %v6830 = vld [vmem:[%s8 + $0x294] sm:$0xf]
    %v6831 = vld [vmem:[%s8 + $0x298] sm:$0xf]
    %v6832 = vld [vmem:[%s8 + $0x29c] sm:$0xf]
    %v6833 = vld [vmem:[%s8 + $0x2a0] sm:$0xf]
    %v6834 = vld [vmem:[%s8 + $0x2a4] sm:$0xf]
    %v6835 = vld [vmem:[%s8 + $0x2a8] sm:$0xf]
    %v6836 = vld [vmem:[%s8 + $0x2ac] sm:$0xf]
    %v6837 = vld [vmem:[%s8 + $0x2b0] sm:$0xf]
    %v6838 = vld [vmem:[%s8 + $0x2b4] sm:$0xf]
    %v6839 = vld [vmem:[%s8 + $0x2b8] sm:$0xf]
    %v6840 = vld [vmem:[%s8 + $0x2bc] sm:$0xf]
    %v6841 = vld [vmem:[%s8 + $0x2c0] sm:$0xf]
    %v6842 = vld [vmem:[%s8 + $0x2c4] sm:$0xf]
    %v6843 = vld [vmem:[%s8 + $0x2c8] sm:$0xf]
    %v6844 = vld [vmem:[%s8 + $0x2cc] sm:$0xf]
    %v6845 = vld [vmem:[%s8 + $0x2d0] sm:$0xf]
    %v6846 = vld [vmem:[%s8 + $0x2d4] sm:$0xf]
    %v6847 = vld [vmem:[%s8 + $0x2d8] sm:$0xf]
    %v6848 = vld [vmem:[%s8 + $0x2dc] sm:$0xf]
    %v6849 = vld [vmem:[%s8 + $0x2e0] sm:$0xf]
    %v6850 = vld [vmem:[%s8 + $0x2e4] sm:$0xf]
    %v6851 = vld [vmem:[%s8 + $0x2e8] sm:$0xf]
    %v6852 = vld [vmem:[%s8 + $0x2ec] sm:$0xf]
    %v6853 = vld [vmem:[%s8 + $0x2f0] sm:$0xf]
    %v6854 = vld [vmem:[%s8 + $0x2f4] sm:$0xf]
    %v6855 = vld [vmem:[%s8 + $0x2f8] sm:$0xf]
    %v6856 = vld [vmem:[%s8 + $0x2fc] sm:$0xf]
    %v6857 = vld [vmem:[%s9] sm:$0x1]
    %v6859 = vlaneseq
    %v6860 = vshrl.u32 %v6859, 7
    %v6861 = vsub.s32 0, %v6860
    %v6862 = vrot.slane %v6857, %v6861
    %v7056 = vunpack.c.l.b16 %v6665
    %v7057 = vunpack.c.l.b16 %v6666
    %v7058 = vunpack.c.l.b16 %v6667
    %v7059 = vunpack.c.l.b16 %v6668
    %v7060 = vunpack.c.l.b16 %v6669
    %v7061 = vunpack.c.l.b16 %v6670
    %v7062 = vunpack.c.l.b16 %v6671
    %v7063 = vunpack.c.l.b16 %v6672
    %v7064 = vunpack.c.l.b16 %v6673
    %v7065 = vunpack.c.l.b16 %v6674
    %v7066 = vunpack.c.l.b16 %v6675
    %v7067 = vunpack.c.l.b16 %v6676
    %v7068 = vunpack.c.l.b16 %v6677
    %v7069 = vunpack.c.l.b16 %v6678
    %v7070 = vunpack.c.l.b16 %v6679
    %v7071 = vunpack.c.l.b16 %v6680
    %v7072 = vunpack.c.l.b16 %v6681
    %v7073 = vunpack.c.l.b16 %v6682
    %v7074 = vunpack.c.l.b16 %v6683
    %v7075 = vunpack.c.l.b16 %v6684
    %v7076 = vunpack.c.l.b16 %v6685
    %v7077 = vunpack.c.l.b16 %v6686
    %v7078 = vunpack.c.l.b16 %v6687
    %v7079 = vunpack.c.l.b16 %v6688
    %v7080 = vunpack.c.l.b16 %v6689
    %v7081 = vunpack.c.l.b16 %v6690
    %v7082 = vunpack.c.l.b16 %v6691
    %v7083 = vunpack.c.l.b16 %v6692
    %v7084 = vunpack.c.l.b16 %v6693
    %v7085 = vunpack.c.l.b16 %v6694
    %v7086 = vunpack.c.l.b16 %v6695
    %v7087 = vunpack.c.l.b16 %v6696
    %v7088 = vunpack.c.l.b16 %v6697
    %v7089 = vunpack.c.l.b16 %v6698
    %v7090 = vunpack.c.l.b16 %v6699
    %v7091 = vunpack.c.l.b16 %v6700
    %v7092 = vunpack.c.l.b16 %v6701
    %v7093 = vunpack.c.l.b16 %v6702
    %v7094 = vunpack.c.l.b16 %v6703
    %v7095 = vunpack.c.l.b16 %v6704
    %v7096 = vunpack.c.l.b16 %v6705
    %v7097 = vunpack.c.l.b16 %v6706
    %v7098 = vunpack.c.l.b16 %v6707
    %v7099 = vunpack.c.l.b16 %v6708
    %v7100 = vunpack.c.l.b16 %v6709
    %v7101 = vunpack.c.l.b16 %v6710
    %v7102 = vunpack.c.l.b16 %v6711
    %v7103 = vunpack.c.l.b16 %v6712
    %v7104 = vunpack.c.l.b16 %v6713
    %v7105 = vunpack.c.l.b16 %v6714
    %v7106 = vunpack.c.l.b16 %v6715
    %v7107 = vunpack.c.l.b16 %v6716
    %v7108 = vunpack.c.l.b16 %v6717
    %v7109 = vunpack.c.l.b16 %v6718
    %v7110 = vunpack.c.l.b16 %v6719
    %v7111 = vunpack.c.l.b16 %v6720
    %v7112 = vunpack.c.l.b16 %v6721
    %v7113 = vunpack.c.l.b16 %v6722
    %v7114 = vunpack.c.l.b16 %v6723
    %v7115 = vunpack.c.l.b16 %v6724
    %v7116 = vunpack.c.l.b16 %v6725
    %v7117 = vunpack.c.l.b16 %v6726
    %v7118 = vunpack.c.l.b16 %v6727
    %v7119 = vunpack.c.l.b16 %v6728
    %v7120 = vunpack.c.l.b16 %v6729
    %v7121 = vunpack.c.l.b16 %v6730
    %v7122 = vunpack.c.l.b16 %v6731
    %v7123 = vunpack.c.l.b16 %v6732
    %v7124 = vunpack.c.l.b16 %v6733
    %v7125 = vunpack.c.l.b16 %v6734
    %v7126 = vunpack.c.l.b16 %v6735
    %v7127 = vunpack.c.l.b16 %v6736
    %v7128 = vunpack.c.l.b16 %v6737
    %v7129 = vunpack.c.l.b16 %v6738
    %v7130 = vunpack.c.l.b16 %v6739
    %v7131 = vunpack.c.l.b16 %v6740
    %v7132 = vunpack.c.l.b16 %v6741
    %v7133 = vunpack.c.l.b16 %v6742
    %v7134 = vunpack.c.l.b16 %v6743
    %v7135 = vunpack.c.l.b16 %v6744
    %v7136 = vunpack.c.l.b16 %v6745
    %v7137 = vunpack.c.l.b16 %v6746
    %v7138 = vunpack.c.l.b16 %v6747
    %v7139 = vunpack.c.l.b16 %v6748
    %v7140 = vunpack.c.l.b16 %v6749
    %v7141 = vunpack.c.l.b16 %v6750
    %v7142 = vunpack.c.l.b16 %v6751
    %v7143 = vunpack.c.l.b16 %v6752
    %v7144 = vunpack.c.l.b16 %v6753
    %v7145 = vunpack.c.l.b16 %v6754
    %v7146 = vunpack.c.l.b16 %v6755
    %v7147 = vunpack.c.l.b16 %v6756
    %v7148 = vunpack.c.l.b16 %v6757
    %v7149 = vunpack.c.l.b16 %v6758
    %v7150 = vunpack.c.l.b16 %v6759
    %v7151 = vunpack.c.l.b16 %v6760
    %v7152 = vunpack.c.l.b16 %v6761
    %v7153 = vunpack.c.l.b16 %v6762
    %v7154 = vunpack.c.l.b16 %v6763
    %v7155 = vunpack.c.l.b16 %v6764
    %v7156 = vunpack.c.l.b16 %v6765
    %v7157 = vunpack.c.l.b16 %v6766
    %v7158 = vunpack.c.l.b16 %v6767
    %v7159 = vunpack.c.l.b16 %v6768
    %v7160 = vunpack.c.l.b16 %v6769
    %v7161 = vunpack.c.l.b16 %v6770
    %v7162 = vunpack.c.l.b16 %v6771
    %v7163 = vunpack.c.l.b16 %v6772
    %v7164 = vunpack.c.l.b16 %v6773
    %v7165 = vunpack.c.l.b16 %v6774
    %v7166 = vunpack.c.l.b16 %v6775
    %v7167 = vunpack.c.l.b16 %v6776
    %v7168 = vunpack.c.l.b16 %v6777
    %v7169 = vunpack.c.l.b16 %v6778
    %v7170 = vunpack.c.l.b16 %v6779
    %v7171 = vunpack.c.l.b16 %v6780
    %v7172 = vunpack.c.l.b16 %v6781
    %v7173 = vunpack.c.l.b16 %v6782
    %v7174 = vunpack.c.l.b16 %v6783
    %v7175 = vunpack.c.l.b16 %v6784
    %v7176 = vunpack.c.l.b16 %v6785
    %v7177 = vunpack.c.l.b16 %v6786
    %v7178 = vunpack.c.l.b16 %v6787
    %v7179 = vunpack.c.l.b16 %v6788
    %v7180 = vunpack.c.l.b16 %v6789
    %v7181 = vunpack.c.l.b16 %v6790
    %v7182 = vunpack.c.l.b16 %v6791
    %v7183 = vunpack.c.l.b16 %v6792
    %v7184 = vunpack.c.l.b16 %v6793
    %v7185 = vunpack.c.l.b16 %v6794
    %v7186 = vunpack.c.l.b16 %v6795
    %v7187 = vunpack.c.l.b16 %v6796
    %v7188 = vunpack.c.l.b16 %v6797
    %v7189 = vunpack.c.l.b16 %v6798
    %v7190 = vunpack.c.l.b16 %v6799
    %v7191 = vunpack.c.l.b16 %v6800
    %v7192 = vunpack.c.l.b16 %v6801
    %v7193 = vunpack.c.l.b16 %v6802
    %v7194 = vunpack.c.l.b16 %v6803
    %v7195 = vunpack.c.l.b16 %v6804
    %v7196 = vunpack.c.l.b16 %v6805
    %v7197 = vunpack.c.l.b16 %v6806
    %v7198 = vunpack.c.l.b16 %v6807
    %v7199 = vunpack.c.l.b16 %v6808
    %v7200 = vunpack.c.l.b16 %v6809
    %v7201 = vunpack.c.l.b16 %v6810
    %v7202 = vunpack.c.l.b16 %v6811
    %v7203 = vunpack.c.l.b16 %v6812
    %v7204 = vunpack.c.l.b16 %v6813
    %v7205 = vunpack.c.l.b16 %v6814
    %v7206 = vunpack.c.l.b16 %v6815
    %v7207 = vunpack.c.l.b16 %v6816
    %v7208 = vunpack.c.l.b16 %v6817
    %v7209 = vunpack.c.l.b16 %v6818
    %v7210 = vunpack.c.l.b16 %v6819
    %v7211 = vunpack.c.l.b16 %v6820
    %v7212 = vunpack.c.l.b16 %v6821
    %v7213 = vunpack.c.l.b16 %v6822
    %v7214 = vunpack.c.l.b16 %v6823
    %v7215 = vunpack.c.l.b16 %v6824
    %v7216 = vunpack.c.l.b16 %v6825
    %v7217 = vunpack.c.l.b16 %v6826
    %v7218 = vunpack.c.l.b16 %v6827
    %v7219 = vunpack.c.l.b16 %v6828
    %v7220 = vunpack.c.l.b16 %v6829
    %v7221 = vunpack.c.l.b16 %v6830
    %v7222 = vunpack.c.l.b16 %v6831
    %v7223 = vunpack.c.l.b16 %v6832
    %v7224 = vunpack.c.l.b16 %v6833
    %v7225 = vunpack.c.l.b16 %v6834
    %v7226 = vunpack.c.l.b16 %v6835
    %v7227 = vunpack.c.l.b16 %v6836
    %v7228 = vunpack.c.l.b16 %v6837
    %v7229 = vunpack.c.l.b16 %v6838
    %v7230 = vunpack.c.l.b16 %v6839
    %v7231 = vunpack.c.l.b16 %v6840
    %v7232 = vunpack.c.l.b16 %v6841
    %v7233 = vunpack.c.l.b16 %v6842
    %v7234 = vunpack.c.l.b16 %v6843
    %v7235 = vunpack.c.l.b16 %v6844
    %v7236 = vunpack.c.l.b16 %v6845
    %v7237 = vunpack.c.l.b16 %v6846
    %v7238 = vunpack.c.l.b16 %v6847
    %v7239 = vunpack.c.l.b16 %v6848
    %v7240 = vunpack.c.l.b16 %v6849
    %v7241 = vunpack.c.l.b16 %v6850
    %v7242 = vunpack.c.l.b16 %v6851
    %v7243 = vunpack.c.l.b16 %v6852
    %v7244 = vunpack.c.l.b16 %v6853
    %v7245 = vunpack.c.l.b16 %v6854
    %v7246 = vunpack.c.l.b16 %v6855
    %v7247 = vunpack.c.l.b16 %v6856
    %v7248 = vpack.c.b16 %v7057, %v7056
    %v7249 = vpack.c.b16 %v7059, %v7058
    %v7250 = vpack.c.b16 %v7061, %v7060
    %v7251 = vpack.c.b16 %v7063, %v7062
    %v7252 = vpack.c.b16 %v7065, %v7064
    %v7253 = vpack.c.b16 %v7067, %v7066
    %v7254 = vpack.c.b16 %v7069, %v7068
    %v7255 = vpack.c.b16 %v7071, %v7070
    %v7256 = vpack.c.b16 %v7073, %v7072
    %v7257 = vpack.c.b16 %v7075, %v7074
    %v7258 = vpack.c.b16 %v7077, %v7076
    %v7259 = vpack.c.b16 %v7079, %v7078
    %v7260 = vpack.c.b16 %v7081, %v7080
    %v7261 = vpack.c.b16 %v7083, %v7082
    %v7262 = vpack.c.b16 %v7085, %v7084
    %v7263 = vpack.c.b16 %v7087, %v7086
    %v7264 = vpack.c.b16 %v7089, %v7088
    %v7265 = vpack.c.b16 %v7091, %v7090
    %v7266 = vpack.c.b16 %v7093, %v7092
    %v7267 = vpack.c.b16 %v7095, %v7094
    %v7268 = vpack.c.b16 %v7097, %v7096
    %v7269 = vpack.c.b16 %v7099, %v7098
    %v7270 = vpack.c.b16 %v7101, %v7100
    %v7271 = vpack.c.b16 %v7103, %v7102
    %v7272 = vpack.c.b16 %v7105, %v7104
    %v7273 = vpack.c.b16 %v7107, %v7106
    %v7274 = vpack.c.b16 %v7109, %v7108
    %v7275 = vpack.c.b16 %v7111, %v7110
    %v7276 = vpack.c.b16 %v7113, %v7112
    %v7277 = vpack.c.b16 %v7115, %v7114
    %v7278 = vpack.c.b16 %v7117, %v7116
    %v7279 = vpack.c.b16 %v7119, %v7118
    %v7280 = vpack.c.b16 %v7121, %v7120
    %v7281 = vpack.c.b16 %v7123, %v7122
    %v7282 = vpack.c.b16 %v7125, %v7124
    %v7283 = vpack.c.b16 %v7127, %v7126
    %v7284 = vpack.c.b16 %v7129, %v7128
    %v7285 = vpack.c.b16 %v7131, %v7130
    %v7286 = vpack.c.b16 %v7133, %v7132
    %v7287 = vpack.c.b16 %v7135, %v7134
    %v7288 = vpack.c.b16 %v7137, %v7136
    %v7289 = vpack.c.b16 %v7139, %v7138
    %v7290 = vpack.c.b16 %v7141, %v7140
    %v7291 = vpack.c.b16 %v7143, %v7142
    %v7292 = vpack.c.b16 %v7145, %v7144
    %v7293 = vpack.c.b16 %v7147, %v7146
    %v7294 = vpack.c.b16 %v7149, %v7148
    %v7295 = vpack.c.b16 %v7151, %v7150
    %v7296 = vpack.c.b16 %v7153, %v7152
    %v7297 = vpack.c.b16 %v7155, %v7154
    %v7298 = vpack.c.b16 %v7157, %v7156
    %v7299 = vpack.c.b16 %v7159, %v7158
    %v7300 = vpack.c.b16 %v7161, %v7160
    %v7301 = vpack.c.b16 %v7163, %v7162
    %v7302 = vpack.c.b16 %v7165, %v7164
    %v7303 = vpack.c.b16 %v7167, %v7166
    %v7304 = vpack.c.b16 %v7169, %v7168
    %v7305 = vpack.c.b16 %v7171, %v7170
    %v7306 = vpack.c.b16 %v7173, %v7172
    %v7307 = vpack.c.b16 %v7175, %v7174
    %v7308 = vpack.c.b16 %v7177, %v7176
    %v7309 = vpack.c.b16 %v7179, %v7178
    %v7310 = vpack.c.b16 %v7181, %v7180
    %v7311 = vpack.c.b16 %v7183, %v7182
    %v7312 = vpack.c.b16 %v7185, %v7184
    %v7313 = vpack.c.b16 %v7187, %v7186
    %v7314 = vpack.c.b16 %v7189, %v7188
    %v7315 = vpack.c.b16 %v7191, %v7190
    %v7316 = vpack.c.b16 %v7193, %v7192
    %v7317 = vpack.c.b16 %v7195, %v7194
    %v7318 = vpack.c.b16 %v7197, %v7196
    %v7319 = vpack.c.b16 %v7199, %v7198
    %v7320 = vpack.c.b16 %v7201, %v7200
    %v7321 = vpack.c.b16 %v7203, %v7202
    %v7322 = vpack.c.b16 %v7205, %v7204
    %v7323 = vpack.c.b16 %v7207, %v7206
    %v7324 = vpack.c.b16 %v7209, %v7208
    %v7325 = vpack.c.b16 %v7211, %v7210
    %v7326 = vpack.c.b16 %v7213, %v7212
    %v7327 = vpack.c.b16 %v7215, %v7214
    %v7328 = vpack.c.b16 %v7217, %v7216
    %v7329 = vpack.c.b16 %v7219, %v7218
    %v7330 = vpack.c.b16 %v7221, %v7220
    %v7331 = vpack.c.b16 %v7223, %v7222
    %v7332 = vpack.c.b16 %v7225, %v7224
    %v7333 = vpack.c.b16 %v7227, %v7226
    %v7334 = vpack.c.b16 %v7229, %v7228
    %v7335 = vpack.c.b16 %v7231, %v7230
    %v7336 = vpack.c.b16 %v7233, %v7232
    %v7337 = vpack.c.b16 %v7235, %v7234
    %v7338 = vpack.c.b16 %v7237, %v7236
    %v7339 = vpack.c.b16 %v7239, %v7238
    %v7340 = vpack.c.b16 %v7241, %v7240
    %v7341 = vpack.c.b16 %v7243, %v7242
    %v7342 = vpack.c.b16 %v7245, %v7244
    %v7343 = vpack.c.b16 %v7247, %v7246
    %7440 = vmatprep.subr.bf16.mxu0 0
    %7441 = vmatpush1.bf16.msra.mxu0 %v7255
    %7442 = vmatprep.subr.bf16.mxu0 0
    %7443 = vmatpush1.bf16.msra.mxu0 %v7254
    %7444 = vmatprep.subr.bf16.mxu0 0
    %7445 = vmatpush1.bf16.msra.mxu0 %v7253
    %7446 = vmatprep.subr.bf16.mxu0 0
    %7447 = vmatpush1.bf16.msra.mxu0 %v7252
    %7448 = vmatprep.subr.bf16.mxu0 0
    %7449 = vmatpush1.bf16.msra.mxu0 %v7251
    %7450 = vmatprep.subr.bf16.mxu0 0
    %7451 = vmatpush1.bf16.msra.mxu0 %v7250
    %7452 = vmatprep.subr.bf16.mxu0 0
    %7453 = vmatpush1.bf16.msra.mxu0 %v7249
    %7454 = vmatprep.subr.bf16.mxu0 0
    %7455 = vmatpush1.bf16.msra.mxu0 %v7248
    %7456 = vmatprep.subr.bf16.mxu0 0
    %7457 = vmatpush2.bf16.msra.mxu0 %v7263
    %7458 = vmatprep.subr.bf16.mxu0 0
    %7459 = vmatpush2.bf16.msra.mxu0 %v7262
    %7460 = vmatprep.subr.bf16.mxu0 0
    %7461 = vmatpush2.bf16.msra.mxu0 %v7261
    %7462 = vmatprep.subr.bf16.mxu0 0
    %7463 = vmatpush2.bf16.msra.mxu0 %v7260
    %7464 = vmatprep.subr.bf16.mxu0 0
    %7465 = vmatpush2.bf16.msra.mxu0 %v7259
    %7466 = vmatprep.subr.bf16.mxu0 0
    %7467 = vmatpush2.bf16.msra.mxu0 %v7258
    %7468 = vmatprep.subr.bf16.mxu0 0
    %7469 = vmatpush2.bf16.msra.mxu0 %v7257
    %7470 = vmatprep.subr.bf16.mxu0 0
    %7471 = vmatpush2.bf16.msra.mxu0 %v7256
    %7472 = vmatprep.mubr.bf16.mxu0 %v6654
    %7473 = vmatmul.mubr.bf16.gmra.mxu0 %v6653
    %v7474 = vpop.f32.mrf.mxu0
    %v7475 = vadd.f32 %v6862, %v7474
    %v7476 = vpop.f32.mrf.mxu0
    %v7477 = vpop.f32.mrf.mxu0
    %v7478 = vpop.f32.mrf.mxu0
    %7479 = vdwg.mxu0
    %7480 = vmatprep.subr.bf16.mxu0 0
    %7481 = vmatpush1.bf16.msra.mxu0 %v7271
    %7482 = vmatprep.subr.bf16.mxu0 0
    %7483 = vmatpush1.bf16.msra.mxu0 %v7270
    %7484 = vmatprep.subr.bf16.mxu0 0
    %7485 = vmatpush1.bf16.msra.mxu0 %v7269
    %7486 = vmatprep.subr.bf16.mxu0 0
    %7487 = vmatpush1.bf16.msra.mxu0 %v7268
    %7488 = vmatprep.subr.bf16.mxu0 0
    %7489 = vmatpush1.bf16.msra.mxu0 %v7267
    %7490 = vmatprep.subr.bf16.mxu0 0
    %7491 = vmatpush1.bf16.msra.mxu0 %v7266
    %7492 = vmatprep.subr.bf16.mxu0 0
    %7493 = vmatpush1.bf16.msra.mxu0 %v7265
    %7494 = vmatprep.subr.bf16.mxu0 0
    %7495 = vmatpush1.bf16.msra.mxu0 %v7264
    %7496 = vmatprep.subr.bf16.mxu0 0
    %7497 = vmatpush2.bf16.msra.mxu0 %v7279
    %7498 = vmatprep.subr.bf16.mxu0 0
    %7499 = vmatpush2.bf16.msra.mxu0 %v7278
    %7500 = vmatprep.subr.bf16.mxu0 0
    %7501 = vmatpush2.bf16.msra.mxu0 %v7277
    %7502 = vmatprep.subr.bf16.mxu0 0
    %7503 = vmatpush2.bf16.msra.mxu0 %v7276
    %7504 = vmatprep.subr.bf16.mxu0 0
    %7505 = vmatpush2.bf16.msra.mxu0 %v7275
    %7506 = vmatprep.subr.bf16.mxu0 0
    %7507 = vmatpush2.bf16.msra.mxu0 %v7274
    %7508 = vmatprep.subr.bf16.mxu0 0
    %7509 = vmatpush2.bf16.msra.mxu0 %v7273
    %7510 = vmatprep.subr.bf16.mxu0 0
    %7511 = vmatpush2.bf16.msra.mxu0 %v7272
    %7512 = vmatprep.mubr.bf16.mxu0 %v6656
    %7513 = vmatmul.mubr.bf16.gmra.mxu0 %v6655
    %v7514 = vpop.f32.mrf.mxu0
    %v7515 = vadd.f32 %v7475, %v7514
    %v7516 = vpop.f32.mrf.mxu0
    %v7517 = vpop.f32.mrf.mxu0
    %v7518 = vpop.f32.mrf.mxu0
    %7519 = vdwg.mxu0
    %7520 = vmatprep.subr.bf16.mxu0 0
    %7521 = vmatpush1.bf16.msra.mxu0 %v7287
    %7522 = vmatprep.subr.bf16.mxu0 0
    %7523 = vmatpush1.bf16.msra.mxu0 %v7286
    %7524 = vmatprep.subr.bf16.mxu0 0
    %7525 = vmatpush1.bf16.msra.mxu0 %v7285
    %7526 = vmatprep.subr.bf16.mxu0 0
    %7527 = vmatpush1.bf16.msra.mxu0 %v7284
    %7528 = vmatprep.subr.bf16.mxu0 0
    %7529 = vmatpush1.bf16.msra.mxu0 %v7283
    %7530 = vmatprep.subr.bf16.mxu0 0
    %7531 = vmatpush1.bf16.msra.mxu0 %v7282
    %7532 = vmatprep.subr.bf16.mxu0 0
    %7533 = vmatpush1.bf16.msra.mxu0 %v7281
    %7534 = vmatprep.subr.bf16.mxu0 0
    %7535 = vmatpush1.bf16.msra.mxu0 %v7280
    %7536 = vmatprep.subr.bf16.mxu0 0
    %7537 = vmatpush2.bf16.msra.mxu0 %v7295
    %7538 = vmatprep.subr.bf16.mxu0 0
    %7539 = vmatpush2.bf16.msra.mxu0 %v7294
    %7540 = vmatprep.subr.bf16.mxu0 0
    %7541 = vmatpush2.bf16.msra.mxu0 %v7293
    %7542 = vmatprep.subr.bf16.mxu0 0
    %7543 = vmatpush2.bf16.msra.mxu0 %v7292
    %7544 = vmatprep.subr.bf16.mxu0 0
    %7545 = vmatpush2.bf16.msra.mxu0 %v7291
    %7546 = vmatprep.subr.bf16.mxu0 0
    %7547 = vmatpush2.bf16.msra.mxu0 %v7290
    %7548 = vmatprep.subr.bf16.mxu0 0
    %7549 = vmatpush2.bf16.msra.mxu0 %v7289
    %7550 = vmatprep.subr.bf16.mxu0 0
    %7551 = vmatpush2.bf16.msra.mxu0 %v7288
    %7552 = vmatprep.mubr.bf16.mxu0 %v6658
    %7553 = vmatmul.mubr.bf16.gmra.mxu0 %v6657
    %v7554 = vpop.f32.mrf.mxu0
    %v7555 = vadd.f32 %v7515, %v7554
    %v7556 = vpop.f32.mrf.mxu0
    %v7557 = vpop.f32.mrf.mxu0
    %v7558 = vpop.f32.mrf.mxu0
    %7559 = vdwg.mxu0
    %7560 = vmatprep.subr.bf16.mxu0 0
    %7561 = vmatpush1.bf16.msra.mxu0 %v7303
    %7562 = vmatprep.subr.bf16.mxu0 0
    %7563 = vmatpush1.bf16.msra.mxu0 %v7302
    %7564 = vmatprep.subr.bf16.mxu0 0
    %7565 = vmatpush1.bf16.msra.mxu0 %v7301
    %7566 = vmatprep.subr.bf16.mxu0 0
    %7567 = vmatpush1.bf16.msra.mxu0 %v7300
    %7568 = vmatprep.subr.bf16.mxu0 0
    %7569 = vmatpush1.bf16.msra.mxu0 %v7299
    %7570 = vmatprep.subr.bf16.mxu0 0
    %7571 = vmatpush1.bf16.msra.mxu0 %v7298
    %7572 = vmatprep.subr.bf16.mxu0 0
    %7573 = vmatpush1.bf16.msra.mxu0 %v7297
    %7574 = vmatprep.subr.bf16.mxu0 0
    %7575 = vmatpush1.bf16.msra.mxu0 %v7296
    %7576 = vmatprep.subr.bf16.mxu0 0
    %7577 = vmatpush2.bf16.msra.mxu0 %v7311
    %7578 = vmatprep.subr.bf16.mxu0 0
    %7579 = vmatpush2.bf16.msra.mxu0 %v7310
    %7580 = vmatprep.subr.bf16.mxu0 0
    %7581 = vmatpush2.bf16.msra.mxu0 %v7309
    %7582 = vmatprep.subr.bf16.mxu0 0
    %7583 = vmatpush2.bf16.msra.mxu0 %v7308
    %7584 = vmatprep.subr.bf16.mxu0 0
    %7585 = vmatpush2.bf16.msra.mxu0 %v7307
    %7586 = vmatprep.subr.bf16.mxu0 0
    %7587 = vmatpush2.bf16.msra.mxu0 %v7306
    %7588 = vmatprep.subr.bf16.mxu0 0
    %7589 = vmatpush2.bf16.msra.mxu0 %v7305
    %7590 = vmatprep.subr.bf16.mxu0 0
    %7591 = vmatpush2.bf16.msra.mxu0 %v7304
    %7592 = vmatprep.mubr.bf16.mxu0 %v6660
    %7593 = vmatmul.mubr.bf16.gmra.mxu0 %v6659
    %v7594 = vpop.f32.mrf.mxu0
    %v7595 = vadd.f32 %v7555, %v7594
    %v7596 = vpop.f32.mrf.mxu0
    %v7597 = vpop.f32.mrf.mxu0
    %v7598 = vpop.f32.mrf.mxu0
    %7599 = vdwg.mxu0
    %7600 = vmatprep.subr.bf16.mxu0 0
    %7601 = vmatpush1.bf16.msra.mxu0 %v7319
    %7602 = vmatprep.subr.bf16.mxu0 0
    %7603 = vmatpush1.bf16.msra.mxu0 %v7318
    %7604 = vmatprep.subr.bf16.mxu0 0
    %7605 = vmatpush1.bf16.msra.mxu0 %v7317
    %7606 = vmatprep.subr.bf16.mxu0 0
    %7607 = vmatpush1.bf16.msra.mxu0 %v7316
    %7608 = vmatprep.subr.bf16.mxu0 0
    %7609 = vmatpush1.bf16.msra.mxu0 %v7315
    %7610 = vmatprep.subr.bf16.mxu0 0
    %7611 = vmatpush1.bf16.msra.mxu0 %v7314
    %7612 = vmatprep.subr.bf16.mxu0 0
    %7613 = vmatpush1.bf16.msra.mxu0 %v7313
    %7614 = vmatprep.subr.bf16.mxu0 0
    %7615 = vmatpush1.bf16.msra.mxu0 %v7312
    %7616 = vmatprep.subr.bf16.mxu0 0
    %7617 = vmatpush2.bf16.msra.mxu0 %v7327
    %7618 = vmatprep.subr.bf16.mxu0 0
    %7619 = vmatpush2.bf16.msra.mxu0 %v7326
    %7620 = vmatprep.subr.bf16.mxu0 0
    %7621 = vmatpush2.bf16.msra.mxu0 %v7325
    %7622 = vmatprep.subr.bf16.mxu0 0
    %7623 = vmatpush2.bf16.msra.mxu0 %v7324
    %7624 = vmatprep.subr.bf16.mxu0 0
    %7625 = vmatpush2.bf16.msra.mxu0 %v7323
    %7626 = vmatprep.subr.bf16.mxu0 0
    %7627 = vmatpush2.bf16.msra.mxu0 %v7322
    %7628 = vmatprep.subr.bf16.mxu0 0
    %7629 = vmatpush2.bf16.msra.mxu0 %v7321
    %7630 = vmatprep.subr.bf16.mxu0 0
    %7631 = vmatpush2.bf16.msra.mxu0 %v7320
    %7632 = vmatprep.mubr.bf16.mxu0 %v6662
    %7633 = vmatmul.mubr.bf16.gmra.mxu0 %v6661
    %v7634 = vpop.f32.mrf.mxu0
    %v7635 = vadd.f32 %v7595, %v7634
    %v7636 = vpop.f32.mrf.mxu0
    %v7637 = vpop.f32.mrf.mxu0
    %v7638 = vpop.f32.mrf.mxu0
    %7639 = vdwg.mxu0
    %7640 = vmatprep.subr.bf16.mxu0 0
    %7641 = vmatpush1.bf16.msra.mxu0 %v7335
    %7642 = vmatprep.subr.bf16.mxu0 0
    %7643 = vmatpush1.bf16.msra.mxu0 %v7334
    %7644 = vmatprep.subr.bf16.mxu0 0
    %7645 = vmatpush1.bf16.msra.mxu0 %v7333
    %7646 = vmatprep.subr.bf16.mxu0 0
    %7647 = vmatpush1.bf16.msra.mxu0 %v7332
    %7648 = vmatprep.subr.bf16.mxu0 0
    %7649 = vmatpush1.bf16.msra.mxu0 %v7331
    %7650 = vmatprep.subr.bf16.mxu0 0
    %7651 = vmatpush1.bf16.msra.mxu0 %v7330
    %7652 = vmatprep.subr.bf16.mxu0 0
    %7653 = vmatpush1.bf16.msra.mxu0 %v7329
    %7654 = vmatprep.subr.bf16.mxu0 0
    %7655 = vmatpush1.bf16.msra.mxu0 %v7328
    %7656 = vmatprep.subr.bf16.mxu0 0
    %7657 = vmatpush2.bf16.msra.mxu0 %v7343
    %7658 = vmatprep.subr.bf16.mxu0 0
    %7659 = vmatpush2.bf16.msra.mxu0 %v7342
    %7660 = vmatprep.subr.bf16.mxu0 0
    %7661 = vmatpush2.bf16.msra.mxu0 %v7341
    %7662 = vmatprep.subr.bf16.mxu0 0
    %7663 = vmatpush2.bf16.msra.mxu0 %v7340
    %7664 = vmatprep.subr.bf16.mxu0 0
    %7665 = vmatpush2.bf16.msra.mxu0 %v7339
    %7666 = vmatprep.subr.bf16.mxu0 0
    %7667 = vmatpush2.bf16.msra.mxu0 %v7338
    %7668 = vmatprep.subr.bf16.mxu0 0
    %7669 = vmatpush2.bf16.msra.mxu0 %v7337
    %7670 = vmatprep.subr.bf16.mxu0 0
    %7671 = vmatpush2.bf16.msra.mxu0 %v7336
    %7672 = vmatprep.mubr.bf16.mxu0 %v6664
    %7673 = vmatmul.mubr.bf16.gmra.mxu0 %v6663
    %v7674 = vpop.f32.mrf.mxu0
    %v7675 = vadd.f32 %v7635, %v7674
    %v7676 = vpop.f32.mrf.mxu0
    %v7677 = vpop.f32.mrf.mxu0
    %v7678 = vpop.f32.mrf.mxu0
    %7679 = vdwg.mxu0
    %v7680 = vadd.f32 %v7675, 3.0
    %v7681 = vmax.f32 %v7680, 0.0
    %v7682 = vmin.f32 %v7681, 6.0
    %v7683 = vmul.f32 %v7675, %v7682
    %v7684 = vpack.c.bf16 %v7683, %v7683
    %v7685 = vld [vmem:[%s10] sm:$0xf]
    %v7686 = vld [vmem:[%s10 + $0x4] sm:$0xf]
    %v7687 = vld [vmem:[%s10 + $0x8] sm:$0xf]
    %v7688 = vld [vmem:[%s10 + $0xc] sm:$0xf]
    %v7689 = vld [vmem:[%s10 + $0x10] sm:$0xf]
    %v7690 = vld [vmem:[%s10 + $0x14] sm:$0xf]
    %v7691 = vld [vmem:[%s10 + $0x18] sm:$0xf]
    %v7692 = vld [vmem:[%s10 + $0x1c] sm:$0xf]
    %v7693 = vld [vmem:[%s10 + $0x20] sm:$0xf]
    %v7694 = vld [vmem:[%s10 + $0x24] sm:$0xf]
    %v7695 = vld [vmem:[%s10 + $0x28] sm:$0xf]
    %v7696 = vld [vmem:[%s10 + $0x2c] sm:$0xf]
    %v7697 = vld [vmem:[%s10 + $0x30] sm:$0xf]
    %v7698 = vld [vmem:[%s10 + $0x34] sm:$0xf]
    %v7699 = vld [vmem:[%s10 + $0x38] sm:$0xf]
    %v7700 = vld [vmem:[%s10 + $0x3c] sm:$0xf]
    %v7701 = vld [vmem:[%s11] sm:$0x1]
    %v7703 = vlaneseq
    %v7704 = vshrl.u32 %v7703, 7
    %v7705 = vsub.s32 0, %v7704
    %v7706 = vrot.slane %v7701, %v7705
    %v7724 = vunpack.c.l.b16 %v7685
    %v7725 = vunpack.c.l.b16 %v7686
    %v7726 = vunpack.c.l.b16 %v7687
    %v7727 = vunpack.c.l.b16 %v7688
    %v7728 = vunpack.c.l.b16 %v7689
    %v7729 = vunpack.c.l.b16 %v7690
    %v7730 = vunpack.c.l.b16 %v7691
    %v7731 = vunpack.c.l.b16 %v7692
    %v7732 = vunpack.c.l.b16 %v7693
    %v7733 = vunpack.c.l.b16 %v7694
    %v7734 = vunpack.c.l.b16 %v7695
    %v7735 = vunpack.c.l.b16 %v7696
    %v7736 = vunpack.c.l.b16 %v7697
    %v7737 = vunpack.c.l.b16 %v7698
    %v7738 = vunpack.c.l.b16 %v7699
    %v7739 = vunpack.c.l.b16 %v7700
    %v7740 = vpack.c.b16 %v7725, %v7724
    %v7741 = vpack.c.b16 %v7727, %v7726
    %v7742 = vpack.c.b16 %v7729, %v7728
    %v7743 = vpack.c.b16 %v7731, %v7730
    %v7744 = vpack.c.b16 %v7733, %v7732
    %v7745 = vpack.c.b16 %v7735, %v7734
    %v7746 = vpack.c.b16 %v7737, %v7736
    %v7747 = vpack.c.b16 %v7739, %v7738
    %7756 = vmatprep.subr.bf16.mxu0 0
    %7757 = vmatpush1.bf16.msra.mxu0 %v7747
    %7758 = vmatprep.subr.bf16.mxu0 0
    %7759 = vmatpush1.bf16.msra.mxu0 %v7746
    %7760 = vmatprep.subr.bf16.mxu0 0
    %7761 = vmatpush1.bf16.msra.mxu0 %v7745
    %7762 = vmatprep.subr.bf16.mxu0 0
    %7763 = vmatpush1.bf16.msra.mxu0 %v7744
    %7764 = vmatprep.subr.bf16.mxu0 0
    %7765 = vmatpush1.bf16.msra.mxu0 %v7743
    %7766 = vmatprep.subr.bf16.mxu0 0
    %7767 = vmatpush1.bf16.msra.mxu0 %v7742
    %7768 = vmatprep.subr.bf16.mxu0 0
    %7769 = vmatpush1.bf16.msra.mxu0 %v7741
    %7770 = vmatprep.subr.bf16.mxu0 0
    %7771 = vmatpush1.bf16.msra.mxu0 %v7740
    %7772 = vmatprep.subr.bf16.mxu0 0
    %7773 = vmatpush2.bf16.msra.mxu0 0
    %7774 = vmatprep.subr.bf16.mxu0 0
    %7775 = vmatpush2.bf16.msra.mxu0 0
    %7776 = vmatprep.subr.bf16.mxu0 0
    %7777 = vmatpush2.bf16.msra.mxu0 0
    %7778 = vmatprep.subr.bf16.mxu0 0
    %7779 = vmatpush2.bf16.msra.mxu0 0
    %7780 = vmatprep.subr.bf16.mxu0 0
    %7781 = vmatpush2.bf16.msra.mxu0 0
    %7782 = vmatprep.subr.bf16.mxu0 0
    %7783 = vmatpush2.bf16.msra.mxu0 0
    %7784 = vmatprep.subr.bf16.mxu0 0
    %7785 = vmatpush2.bf16.msra.mxu0 0
    %7786 = vmatprep.subr.bf16.mxu0 0
    %7787 = vmatpush2.bf16.msra.mxu0 0
    %7788 = vmatprep.mubr.bf16.mxu0 0
    %7789 = vmatmul.mubr.bf16.gmra.mxu0 %v7684
    %v7790 = vpop.f32.mrf.mxu0
    %v7791 = vadd.f32 %v7706, %v7790
    %v7792 = vpop.f32.mrf.mxu0
    %v7793 = vpop.f32.mrf.mxu0
    %v7794 = vpop.f32.mrf.mxu0
    %7795 = vdwg.mxu0
    %7796 = vst [vmem:[%s12] sm:$0xff] %v7791
  $region57: #{mobilenetv3_decoder.1} parent=0 // pred_fallthru
    _
  // Predicated region
  $region58: #{mobilenetv3_decoder.1} parent=0 // pred_check
    _
  $region59: #{mobilenetv3_decoder.1} parent=0 // pred_check_branch
    %7798 = sbr.rel (0) target = $region61
  $region60: #{mobilenetv3_decoder.1} parent=0 // pred_region
    _
  $region61: #{mobilenetv3_decoder.1} parent=0 // pred_fallthru
    _
  // Predicated region
  $region62: #{mobilenetv3_decoder.1} parent=0 // pred_check
    _
  $region63: #{mobilenetv3_decoder.1} parent=0 // pred_check_branch
    %7800 = sbr.rel (0) target = $region65
  $region64: #{mobilenetv3_decoder.1} parent=0 // pred_region
    _
  $region65: #{mobilenetv3_decoder.1} parent=0 // pred_fallthru
    _

</llo_original>
